<compile_context>
chip_gen: v5e
topology: v5e:2x2
jax: 0.10.0
libtpu: 0.0.40
codegen_flags: <defaults>
</compile_context>

<pallas_src>
import jax
import jax.numpy as jnp
import numpy as np
from jax.experimental import pallas as pl
from jax.experimental.pallas import tpu as pltpu

jax.config.update("jax_default_matmul_precision", "highest")

# ---- model hyperparameters (small, consistent with the module) ----
SPACIAL_DIM = 4          # H = W = 4
EMBED_DIM   = 32         # C
NUM_HEADS   = 4
OUTPUT_DIM  = 64
BATCH       = 2

S        = SPACIAL_DIM * SPACIAL_DIM     # 16 spatial tokens
L        = S + 1                         # +1 pooled (mean) token
HEAD_DIM = EMBED_DIM // NUM_HEADS        # 8 (== sublane granularity)
SCALE    = HEAD_DIM ** -0.5

# ---- packed parameter slab layout (single input DMA for all params) ----
_W_ROWS    = 3 * EMBED_DIM                 # 96  : fused [scale*Wq; Wk; Wv]   (out, in)
_PB_BASE   = _W_ROWS                       # 96  : pos_bias rows (3C, L)
_WC_BASE   = _PB_BASE + 3 * EMBED_DIM      # 192 : Wc^T rows (in, out)
_BC_ROW    = _WC_BASE + EMBED_DIM          # 224 : bc row
PARAM_ROWS = 232                           # padded to a multiple of 8 sublanes
PARAM_COLS = 64


def attention_pool_kernel(x_ref, p_ref, o_ref):
    """Whole batch in one invocation.

    x_ref : (N, C, S)           NCHW input with spatial flattened (feature-major)
    p_ref : (PARAM_ROWS, 64)    packed parameter slab (see pack_params)
    o_ref : (L, N*OUTPUT_DIM)   lane-dense output (batch b -> lanes [b*D, (b+1)*D))
    """
    wqkv     = p_ref[0:_W_ROWS, 0:EMBED_DIM]              # (3C, C)
    pos_bias = p_ref[_PB_BASE:_PB_BASE + _W_ROWS, 0:L]    # (3C, L)

    # ---- fused QKV projection, feature-major; heads split on the SUBLANE axis ----
    q_list, k_list, v_list = [], [], []
    for b in range(BATCH):                                  # static unroll (N = 2)
        xb = x_ref[b]                                       # (C, S), already feature-major
        mean_b = jnp.mean(xb, axis=1, keepdims=True)        # (C, 1) pooled token
        tok = jnp.concatenate([mean_b, xb], axis=1)         # (C, L)
        qkvT = jnp.dot(wqkv, tok,
                       preferred_element_type=jnp.float32) + pos_bias     # (3C, L)
        for h in range(NUM_HEADS):
            r = h * HEAD_DIM
            # q needs tokens on sublanes for the scores matmul -> tiny (8, L) transpose
            q_list.append(qkvT[r:r + HEAD_DIM, :].T)                             # (L, Dh)
            k_list.append(qkvT[EMBED_DIM + r:EMBED_DIM + r + HEAD_DIM, :])        # (Dh, L)
            v_list.append(qkvT[2 * EMBED_DIM + r:2 * EMBED_DIM + r + HEAD_DIM, :])

    q3 = jnp.stack(q_list, axis=0)                          # (G, L, Dh)   G = N*H = 8
    k3 = jnp.stack(k_list, axis=0)                          # (G, Dh, L)
    v3 = jnp.stack(v_list, axis=0)                          # (G, Dh, L)

    # ---- attention: canonical batched matmuls; no cross-batch mask needed --------
    scores = jnp.einsum('gqd,gdk->gqk', q3, k3,
                        preferred_element_type=jnp.float32)               # (G, L, L)
    m = jnp.max(scores, axis=-1, keepdims=True)
    p = jnp.exp(scores - m)
    attn = p / jnp.sum(p, axis=-1, keepdims=True)           # exact divide (tiny tensor)
    ctx = jnp.einsum('gqk,gdk->gqd', attn, v3,
                     preferred_element_type=jnp.float32)                  # (G, L, Dh)

    # ---- head merge + output projection: merge absorbed by the MXU as a sum of
    #      per-head (L, Dh) @ (Dh, D_out) matmuls (weights sliced on sublanes) -----
    bc_row = p_ref[_BC_ROW:_BC_ROW + 1, 0:OUTPUT_DIM]       # (1, D_out)
    outs = []
    for b in range(BATCH):
        ob = bc_row
        for h in range(NUM_HEADS):
            wc_h = p_ref[_WC_BASE + h * HEAD_DIM:_WC_BASE + (h + 1) * HEAD_DIM,
                         0:OUTPUT_DIM]                                     # (Dh, D_out)
            ob = ob + jnp.dot(ctx[b * NUM_HEADS + h], wc_h,
                              preferred_element_type=jnp.float32)          # (L, D_out)
        outs.append(ob)

    # lane-dense output: batch b occupies lanes [b*D_out, (b+1)*D_out)
    o_ref[...] = jnp.concatenate(outs, axis=1).astype(o_ref.dtype)


def pack_params(pos, wq, bq, wk, bk, wv, bv, wc, bc):
    """One-time host-side packing of all parameters into a single (232, 64) f32 slab.

    Folds the query scaling into Wq/bq, folds positional embedding + fused QKV bias
    into pos_bias = Wqkv_scaled @ pos^T + bqkv_scaled, and stores Wc transposed to
    (in, out) so the per-head slices in the kernel are sublane-aligned.
    """
    wqkv = np.concatenate([np.asarray(wq) * SCALE, np.asarray(wk), np.asarray(wv)],
                          axis=0).astype(np.float32)                       # (3C, C)
    bqkv = np.concatenate([np.asarray(bq) * SCALE, np.asarray(bk), np.asarray(bv)],
                          axis=0).astype(np.float32)                       # (3C,)
    pos_bias = wqkv @ np.asarray(pos, np.float32).T + bqkv[:, None]        # (3C, L)

    slab = np.zeros((PARAM_ROWS, PARAM_COLS), np.float32)
    slab[0:_W_ROWS, 0:EMBED_DIM] = wqkv
    slab[_PB_BASE:_PB_BASE + _W_ROWS, 0:L] = pos_bias
    slab[_WC_BASE:_WC_BASE + EMBED_DIM, 0:OUTPUT_DIM] = np.asarray(wc, np.float32).T
    slab[_BC_ROW, 0:OUTPUT_DIM] = np.asarray(bc, np.float32)
    return jnp.asarray(slab)


def attention_pool_2d(x_nchw, packed_params):
    """x_nchw: (N, C, H, W) float32. Returns (L, N, OUTPUT_DIM) like the PyTorch module."""
    N, C, H, W = x_nchw.shape
    assert (N, C, H * W) == (BATCH, EMBED_DIM, S)
    x_ncs = x_nchw.reshape(N, C, H * W).astype(jnp.float32)     # free reshape only

    out = pl.pallas_call(
        attention_pool_kernel,
        out_shape=jax.ShapeDtypeStruct((L, BATCH * OUTPUT_DIM), jnp.float32),
        grid_spec=pltpu.PrefetchScalarGridSpec(
            num_scalar_prefetch=0,
            grid=(1,),                                           # single step: no pipeline overhead
            in_specs=[
                pl.BlockSpec((BATCH, EMBED_DIM, S), lambda i: (0, 0, 0)),   # x
                pl.BlockSpec((PARAM_ROWS, PARAM_COLS), lambda i: (0, 0)),   # packed params
            ],
            out_specs=pl.BlockSpec((L, BATCH * OUTPUT_DIM), lambda i: (0, 0)),
        ),
        compiler_params=pltpu.CompilerParams(dimension_semantics=("arbitrary",)),
    )(x_ncs, packed_params)

    # (L, N*D) -> (L, N, D): zero-cost view; matches PyTorch's (L, N, D) output.
    return out.reshape(L, BATCH, OUTPUT_DIM)


def reference(x_nchw, raw):
    """Pure-JAX reference of F.multi_head_attention_forward with separate proj weights."""
    pos, wq, bq, wk, bk, wv, bv, wc, bc = raw
    N, C, H, W = x_nchw.shape
    x = jnp.transpose(x_nchw.reshape(N, C, H * W), (0, 2, 1))               # (N, S, C)
    tok = jnp.concatenate([x.mean(axis=1, keepdims=True), x], axis=1) + pos[None]  # (N, L, C)
    q = (tok @ wq.T + bq) * SCALE
    k = tok @ wk.T + bk
    v = tok @ wv.T + bv
    qh = q.reshape(N, L, NUM_HEADS, HEAD_DIM)
    kh = k.reshape(N, L, NUM_HEADS, HEAD_DIM)
    vh = v.reshape(N, L, NUM_HEADS, HEAD_DIM)
    scores = jnp.einsum('nqhd,nkhd->nhqk', qh, kh)
    attn = jax.nn.softmax(scores, axis=-1)
    o = jnp.einsum('nhqk,nkhd->nqhd', attn, vh).reshape(N, L, EMBED_DIM)
    o = o @ wc.T + bc
    return jnp.transpose(o, (1, 0, 2))                                      # (L, N, D_out)


def init_raw_params(key):
    ks = jax.random.split(key, 9)
    pos = jax.random.normal(ks[0], (L, EMBED_DIM), jnp.float32) / (EMBED_DIM ** 0.5)
    wq = jax.random.normal(ks[1], (EMBED_DIM, EMBED_DIM), jnp.float32) * 0.05
    bq = jax.random.normal(ks[2], (EMBED_DIM,), jnp.float32) * 0.01
    wk = jax.random.normal(ks[3], (EMBED_DIM, EMBED_DIM), jnp.float32) * 0.05
    bk = jax.random.normal(ks[4], (EMBED_DIM,), jnp.float32) * 0.01
    wv = jax.random.normal(ks[5], (EMBED_DIM, EMBED_DIM), jnp.float32) * 0.05
    bv = jax.random.normal(ks[6], (EMBED_DIM,), jnp.float32) * 0.01
    wc = jax.random.normal(ks[7], (OUTPUT_DIM, EMBED_DIM), jnp.float32) * 0.05
    bc = jax.random.normal(ks[8], (OUTPUT_DIM,), jnp.float32) * 0.01
    return (pos, wq, bq, wk, bk, wv, bv, wc, bc)


if __name__ == "__main__":
    key = jax.random.PRNGKey(0)
    k_x, k_p = jax.random.split(key)
    x = jax.random.normal(k_x, (BATCH, EMBED_DIM, SPACIAL_DIM, SPACIAL_DIM), jnp.float32)
    raw = init_raw_params(k_p)
    packed = pack_params(*raw)            # one-time host-side parameter packing

    out = jax.block_until_ready(attention_pool_2d(x, packed))
    ref = jax.block_until_ready(reference(x, raw))

    assert out.shape == (L, BATCH, OUTPUT_DIM), out.shape
    # exact softmax divide + highest matmul precision -> tight parity with the reference
    np.testing.assert_allclose(np.asarray(out), np.asarray(ref), atol=2e-4, rtol=2e-4)
    print("KERNEL_OK")
</pallas_src>

<mosaic_0001>
module attributes {stable_mosaic.version = 11 : i64} {
  func.func @attention_pool_kernel(%arg0: i32, %arg1: memref<2x32x16xf32, #tpu.memory_space<vmem>>, %arg2: memref<232x64xf32, #tpu.memory_space<vmem>>, %arg3: memref<17x128xf32, #tpu.memory_space<vmem>>) attributes {dimension_semantics = [#tpu.dimension_semantics<arbitrary>], iteration_bounds = array<i64: 1>, scalar_prefetch = 0 : i64, scratch_operands = 0 : i64, tpu.core_type = #tpu.core_type<tc>, window_params = [{pipeline_mode = #tpu.pipeline_mode<synchronous>, transform_indices = @transform_0, window_bounds = array<i64: 2, 32, 16>}, {pipeline_mode = #tpu.pipeline_mode<synchronous>, transform_indices = @transform_1, window_bounds = array<i64: 232, 64>}, {pipeline_mode = #tpu.pipeline_mode<synchronous>, transform_indices = @transform_2, window_bounds = array<i64: 17, 128>}]} {
    %c0 = arith.constant 0 : index
    %c0_0 = arith.constant 0 : index
    %0 = vector.load %arg2[%c0, %c0_0] : memref<232x64xf32, #tpu.memory_space<vmem>>, vector<96x32xf32>
    %c96 = arith.constant 96 : index
    %c0_1 = arith.constant 0 : index
    %1 = vector.load %arg2[%c96, %c0_1] : memref<232x64xf32, #tpu.memory_space<vmem>>, vector<96x17xf32>
    %c0_2 = arith.constant 0 : index
    %c0_3 = arith.constant 0 : index
    %c0_4 = arith.constant 0 : index
    %2 = vector.load %arg1[%c0_2, %c0_3, %c0_4] : memref<2x32x16xf32, #tpu.memory_space<vmem>>, vector<1x32x16xf32>
    %3 = vector.shape_cast %2 : vector<1x32x16xf32> to vector<32x16xf32>
    %cst = arith.constant dense<0.000000e+00> : vector<32xf32>
    %4 = vector.multi_reduction <add>, %3, %cst [1] : vector<32x16xf32> to vector<32xf32>
    %5 = vector.shape_cast %4 : vector<32xf32> to vector<32x1xf32>
    %cst_5 = arith.constant 1.600000e+01 : f32
    %6 = vector.broadcast %cst_5 : f32 to vector<32x1xf32>
    %7 = arith.divf %5, %6 : vector<32x1xf32>
    %8 = tpu.concatenate %7, %3 in 1 : vector<32x1xf32>, vector<32x16xf32> -> vector<32x17xf32>
    %cst_6 = arith.constant dense<0.000000e+00> : vector<96x17xf32>
    %9 = tpu.matmul %0, %8, %cst_6 {dimension_numbers = #tpu.dot_dimension_numbers<[1], [0], [0], [1], [0, 0, 1, 1], [], []>, precision = #tpu.contract_precision<fp32>} : vector<96x32xf32>, vector<32x17xf32>, vector<96x17xf32> -> vector<96x17xf32>
    %10 = arith.addf %9, %1 : vector<96x17xf32>
    %11 = vector.extract_strided_slice %10 {offsets = [0, 0], sizes = [8, 17], strides = [1, 1]} : vector<96x17xf32> to vector<8x17xf32>
    %12 = tpu.transpose %11, [1, 0] : vector<8x17xf32> -> vector<17x8xf32>
    %13 = vector.extract_strided_slice %10 {offsets = [32, 0], sizes = [8, 17], strides = [1, 1]} : vector<96x17xf32> to vector<8x17xf32>
    %14 = vector.extract_strided_slice %10 {offsets = [64, 0], sizes = [8, 17], strides = [1, 1]} : vector<96x17xf32> to vector<8x17xf32>
    %15 = vector.extract_strided_slice %10 {offsets = [8, 0], sizes = [8, 17], strides = [1, 1]} : vector<96x17xf32> to vector<8x17xf32>
    %16 = tpu.transpose %15, [1, 0] : vector<8x17xf32> -> vector<17x8xf32>
    %17 = vector.extract_strided_slice %10 {offsets = [40, 0], sizes = [8, 17], strides = [1, 1]} : vector<96x17xf32> to vector<8x17xf32>
    %18 = vector.extract_strided_slice %10 {offsets = [72, 0], sizes = [8, 17], strides = [1, 1]} : vector<96x17xf32> to vector<8x17xf32>
    %19 = vector.extract_strided_slice %10 {offsets = [16, 0], sizes = [8, 17], strides = [1, 1]} : vector<96x17xf32> to vector<8x17xf32>
    %20 = tpu.transpose %19, [1, 0] : vector<8x17xf32> -> vector<17x8xf32>
    %21 = vector.extract_strided_slice %10 {offsets = [48, 0], sizes = [8, 17], strides = [1, 1]} : vector<96x17xf32> to vector<8x17xf32>
    %22 = vector.extract_strided_slice %10 {offsets = [80, 0], sizes = [8, 17], strides = [1, 1]} : vector<96x17xf32> to vector<8x17xf32>
    %23 = vector.extract_strided_slice %10 {offsets = [24, 0], sizes = [8, 17], strides = [1, 1]} : vector<96x17xf32> to vector<8x17xf32>
    %24 = tpu.transpose %23, [1, 0] : vector<8x17xf32> -> vector<17x8xf32>
    %25 = vector.extract_strided_slice %10 {offsets = [56, 0], sizes = [8, 17], strides = [1, 1]} : vector<96x17xf32> to vector<8x17xf32>
    %26 = vector.extract_strided_slice %10 {offsets = [88, 0], sizes = [8, 17], strides = [1, 1]} : vector<96x17xf32> to vector<8x17xf32>
    %c1 = arith.constant 1 : index
    %c0_7 = arith.constant 0 : index
    %c0_8 = arith.constant 0 : index
    %27 = vector.load %arg1[%c1, %c0_7, %c0_8] : memref<2x32x16xf32, #tpu.memory_space<vmem>>, vector<1x32x16xf32>
    %28 = vector.shape_cast %27 : vector<1x32x16xf32> to vector<32x16xf32>
    %cst_9 = arith.constant dense<0.000000e+00> : vector<32xf32>
    %29 = vector.multi_reduction <add>, %28, %cst_9 [1] : vector<32x16xf32> to vector<32xf32>
    %30 = vector.shape_cast %29 : vector<32xf32> to vector<32x1xf32>
    %cst_10 = arith.constant 1.600000e+01 : f32
    %31 = vector.broadcast %cst_10 : f32 to vector<32x1xf32>
    %32 = arith.divf %30, %31 : vector<32x1xf32>
    %33 = tpu.concatenate %32, %28 in 1 : vector<32x1xf32>, vector<32x16xf32> -> vector<32x17xf32>
    %cst_11 = arith.constant dense<0.000000e+00> : vector<96x17xf32>
    %34 = tpu.matmul %0, %33, %cst_11 {dimension_numbers = #tpu.dot_dimension_numbers<[1], [0], [0], [1], [0, 0, 1, 1], [], []>, precision = #tpu.contract_precision<fp32>} : vector<96x32xf32>, vector<32x17xf32>, vector<96x17xf32> -> vector<96x17xf32>
    %35 = arith.addf %34, %1 : vector<96x17xf32>
    %36 = vector.extract_strided_slice %35 {offsets = [0, 0], sizes = [8, 17], strides = [1, 1]} : vector<96x17xf32> to vector<8x17xf32>
    %37 = tpu.transpose %36, [1, 0] : vector<8x17xf32> -> vector<17x8xf32>
    %38 = vector.extract_strided_slice %35 {offsets = [32, 0], sizes = [8, 17], strides = [1, 1]} : vector<96x17xf32> to vector<8x17xf32>
    %39 = vector.extract_strided_slice %35 {offsets = [64, 0], sizes = [8, 17], strides = [1, 1]} : vector<96x17xf32> to vector<8x17xf32>
    %40 = vector.extract_strided_slice %35 {offsets = [8, 0], sizes = [8, 17], strides = [1, 1]} : vector<96x17xf32> to vector<8x17xf32>
    %41 = tpu.transpose %40, [1, 0] : vector<8x17xf32> -> vector<17x8xf32>
    %42 = vector.extract_strided_slice %35 {offsets = [40, 0], sizes = [8, 17], strides = [1, 1]} : vector<96x17xf32> to vector<8x17xf32>
    %43 = vector.extract_strided_slice %35 {offsets = [72, 0], sizes = [8, 17], strides = [1, 1]} : vector<96x17xf32> to vector<8x17xf32>
    %44 = vector.extract_strided_slice %35 {offsets = [16, 0], sizes = [8, 17], strides = [1, 1]} : vector<96x17xf32> to vector<8x17xf32>
    %45 = tpu.transpose %44, [1, 0] : vector<8x17xf32> -> vector<17x8xf32>
    %46 = vector.extract_strided_slice %35 {offsets = [48, 0], sizes = [8, 17], strides = [1, 1]} : vector<96x17xf32> to vector<8x17xf32>
    %47 = vector.extract_strided_slice %35 {offsets = [80, 0], sizes = [8, 17], strides = [1, 1]} : vector<96x17xf32> to vector<8x17xf32>
    %48 = vector.extract_strided_slice %35 {offsets = [24, 0], sizes = [8, 17], strides = [1, 1]} : vector<96x17xf32> to vector<8x17xf32>
    %49 = tpu.transpose %48, [1, 0] : vector<8x17xf32> -> vector<17x8xf32>
    %50 = vector.extract_strided_slice %35 {offsets = [56, 0], sizes = [8, 17], strides = [1, 1]} : vector<96x17xf32> to vector<8x17xf32>
    %51 = vector.extract_strided_slice %35 {offsets = [88, 0], sizes = [8, 17], strides = [1, 1]} : vector<96x17xf32> to vector<8x17xf32>
    %52 = vector.shape_cast %12 : vector<17x8xf32> to vector<1x17x8xf32>
    %53 = vector.shape_cast %16 : vector<17x8xf32> to vector<1x17x8xf32>
    %54 = vector.shape_cast %20 : vector<17x8xf32> to vector<1x17x8xf32>
    %55 = vector.shape_cast %24 : vector<17x8xf32> to vector<1x17x8xf32>
    %56 = vector.shape_cast %37 : vector<17x8xf32> to vector<1x17x8xf32>
    %57 = vector.shape_cast %41 : vector<17x8xf32> to vector<1x17x8xf32>
    %58 = vector.shape_cast %45 : vector<17x8xf32> to vector<1x17x8xf32>
    %59 = vector.shape_cast %49 : vector<17x8xf32> to vector<1x17x8xf32>
    %60 = tpu.concatenate %52, %53, %54, %55, %56, %57, %58, %59 in 0 : vector<1x17x8xf32>, vector<1x17x8xf32>, vector<1x17x8xf32>, vector<1x17x8xf32>, vector<1x17x8xf32>, vector<1x17x8xf32>, vector<1x17x8xf32>, vector<1x17x8xf32> -> vector<8x17x8xf32>
    %61 = vector.shape_cast %13 : vector<8x17xf32> to vector<1x8x17xf32>
    %62 = vector.shape_cast %17 : vector<8x17xf32> to vector<1x8x17xf32>
    %63 = vector.shape_cast %21 : vector<8x17xf32> to vector<1x8x17xf32>
    %64 = vector.shape_cast %25 : vector<8x17xf32> to vector<1x8x17xf32>
    %65 = vector.shape_cast %38 : vector<8x17xf32> to vector<1x8x17xf32>
    %66 = vector.shape_cast %42 : vector<8x17xf32> to vector<1x8x17xf32>
    %67 = vector.shape_cast %46 : vector<8x17xf32> to vector<1x8x17xf32>
    %68 = vector.shape_cast %50 : vector<8x17xf32> to vector<1x8x17xf32>
    %69 = tpu.concatenate %61, %62, %63, %64, %65, %66, %67, %68 in 0 : vector<1x8x17xf32>, vector<1x8x17xf32>, vector<1x8x17xf32>, vector<1x8x17xf32>, vector<1x8x17xf32>, vector<1x8x17xf32>, vector<1x8x17xf32>, vector<1x8x17xf32> -> vector<8x8x17xf32>
    %70 = vector.shape_cast %14 : vector<8x17xf32> to vector<1x8x17xf32>
    %71 = vector.shape_cast %18 : vector<8x17xf32> to vector<1x8x17xf32>
    %72 = vector.shape_cast %22 : vector<8x17xf32> to vector<1x8x17xf32>
    %73 = vector.shape_cast %26 : vector<8x17xf32> to vector<1x8x17xf32>
    %74 = vector.shape_cast %39 : vector<8x17xf32> to vector<1x8x17xf32>
    %75 = vector.shape_cast %43 : vector<8x17xf32> to vector<1x8x17xf32>
    %76 = vector.shape_cast %47 : vector<8x17xf32> to vector<1x8x17xf32>
    %77 = vector.shape_cast %51 : vector<8x17xf32> to vector<1x8x17xf32>
    %78 = tpu.concatenate %70, %71, %72, %73, %74, %75, %76, %77 in 0 : vector<1x8x17xf32>, vector<1x8x17xf32>, vector<1x8x17xf32>, vector<1x8x17xf32>, vector<1x8x17xf32>, vector<1x8x17xf32>, vector<1x8x17xf32>, vector<1x8x17xf32> -> vector<8x8x17xf32>
    "tpu.trace_start"() <{level = 10 : i32, message = "gqd,gdk->gqk"}> : () -> ()
    %cst_12 = arith.constant dense<0.000000e+00> : vector<8x17x17xf32>
    %79 = tpu.matmul %60, %69, %cst_12 {dimension_numbers = #tpu.dot_dimension_numbers<[2], [1], [1], [2], [0, 0, 0, 1, 1, 2], [0], [0]>, precision = #tpu.contract_precision<fp32>} : vector<8x17x8xf32>, vector<8x8x17xf32>, vector<8x17x17xf32> -> vector<8x17x17xf32>
    "tpu.trace_stop"() : () -> ()
    %cst_13 = arith.constant dense<0xFF800000> : vector<8x17xf32>
    %80 = vector.multi_reduction <maximumf>, %79, %cst_13 [2] : vector<8x17x17xf32> to vector<8x17xf32>
    %81 = vector.shape_cast %80 : vector<8x17xf32> to vector<8x17x1xf32>
    %82 = vector.broadcast %81 : vector<8x17x1xf32> to vector<8x17x17xf32>
    %83 = arith.subf %79, %82 : vector<8x17x17xf32>
    %84 = math.exp %83 : vector<8x17x17xf32>
    %cst_14 = arith.constant dense<0.000000e+00> : vector<8x17xf32>
    %85 = vector.multi_reduction <add>, %84, %cst_14 [2] : vector<8x17x17xf32> to vector<8x17xf32>
    %86 = vector.shape_cast %85 : vector<8x17xf32> to vector<8x17x1xf32>
    %87 = vector.broadcast %86 : vector<8x17x1xf32> to vector<8x17x17xf32>
    %88 = arith.divf %84, %87 : vector<8x17x17xf32>
    "tpu.trace_start"() <{level = 10 : i32, message = "gqk,gdk->gqd"}> : () -> ()
    %cst_15 = arith.constant dense<0.000000e+00> : vector<8x17x8xf32>
    %89 = tpu.matmul %88, %78, %cst_15 {dimension_numbers = #tpu.dot_dimension_numbers<[2], [2], [1], [1], [0, 0, 0, 1, 1, 1], [0], [0]>, precision = #tpu.contract_precision<fp32>} : vector<8x17x17xf32>, vector<8x8x17xf32>, vector<8x17x8xf32> -> vector<8x17x8xf32>
    "tpu.trace_stop"() : () -> ()
    %c224 = arith.constant 224 : index
    %c0_16 = arith.constant 0 : index
    %90 = vector.load %arg2[%c224, %c0_16] : memref<232x64xf32, #tpu.memory_space<vmem>>, vector<1x64xf32>
    %c192 = arith.constant 192 : index
    %c0_17 = arith.constant 0 : index
    %91 = vector.load %arg2[%c192, %c0_17] : memref<232x64xf32, #tpu.memory_space<vmem>>, vector<8x64xf32>
    %92 = vector.extract_strided_slice %89 {offsets = [0, 0, 0], sizes = [1, 17, 8], strides = [1, 1, 1]} : vector<8x17x8xf32> to vector<1x17x8xf32>
    %93 = vector.shape_cast %92 : vector<1x17x8xf32> to vector<17x8xf32>
    %cst_18 = arith.constant dense<0.000000e+00> : vector<17x64xf32>
    %94 = tpu.matmul %93, %91, %cst_18 {dimension_numbers = #tpu.dot_dimension_numbers<[1], [0], [0], [1], [0, 0, 1, 1], [], []>, precision = #tpu.contract_precision<fp32>} : vector<17x8xf32>, vector<8x64xf32>, vector<17x64xf32> -> vector<17x64xf32>
    %95 = vector.broadcast %90 : vector<1x64xf32> to vector<17x64xf32>
    %96 = arith.addf %95, %94 : vector<17x64xf32>
    %c200 = arith.constant 200 : index
    %c0_19 = arith.constant 0 : index
    %97 = vector.load %arg2[%c200, %c0_19] : memref<232x64xf32, #tpu.memory_space<vmem>>, vector<8x64xf32>
    %98 = vector.extract_strided_slice %89 {offsets = [1, 0, 0], sizes = [1, 17, 8], strides = [1, 1, 1]} : vector<8x17x8xf32> to vector<1x17x8xf32>
    %99 = vector.shape_cast %98 : vector<1x17x8xf32> to vector<17x8xf32>
    %cst_20 = arith.constant dense<0.000000e+00> : vector<17x64xf32>
    %100 = tpu.matmul %99, %97, %cst_20 {dimension_numbers = #tpu.dot_dimension_numbers<[1], [0], [0], [1], [0, 0, 1, 1], [], []>, precision = #tpu.contract_precision<fp32>} : vector<17x8xf32>, vector<8x64xf32>, vector<17x64xf32> -> vector<17x64xf32>
    %101 = arith.addf %96, %100 : vector<17x64xf32>
    %c208 = arith.constant 208 : index
    %c0_21 = arith.constant 0 : index
    %102 = vector.load %arg2[%c208, %c0_21] : memref<232x64xf32, #tpu.memory_space<vmem>>, vector<8x64xf32>
    %103 = vector.extract_strided_slice %89 {offsets = [2, 0, 0], sizes = [1, 17, 8], strides = [1, 1, 1]} : vector<8x17x8xf32> to vector<1x17x8xf32>
    %104 = vector.shape_cast %103 : vector<1x17x8xf32> to vector<17x8xf32>
    %cst_22 = arith.constant dense<0.000000e+00> : vector<17x64xf32>
    %105 = tpu.matmul %104, %102, %cst_22 {dimension_numbers = #tpu.dot_dimension_numbers<[1], [0], [0], [1], [0, 0, 1, 1], [], []>, precision = #tpu.contract_precision<fp32>} : vector<17x8xf32>, vector<8x64xf32>, vector<17x64xf32> -> vector<17x64xf32>
    %106 = arith.addf %101, %105 : vector<17x64xf32>
    %c216 = arith.constant 216 : index
    %c0_23 = arith.constant 0 : index
    %107 = vector.load %arg2[%c216, %c0_23] : memref<232x64xf32, #tpu.memory_space<vmem>>, vector<8x64xf32>
    %108 = vector.extract_strided_slice %89 {offsets = [3, 0, 0], sizes = [1, 17, 8], strides = [1, 1, 1]} : vector<8x17x8xf32> to vector<1x17x8xf32>
    %109 = vector.shape_cast %108 : vector<1x17x8xf32> to vector<17x8xf32>
    %cst_24 = arith.constant dense<0.000000e+00> : vector<17x64xf32>
    %110 = tpu.matmul %109, %107, %cst_24 {dimension_numbers = #tpu.dot_dimension_numbers<[1], [0], [0], [1], [0, 0, 1, 1], [], []>, precision = #tpu.contract_precision<fp32>} : vector<17x8xf32>, vector<8x64xf32>, vector<17x64xf32> -> vector<17x64xf32>
    %111 = arith.addf %106, %110 : vector<17x64xf32>
    %c192_25 = arith.constant 192 : index
    %c0_26 = arith.constant 0 : index
    %112 = vector.load %arg2[%c192_25, %c0_26] : memref<232x64xf32, #tpu.memory_space<vmem>>, vector<8x64xf32>
    %113 = vector.extract_strided_slice %89 {offsets = [4, 0, 0], sizes = [1, 17, 8], strides = [1, 1, 1]} : vector<8x17x8xf32> to vector<1x17x8xf32>
    %114 = vector.shape_cast %113 : vector<1x17x8xf32> to vector<17x8xf32>
    %cst_27 = arith.constant dense<0.000000e+00> : vector<17x64xf32>
    %115 = tpu.matmul %114, %112, %cst_27 {dimension_numbers = #tpu.dot_dimension_numbers<[1], [0], [0], [1], [0, 0, 1, 1], [], []>, precision = #tpu.contract_precision<fp32>} : vector<17x8xf32>, vector<8x64xf32>, vector<17x64xf32> -> vector<17x64xf32>
    %116 = vector.broadcast %90 : vector<1x64xf32> to vector<17x64xf32>
    %117 = arith.addf %116, %115 : vector<17x64xf32>
    %c200_28 = arith.constant 200 : index
    %c0_29 = arith.constant 0 : index
    %118 = vector.load %arg2[%c200_28, %c0_29] : memref<232x64xf32, #tpu.memory_space<vmem>>, vector<8x64xf32>
    %119 = vector.extract_strided_slice %89 {offsets = [5, 0, 0], sizes = [1, 17, 8], strides = [1, 1, 1]} : vector<8x17x8xf32> to vector<1x17x8xf32>
    %120 = vector.shape_cast %119 : vector<1x17x8xf32> to vector<17x8xf32>
    %cst_30 = arith.constant dense<0.000000e+00> : vector<17x64xf32>
    %121 = tpu.matmul %120, %118, %cst_30 {dimension_numbers = #tpu.dot_dimension_numbers<[1], [0], [0], [1], [0, 0, 1, 1], [], []>, precision = #tpu.contract_precision<fp32>} : vector<17x8xf32>, vector<8x64xf32>, vector<17x64xf32> -> vector<17x64xf32>
    %122 = arith.addf %117, %121 : vector<17x64xf32>
    %c208_31 = arith.constant 208 : index
    %c0_32 = arith.constant 0 : index
    %123 = vector.load %arg2[%c208_31, %c0_32] : memref<232x64xf32, #tpu.memory_space<vmem>>, vector<8x64xf32>
    %124 = vector.extract_strided_slice %89 {offsets = [6, 0, 0], sizes = [1, 17, 8], strides = [1, 1, 1]} : vector<8x17x8xf32> to vector<1x17x8xf32>
    %125 = vector.shape_cast %124 : vector<1x17x8xf32> to vector<17x8xf32>
    %cst_33 = arith.constant dense<0.000000e+00> : vector<17x64xf32>
    %126 = tpu.matmul %125, %123, %cst_33 {dimension_numbers = #tpu.dot_dimension_numbers<[1], [0], [0], [1], [0, 0, 1, 1], [], []>, precision = #tpu.contract_precision<fp32>} : vector<17x8xf32>, vector<8x64xf32>, vector<17x64xf32> -> vector<17x64xf32>
    %127 = arith.addf %122, %126 : vector<17x64xf32>
    %c216_34 = arith.constant 216 : index
    %c0_35 = arith.constant 0 : index
    %128 = vector.load %arg2[%c216_34, %c0_35] : memref<232x64xf32, #tpu.memory_space<vmem>>, vector<8x64xf32>
    %129 = vector.extract_strided_slice %89 {offsets = [7, 0, 0], sizes = [1, 17, 8], strides = [1, 1, 1]} : vector<8x17x8xf32> to vector<1x17x8xf32>
    %130 = vector.shape_cast %129 : vector<1x17x8xf32> to vector<17x8xf32>
    %cst_36 = arith.constant dense<0.000000e+00> : vector<17x64xf32>
    %131 = tpu.matmul %130, %128, %cst_36 {dimension_numbers = #tpu.dot_dimension_numbers<[1], [0], [0], [1], [0, 0, 1, 1], [], []>, precision = #tpu.contract_precision<fp32>} : vector<17x8xf32>, vector<8x64xf32>, vector<17x64xf32> -> vector<17x64xf32>
    %132 = arith.addf %127, %131 : vector<17x64xf32>
    %133 = tpu.concatenate %111, %132 in 1 : vector<17x64xf32>, vector<17x64xf32> -> vector<17x128xf32>
    %c0_37 = arith.constant 0 : index
    %c0_38 = arith.constant 0 : index
    %134 = vector.load %arg3[%c0_37, %c0_38] : memref<17x128xf32, #tpu.memory_space<vmem>>, vector<17x128xf32>
    tpu.vector_store %arg3[%c0_37, %c0_38], %133 {strides = array<i32>} : memref<17x128xf32, #tpu.memory_space<vmem>>, vector<17x128xf32>,
    return
  }
  func.func @transform_0(%arg0: i32) -> (i32, i32, i32) {
    %c0_i32 = arith.constant 0 : i32
    %c0_i32_0 = arith.constant 0 : i32
    %c0_i32_1 = arith.constant 0 : i32
    %c0_i32_2 = arith.constant 0 : i32
    return %c0_i32, %c0_i32_0, %c0_i32_1 : i32, i32, i32
  }
  func.func @transform_1(%arg0: i32) -> (i32, i32) {
    %c0_i32 = arith.constant 0 : i32
    %c0_i32_0 = arith.constant 0 : i32
    %c0_i32_1 = arith.constant 0 : i32
    return %c0_i32, %c0_i32_0 : i32, i32
  }
  func.func @transform_2(%arg0: i32) -> (i32, i32) {
    %c0_i32 = arith.constant 0 : i32
    %c0_i32_0 = arith.constant 0 : i32
    %c0_i32_1 = arith.constant 0 : i32
    return %c0_i32, %c0_i32_0 : i32, i32
  }
}

</mosaic_0001>

<llo_original>
// kernel: tpu_custom_call.1
$region0: #{tpu_custom_call.1}
  #allocation0 [shape = 'u32[]', space=smem, size = 0x4, offset = 0x4, fixed_abs, tag = 'smem constant byte address 0x4 - core index']
  #allocation1 [shape = 'u32[72,128]{1,0:T(1,128)}', space=vmem, size = 0x9000, scoped, tag = 'internal scratch']
  %s0 = inlined_call_operand.vmem [shape: f32[2,32,16], index: 0, kind: input, shape index: {}]
  %s1 = inlined_call_operand.vmem [shape: f32[232,64], index: 1, kind: input, shape index: {}]
  %s2 = inlined_call_operand.hbm [shape: f32[17,128], index: 2, kind: output, shape index: {}]
  %s3 = sld [smem:[#allocation0]]
  $region18: #{tpu_custom_call.1} parent=0
    _
  %s5 = ssub.s32 1, %s3
  %s6 = scalar_select 0, %s5, %s3
  $region1: #{tpu_custom_call.1} parent=0
    #allocation2 [shape = 'u8[12288]{0}', space=vmem, size = 0x3000, scoped, tag = 'output window, operand 0, single buffered']
    #allocation3 [shape = 's32[1]{0}', space=sflag, size = 0x4, scoped, tag = 'scoped memory for tpu_custom_call.1']
    %7 = vsyncpa [#allocation3], 0
    // Predicated region
    $region2: #{tpu_custom_call.1} parent=1 // pred_check
      _
    $region3: #{tpu_custom_call.1} parent=1 // pred_check_branch
      %9 = sbr.rel (0) target = $region5
    $region4: #{tpu_custom_call.1} parent=1 // pred_region
      _
    $region5: #{tpu_custom_call.1} parent=1 // pred_fallthru
      _
    // Predicated region
    $region6: #{tpu_custom_call.1} parent=1 // pred_check
      _
    $region7: #{tpu_custom_call.1} parent=1 // pred_check_branch
      %11 = sbr.rel (0) target = $region9
    $region8: #{tpu_custom_call.1} parent=1 // pred_region
      _
    $region9: #{tpu_custom_call.1} parent=1 // pred_fallthru
      _
    %v12 = vld [vmem:[%s1] sm:$0xff]
    %v13 = vld [vmem:[%s1 + $0x8] sm:$0xff]
    %v14 = vld [vmem:[%s1 + $0x10] sm:$0xff]
    %v15 = vld [vmem:[%s1 + $0x18] sm:$0xff]
    %v16 = vld [vmem:[%s1 + $0x20] sm:$0xff]
    %v17 = vld [vmem:[%s1 + $0x28] sm:$0xff]
    %v18 = vld [vmem:[%s1 + $0x30] sm:$0xff]
    %v19 = vld [vmem:[%s1 + $0x38] sm:$0xff]
    %v20 = vld [vmem:[%s1 + $0x40] sm:$0xff]
    %v21 = vld [vmem:[%s1 + $0x48] sm:$0xff]
    %v22 = vld [vmem:[%s1 + $0x50] sm:$0xff]
    %v23 = vld [vmem:[%s1 + $0x58] sm:$0xff]
    %v24 = vld [vmem:[%s1 + $0x60] sm:$0xff]
    %v25 = vld [vmem:[%s1 + $0x68] sm:$0xff]
    %v26 = vld [vmem:[%s1 + $0x70] sm:$0xff]
    %v27 = vld [vmem:[%s1 + $0x78] sm:$0xff]
    %v28 = vld [vmem:[%s1 + $0x80] sm:$0xff]
    %v29 = vld [vmem:[%s1 + $0x88] sm:$0xff]
    %v30 = vld [vmem:[%s1 + $0x90] sm:$0xff]
    %v31 = vld [vmem:[%s1 + $0x98] sm:$0xff]
    %v32 = vld [vmem:[%s1 + $0xa0] sm:$0xff]
    %v33 = vld [vmem:[%s1 + $0xa8] sm:$0xff]
    %v34 = vld [vmem:[%s1 + $0xb0] sm:$0xff]
    %v35 = vld [vmem:[%s1 + $0xb8] sm:$0xff]
    %v36 = vld [vmem:[%s0] sm:$0xff]
    %v37 = vld [vmem:[%s0 + $0x8] sm:$0xff]
    %v38 = vld [vmem:[%s0 + $0x10] sm:$0xff]
    %v39 = vld [vmem:[%s0 + $0x18] sm:$0xff]
    %vm40 = vcmask 130048
    %v41 = vsel %vm40, %v36, 0.0
    %42 = vadd.xlane.f32.xlu0 %v41
    %v43 = vpop.xlane.xlu0 %42
    %v44 = vsel %vm40, %v37, 0.0
    %45 = vadd.xlane.f32.xlu0 %v44
    %v46 = vpop.xlane.xlu0 %45
    %v47 = vsel %vm40, %v38, 0.0
    %48 = vadd.xlane.f32.xlu0 %v47
    %v49 = vpop.xlane.xlu0 %48
    %v50 = vsel %vm40, %v39, 0.0
    %51 = vadd.xlane.f32.xlu0 %v50
    %v52 = vpop.xlane.xlu0 %51
    %v53 = vrcp.pop 16.0
    %v54 = vmul.f32 16.0, %v53
    %v55 = vsub.f32 1.0, %v54
    %v56 = vmul.f32 %v53, %v55
    %v57 = vadd.f32 %v53, %v56
    %vm58 = vweird.f32 %v53
    %v59 = vsel %vm58, %v53, %v57
    %v60 = vmul.f32 %v43, %v59
    %v61 = vmul.f32 %v46, %v59
    %v62 = vmul.f32 %v49, %v59
    %v63 = vmul.f32 %v52, %v59
    %68 = vrot.lane.b32.xlu0 %v36, 1
    %v69 = vpop.permute.xlu0 %68
    %70 = vrot.lane.b32.xlu0 %v37, 1
    %v71 = vpop.permute.xlu0 %70
    %72 = vrot.lane.b32.xlu0 %v38, 1
    %v73 = vpop.permute.xlu0 %72
    %74 = vrot.lane.b32.xlu0 %v39, 1
    %v75 = vpop.permute.xlu0 %74
    %vm80 = vcmask 7168
    %v81 = vsel %vm80, %v60, %v69
    %v82 = vsel %vm80, %v61, %v71
    %v83 = vsel %vm80, %v62, %v73
    %v84 = vsel %vm80, %v63, %v75
    %vm85 = vcmask 261120
    %v87 = vsel %vm85, %v12, 0
    %v90 = vsel %vm85, %v13, 0
    %v93 = vsel %vm85, %v14, 0
    %v96 = vsel %vm85, %v15, 0
    %v99 = vsel %vm85, %v16, 0
    %v102 = vsel %vm85, %v17, 0
    %v105 = vsel %vm85, %v18, 0
    %v108 = vsel %vm85, %v19, 0
    %v111 = vsel %vm85, %v20, 0
    %v114 = vsel %vm85, %v21, 0
    %v117 = vsel %vm85, %v22, 0
    %v120 = vsel %vm85, %v23, 0
    %122 = vmatpush.msra.mxu0 0.0
    %123 = vmatpush.msra.mxu0 0.0
    %124 = vmatpush.msra.mxu0 0.0
    %125 = vmatpush.msra.mxu0 0.0
    %126 = vmatpush.msra.mxu0 0.0
    %127 = vmatpush.msra.mxu0 0.0
    %128 = vmatpush.msra.mxu0 0.0
    %129 = vmatpush.msra.mxu0 0.0
    %130 = vmatpush.msra.mxu0 0.0
    %131 = vmatpush.msra.mxu0 0.0
    %132 = vmatpush.msra.mxu0 0.0
    %133 = vmatpush.msra.mxu0 0.0
    %v134 = vand.u32 %v84, 4294901760
    %135 = vmatpush.msra.mxu0 %v134
    %v136 = vand.u32 %v83, 4294901760
    %137 = vmatpush.msra.mxu0 %v136
    %v138 = vand.u32 %v82, 4294901760
    %139 = vmatpush.msra.mxu0 %v138
    %v140 = vand.u32 %v81, 4294901760
    %141 = vmatpush.msra.mxu0 %v140
    %v142 = vand.u32 %v87, 4294901760
    %v143 = vsub.f32 %v87, %v142
    %v144 = vand.u32 %v143, 4294901760
    %v145 = vsub.f32 %v143, %v144
    %v146 = vand.u32 %v145, 4294901760
    %147 = vmatmul.f32.gmra.mxu0 %v146
    %v148 = vpop.f32.mrf.mxu0
    %v149 = vadd.f32 %v24, %v148
    %v150 = vand.u32 %v90, 4294901760
    %v151 = vsub.f32 %v90, %v150
    %v152 = vand.u32 %v151, 4294901760
    %v153 = vsub.f32 %v151, %v152
    %v154 = vand.u32 %v153, 4294901760
    %155 = vmatmul.f32.gmra.mxu0 %v154
    %v156 = vpop.f32.mrf.mxu0
    %v157 = vadd.f32 %v25, %v156
    %v158 = vand.u32 %v93, 4294901760
    %v159 = vsub.f32 %v93, %v158
    %v160 = vand.u32 %v159, 4294901760
    %v161 = vsub.f32 %v159, %v160
    %v162 = vand.u32 %v161, 4294901760
    %163 = vmatmul.f32.gmra.mxu0 %v162
    %v164 = vpop.f32.mrf.mxu0
    %v165 = vadd.f32 %v26, %v164
    %v166 = vand.u32 %v96, 4294901760
    %v167 = vsub.f32 %v96, %v166
    %v168 = vand.u32 %v167, 4294901760
    %v169 = vsub.f32 %v167, %v168
    %v170 = vand.u32 %v169, 4294901760
    %171 = vmatmul.f32.gmra.mxu0 %v170
    %v172 = vpop.f32.mrf.mxu0
    %v173 = vadd.f32 %v27, %v172
    %v174 = vand.u32 %v99, 4294901760
    %v175 = vsub.f32 %v99, %v174
    %v176 = vand.u32 %v175, 4294901760
    %v177 = vsub.f32 %v175, %v176
    %v178 = vand.u32 %v177, 4294901760
    %179 = vmatmul.f32.gmra.mxu0 %v178
    %v180 = vpop.f32.mrf.mxu0
    %v181 = vadd.f32 %v28, %v180
    %v182 = vand.u32 %v102, 4294901760
    %v183 = vsub.f32 %v102, %v182
    %v184 = vand.u32 %v183, 4294901760
    %v185 = vsub.f32 %v183, %v184
    %v186 = vand.u32 %v185, 4294901760
    %187 = vmatmul.f32.gmra.mxu0 %v186
    %v188 = vpop.f32.mrf.mxu0
    %v189 = vadd.f32 %v29, %v188
    %v190 = vand.u32 %v105, 4294901760
    %v191 = vsub.f32 %v105, %v190
    %v192 = vand.u32 %v191, 4294901760
    %v193 = vsub.f32 %v191, %v192
    %v194 = vand.u32 %v193, 4294901760
    %195 = vmatmul.f32.gmra.mxu0 %v194
    %v196 = vpop.f32.mrf.mxu0
    %v197 = vadd.f32 %v30, %v196
    %v198 = vand.u32 %v108, 4294901760
    %v199 = vsub.f32 %v108, %v198
    %v200 = vand.u32 %v199, 4294901760
    %v201 = vsub.f32 %v199, %v200
    %v202 = vand.u32 %v201, 4294901760
    %203 = vmatmul.f32.gmra.mxu0 %v202
    %v204 = vpop.f32.mrf.mxu0
    %v205 = vadd.f32 %v31, %v204
    %v206 = vand.u32 %v111, 4294901760
    %v207 = vsub.f32 %v111, %v206
    %v208 = vand.u32 %v207, 4294901760
    %v209 = vsub.f32 %v207, %v208
    %v210 = vand.u32 %v209, 4294901760
    %211 = vmatmul.f32.gmra.mxu0 %v210
    %v212 = vpop.f32.mrf.mxu0
    %v213 = vadd.f32 %v32, %v212
    %v214 = vand.u32 %v114, 4294901760
    %v215 = vsub.f32 %v114, %v214
    %v216 = vand.u32 %v215, 4294901760
    %v217 = vsub.f32 %v215, %v216
    %v218 = vand.u32 %v217, 4294901760
    %219 = vmatmul.f32.gmra.mxu0 %v218
    %v220 = vpop.f32.mrf.mxu0
    %v221 = vadd.f32 %v33, %v220
    %v222 = vand.u32 %v117, 4294901760
    %v223 = vsub.f32 %v117, %v222
    %v224 = vand.u32 %v223, 4294901760
    %v225 = vsub.f32 %v223, %v224
    %v226 = vand.u32 %v225, 4294901760
    %227 = vmatmul.f32.gmra.mxu0 %v226
    %v228 = vpop.f32.mrf.mxu0
    %v229 = vadd.f32 %v34, %v228
    %v230 = vand.u32 %v120, 4294901760
    %v231 = vsub.f32 %v120, %v230
    %v232 = vand.u32 %v231, 4294901760
    %v233 = vsub.f32 %v231, %v232
    %v234 = vand.u32 %v233, 4294901760
    %235 = vmatmul.f32.gmra.mxu0 %v234
    %v236 = vpop.f32.mrf.mxu0
    %v237 = vadd.f32 %v35, %v236
    %238 = vdwg.mxu0
    %239 = vmatpush.msra.mxu0 0.0
    %240 = vmatpush.msra.mxu0 0.0
    %241 = vmatpush.msra.mxu0 0.0
    %242 = vmatpush.msra.mxu0 0.0
    %243 = vmatpush.msra.mxu0 0.0
    %244 = vmatpush.msra.mxu0 0.0
    %245 = vmatpush.msra.mxu0 0.0
    %246 = vmatpush.msra.mxu0 0.0
    %247 = vmatpush.msra.mxu0 0.0
    %248 = vmatpush.msra.mxu0 0.0
    %249 = vmatpush.msra.mxu0 0.0
    %250 = vmatpush.msra.mxu0 0.0
    %v251 = vand.u32 %v84, 4294901760
    %v252 = vsub.f32 %v84, %v251
    %v253 = vand.u32 %v252, 4294901760
    %v254 = vsub.f32 %v252, %v253
    %v255 = vand.u32 %v254, 4294901760
    %256 = vmatpush.msra.mxu0 %v255
    %v257 = vand.u32 %v83, 4294901760
    %v258 = vsub.f32 %v83, %v257
    %v259 = vand.u32 %v258, 4294901760
    %v260 = vsub.f32 %v258, %v259
    %v261 = vand.u32 %v260, 4294901760
    %262 = vmatpush.msra.mxu0 %v261
    %v263 = vand.u32 %v82, 4294901760
    %v264 = vsub.f32 %v82, %v263
    %v265 = vand.u32 %v264, 4294901760
    %v266 = vsub.f32 %v264, %v265
    %v267 = vand.u32 %v266, 4294901760
    %268 = vmatpush.msra.mxu0 %v267
    %v269 = vand.u32 %v81, 4294901760
    %v270 = vsub.f32 %v81, %v269
    %v271 = vand.u32 %v270, 4294901760
    %v272 = vsub.f32 %v270, %v271
    %v273 = vand.u32 %v272, 4294901760
    %274 = vmatpush.msra.mxu0 %v273
    %v275 = vand.u32 %v87, 4294901760
    %276 = vmatmul.f32.gmra.mxu0 %v275
    %v277 = vpop.f32.mrf.mxu0
    %v278 = vadd.f32 %v149, %v277
    %v279 = vand.u32 %v90, 4294901760
    %280 = vmatmul.f32.gmra.mxu0 %v279
    %v281 = vpop.f32.mrf.mxu0
    %v282 = vadd.f32 %v157, %v281
    %v283 = vand.u32 %v93, 4294901760
    %284 = vmatmul.f32.gmra.mxu0 %v283
    %v285 = vpop.f32.mrf.mxu0
    %v286 = vadd.f32 %v165, %v285
    %v287 = vand.u32 %v96, 4294901760
    %288 = vmatmul.f32.gmra.mxu0 %v287
    %v289 = vpop.f32.mrf.mxu0
    %v290 = vadd.f32 %v173, %v289
    %v291 = vand.u32 %v99, 4294901760
    %292 = vmatmul.f32.gmra.mxu0 %v291
    %v293 = vpop.f32.mrf.mxu0
    %v294 = vadd.f32 %v181, %v293
    %v295 = vand.u32 %v102, 4294901760
    %296 = vmatmul.f32.gmra.mxu0 %v295
    %v297 = vpop.f32.mrf.mxu0
    %v298 = vadd.f32 %v189, %v297
    %v299 = vand.u32 %v105, 4294901760
    %300 = vmatmul.f32.gmra.mxu0 %v299
    %v301 = vpop.f32.mrf.mxu0
    %v302 = vadd.f32 %v197, %v301
    %v303 = vand.u32 %v108, 4294901760
    %304 = vmatmul.f32.gmra.mxu0 %v303
    %v305 = vpop.f32.mrf.mxu0
    %v306 = vadd.f32 %v205, %v305
    %v307 = vand.u32 %v111, 4294901760
    %308 = vmatmul.f32.gmra.mxu0 %v307
    %v309 = vpop.f32.mrf.mxu0
    %v310 = vadd.f32 %v213, %v309
    %v311 = vand.u32 %v114, 4294901760
    %312 = vmatmul.f32.gmra.mxu0 %v311
    %v313 = vpop.f32.mrf.mxu0
    %v314 = vadd.f32 %v221, %v313
    %v315 = vand.u32 %v117, 4294901760
    %316 = vmatmul.f32.gmra.mxu0 %v315
    %v317 = vpop.f32.mrf.mxu0
    %v318 = vadd.f32 %v229, %v317
    %v319 = vand.u32 %v120, 4294901760
    %320 = vmatmul.f32.gmra.mxu0 %v319
    %v321 = vpop.f32.mrf.mxu0
    %v322 = vadd.f32 %v237, %v321
    %323 = vdwg.mxu0
    %324 = vmatpush.msra.mxu0 0.0
    %325 = vmatpush.msra.mxu0 0.0
    %326 = vmatpush.msra.mxu0 0.0
    %327 = vmatpush.msra.mxu0 0.0
    %328 = vmatpush.msra.mxu0 0.0
    %329 = vmatpush.msra.mxu0 0.0
    %330 = vmatpush.msra.mxu0 0.0
    %331 = vmatpush.msra.mxu0 0.0
    %332 = vmatpush.msra.mxu0 0.0
    %333 = vmatpush.msra.mxu0 0.0
    %334 = vmatpush.msra.mxu0 0.0
    %335 = vmatpush.msra.mxu0 0.0
    %v336 = vand.u32 %v84, 4294901760
    %v337 = vsub.f32 %v84, %v336
    %338 = vmatpush.msra.mxu0 %v337
    %v339 = vand.u32 %v83, 4294901760
    %v340 = vsub.f32 %v83, %v339
    %341 = vmatpush.msra.mxu0 %v340
    %v342 = vand.u32 %v82, 4294901760
    %v343 = vsub.f32 %v82, %v342
    %344 = vmatpush.msra.mxu0 %v343
    %v345 = vand.u32 %v81, 4294901760
    %v346 = vsub.f32 %v81, %v345
    %347 = vmatpush.msra.mxu0 %v346
    %v348 = vand.u32 %v87, 4294901760
    %v349 = vsub.f32 %v87, %v348
    %350 = vmatmul.f32.gmra.mxu0 %v349
    %v351 = vpop.f32.mrf.mxu0
    %v352 = vadd.f32 %v278, %v351
    %v353 = vand.u32 %v90, 4294901760
    %v354 = vsub.f32 %v90, %v353
    %355 = vmatmul.f32.gmra.mxu0 %v354
    %v356 = vpop.f32.mrf.mxu0
    %v357 = vadd.f32 %v282, %v356
    %v358 = vand.u32 %v93, 4294901760
    %v359 = vsub.f32 %v93, %v358
    %360 = vmatmul.f32.gmra.mxu0 %v359
    %v361 = vpop.f32.mrf.mxu0
    %v362 = vadd.f32 %v286, %v361
    %v363 = vand.u32 %v96, 4294901760
    %v364 = vsub.f32 %v96, %v363
    %365 = vmatmul.f32.gmra.mxu0 %v364
    %v366 = vpop.f32.mrf.mxu0
    %v367 = vadd.f32 %v290, %v366
    %v368 = vand.u32 %v99, 4294901760
    %v369 = vsub.f32 %v99, %v368
    %370 = vmatmul.f32.gmra.mxu0 %v369
    %v371 = vpop.f32.mrf.mxu0
    %v372 = vadd.f32 %v294, %v371
    %v373 = vand.u32 %v102, 4294901760
    %v374 = vsub.f32 %v102, %v373
    %375 = vmatmul.f32.gmra.mxu0 %v374
    %v376 = vpop.f32.mrf.mxu0
    %v377 = vadd.f32 %v298, %v376
    %v378 = vand.u32 %v105, 4294901760
    %v379 = vsub.f32 %v105, %v378
    %380 = vmatmul.f32.gmra.mxu0 %v379
    %v381 = vpop.f32.mrf.mxu0
    %v382 = vadd.f32 %v302, %v381
    %v383 = vand.u32 %v108, 4294901760
    %v384 = vsub.f32 %v108, %v383
    %385 = vmatmul.f32.gmra.mxu0 %v384
    %v386 = vpop.f32.mrf.mxu0
    %v387 = vadd.f32 %v306, %v386
    %v388 = vand.u32 %v111, 4294901760
    %v389 = vsub.f32 %v111, %v388
    %390 = vmatmul.f32.gmra.mxu0 %v389
    %v391 = vpop.f32.mrf.mxu0
    %v392 = vadd.f32 %v310, %v391
    %v393 = vand.u32 %v114, 4294901760
    %v394 = vsub.f32 %v114, %v393
    %395 = vmatmul.f32.gmra.mxu0 %v394
    %v396 = vpop.f32.mrf.mxu0
    %v397 = vadd.f32 %v314, %v396
    %v398 = vand.u32 %v117, 4294901760
    %v399 = vsub.f32 %v117, %v398
    %400 = vmatmul.f32.gmra.mxu0 %v399
    %v401 = vpop.f32.mrf.mxu0
    %v402 = vadd.f32 %v318, %v401
    %v403 = vand.u32 %v120, 4294901760
    %v404 = vsub.f32 %v120, %v403
    %405 = vmatmul.f32.gmra.mxu0 %v404
    %v406 = vpop.f32.mrf.mxu0
    %v407 = vadd.f32 %v322, %v406
    %408 = vdwg.mxu0
    %409 = vmatpush.msra.mxu0 0.0
    %410 = vmatpush.msra.mxu0 0.0
    %411 = vmatpush.msra.mxu0 0.0
    %412 = vmatpush.msra.mxu0 0.0
    %413 = vmatpush.msra.mxu0 0.0
    %414 = vmatpush.msra.mxu0 0.0
    %415 = vmatpush.msra.mxu0 0.0
    %416 = vmatpush.msra.mxu0 0.0
    %417 = vmatpush.msra.mxu0 0.0
    %418 = vmatpush.msra.mxu0 0.0
    %419 = vmatpush.msra.mxu0 0.0
    %420 = vmatpush.msra.mxu0 0.0
    %v421 = vand.u32 %v84, 4294901760
    %422 = vmatpush.msra.mxu0 %v421
    %v423 = vand.u32 %v83, 4294901760
    %424 = vmatpush.msra.mxu0 %v423
    %v425 = vand.u32 %v82, 4294901760
    %426 = vmatpush.msra.mxu0 %v425
    %v427 = vand.u32 %v81, 4294901760
    %428 = vmatpush.msra.mxu0 %v427
    %v429 = vand.u32 %v87, 4294901760
    %v430 = vsub.f32 %v87, %v429
    %v431 = vand.u32 %v430, 4294901760
    %432 = vmatmul.f32.gmra.mxu0 %v431
    %v433 = vpop.f32.mrf.mxu0
    %v434 = vadd.f32 %v352, %v433
    %v435 = vand.u32 %v90, 4294901760
    %v436 = vsub.f32 %v90, %v435
    %v437 = vand.u32 %v436, 4294901760
    %438 = vmatmul.f32.gmra.mxu0 %v437
    %v439 = vpop.f32.mrf.mxu0
    %v440 = vadd.f32 %v357, %v439
    %v441 = vand.u32 %v93, 4294901760
    %v442 = vsub.f32 %v93, %v441
    %v443 = vand.u32 %v442, 4294901760
    %444 = vmatmul.f32.gmra.mxu0 %v443
    %v445 = vpop.f32.mrf.mxu0
    %v446 = vadd.f32 %v362, %v445
    %v447 = vand.u32 %v96, 4294901760
    %v448 = vsub.f32 %v96, %v447
    %v449 = vand.u32 %v448, 4294901760
    %450 = vmatmul.f32.gmra.mxu0 %v449
    %v451 = vpop.f32.mrf.mxu0
    %v452 = vadd.f32 %v367, %v451
    %v453 = vand.u32 %v99, 4294901760
    %v454 = vsub.f32 %v99, %v453
    %v455 = vand.u32 %v454, 4294901760
    %456 = vmatmul.f32.gmra.mxu0 %v455
    %v457 = vpop.f32.mrf.mxu0
    %v458 = vadd.f32 %v372, %v457
    %v459 = vand.u32 %v102, 4294901760
    %v460 = vsub.f32 %v102, %v459
    %v461 = vand.u32 %v460, 4294901760
    %462 = vmatmul.f32.gmra.mxu0 %v461
    %v463 = vpop.f32.mrf.mxu0
    %v464 = vadd.f32 %v377, %v463
    %v465 = vand.u32 %v105, 4294901760
    %v466 = vsub.f32 %v105, %v465
    %v467 = vand.u32 %v466, 4294901760
    %468 = vmatmul.f32.gmra.mxu0 %v467
    %v469 = vpop.f32.mrf.mxu0
    %v470 = vadd.f32 %v382, %v469
    %v471 = vand.u32 %v108, 4294901760
    %v472 = vsub.f32 %v108, %v471
    %v473 = vand.u32 %v472, 4294901760
    %474 = vmatmul.f32.gmra.mxu0 %v473
    %v475 = vpop.f32.mrf.mxu0
    %v476 = vadd.f32 %v387, %v475
    %v477 = vand.u32 %v111, 4294901760
    %v478 = vsub.f32 %v111, %v477
    %v479 = vand.u32 %v478, 4294901760
    %480 = vmatmul.f32.gmra.mxu0 %v479
    %v481 = vpop.f32.mrf.mxu0
    %v482 = vadd.f32 %v392, %v481
    %v483 = vand.u32 %v114, 4294901760
    %v484 = vsub.f32 %v114, %v483
    %v485 = vand.u32 %v484, 4294901760
    %486 = vmatmul.f32.gmra.mxu0 %v485
    %v487 = vpop.f32.mrf.mxu0
    %v488 = vadd.f32 %v397, %v487
    %v489 = vand.u32 %v117, 4294901760
    %v490 = vsub.f32 %v117, %v489
    %v491 = vand.u32 %v490, 4294901760
    %492 = vmatmul.f32.gmra.mxu0 %v491
    %v493 = vpop.f32.mrf.mxu0
    %v494 = vadd.f32 %v402, %v493
    %v495 = vand.u32 %v120, 4294901760
    %v496 = vsub.f32 %v120, %v495
    %v497 = vand.u32 %v496, 4294901760
    %498 = vmatmul.f32.gmra.mxu0 %v497
    %v499 = vpop.f32.mrf.mxu0
    %v500 = vadd.f32 %v407, %v499
    %501 = vdwg.mxu0
    %502 = vmatpush.msra.mxu0 0.0
    %503 = vmatpush.msra.mxu0 0.0
    %504 = vmatpush.msra.mxu0 0.0
    %505 = vmatpush.msra.mxu0 0.0
    %506 = vmatpush.msra.mxu0 0.0
    %507 = vmatpush.msra.mxu0 0.0
    %508 = vmatpush.msra.mxu0 0.0
    %509 = vmatpush.msra.mxu0 0.0
    %510 = vmatpush.msra.mxu0 0.0
    %511 = vmatpush.msra.mxu0 0.0
    %512 = vmatpush.msra.mxu0 0.0
    %513 = vmatpush.msra.mxu0 0.0
    %v514 = vand.u32 %v84, 4294901760
    %v515 = vsub.f32 %v84, %v514
    %v516 = vand.u32 %v515, 4294901760
    %517 = vmatpush.msra.mxu0 %v516
    %v518 = vand.u32 %v83, 4294901760
    %v519 = vsub.f32 %v83, %v518
    %v520 = vand.u32 %v519, 4294901760
    %521 = vmatpush.msra.mxu0 %v520
    %v522 = vand.u32 %v82, 4294901760
    %v523 = vsub.f32 %v82, %v522
    %v524 = vand.u32 %v523, 4294901760
    %525 = vmatpush.msra.mxu0 %v524
    %v526 = vand.u32 %v81, 4294901760
    %v527 = vsub.f32 %v81, %v526
    %v528 = vand.u32 %v527, 4294901760
    %529 = vmatpush.msra.mxu0 %v528
    %v530 = vand.u32 %v87, 4294901760
    %531 = vmatmul.f32.gmra.mxu0 %v530
    %v532 = vpop.f32.mrf.mxu0
    %v533 = vadd.f32 %v434, %v532
    %v534 = vand.u32 %v90, 4294901760
    %535 = vmatmul.f32.gmra.mxu0 %v534
    %v536 = vpop.f32.mrf.mxu0
    %v537 = vadd.f32 %v440, %v536
    %v538 = vand.u32 %v93, 4294901760
    %539 = vmatmul.f32.gmra.mxu0 %v538
    %v540 = vpop.f32.mrf.mxu0
    %v541 = vadd.f32 %v446, %v540
    %v542 = vand.u32 %v96, 4294901760
    %543 = vmatmul.f32.gmra.mxu0 %v542
    %v544 = vpop.f32.mrf.mxu0
    %v545 = vadd.f32 %v452, %v544
    %v546 = vand.u32 %v99, 4294901760
    %547 = vmatmul.f32.gmra.mxu0 %v546
    %v548 = vpop.f32.mrf.mxu0
    %v549 = vadd.f32 %v458, %v548
    %v550 = vand.u32 %v102, 4294901760
    %551 = vmatmul.f32.gmra.mxu0 %v550
    %v552 = vpop.f32.mrf.mxu0
    %v553 = vadd.f32 %v464, %v552
    %v554 = vand.u32 %v105, 4294901760
    %555 = vmatmul.f32.gmra.mxu0 %v554
    %v556 = vpop.f32.mrf.mxu0
    %v557 = vadd.f32 %v470, %v556
    %v558 = vand.u32 %v108, 4294901760
    %559 = vmatmul.f32.gmra.mxu0 %v558
    %v560 = vpop.f32.mrf.mxu0
    %v561 = vadd.f32 %v476, %v560
    %v562 = vand.u32 %v111, 4294901760
    %563 = vmatmul.f32.gmra.mxu0 %v562
    %v564 = vpop.f32.mrf.mxu0
    %v565 = vadd.f32 %v482, %v564
    %v566 = vand.u32 %v114, 4294901760
    %567 = vmatmul.f32.gmra.mxu0 %v566
    %v568 = vpop.f32.mrf.mxu0
    %v569 = vadd.f32 %v488, %v568
    %v570 = vand.u32 %v117, 4294901760
    %571 = vmatmul.f32.gmra.mxu0 %v570
    %v572 = vpop.f32.mrf.mxu0
    %v573 = vadd.f32 %v494, %v572
    %v574 = vand.u32 %v120, 4294901760
    %575 = vmatmul.f32.gmra.mxu0 %v574
    %v576 = vpop.f32.mrf.mxu0
    %v577 = vadd.f32 %v500, %v576
    %578 = vdwg.mxu0
    %579 = vmatpush.msra.mxu0 0.0
    %580 = vmatpush.msra.mxu0 0.0
    %581 = vmatpush.msra.mxu0 0.0
    %582 = vmatpush.msra.mxu0 0.0
    %583 = vmatpush.msra.mxu0 0.0
    %584 = vmatpush.msra.mxu0 0.0
    %585 = vmatpush.msra.mxu0 0.0
    %586 = vmatpush.msra.mxu0 0.0
    %587 = vmatpush.msra.mxu0 0.0
    %588 = vmatpush.msra.mxu0 0.0
    %589 = vmatpush.msra.mxu0 0.0
    %590 = vmatpush.msra.mxu0 0.0
    %v591 = vand.u32 %v84, 4294901760
    %592 = vmatpush.msra.mxu0 %v591
    %v593 = vand.u32 %v83, 4294901760
    %594 = vmatpush.msra.mxu0 %v593
    %v595 = vand.u32 %v82, 4294901760
    %596 = vmatpush.msra.mxu0 %v595
    %v597 = vand.u32 %v81, 4294901760
    %598 = vmatpush.msra.mxu0 %v597
    %v599 = vand.u32 %v87, 4294901760
    %600 = vmatmul.f32.gmra.mxu0 %v599
    %v601 = vpop.f32.mrf.mxu0
    %v602 = vadd.f32 %v533, %v601
    %v603 = vand.u32 %v90, 4294901760
    %604 = vmatmul.f32.gmra.mxu0 %v603
    %v605 = vpop.f32.mrf.mxu0
    %v606 = vadd.f32 %v537, %v605
    %v607 = vand.u32 %v93, 4294901760
    %608 = vmatmul.f32.gmra.mxu0 %v607
    %v609 = vpop.f32.mrf.mxu0
    %v610 = vadd.f32 %v541, %v609
    %v611 = vand.u32 %v96, 4294901760
    %612 = vmatmul.f32.gmra.mxu0 %v611
    %v613 = vpop.f32.mrf.mxu0
    %v614 = vadd.f32 %v545, %v613
    %v615 = vand.u32 %v99, 4294901760
    %616 = vmatmul.f32.gmra.mxu0 %v615
    %v617 = vpop.f32.mrf.mxu0
    %v618 = vadd.f32 %v549, %v617
    %v619 = vand.u32 %v102, 4294901760
    %620 = vmatmul.f32.gmra.mxu0 %v619
    %v621 = vpop.f32.mrf.mxu0
    %v622 = vadd.f32 %v553, %v621
    %v623 = vand.u32 %v105, 4294901760
    %624 = vmatmul.f32.gmra.mxu0 %v623
    %v625 = vpop.f32.mrf.mxu0
    %v626 = vadd.f32 %v557, %v625
    %v627 = vand.u32 %v108, 4294901760
    %628 = vmatmul.f32.gmra.mxu0 %v627
    %v629 = vpop.f32.mrf.mxu0
    %v630 = vadd.f32 %v561, %v629
    %v631 = vand.u32 %v111, 4294901760
    %632 = vmatmul.f32.gmra.mxu0 %v631
    %v633 = vpop.f32.mrf.mxu0
    %v634 = vadd.f32 %v565, %v633
    %v635 = vand.u32 %v114, 4294901760
    %636 = vmatmul.f32.gmra.mxu0 %v635
    %v637 = vpop.f32.mrf.mxu0
    %v638 = vadd.f32 %v569, %v637
    %v639 = vand.u32 %v117, 4294901760
    %640 = vmatmul.f32.gmra.mxu0 %v639
    %v641 = vpop.f32.mrf.mxu0
    %v642 = vadd.f32 %v573, %v641
    %v643 = vand.u32 %v120, 4294901760
    %644 = vmatmul.f32.gmra.mxu0 %v643
    %v645 = vpop.f32.mrf.mxu0
    %v646 = vadd.f32 %v577, %v645
    %647 = vdwg.mxu0
    %648 = vxpose.xlu0.b32.start [1/16] %v602, 128
    %649 = vxpose.xlu0.b32.cont [2/16] 0.0, 128
    %650 = vxpose.xlu0.b32.cont [3/16] 0.0, 128
    %651 = vxpose.xlu0.b32.cont [4/16] 0.0, 128
    %652 = vxpose.xlu0.b32.cont [5/16] 0.0, 128
    %653 = vxpose.xlu0.b32.cont [6/16] 0.0, 128
    %654 = vxpose.xlu0.b32.cont [7/16] 0.0, 128
    %655 = vxpose.xlu0.b32.cont [8/16] 0.0, 128
    %656 = vxpose.xlu0.b32.cont [9/16] 0.0, 128
    %657 = vxpose.xlu0.b32.cont [10/16] 0.0, 128
    %658 = vxpose.xlu0.b32.cont [11/16] 0.0, 128
    %659 = vxpose.xlu0.b32.cont [12/16] 0.0, 128
    %660 = vxpose.xlu0.b32.cont [13/16] 0.0, 128
    %661 = vxpose.xlu0.b32.cont [14/16] 0.0, 128
    %662 = vxpose.xlu0.b32.cont [15/16] 0.0, 128
    %663 = vxpose.xlu0.b32.end [16/16] 0.0, 128
    %v664 = vpop.trf.xlu0
    %v665 = vpop.trf.xlu0
    %v666 = vpop.trf.xlu0
    %v667 = vpop.trf.xlu0
    %v668 = vpop.trf.xlu0
    %v669 = vpop.trf.xlu0
    %v670 = vpop.trf.xlu0
    %v671 = vpop.trf.xlu0
    %v672 = vpop.trf.xlu0
    %v673 = vpop.trf.xlu0
    %v674 = vpop.trf.xlu0
    %v675 = vpop.trf.xlu0
    %v676 = vpop.trf.xlu0
    %v677 = vpop.trf.xlu0
    %v678 = vpop.trf.xlu0
    %v679 = vpop.trf.xlu0
    %680 = vxpose.xlu0.b32.start [1/16] %v606, 128
    %681 = vxpose.xlu0.b32.cont [2/16] 0.0, 128
    %682 = vxpose.xlu0.b32.cont [3/16] 0.0, 128
    %683 = vxpose.xlu0.b32.cont [4/16] 0.0, 128
    %684 = vxpose.xlu0.b32.cont [5/16] 0.0, 128
    %685 = vxpose.xlu0.b32.cont [6/16] 0.0, 128
    %686 = vxpose.xlu0.b32.cont [7/16] 0.0, 128
    %687 = vxpose.xlu0.b32.cont [8/16] 0.0, 128
    %688 = vxpose.xlu0.b32.cont [9/16] 0.0, 128
    %689 = vxpose.xlu0.b32.cont [10/16] 0.0, 128
    %690 = vxpose.xlu0.b32.cont [11/16] 0.0, 128
    %691 = vxpose.xlu0.b32.cont [12/16] 0.0, 128
    %692 = vxpose.xlu0.b32.cont [13/16] 0.0, 128
    %693 = vxpose.xlu0.b32.cont [14/16] 0.0, 128
    %694 = vxpose.xlu0.b32.cont [15/16] 0.0, 128
    %695 = vxpose.xlu0.b32.end [16/16] 0.0, 128
    %v696 = vpop.trf.xlu0
    %v697 = vpop.trf.xlu0
    %v698 = vpop.trf.xlu0
    %v699 = vpop.trf.xlu0
    %v700 = vpop.trf.xlu0
    %v701 = vpop.trf.xlu0
    %v702 = vpop.trf.xlu0
    %v703 = vpop.trf.xlu0
    %v704 = vpop.trf.xlu0
    %v705 = vpop.trf.xlu0
    %v706 = vpop.trf.xlu0
    %v707 = vpop.trf.xlu0
    %v708 = vpop.trf.xlu0
    %v709 = vpop.trf.xlu0
    %v710 = vpop.trf.xlu0
    %v711 = vpop.trf.xlu0
    %712 = vxpose.xlu0.b32.start [1/16] %v610, 128
    %713 = vxpose.xlu0.b32.cont [2/16] 0.0, 128
    %714 = vxpose.xlu0.b32.cont [3/16] 0.0, 128
    %715 = vxpose.xlu0.b32.cont [4/16] 0.0, 128
    %716 = vxpose.xlu0.b32.cont [5/16] 0.0, 128
    %717 = vxpose.xlu0.b32.cont [6/16] 0.0, 128
    %718 = vxpose.xlu0.b32.cont [7/16] 0.0, 128
    %719 = vxpose.xlu0.b32.cont [8/16] 0.0, 128
    %720 = vxpose.xlu0.b32.cont [9/16] 0.0, 128
    %721 = vxpose.xlu0.b32.cont [10/16] 0.0, 128
    %722 = vxpose.xlu0.b32.cont [11/16] 0.0, 128
    %723 = vxpose.xlu0.b32.cont [12/16] 0.0, 128
    %724 = vxpose.xlu0.b32.cont [13/16] 0.0, 128
    %725 = vxpose.xlu0.b32.cont [14/16] 0.0, 128
    %726 = vxpose.xlu0.b32.cont [15/16] 0.0, 128
    %727 = vxpose.xlu0.b32.end [16/16] 0.0, 128
    %v728 = vpop.trf.xlu0
    %v729 = vpop.trf.xlu0
    %v730 = vpop.trf.xlu0
    %v731 = vpop.trf.xlu0
    %v732 = vpop.trf.xlu0
    %v733 = vpop.trf.xlu0
    %v734 = vpop.trf.xlu0
    %v735 = vpop.trf.xlu0
    %v736 = vpop.trf.xlu0
    %v737 = vpop.trf.xlu0
    %v738 = vpop.trf.xlu0
    %v739 = vpop.trf.xlu0
    %v740 = vpop.trf.xlu0
    %v741 = vpop.trf.xlu0
    %v742 = vpop.trf.xlu0
    %v743 = vpop.trf.xlu0
    %744 = vxpose.xlu0.b32.start [1/16] %v614, 128
    %745 = vxpose.xlu0.b32.cont [2/16] 0.0, 128
    %746 = vxpose.xlu0.b32.cont [3/16] 0.0, 128
    %747 = vxpose.xlu0.b32.cont [4/16] 0.0, 128
    %748 = vxpose.xlu0.b32.cont [5/16] 0.0, 128
    %749 = vxpose.xlu0.b32.cont [6/16] 0.0, 128
    %750 = vxpose.xlu0.b32.cont [7/16] 0.0, 128
    %751 = vxpose.xlu0.b32.cont [8/16] 0.0, 128
    %752 = vxpose.xlu0.b32.cont [9/16] 0.0, 128
    %753 = vxpose.xlu0.b32.cont [10/16] 0.0, 128
    %754 = vxpose.xlu0.b32.cont [11/16] 0.0, 128
    %755 = vxpose.xlu0.b32.cont [12/16] 0.0, 128
    %756 = vxpose.xlu0.b32.cont [13/16] 0.0, 128
    %757 = vxpose.xlu0.b32.cont [14/16] 0.0, 128
    %758 = vxpose.xlu0.b32.cont [15/16] 0.0, 128
    %759 = vxpose.xlu0.b32.end [16/16] 0.0, 128
    %v760 = vpop.trf.xlu0
    %v761 = vpop.trf.xlu0
    %v762 = vpop.trf.xlu0
    %v763 = vpop.trf.xlu0
    %v764 = vpop.trf.xlu0
    %v765 = vpop.trf.xlu0
    %v766 = vpop.trf.xlu0
    %v767 = vpop.trf.xlu0
    %v768 = vpop.trf.xlu0
    %v769 = vpop.trf.xlu0
    %v770 = vpop.trf.xlu0
    %v771 = vpop.trf.xlu0
    %v772 = vpop.trf.xlu0
    %v773 = vpop.trf.xlu0
    %v774 = vpop.trf.xlu0
    %v775 = vpop.trf.xlu0
    %s776 = scalar_lea.vmem %s0, 32
    %v777 = vld [vmem:[%s776] sm:$0xff]
    %v778 = vld [vmem:[%s776 + $0x8] sm:$0xff]
    %v779 = vld [vmem:[%s776 + $0x10] sm:$0xff]
    %v780 = vld [vmem:[%s776 + $0x18] sm:$0xff]
    %v781 = vsel %vm40, %v777, 0.0
    %782 = vadd.xlane.f32.xlu0 %v781
    %v783 = vpop.xlane.xlu0 %782
    %v784 = vsel %vm40, %v778, 0.0
    %785 = vadd.xlane.f32.xlu0 %v784
    %v786 = vpop.xlane.xlu0 %785
    %v787 = vsel %vm40, %v779, 0.0
    %788 = vadd.xlane.f32.xlu0 %v787
    %v789 = vpop.xlane.xlu0 %788
    %v790 = vsel %vm40, %v780, 0.0
    %791 = vadd.xlane.f32.xlu0 %v790
    %v792 = vpop.xlane.xlu0 %791
    %v793 = vmul.f32 %v783, %v59
    %v794 = vmul.f32 %v786, %v59
    %v795 = vmul.f32 %v789, %v59
    %v796 = vmul.f32 %v792, %v59
    %801 = vrot.lane.b32.xlu0 %v777, 1
    %v802 = vpop.permute.xlu0 %801
    %803 = vrot.lane.b32.xlu0 %v778, 1
    %v804 = vpop.permute.xlu0 %803
    %805 = vrot.lane.b32.xlu0 %v779, 1
    %v806 = vpop.permute.xlu0 %805
    %807 = vrot.lane.b32.xlu0 %v780, 1
    %v808 = vpop.permute.xlu0 %807
    %v813 = vsel %vm80, %v793, %v802
    %v814 = vsel %vm80, %v794, %v804
    %v815 = vsel %vm80, %v795, %v806
    %v816 = vsel %vm80, %v796, %v808
    %817 = vmatpush.msra.mxu0 0.0
    %818 = vmatpush.msra.mxu0 0.0
    %819 = vmatpush.msra.mxu0 0.0
    %820 = vmatpush.msra.mxu0 0.0
    %821 = vmatpush.msra.mxu0 0.0
    %822 = vmatpush.msra.mxu0 0.0
    %823 = vmatpush.msra.mxu0 0.0
    %824 = vmatpush.msra.mxu0 0.0
    %825 = vmatpush.msra.mxu0 0.0
    %826 = vmatpush.msra.mxu0 0.0
    %827 = vmatpush.msra.mxu0 0.0
    %828 = vmatpush.msra.mxu0 0.0
    %v829 = vand.u32 %v816, 4294901760
    %830 = vmatpush.msra.mxu0 %v829
    %v831 = vand.u32 %v815, 4294901760
    %832 = vmatpush.msra.mxu0 %v831
    %v833 = vand.u32 %v814, 4294901760
    %834 = vmatpush.msra.mxu0 %v833
    %v835 = vand.u32 %v813, 4294901760
    %836 = vmatpush.msra.mxu0 %v835
    %v837 = vand.u32 %v87, 4294901760
    %v838 = vsub.f32 %v87, %v837
    %v839 = vand.u32 %v838, 4294901760
    %v840 = vsub.f32 %v838, %v839
    %v841 = vand.u32 %v840, 4294901760
    %842 = vmatmul.f32.gmra.mxu0 %v841
    %v843 = vpop.f32.mrf.mxu0
    %v844 = vadd.f32 %v24, %v843
    %v845 = vand.u32 %v90, 4294901760
    %v846 = vsub.f32 %v90, %v845
    %v847 = vand.u32 %v846, 4294901760
    %v848 = vsub.f32 %v846, %v847
    %v849 = vand.u32 %v848, 4294901760
    %850 = vmatmul.f32.gmra.mxu0 %v849
    %v851 = vpop.f32.mrf.mxu0
    %v852 = vadd.f32 %v25, %v851
    %v853 = vand.u32 %v93, 4294901760
    %v854 = vsub.f32 %v93, %v853
    %v855 = vand.u32 %v854, 4294901760
    %v856 = vsub.f32 %v854, %v855
    %v857 = vand.u32 %v856, 4294901760
    %858 = vmatmul.f32.gmra.mxu0 %v857
    %v859 = vpop.f32.mrf.mxu0
    %v860 = vadd.f32 %v26, %v859
    %v861 = vand.u32 %v96, 4294901760
    %v862 = vsub.f32 %v96, %v861
    %v863 = vand.u32 %v862, 4294901760
    %v864 = vsub.f32 %v862, %v863
    %v865 = vand.u32 %v864, 4294901760
    %866 = vmatmul.f32.gmra.mxu0 %v865
    %v867 = vpop.f32.mrf.mxu0
    %v868 = vadd.f32 %v27, %v867
    %v869 = vand.u32 %v99, 4294901760
    %v870 = vsub.f32 %v99, %v869
    %v871 = vand.u32 %v870, 4294901760
    %v872 = vsub.f32 %v870, %v871
    %v873 = vand.u32 %v872, 4294901760
    %874 = vmatmul.f32.gmra.mxu0 %v873
    %v875 = vpop.f32.mrf.mxu0
    %v876 = vadd.f32 %v28, %v875
    %v877 = vand.u32 %v102, 4294901760
    %v878 = vsub.f32 %v102, %v877
    %v879 = vand.u32 %v878, 4294901760
    %v880 = vsub.f32 %v878, %v879
    %v881 = vand.u32 %v880, 4294901760
    %882 = vmatmul.f32.gmra.mxu0 %v881
    %v883 = vpop.f32.mrf.mxu0
    %v884 = vadd.f32 %v29, %v883
    %v885 = vand.u32 %v105, 4294901760
    %v886 = vsub.f32 %v105, %v885
    %v887 = vand.u32 %v886, 4294901760
    %v888 = vsub.f32 %v886, %v887
    %v889 = vand.u32 %v888, 4294901760
    %890 = vmatmul.f32.gmra.mxu0 %v889
    %v891 = vpop.f32.mrf.mxu0
    %v892 = vadd.f32 %v30, %v891
    %v893 = vand.u32 %v108, 4294901760
    %v894 = vsub.f32 %v108, %v893
    %v895 = vand.u32 %v894, 4294901760
    %v896 = vsub.f32 %v894, %v895
    %v897 = vand.u32 %v896, 4294901760
    %898 = vmatmul.f32.gmra.mxu0 %v897
    %v899 = vpop.f32.mrf.mxu0
    %v900 = vadd.f32 %v31, %v899
    %v901 = vand.u32 %v111, 4294901760
    %v902 = vsub.f32 %v111, %v901
    %v903 = vand.u32 %v902, 4294901760
    %v904 = vsub.f32 %v902, %v903
    %v905 = vand.u32 %v904, 4294901760
    %906 = vmatmul.f32.gmra.mxu0 %v905
    %v907 = vpop.f32.mrf.mxu0
    %v908 = vadd.f32 %v32, %v907
    %v909 = vand.u32 %v114, 4294901760
    %v910 = vsub.f32 %v114, %v909
    %v911 = vand.u32 %v910, 4294901760
    %v912 = vsub.f32 %v910, %v911
    %v913 = vand.u32 %v912, 4294901760
    %914 = vmatmul.f32.gmra.mxu0 %v913
    %v915 = vpop.f32.mrf.mxu0
    %v916 = vadd.f32 %v33, %v915
    %v917 = vand.u32 %v117, 4294901760
    %v918 = vsub.f32 %v117, %v917
    %v919 = vand.u32 %v918, 4294901760
    %v920 = vsub.f32 %v918, %v919
    %v921 = vand.u32 %v920, 4294901760
    %922 = vmatmul.f32.gmra.mxu0 %v921
    %v923 = vpop.f32.mrf.mxu0
    %v924 = vadd.f32 %v34, %v923
    %v925 = vand.u32 %v120, 4294901760
    %v926 = vsub.f32 %v120, %v925
    %v927 = vand.u32 %v926, 4294901760
    %v928 = vsub.f32 %v926, %v927
    %v929 = vand.u32 %v928, 4294901760
    %930 = vmatmul.f32.gmra.mxu0 %v929
    %v931 = vpop.f32.mrf.mxu0
    %v932 = vadd.f32 %v35, %v931
    %933 = vdwg.mxu0
    %934 = vmatpush.msra.mxu0 0.0
    %935 = vmatpush.msra.mxu0 0.0
    %936 = vmatpush.msra.mxu0 0.0
    %937 = vmatpush.msra.mxu0 0.0
    %938 = vmatpush.msra.mxu0 0.0
    %939 = vmatpush.msra.mxu0 0.0
    %940 = vmatpush.msra.mxu0 0.0
    %941 = vmatpush.msra.mxu0 0.0
    %942 = vmatpush.msra.mxu0 0.0
    %943 = vmatpush.msra.mxu0 0.0
    %944 = vmatpush.msra.mxu0 0.0
    %945 = vmatpush.msra.mxu0 0.0
    %v946 = vand.u32 %v816, 4294901760
    %v947 = vsub.f32 %v816, %v946
    %v948 = vand.u32 %v947, 4294901760
    %v949 = vsub.f32 %v947, %v948
    %v950 = vand.u32 %v949, 4294901760
    %951 = vmatpush.msra.mxu0 %v950
    %v952 = vand.u32 %v815, 4294901760
    %v953 = vsub.f32 %v815, %v952
    %v954 = vand.u32 %v953, 4294901760
    %v955 = vsub.f32 %v953, %v954
    %v956 = vand.u32 %v955, 4294901760
    %957 = vmatpush.msra.mxu0 %v956
    %v958 = vand.u32 %v814, 4294901760
    %v959 = vsub.f32 %v814, %v958
    %v960 = vand.u32 %v959, 4294901760
    %v961 = vsub.f32 %v959, %v960
    %v962 = vand.u32 %v961, 4294901760
    %963 = vmatpush.msra.mxu0 %v962
    %v964 = vand.u32 %v813, 4294901760
    %v965 = vsub.f32 %v813, %v964
    %v966 = vand.u32 %v965, 4294901760
    %v967 = vsub.f32 %v965, %v966
    %v968 = vand.u32 %v967, 4294901760
    %969 = vmatpush.msra.mxu0 %v968
    %v970 = vand.u32 %v87, 4294901760
    %971 = vmatmul.f32.gmra.mxu0 %v970
    %v972 = vpop.f32.mrf.mxu0
    %v973 = vadd.f32 %v844, %v972
    %v974 = vand.u32 %v90, 4294901760
    %975 = vmatmul.f32.gmra.mxu0 %v974
    %v976 = vpop.f32.mrf.mxu0
    %v977 = vadd.f32 %v852, %v976
    %v978 = vand.u32 %v93, 4294901760
    %979 = vmatmul.f32.gmra.mxu0 %v978
    %v980 = vpop.f32.mrf.mxu0
    %v981 = vadd.f32 %v860, %v980
    %v982 = vand.u32 %v96, 4294901760
    %983 = vmatmul.f32.gmra.mxu0 %v982
    %v984 = vpop.f32.mrf.mxu0
    %v985 = vadd.f32 %v868, %v984
    %v986 = vand.u32 %v99, 4294901760
    %987 = vmatmul.f32.gmra.mxu0 %v986
    %v988 = vpop.f32.mrf.mxu0
    %v989 = vadd.f32 %v876, %v988
    %v990 = vand.u32 %v102, 4294901760
    %991 = vmatmul.f32.gmra.mxu0 %v990
    %v992 = vpop.f32.mrf.mxu0
    %v993 = vadd.f32 %v884, %v992
    %v994 = vand.u32 %v105, 4294901760
    %995 = vmatmul.f32.gmra.mxu0 %v994
    %v996 = vpop.f32.mrf.mxu0
    %v997 = vadd.f32 %v892, %v996
    %v998 = vand.u32 %v108, 4294901760
    %999 = vmatmul.f32.gmra.mxu0 %v998
    %v1000 = vpop.f32.mrf.mxu0
    %v1001 = vadd.f32 %v900, %v1000
    %v1002 = vand.u32 %v111, 4294901760
    %1003 = vmatmul.f32.gmra.mxu0 %v1002
    %v1004 = vpop.f32.mrf.mxu0
    %v1005 = vadd.f32 %v908, %v1004
    %v1006 = vand.u32 %v114, 4294901760
    %1007 = vmatmul.f32.gmra.mxu0 %v1006
    %v1008 = vpop.f32.mrf.mxu0
    %v1009 = vadd.f32 %v916, %v1008
    %v1010 = vand.u32 %v117, 4294901760
    %1011 = vmatmul.f32.gmra.mxu0 %v1010
    %v1012 = vpop.f32.mrf.mxu0
    %v1013 = vadd.f32 %v924, %v1012
    %v1014 = vand.u32 %v120, 4294901760
    %1015 = vmatmul.f32.gmra.mxu0 %v1014
    %v1016 = vpop.f32.mrf.mxu0
    %v1017 = vadd.f32 %v932, %v1016
    %1018 = vdwg.mxu0
    %1019 = vmatpush.msra.mxu0 0.0
    %1020 = vmatpush.msra.mxu0 0.0
    %1021 = vmatpush.msra.mxu0 0.0
    %1022 = vmatpush.msra.mxu0 0.0
    %1023 = vmatpush.msra.mxu0 0.0
    %1024 = vmatpush.msra.mxu0 0.0
    %1025 = vmatpush.msra.mxu0 0.0
    %1026 = vmatpush.msra.mxu0 0.0
    %1027 = vmatpush.msra.mxu0 0.0
    %1028 = vmatpush.msra.mxu0 0.0
    %1029 = vmatpush.msra.mxu0 0.0
    %1030 = vmatpush.msra.mxu0 0.0
    %v1031 = vand.u32 %v816, 4294901760
    %v1032 = vsub.f32 %v816, %v1031
    %1033 = vmatpush.msra.mxu0 %v1032
    %v1034 = vand.u32 %v815, 4294901760
    %v1035 = vsub.f32 %v815, %v1034
    %1036 = vmatpush.msra.mxu0 %v1035
    %v1037 = vand.u32 %v814, 4294901760
    %v1038 = vsub.f32 %v814, %v1037
    %1039 = vmatpush.msra.mxu0 %v1038
    %v1040 = vand.u32 %v813, 4294901760
    %v1041 = vsub.f32 %v813, %v1040
    %1042 = vmatpush.msra.mxu0 %v1041
    %v1043 = vand.u32 %v87, 4294901760
    %v1044 = vsub.f32 %v87, %v1043
    %1045 = vmatmul.f32.gmra.mxu0 %v1044
    %v1046 = vpop.f32.mrf.mxu0
    %v1047 = vadd.f32 %v973, %v1046
    %v1048 = vand.u32 %v90, 4294901760
    %v1049 = vsub.f32 %v90, %v1048
    %1050 = vmatmul.f32.gmra.mxu0 %v1049
    %v1051 = vpop.f32.mrf.mxu0
    %v1052 = vadd.f32 %v977, %v1051
    %v1053 = vand.u32 %v93, 4294901760
    %v1054 = vsub.f32 %v93, %v1053
    %1055 = vmatmul.f32.gmra.mxu0 %v1054
    %v1056 = vpop.f32.mrf.mxu0
    %v1057 = vadd.f32 %v981, %v1056
    %v1058 = vand.u32 %v96, 4294901760
    %v1059 = vsub.f32 %v96, %v1058
    %1060 = vmatmul.f32.gmra.mxu0 %v1059
    %v1061 = vpop.f32.mrf.mxu0
    %v1062 = vadd.f32 %v985, %v1061
    %v1063 = vand.u32 %v99, 4294901760
    %v1064 = vsub.f32 %v99, %v1063
    %1065 = vmatmul.f32.gmra.mxu0 %v1064
    %v1066 = vpop.f32.mrf.mxu0
    %v1067 = vadd.f32 %v989, %v1066
    %v1068 = vand.u32 %v102, 4294901760
    %v1069 = vsub.f32 %v102, %v1068
    %1070 = vmatmul.f32.gmra.mxu0 %v1069
    %v1071 = vpop.f32.mrf.mxu0
    %v1072 = vadd.f32 %v993, %v1071
    %v1073 = vand.u32 %v105, 4294901760
    %v1074 = vsub.f32 %v105, %v1073
    %1075 = vmatmul.f32.gmra.mxu0 %v1074
    %v1076 = vpop.f32.mrf.mxu0
    %v1077 = vadd.f32 %v997, %v1076
    %v1078 = vand.u32 %v108, 4294901760
    %v1079 = vsub.f32 %v108, %v1078
    %1080 = vmatmul.f32.gmra.mxu0 %v1079
    %v1081 = vpop.f32.mrf.mxu0
    %v1082 = vadd.f32 %v1001, %v1081
    %v1083 = vand.u32 %v111, 4294901760
    %v1084 = vsub.f32 %v111, %v1083
    %1085 = vmatmul.f32.gmra.mxu0 %v1084
    %v1086 = vpop.f32.mrf.mxu0
    %v1087 = vadd.f32 %v1005, %v1086
    %v1088 = vand.u32 %v114, 4294901760
    %v1089 = vsub.f32 %v114, %v1088
    %1090 = vmatmul.f32.gmra.mxu0 %v1089
    %v1091 = vpop.f32.mrf.mxu0
    %v1092 = vadd.f32 %v1009, %v1091
    %v1093 = vand.u32 %v117, 4294901760
    %v1094 = vsub.f32 %v117, %v1093
    %1095 = vmatmul.f32.gmra.mxu0 %v1094
    %v1096 = vpop.f32.mrf.mxu0
    %v1097 = vadd.f32 %v1013, %v1096
    %v1098 = vand.u32 %v120, 4294901760
    %v1099 = vsub.f32 %v120, %v1098
    %1100 = vmatmul.f32.gmra.mxu0 %v1099
    %v1101 = vpop.f32.mrf.mxu0
    %v1102 = vadd.f32 %v1017, %v1101
    %1103 = vdwg.mxu0
    %1104 = vmatpush.msra.mxu0 0.0
    %1105 = vmatpush.msra.mxu0 0.0
    %1106 = vmatpush.msra.mxu0 0.0
    %1107 = vmatpush.msra.mxu0 0.0
    %1108 = vmatpush.msra.mxu0 0.0
    %1109 = vmatpush.msra.mxu0 0.0
    %1110 = vmatpush.msra.mxu0 0.0
    %1111 = vmatpush.msra.mxu0 0.0
    %1112 = vmatpush.msra.mxu0 0.0
    %1113 = vmatpush.msra.mxu0 0.0
    %1114 = vmatpush.msra.mxu0 0.0
    %1115 = vmatpush.msra.mxu0 0.0
    %v1116 = vand.u32 %v816, 4294901760
    %1117 = vmatpush.msra.mxu0 %v1116
    %v1118 = vand.u32 %v815, 4294901760
    %1119 = vmatpush.msra.mxu0 %v1118
    %v1120 = vand.u32 %v814, 4294901760
    %1121 = vmatpush.msra.mxu0 %v1120
    %v1122 = vand.u32 %v813, 4294901760
    %1123 = vmatpush.msra.mxu0 %v1122
    %v1124 = vand.u32 %v87, 4294901760
    %v1125 = vsub.f32 %v87, %v1124
    %v1126 = vand.u32 %v1125, 4294901760
    %1127 = vmatmul.f32.gmra.mxu0 %v1126
    %v1128 = vpop.f32.mrf.mxu0
    %v1129 = vadd.f32 %v1047, %v1128
    %v1130 = vand.u32 %v90, 4294901760
    %v1131 = vsub.f32 %v90, %v1130
    %v1132 = vand.u32 %v1131, 4294901760
    %1133 = vmatmul.f32.gmra.mxu0 %v1132
    %v1134 = vpop.f32.mrf.mxu0
    %v1135 = vadd.f32 %v1052, %v1134
    %v1136 = vand.u32 %v93, 4294901760
    %v1137 = vsub.f32 %v93, %v1136
    %v1138 = vand.u32 %v1137, 4294901760
    %1139 = vmatmul.f32.gmra.mxu0 %v1138
    %v1140 = vpop.f32.mrf.mxu0
    %v1141 = vadd.f32 %v1057, %v1140
    %v1142 = vand.u32 %v96, 4294901760
    %v1143 = vsub.f32 %v96, %v1142
    %v1144 = vand.u32 %v1143, 4294901760
    %1145 = vmatmul.f32.gmra.mxu0 %v1144
    %v1146 = vpop.f32.mrf.mxu0
    %v1147 = vadd.f32 %v1062, %v1146
    %v1148 = vand.u32 %v99, 4294901760
    %v1149 = vsub.f32 %v99, %v1148
    %v1150 = vand.u32 %v1149, 4294901760
    %1151 = vmatmul.f32.gmra.mxu0 %v1150
    %v1152 = vpop.f32.mrf.mxu0
    %v1153 = vadd.f32 %v1067, %v1152
    %v1154 = vand.u32 %v102, 4294901760
    %v1155 = vsub.f32 %v102, %v1154
    %v1156 = vand.u32 %v1155, 4294901760
    %1157 = vmatmul.f32.gmra.mxu0 %v1156
    %v1158 = vpop.f32.mrf.mxu0
    %v1159 = vadd.f32 %v1072, %v1158
    %v1160 = vand.u32 %v105, 4294901760
    %v1161 = vsub.f32 %v105, %v1160
    %v1162 = vand.u32 %v1161, 4294901760
    %1163 = vmatmul.f32.gmra.mxu0 %v1162
    %v1164 = vpop.f32.mrf.mxu0
    %v1165 = vadd.f32 %v1077, %v1164
    %v1166 = vand.u32 %v108, 4294901760
    %v1167 = vsub.f32 %v108, %v1166
    %v1168 = vand.u32 %v1167, 4294901760
    %1169 = vmatmul.f32.gmra.mxu0 %v1168
    %v1170 = vpop.f32.mrf.mxu0
    %v1171 = vadd.f32 %v1082, %v1170
    %v1172 = vand.u32 %v111, 4294901760
    %v1173 = vsub.f32 %v111, %v1172
    %v1174 = vand.u32 %v1173, 4294901760
    %1175 = vmatmul.f32.gmra.mxu0 %v1174
    %v1176 = vpop.f32.mrf.mxu0
    %v1177 = vadd.f32 %v1087, %v1176
    %v1178 = vand.u32 %v114, 4294901760
    %v1179 = vsub.f32 %v114, %v1178
    %v1180 = vand.u32 %v1179, 4294901760
    %1181 = vmatmul.f32.gmra.mxu0 %v1180
    %v1182 = vpop.f32.mrf.mxu0
    %v1183 = vadd.f32 %v1092, %v1182
    %v1184 = vand.u32 %v117, 4294901760
    %v1185 = vsub.f32 %v117, %v1184
    %v1186 = vand.u32 %v1185, 4294901760
    %1187 = vmatmul.f32.gmra.mxu0 %v1186
    %v1188 = vpop.f32.mrf.mxu0
    %v1189 = vadd.f32 %v1097, %v1188
    %v1190 = vand.u32 %v120, 4294901760
    %v1191 = vsub.f32 %v120, %v1190
    %v1192 = vand.u32 %v1191, 4294901760
    %1193 = vmatmul.f32.gmra.mxu0 %v1192
    %v1194 = vpop.f32.mrf.mxu0
    %v1195 = vadd.f32 %v1102, %v1194
    %1196 = vdwg.mxu0
    %1197 = vmatpush.msra.mxu0 0.0
    %1198 = vmatpush.msra.mxu0 0.0
    %1199 = vmatpush.msra.mxu0 0.0
    %1200 = vmatpush.msra.mxu0 0.0
    %1201 = vmatpush.msra.mxu0 0.0
    %1202 = vmatpush.msra.mxu0 0.0
    %1203 = vmatpush.msra.mxu0 0.0
    %1204 = vmatpush.msra.mxu0 0.0
    %1205 = vmatpush.msra.mxu0 0.0
    %1206 = vmatpush.msra.mxu0 0.0
    %1207 = vmatpush.msra.mxu0 0.0
    %1208 = vmatpush.msra.mxu0 0.0
    %v1209 = vand.u32 %v816, 4294901760
    %v1210 = vsub.f32 %v816, %v1209
    %v1211 = vand.u32 %v1210, 4294901760
    %1212 = vmatpush.msra.mxu0 %v1211
    %v1213 = vand.u32 %v815, 4294901760
    %v1214 = vsub.f32 %v815, %v1213
    %v1215 = vand.u32 %v1214, 4294901760
    %1216 = vmatpush.msra.mxu0 %v1215
    %v1217 = vand.u32 %v814, 4294901760
    %v1218 = vsub.f32 %v814, %v1217
    %v1219 = vand.u32 %v1218, 4294901760
    %1220 = vmatpush.msra.mxu0 %v1219
    %v1221 = vand.u32 %v813, 4294901760
    %v1222 = vsub.f32 %v813, %v1221
    %v1223 = vand.u32 %v1222, 4294901760
    %1224 = vmatpush.msra.mxu0 %v1223
    %v1225 = vand.u32 %v87, 4294901760
    %1226 = vmatmul.f32.gmra.mxu0 %v1225
    %v1227 = vpop.f32.mrf.mxu0
    %v1228 = vadd.f32 %v1129, %v1227
    %v1229 = vand.u32 %v90, 4294901760
    %1230 = vmatmul.f32.gmra.mxu0 %v1229
    %v1231 = vpop.f32.mrf.mxu0
    %v1232 = vadd.f32 %v1135, %v1231
    %v1233 = vand.u32 %v93, 4294901760
    %1234 = vmatmul.f32.gmra.mxu0 %v1233
    %v1235 = vpop.f32.mrf.mxu0
    %v1236 = vadd.f32 %v1141, %v1235
    %v1237 = vand.u32 %v96, 4294901760
    %1238 = vmatmul.f32.gmra.mxu0 %v1237
    %v1239 = vpop.f32.mrf.mxu0
    %v1240 = vadd.f32 %v1147, %v1239
    %v1241 = vand.u32 %v99, 4294901760
    %1242 = vmatmul.f32.gmra.mxu0 %v1241
    %v1243 = vpop.f32.mrf.mxu0
    %v1244 = vadd.f32 %v1153, %v1243
    %v1245 = vand.u32 %v102, 4294901760
    %1246 = vmatmul.f32.gmra.mxu0 %v1245
    %v1247 = vpop.f32.mrf.mxu0
    %v1248 = vadd.f32 %v1159, %v1247
    %v1249 = vand.u32 %v105, 4294901760
    %1250 = vmatmul.f32.gmra.mxu0 %v1249
    %v1251 = vpop.f32.mrf.mxu0
    %v1252 = vadd.f32 %v1165, %v1251
    %v1253 = vand.u32 %v108, 4294901760
    %1254 = vmatmul.f32.gmra.mxu0 %v1253
    %v1255 = vpop.f32.mrf.mxu0
    %v1256 = vadd.f32 %v1171, %v1255
    %v1257 = vand.u32 %v111, 4294901760
    %1258 = vmatmul.f32.gmra.mxu0 %v1257
    %v1259 = vpop.f32.mrf.mxu0
    %v1260 = vadd.f32 %v1177, %v1259
    %v1261 = vand.u32 %v114, 4294901760
    %1262 = vmatmul.f32.gmra.mxu0 %v1261
    %v1263 = vpop.f32.mrf.mxu0
    %v1264 = vadd.f32 %v1183, %v1263
    %v1265 = vand.u32 %v117, 4294901760
    %1266 = vmatmul.f32.gmra.mxu0 %v1265
    %v1267 = vpop.f32.mrf.mxu0
    %v1268 = vadd.f32 %v1189, %v1267
    %v1269 = vand.u32 %v120, 4294901760
    %1270 = vmatmul.f32.gmra.mxu0 %v1269
    %v1271 = vpop.f32.mrf.mxu0
    %v1272 = vadd.f32 %v1195, %v1271
    %1273 = vdwg.mxu0
    %1274 = vmatpush.msra.mxu0 0.0
    %1275 = vmatpush.msra.mxu0 0.0
    %1276 = vmatpush.msra.mxu0 0.0
    %1277 = vmatpush.msra.mxu0 0.0
    %1278 = vmatpush.msra.mxu0 0.0
    %1279 = vmatpush.msra.mxu0 0.0
    %1280 = vmatpush.msra.mxu0 0.0
    %1281 = vmatpush.msra.mxu0 0.0
    %1282 = vmatpush.msra.mxu0 0.0
    %1283 = vmatpush.msra.mxu0 0.0
    %1284 = vmatpush.msra.mxu0 0.0
    %1285 = vmatpush.msra.mxu0 0.0
    %v1286 = vand.u32 %v816, 4294901760
    %1287 = vmatpush.msra.mxu0 %v1286
    %v1288 = vand.u32 %v815, 4294901760
    %1289 = vmatpush.msra.mxu0 %v1288
    %v1290 = vand.u32 %v814, 4294901760
    %1291 = vmatpush.msra.mxu0 %v1290
    %v1292 = vand.u32 %v813, 4294901760
    %1293 = vmatpush.msra.mxu0 %v1292
    %v1294 = vand.u32 %v87, 4294901760
    %1295 = vmatmul.f32.gmra.mxu0 %v1294
    %v1296 = vpop.f32.mrf.mxu0
    %v1297 = vadd.f32 %v1228, %v1296
    %v1298 = vand.u32 %v90, 4294901760
    %1299 = vmatmul.f32.gmra.mxu0 %v1298
    %v1300 = vpop.f32.mrf.mxu0
    %v1301 = vadd.f32 %v1232, %v1300
    %v1302 = vand.u32 %v93, 4294901760
    %1303 = vmatmul.f32.gmra.mxu0 %v1302
    %v1304 = vpop.f32.mrf.mxu0
    %v1305 = vadd.f32 %v1236, %v1304
    %v1306 = vand.u32 %v96, 4294901760
    %1307 = vmatmul.f32.gmra.mxu0 %v1306
    %v1308 = vpop.f32.mrf.mxu0
    %v1309 = vadd.f32 %v1240, %v1308
    %v1310 = vand.u32 %v99, 4294901760
    %1311 = vmatmul.f32.gmra.mxu0 %v1310
    %v1312 = vpop.f32.mrf.mxu0
    %v1313 = vadd.f32 %v1244, %v1312
    %v1314 = vand.u32 %v102, 4294901760
    %1315 = vmatmul.f32.gmra.mxu0 %v1314
    %v1316 = vpop.f32.mrf.mxu0
    %v1317 = vadd.f32 %v1248, %v1316
    %v1318 = vand.u32 %v105, 4294901760
    %1319 = vmatmul.f32.gmra.mxu0 %v1318
    %v1320 = vpop.f32.mrf.mxu0
    %v1321 = vadd.f32 %v1252, %v1320
    %v1322 = vand.u32 %v108, 4294901760
    %1323 = vmatmul.f32.gmra.mxu0 %v1322
    %v1324 = vpop.f32.mrf.mxu0
    %v1325 = vadd.f32 %v1256, %v1324
    %v1326 = vand.u32 %v111, 4294901760
    %1327 = vmatmul.f32.gmra.mxu0 %v1326
    %v1328 = vpop.f32.mrf.mxu0
    %v1329 = vadd.f32 %v1260, %v1328
    %v1330 = vand.u32 %v114, 4294901760
    %1331 = vmatmul.f32.gmra.mxu0 %v1330
    %v1332 = vpop.f32.mrf.mxu0
    %v1333 = vadd.f32 %v1264, %v1332
    %v1334 = vand.u32 %v117, 4294901760
    %1335 = vmatmul.f32.gmra.mxu0 %v1334
    %v1336 = vpop.f32.mrf.mxu0
    %v1337 = vadd.f32 %v1268, %v1336
    %v1338 = vand.u32 %v120, 4294901760
    %1339 = vmatmul.f32.gmra.mxu0 %v1338
    %v1340 = vpop.f32.mrf.mxu0
    %v1341 = vadd.f32 %v1272, %v1340
    %1342 = vdwg.mxu0
    %1343 = vxpose.xlu0.b32.start [1/16] %v1297, 128
    %1344 = vxpose.xlu0.b32.cont [2/16] 0.0, 128
    %1345 = vxpose.xlu0.b32.cont [3/16] 0.0, 128
    %1346 = vxpose.xlu0.b32.cont [4/16] 0.0, 128
    %1347 = vxpose.xlu0.b32.cont [5/16] 0.0, 128
    %1348 = vxpose.xlu0.b32.cont [6/16] 0.0, 128
    %1349 = vxpose.xlu0.b32.cont [7/16] 0.0, 128
    %1350 = vxpose.xlu0.b32.cont [8/16] 0.0, 128
    %1351 = vxpose.xlu0.b32.cont [9/16] 0.0, 128
    %1352 = vxpose.xlu0.b32.cont [10/16] 0.0, 128
    %1353 = vxpose.xlu0.b32.cont [11/16] 0.0, 128
    %1354 = vxpose.xlu0.b32.cont [12/16] 0.0, 128
    %1355 = vxpose.xlu0.b32.cont [13/16] 0.0, 128
    %1356 = vxpose.xlu0.b32.cont [14/16] 0.0, 128
    %1357 = vxpose.xlu0.b32.cont [15/16] 0.0, 128
    %1358 = vxpose.xlu0.b32.end [16/16] 0.0, 128
    %v1359 = vpop.trf.xlu0
    %v1360 = vpop.trf.xlu0
    %v1361 = vpop.trf.xlu0
    %v1362 = vpop.trf.xlu0
    %v1363 = vpop.trf.xlu0
    %v1364 = vpop.trf.xlu0
    %v1365 = vpop.trf.xlu0
    %v1366 = vpop.trf.xlu0
    %v1367 = vpop.trf.xlu0
    %v1368 = vpop.trf.xlu0
    %v1369 = vpop.trf.xlu0
    %v1370 = vpop.trf.xlu0
    %v1371 = vpop.trf.xlu0
    %v1372 = vpop.trf.xlu0
    %v1373 = vpop.trf.xlu0
    %v1374 = vpop.trf.xlu0
    %1375 = vxpose.xlu0.b32.start [1/16] %v1301, 128
    %1376 = vxpose.xlu0.b32.cont [2/16] 0.0, 128
    %1377 = vxpose.xlu0.b32.cont [3/16] 0.0, 128
    %1378 = vxpose.xlu0.b32.cont [4/16] 0.0, 128
    %1379 = vxpose.xlu0.b32.cont [5/16] 0.0, 128
    %1380 = vxpose.xlu0.b32.cont [6/16] 0.0, 128
    %1381 = vxpose.xlu0.b32.cont [7/16] 0.0, 128
    %1382 = vxpose.xlu0.b32.cont [8/16] 0.0, 128
    %1383 = vxpose.xlu0.b32.cont [9/16] 0.0, 128
    %1384 = vxpose.xlu0.b32.cont [10/16] 0.0, 128
    %1385 = vxpose.xlu0.b32.cont [11/16] 0.0, 128
    %1386 = vxpose.xlu0.b32.cont [12/16] 0.0, 128
    %1387 = vxpose.xlu0.b32.cont [13/16] 0.0, 128
    %1388 = vxpose.xlu0.b32.cont [14/16] 0.0, 128
    %1389 = vxpose.xlu0.b32.cont [15/16] 0.0, 128
    %1390 = vxpose.xlu0.b32.end [16/16] 0.0, 128
    %v1391 = vpop.trf.xlu0
    %v1392 = vpop.trf.xlu0
    %v1393 = vpop.trf.xlu0
    %v1394 = vpop.trf.xlu0
    %v1395 = vpop.trf.xlu0
    %v1396 = vpop.trf.xlu0
    %v1397 = vpop.trf.xlu0
    %v1398 = vpop.trf.xlu0
    %v1399 = vpop.trf.xlu0
    %v1400 = vpop.trf.xlu0
    %v1401 = vpop.trf.xlu0
    %v1402 = vpop.trf.xlu0
    %v1403 = vpop.trf.xlu0
    %v1404 = vpop.trf.xlu0
    %v1405 = vpop.trf.xlu0
    %v1406 = vpop.trf.xlu0
    %1407 = vxpose.xlu0.b32.start [1/16] %v1305, 128
    %1408 = vxpose.xlu0.b32.cont [2/16] 0.0, 128
    %1409 = vxpose.xlu0.b32.cont [3/16] 0.0, 128
    %1410 = vxpose.xlu0.b32.cont [4/16] 0.0, 128
    %1411 = vxpose.xlu0.b32.cont [5/16] 0.0, 128
    %1412 = vxpose.xlu0.b32.cont [6/16] 0.0, 128
    %1413 = vxpose.xlu0.b32.cont [7/16] 0.0, 128
    %1414 = vxpose.xlu0.b32.cont [8/16] 0.0, 128
    %1415 = vxpose.xlu0.b32.cont [9/16] 0.0, 128
    %1416 = vxpose.xlu0.b32.cont [10/16] 0.0, 128
    %1417 = vxpose.xlu0.b32.cont [11/16] 0.0, 128
    %1418 = vxpose.xlu0.b32.cont [12/16] 0.0, 128
    %1419 = vxpose.xlu0.b32.cont [13/16] 0.0, 128
    %1420 = vxpose.xlu0.b32.cont [14/16] 0.0, 128
    %1421 = vxpose.xlu0.b32.cont [15/16] 0.0, 128
    %1422 = vxpose.xlu0.b32.end [16/16] 0.0, 128
    %v1423 = vpop.trf.xlu0
    %v1424 = vpop.trf.xlu0
    %v1425 = vpop.trf.xlu0
    %v1426 = vpop.trf.xlu0
    %v1427 = vpop.trf.xlu0
    %v1428 = vpop.trf.xlu0
    %v1429 = vpop.trf.xlu0
    %v1430 = vpop.trf.xlu0
    %v1431 = vpop.trf.xlu0
    %v1432 = vpop.trf.xlu0
    %v1433 = vpop.trf.xlu0
    %v1434 = vpop.trf.xlu0
    %v1435 = vpop.trf.xlu0
    %v1436 = vpop.trf.xlu0
    %v1437 = vpop.trf.xlu0
    %v1438 = vpop.trf.xlu0
    %1439 = vxpose.xlu0.b32.start [1/16] %v1309, 128
    %1440 = vxpose.xlu0.b32.cont [2/16] 0.0, 128
    %1441 = vxpose.xlu0.b32.cont [3/16] 0.0, 128
    %1442 = vxpose.xlu0.b32.cont [4/16] 0.0, 128
    %1443 = vxpose.xlu0.b32.cont [5/16] 0.0, 128
    %1444 = vxpose.xlu0.b32.cont [6/16] 0.0, 128
    %1445 = vxpose.xlu0.b32.cont [7/16] 0.0, 128
    %1446 = vxpose.xlu0.b32.cont [8/16] 0.0, 128
    %1447 = vxpose.xlu0.b32.cont [9/16] 0.0, 128
    %1448 = vxpose.xlu0.b32.cont [10/16] 0.0, 128
    %1449 = vxpose.xlu0.b32.cont [11/16] 0.0, 128
    %1450 = vxpose.xlu0.b32.cont [12/16] 0.0, 128
    %1451 = vxpose.xlu0.b32.cont [13/16] 0.0, 128
    %1452 = vxpose.xlu0.b32.cont [14/16] 0.0, 128
    %1453 = vxpose.xlu0.b32.cont [15/16] 0.0, 128
    %1454 = vxpose.xlu0.b32.end [16/16] 0.0, 128
    %v1455 = vpop.trf.xlu0
    %v1456 = vpop.trf.xlu0
    %v1457 = vpop.trf.xlu0
    %v1458 = vpop.trf.xlu0
    %v1459 = vpop.trf.xlu0
    %v1460 = vpop.trf.xlu0
    %v1461 = vpop.trf.xlu0
    %v1462 = vpop.trf.xlu0
    %v1463 = vpop.trf.xlu0
    %v1464 = vpop.trf.xlu0
    %v1465 = vpop.trf.xlu0
    %v1466 = vpop.trf.xlu0
    %v1467 = vpop.trf.xlu0
    %v1468 = vpop.trf.xlu0
    %v1469 = vpop.trf.xlu0
    %v1470 = vpop.trf.xlu0
    %vm1471 = vcmask 64512
    %v1473 = vsel %vm1471, %v664, 0
    %v1476 = vsel %vm1471, %v665, 0
    %v1479 = vsel %vm1471, %v666, 0
    %1481 = vmatpush.msra.mxu0 0.0
    %1482 = vmatpush.msra.mxu0 0.0
    %1483 = vmatpush.msra.mxu0 0.0
    %1484 = vmatpush.msra.mxu0 0.0
    %1485 = vmatpush.msra.mxu0 0.0
    %1486 = vmatpush.msra.mxu0 0.0
    %1487 = vmatpush.msra.mxu0 0.0
    %1488 = vmatpush.msra.mxu0 0.0
    %1489 = vmatpush.msra.mxu0 0.0
    %1490 = vmatpush.msra.mxu0 0.0
    %1491 = vmatpush.msra.mxu0 0.0
    %1492 = vmatpush.msra.mxu0 0.0
    %1493 = vmatpush.msra.mxu0 0.0
    %1494 = vmatpush.msra.mxu0 0.0
    %1495 = vmatpush.msra.mxu0 0.0
    %v1496 = vand.u32 %v618, 4294901760
    %1497 = vmatpush.msra.mxu0 %v1496
    %v1498 = vand.u32 %v1473, 4294901760
    %v1499 = vsub.f32 %v1473, %v1498
    %v1500 = vand.u32 %v1499, 4294901760
    %v1501 = vsub.f32 %v1499, %v1500
    %v1502 = vand.u32 %v1501, 4294901760
    %1503 = vmatmul.f32.gmra.mxu0 %v1502
    %v1504 = vpop.f32.mrf.mxu0
    %v1505 = vadd.f32 0.0, %v1504
    %v1506 = vand.u32 %v1476, 4294901760
    %v1507 = vsub.f32 %v1476, %v1506
    %v1508 = vand.u32 %v1507, 4294901760
    %v1509 = vsub.f32 %v1507, %v1508
    %v1510 = vand.u32 %v1509, 4294901760
    %1511 = vmatmul.f32.gmra.mxu0 %v1510
    %v1512 = vpop.f32.mrf.mxu0
    %v1513 = vadd.f32 0.0, %v1512
    %v1514 = vand.u32 %v1479, 4294901760
    %v1515 = vsub.f32 %v1479, %v1514
    %v1516 = vand.u32 %v1515, 4294901760
    %v1517 = vsub.f32 %v1515, %v1516
    %v1518 = vand.u32 %v1517, 4294901760
    %1519 = vmatmul.f32.gmra.mxu0 %v1518
    %v1520 = vpop.f32.mrf.mxu0
    %v1521 = vadd.f32 0.0, %v1520
    %1522 = vdwg.mxu0
    %1523 = vmatpush.msra.mxu0 0.0
    %1524 = vmatpush.msra.mxu0 0.0
    %1525 = vmatpush.msra.mxu0 0.0
    %1526 = vmatpush.msra.mxu0 0.0
    %1527 = vmatpush.msra.mxu0 0.0
    %1528 = vmatpush.msra.mxu0 0.0
    %1529 = vmatpush.msra.mxu0 0.0
    %1530 = vmatpush.msra.mxu0 0.0
    %1531 = vmatpush.msra.mxu0 0.0
    %1532 = vmatpush.msra.mxu0 0.0
    %1533 = vmatpush.msra.mxu0 0.0
    %1534 = vmatpush.msra.mxu0 0.0
    %1535 = vmatpush.msra.mxu0 0.0
    %1536 = vmatpush.msra.mxu0 0.0
    %1537 = vmatpush.msra.mxu0 0.0
    %v1538 = vand.u32 %v618, 4294901760
    %v1539 = vsub.f32 %v618, %v1538
    %v1540 = vand.u32 %v1539, 4294901760
    %v1541 = vsub.f32 %v1539, %v1540
    %v1542 = vand.u32 %v1541, 4294901760
    %1543 = vmatpush.msra.mxu0 %v1542
    %v1544 = vand.u32 %v1473, 4294901760
    %1545 = vmatmul.f32.gmra.mxu0 %v1544
    %v1546 = vpop.f32.mrf.mxu0
    %v1547 = vadd.f32 %v1505, %v1546
    %v1548 = vand.u32 %v1476, 4294901760
    %1549 = vmatmul.f32.gmra.mxu0 %v1548
    %v1550 = vpop.f32.mrf.mxu0
    %v1551 = vadd.f32 %v1513, %v1550
    %v1552 = vand.u32 %v1479, 4294901760
    %1553 = vmatmul.f32.gmra.mxu0 %v1552
    %v1554 = vpop.f32.mrf.mxu0
    %v1555 = vadd.f32 %v1521, %v1554
    %1556 = vdwg.mxu0
    %1557 = vmatpush.msra.mxu0 0.0
    %1558 = vmatpush.msra.mxu0 0.0
    %1559 = vmatpush.msra.mxu0 0.0
    %1560 = vmatpush.msra.mxu0 0.0
    %1561 = vmatpush.msra.mxu0 0.0
    %1562 = vmatpush.msra.mxu0 0.0
    %1563 = vmatpush.msra.mxu0 0.0
    %1564 = vmatpush.msra.mxu0 0.0
    %1565 = vmatpush.msra.mxu0 0.0
    %1566 = vmatpush.msra.mxu0 0.0
    %1567 = vmatpush.msra.mxu0 0.0
    %1568 = vmatpush.msra.mxu0 0.0
    %1569 = vmatpush.msra.mxu0 0.0
    %1570 = vmatpush.msra.mxu0 0.0
    %1571 = vmatpush.msra.mxu0 0.0
    %v1572 = vand.u32 %v618, 4294901760
    %v1573 = vsub.f32 %v618, %v1572
    %1574 = vmatpush.msra.mxu0 %v1573
    %v1575 = vand.u32 %v1473, 4294901760
    %v1576 = vsub.f32 %v1473, %v1575
    %1577 = vmatmul.f32.gmra.mxu0 %v1576
    %v1578 = vpop.f32.mrf.mxu0
    %v1579 = vadd.f32 %v1547, %v1578
    %v1580 = vand.u32 %v1476, 4294901760
    %v1581 = vsub.f32 %v1476, %v1580
    %1582 = vmatmul.f32.gmra.mxu0 %v1581
    %v1583 = vpop.f32.mrf.mxu0
    %v1584 = vadd.f32 %v1551, %v1583
    %v1585 = vand.u32 %v1479, 4294901760
    %v1586 = vsub.f32 %v1479, %v1585
    %1587 = vmatmul.f32.gmra.mxu0 %v1586
    %v1588 = vpop.f32.mrf.mxu0
    %v1589 = vadd.f32 %v1555, %v1588
    %1590 = vdwg.mxu0
    %1591 = vmatpush.msra.mxu0 0.0
    %1592 = vmatpush.msra.mxu0 0.0
    %1593 = vmatpush.msra.mxu0 0.0
    %1594 = vmatpush.msra.mxu0 0.0
    %1595 = vmatpush.msra.mxu0 0.0
    %1596 = vmatpush.msra.mxu0 0.0
    %1597 = vmatpush.msra.mxu0 0.0
    %1598 = vmatpush.msra.mxu0 0.0
    %1599 = vmatpush.msra.mxu0 0.0
    %1600 = vmatpush.msra.mxu0 0.0
    %1601 = vmatpush.msra.mxu0 0.0
    %1602 = vmatpush.msra.mxu0 0.0
    %1603 = vmatpush.msra.mxu0 0.0
    %1604 = vmatpush.msra.mxu0 0.0
    %1605 = vmatpush.msra.mxu0 0.0
    %v1606 = vand.u32 %v618, 4294901760
    %1607 = vmatpush.msra.mxu0 %v1606
    %v1608 = vand.u32 %v1473, 4294901760
    %v1609 = vsub.f32 %v1473, %v1608
    %v1610 = vand.u32 %v1609, 4294901760
    %1611 = vmatmul.f32.gmra.mxu0 %v1610
    %v1612 = vpop.f32.mrf.mxu0
    %v1613 = vadd.f32 %v1579, %v1612
    %v1614 = vand.u32 %v1476, 4294901760
    %v1615 = vsub.f32 %v1476, %v1614
    %v1616 = vand.u32 %v1615, 4294901760
    %1617 = vmatmul.f32.gmra.mxu0 %v1616
    %v1618 = vpop.f32.mrf.mxu0
    %v1619 = vadd.f32 %v1584, %v1618
    %v1620 = vand.u32 %v1479, 4294901760
    %v1621 = vsub.f32 %v1479, %v1620
    %v1622 = vand.u32 %v1621, 4294901760
    %1623 = vmatmul.f32.gmra.mxu0 %v1622
    %v1624 = vpop.f32.mrf.mxu0
    %v1625 = vadd.f32 %v1589, %v1624
    %1626 = vdwg.mxu0
    %1627 = vmatpush.msra.mxu0 0.0
    %1628 = vmatpush.msra.mxu0 0.0
    %1629 = vmatpush.msra.mxu0 0.0
    %1630 = vmatpush.msra.mxu0 0.0
    %1631 = vmatpush.msra.mxu0 0.0
    %1632 = vmatpush.msra.mxu0 0.0
    %1633 = vmatpush.msra.mxu0 0.0
    %1634 = vmatpush.msra.mxu0 0.0
    %1635 = vmatpush.msra.mxu0 0.0
    %1636 = vmatpush.msra.mxu0 0.0
    %1637 = vmatpush.msra.mxu0 0.0
    %1638 = vmatpush.msra.mxu0 0.0
    %1639 = vmatpush.msra.mxu0 0.0
    %1640 = vmatpush.msra.mxu0 0.0
    %1641 = vmatpush.msra.mxu0 0.0
    %v1642 = vand.u32 %v618, 4294901760
    %v1643 = vsub.f32 %v618, %v1642
    %v1644 = vand.u32 %v1643, 4294901760
    %1645 = vmatpush.msra.mxu0 %v1644
    %v1646 = vand.u32 %v1473, 4294901760
    %1647 = vmatmul.f32.gmra.mxu0 %v1646
    %v1648 = vpop.f32.mrf.mxu0
    %v1649 = vadd.f32 %v1613, %v1648
    %v1650 = vand.u32 %v1476, 4294901760
    %1651 = vmatmul.f32.gmra.mxu0 %v1650
    %v1652 = vpop.f32.mrf.mxu0
    %v1653 = vadd.f32 %v1619, %v1652
    %v1654 = vand.u32 %v1479, 4294901760
    %1655 = vmatmul.f32.gmra.mxu0 %v1654
    %v1656 = vpop.f32.mrf.mxu0
    %v1657 = vadd.f32 %v1625, %v1656
    %1658 = vdwg.mxu0
    %1659 = vmatpush.msra.mxu0 0.0
    %1660 = vmatpush.msra.mxu0 0.0
    %1661 = vmatpush.msra.mxu0 0.0
    %1662 = vmatpush.msra.mxu0 0.0
    %1663 = vmatpush.msra.mxu0 0.0
    %1664 = vmatpush.msra.mxu0 0.0
    %1665 = vmatpush.msra.mxu0 0.0
    %1666 = vmatpush.msra.mxu0 0.0
    %1667 = vmatpush.msra.mxu0 0.0
    %1668 = vmatpush.msra.mxu0 0.0
    %1669 = vmatpush.msra.mxu0 0.0
    %1670 = vmatpush.msra.mxu0 0.0
    %1671 = vmatpush.msra.mxu0 0.0
    %1672 = vmatpush.msra.mxu0 0.0
    %1673 = vmatpush.msra.mxu0 0.0
    %v1674 = vand.u32 %v618, 4294901760
    %1675 = vmatpush.msra.mxu0 %v1674
    %v1676 = vand.u32 %v1473, 4294901760
    %1677 = vmatmul.f32.gmra.mxu0 %v1676
    %v1678 = vpop.f32.mrf.mxu0
    %v1679 = vadd.f32 %v1649, %v1678
    %v1680 = vand.u32 %v1476, 4294901760
    %1681 = vmatmul.f32.gmra.mxu0 %v1680
    %v1682 = vpop.f32.mrf.mxu0
    %v1683 = vadd.f32 %v1653, %v1682
    %v1684 = vand.u32 %v1479, 4294901760
    %1685 = vmatmul.f32.gmra.mxu0 %v1684
    %v1686 = vpop.f32.mrf.mxu0
    %v1687 = vadd.f32 %v1657, %v1686
    %1688 = vdwg.mxu0
    %v1690 = vsel %vm1471, %v696, 0
    %v1693 = vsel %vm1471, %v697, 0
    %v1696 = vsel %vm1471, %v698, 0
    %1698 = vmatpush.msra.mxu0 0.0
    %1699 = vmatpush.msra.mxu0 0.0
    %1700 = vmatpush.msra.mxu0 0.0
    %1701 = vmatpush.msra.mxu0 0.0
    %1702 = vmatpush.msra.mxu0 0.0
    %1703 = vmatpush.msra.mxu0 0.0
    %1704 = vmatpush.msra.mxu0 0.0
    %1705 = vmatpush.msra.mxu0 0.0
    %1706 = vmatpush.msra.mxu0 0.0
    %1707 = vmatpush.msra.mxu0 0.0
    %1708 = vmatpush.msra.mxu0 0.0
    %1709 = vmatpush.msra.mxu0 0.0
    %1710 = vmatpush.msra.mxu0 0.0
    %1711 = vmatpush.msra.mxu0 0.0
    %1712 = vmatpush.msra.mxu0 0.0
    %v1713 = vand.u32 %v622, 4294901760
    %1714 = vmatpush.msra.mxu0 %v1713
    %v1715 = vand.u32 %v1690, 4294901760
    %v1716 = vsub.f32 %v1690, %v1715
    %v1717 = vand.u32 %v1716, 4294901760
    %v1718 = vsub.f32 %v1716, %v1717
    %v1719 = vand.u32 %v1718, 4294901760
    %1720 = vmatmul.f32.gmra.mxu0 %v1719
    %v1721 = vpop.f32.mrf.mxu0
    %v1722 = vadd.f32 0.0, %v1721
    %v1723 = vand.u32 %v1693, 4294901760
    %v1724 = vsub.f32 %v1693, %v1723
    %v1725 = vand.u32 %v1724, 4294901760
    %v1726 = vsub.f32 %v1724, %v1725
    %v1727 = vand.u32 %v1726, 4294901760
    %1728 = vmatmul.f32.gmra.mxu0 %v1727
    %v1729 = vpop.f32.mrf.mxu0
    %v1730 = vadd.f32 0.0, %v1729
    %v1731 = vand.u32 %v1696, 4294901760
    %v1732 = vsub.f32 %v1696, %v1731
    %v1733 = vand.u32 %v1732, 4294901760
    %v1734 = vsub.f32 %v1732, %v1733
    %v1735 = vand.u32 %v1734, 4294901760
    %1736 = vmatmul.f32.gmra.mxu0 %v1735
    %v1737 = vpop.f32.mrf.mxu0
    %v1738 = vadd.f32 0.0, %v1737
    %1739 = vdwg.mxu0
    %1740 = vmatpush.msra.mxu0 0.0
    %1741 = vmatpush.msra.mxu0 0.0
    %1742 = vmatpush.msra.mxu0 0.0
    %1743 = vmatpush.msra.mxu0 0.0
    %1744 = vmatpush.msra.mxu0 0.0
    %1745 = vmatpush.msra.mxu0 0.0
    %1746 = vmatpush.msra.mxu0 0.0
    %1747 = vmatpush.msra.mxu0 0.0
    %1748 = vmatpush.msra.mxu0 0.0
    %1749 = vmatpush.msra.mxu0 0.0
    %1750 = vmatpush.msra.mxu0 0.0
    %1751 = vmatpush.msra.mxu0 0.0
    %1752 = vmatpush.msra.mxu0 0.0
    %1753 = vmatpush.msra.mxu0 0.0
    %1754 = vmatpush.msra.mxu0 0.0
    %v1755 = vand.u32 %v622, 4294901760
    %v1756 = vsub.f32 %v622, %v1755
    %v1757 = vand.u32 %v1756, 4294901760
    %v1758 = vsub.f32 %v1756, %v1757
    %v1759 = vand.u32 %v1758, 4294901760
    %1760 = vmatpush.msra.mxu0 %v1759
    %v1761 = vand.u32 %v1690, 4294901760
    %1762 = vmatmul.f32.gmra.mxu0 %v1761
    %v1763 = vpop.f32.mrf.mxu0
    %v1764 = vadd.f32 %v1722, %v1763
    %v1765 = vand.u32 %v1693, 4294901760
    %1766 = vmatmul.f32.gmra.mxu0 %v1765
    %v1767 = vpop.f32.mrf.mxu0
    %v1768 = vadd.f32 %v1730, %v1767
    %v1769 = vand.u32 %v1696, 4294901760
    %1770 = vmatmul.f32.gmra.mxu0 %v1769
    %v1771 = vpop.f32.mrf.mxu0
    %v1772 = vadd.f32 %v1738, %v1771
    %1773 = vdwg.mxu0
    %1774 = vmatpush.msra.mxu0 0.0
    %1775 = vmatpush.msra.mxu0 0.0
    %1776 = vmatpush.msra.mxu0 0.0
    %1777 = vmatpush.msra.mxu0 0.0
    %1778 = vmatpush.msra.mxu0 0.0
    %1779 = vmatpush.msra.mxu0 0.0
    %1780 = vmatpush.msra.mxu0 0.0
    %1781 = vmatpush.msra.mxu0 0.0
    %1782 = vmatpush.msra.mxu0 0.0
    %1783 = vmatpush.msra.mxu0 0.0
    %1784 = vmatpush.msra.mxu0 0.0
    %1785 = vmatpush.msra.mxu0 0.0
    %1786 = vmatpush.msra.mxu0 0.0
    %1787 = vmatpush.msra.mxu0 0.0
    %1788 = vmatpush.msra.mxu0 0.0
    %v1789 = vand.u32 %v622, 4294901760
    %v1790 = vsub.f32 %v622, %v1789
    %1791 = vmatpush.msra.mxu0 %v1790
    %v1792 = vand.u32 %v1690, 4294901760
    %v1793 = vsub.f32 %v1690, %v1792
    %1794 = vmatmul.f32.gmra.mxu0 %v1793
    %v1795 = vpop.f32.mrf.mxu0
    %v1796 = vadd.f32 %v1764, %v1795
    %v1797 = vand.u32 %v1693, 4294901760
    %v1798 = vsub.f32 %v1693, %v1797
    %1799 = vmatmul.f32.gmra.mxu0 %v1798
    %v1800 = vpop.f32.mrf.mxu0
    %v1801 = vadd.f32 %v1768, %v1800
    %v1802 = vand.u32 %v1696, 4294901760
    %v1803 = vsub.f32 %v1696, %v1802
    %1804 = vmatmul.f32.gmra.mxu0 %v1803
    %v1805 = vpop.f32.mrf.mxu0
    %v1806 = vadd.f32 %v1772, %v1805
    %1807 = vdwg.mxu0
    %1808 = vmatpush.msra.mxu0 0.0
    %1809 = vmatpush.msra.mxu0 0.0
    %1810 = vmatpush.msra.mxu0 0.0
    %1811 = vmatpush.msra.mxu0 0.0
    %1812 = vmatpush.msra.mxu0 0.0
    %1813 = vmatpush.msra.mxu0 0.0
    %1814 = vmatpush.msra.mxu0 0.0
    %1815 = vmatpush.msra.mxu0 0.0
    %1816 = vmatpush.msra.mxu0 0.0
    %1817 = vmatpush.msra.mxu0 0.0
    %1818 = vmatpush.msra.mxu0 0.0
    %1819 = vmatpush.msra.mxu0 0.0
    %1820 = vmatpush.msra.mxu0 0.0
    %1821 = vmatpush.msra.mxu0 0.0
    %1822 = vmatpush.msra.mxu0 0.0
    %v1823 = vand.u32 %v622, 4294901760
    %1824 = vmatpush.msra.mxu0 %v1823
    %v1825 = vand.u32 %v1690, 4294901760
    %v1826 = vsub.f32 %v1690, %v1825
    %v1827 = vand.u32 %v1826, 4294901760
    %1828 = vmatmul.f32.gmra.mxu0 %v1827
    %v1829 = vpop.f32.mrf.mxu0
    %v1830 = vadd.f32 %v1796, %v1829
    %v1831 = vand.u32 %v1693, 4294901760
    %v1832 = vsub.f32 %v1693, %v1831
    %v1833 = vand.u32 %v1832, 4294901760
    %1834 = vmatmul.f32.gmra.mxu0 %v1833
    %v1835 = vpop.f32.mrf.mxu0
    %v1836 = vadd.f32 %v1801, %v1835
    %v1837 = vand.u32 %v1696, 4294901760
    %v1838 = vsub.f32 %v1696, %v1837
    %v1839 = vand.u32 %v1838, 4294901760
    %1840 = vmatmul.f32.gmra.mxu0 %v1839
    %v1841 = vpop.f32.mrf.mxu0
    %v1842 = vadd.f32 %v1806, %v1841
    %1843 = vdwg.mxu0
    %1844 = vmatpush.msra.mxu0 0.0
    %1845 = vmatpush.msra.mxu0 0.0
    %1846 = vmatpush.msra.mxu0 0.0
    %1847 = vmatpush.msra.mxu0 0.0
    %1848 = vmatpush.msra.mxu0 0.0
    %1849 = vmatpush.msra.mxu0 0.0
    %1850 = vmatpush.msra.mxu0 0.0
    %1851 = vmatpush.msra.mxu0 0.0
    %1852 = vmatpush.msra.mxu0 0.0
    %1853 = vmatpush.msra.mxu0 0.0
    %1854 = vmatpush.msra.mxu0 0.0
    %1855 = vmatpush.msra.mxu0 0.0
    %1856 = vmatpush.msra.mxu0 0.0
    %1857 = vmatpush.msra.mxu0 0.0
    %1858 = vmatpush.msra.mxu0 0.0
    %v1859 = vand.u32 %v622, 4294901760
    %v1860 = vsub.f32 %v622, %v1859
    %v1861 = vand.u32 %v1860, 4294901760
    %1862 = vmatpush.msra.mxu0 %v1861
    %v1863 = vand.u32 %v1690, 4294901760
    %1864 = vmatmul.f32.gmra.mxu0 %v1863
    %v1865 = vpop.f32.mrf.mxu0
    %v1866 = vadd.f32 %v1830, %v1865
    %v1867 = vand.u32 %v1693, 4294901760
    %1868 = vmatmul.f32.gmra.mxu0 %v1867
    %v1869 = vpop.f32.mrf.mxu0
    %v1870 = vadd.f32 %v1836, %v1869
    %v1871 = vand.u32 %v1696, 4294901760
    %1872 = vmatmul.f32.gmra.mxu0 %v1871
    %v1873 = vpop.f32.mrf.mxu0
    %v1874 = vadd.f32 %v1842, %v1873
    %1875 = vdwg.mxu0
    %1876 = vmatpush.msra.mxu0 0.0
    %1877 = vmatpush.msra.mxu0 0.0
    %1878 = vmatpush.msra.mxu0 0.0
    %1879 = vmatpush.msra.mxu0 0.0
    %1880 = vmatpush.msra.mxu0 0.0
    %1881 = vmatpush.msra.mxu0 0.0
    %1882 = vmatpush.msra.mxu0 0.0
    %1883 = vmatpush.msra.mxu0 0.0
    %1884 = vmatpush.msra.mxu0 0.0
    %1885 = vmatpush.msra.mxu0 0.0
    %1886 = vmatpush.msra.mxu0 0.0
    %1887 = vmatpush.msra.mxu0 0.0
    %1888 = vmatpush.msra.mxu0 0.0
    %1889 = vmatpush.msra.mxu0 0.0
    %1890 = vmatpush.msra.mxu0 0.0
    %v1891 = vand.u32 %v622, 4294901760
    %1892 = vmatpush.msra.mxu0 %v1891
    %v1893 = vand.u32 %v1690, 4294901760
    %1894 = vmatmul.f32.gmra.mxu0 %v1893
    %v1895 = vpop.f32.mrf.mxu0
    %v1896 = vadd.f32 %v1866, %v1895
    %v1897 = vand.u32 %v1693, 4294901760
    %1898 = vmatmul.f32.gmra.mxu0 %v1897
    %v1899 = vpop.f32.mrf.mxu0
    %v1900 = vadd.f32 %v1870, %v1899
    %v1901 = vand.u32 %v1696, 4294901760
    %1902 = vmatmul.f32.gmra.mxu0 %v1901
    %v1903 = vpop.f32.mrf.mxu0
    %v1904 = vadd.f32 %v1874, %v1903
    %1905 = vdwg.mxu0
    %v1907 = vsel %vm1471, %v728, 0
    %v1910 = vsel %vm1471, %v729, 0
    %v1913 = vsel %vm1471, %v730, 0
    %1915 = vmatpush.msra.mxu0 0.0
    %1916 = vmatpush.msra.mxu0 0.0
    %1917 = vmatpush.msra.mxu0 0.0
    %1918 = vmatpush.msra.mxu0 0.0
    %1919 = vmatpush.msra.mxu0 0.0
    %1920 = vmatpush.msra.mxu0 0.0
    %1921 = vmatpush.msra.mxu0 0.0
    %1922 = vmatpush.msra.mxu0 0.0
    %1923 = vmatpush.msra.mxu0 0.0
    %1924 = vmatpush.msra.mxu0 0.0
    %1925 = vmatpush.msra.mxu0 0.0
    %1926 = vmatpush.msra.mxu0 0.0
    %1927 = vmatpush.msra.mxu0 0.0
    %1928 = vmatpush.msra.mxu0 0.0
    %1929 = vmatpush.msra.mxu0 0.0
    %v1930 = vand.u32 %v626, 4294901760
    %1931 = vmatpush.msra.mxu0 %v1930
    %v1932 = vand.u32 %v1907, 4294901760
    %v1933 = vsub.f32 %v1907, %v1932
    %v1934 = vand.u32 %v1933, 4294901760
    %v1935 = vsub.f32 %v1933, %v1934
    %v1936 = vand.u32 %v1935, 4294901760
    %1937 = vmatmul.f32.gmra.mxu0 %v1936
    %v1938 = vpop.f32.mrf.mxu0
    %v1939 = vadd.f32 0.0, %v1938
    %v1940 = vand.u32 %v1910, 4294901760
    %v1941 = vsub.f32 %v1910, %v1940
    %v1942 = vand.u32 %v1941, 4294901760
    %v1943 = vsub.f32 %v1941, %v1942
    %v1944 = vand.u32 %v1943, 4294901760
    %1945 = vmatmul.f32.gmra.mxu0 %v1944
    %v1946 = vpop.f32.mrf.mxu0
    %v1947 = vadd.f32 0.0, %v1946
    %v1948 = vand.u32 %v1913, 4294901760
    %v1949 = vsub.f32 %v1913, %v1948
    %v1950 = vand.u32 %v1949, 4294901760
    %v1951 = vsub.f32 %v1949, %v1950
    %v1952 = vand.u32 %v1951, 4294901760
    %1953 = vmatmul.f32.gmra.mxu0 %v1952
    %v1954 = vpop.f32.mrf.mxu0
    %v1955 = vadd.f32 0.0, %v1954
    %1956 = vdwg.mxu0
    %1957 = vmatpush.msra.mxu0 0.0
    %1958 = vmatpush.msra.mxu0 0.0
    %1959 = vmatpush.msra.mxu0 0.0
    %1960 = vmatpush.msra.mxu0 0.0
    %1961 = vmatpush.msra.mxu0 0.0
    %1962 = vmatpush.msra.mxu0 0.0
    %1963 = vmatpush.msra.mxu0 0.0
    %1964 = vmatpush.msra.mxu0 0.0
    %1965 = vmatpush.msra.mxu0 0.0
    %1966 = vmatpush.msra.mxu0 0.0
    %1967 = vmatpush.msra.mxu0 0.0
    %1968 = vmatpush.msra.mxu0 0.0
    %1969 = vmatpush.msra.mxu0 0.0
    %1970 = vmatpush.msra.mxu0 0.0
    %1971 = vmatpush.msra.mxu0 0.0
    %v1972 = vand.u32 %v626, 4294901760
    %v1973 = vsub.f32 %v626, %v1972
    %v1974 = vand.u32 %v1973, 4294901760
    %v1975 = vsub.f32 %v1973, %v1974
    %v1976 = vand.u32 %v1975, 4294901760
    %1977 = vmatpush.msra.mxu0 %v1976
    %v1978 = vand.u32 %v1907, 4294901760
    %1979 = vmatmul.f32.gmra.mxu0 %v1978
    %v1980 = vpop.f32.mrf.mxu0
    %v1981 = vadd.f32 %v1939, %v1980
    %v1982 = vand.u32 %v1910, 4294901760
    %1983 = vmatmul.f32.gmra.mxu0 %v1982
    %v1984 = vpop.f32.mrf.mxu0
    %v1985 = vadd.f32 %v1947, %v1984
    %v1986 = vand.u32 %v1913, 4294901760
    %1987 = vmatmul.f32.gmra.mxu0 %v1986
    %v1988 = vpop.f32.mrf.mxu0
    %v1989 = vadd.f32 %v1955, %v1988
    %1990 = vdwg.mxu0
    %1991 = vmatpush.msra.mxu0 0.0
    %1992 = vmatpush.msra.mxu0 0.0
    %1993 = vmatpush.msra.mxu0 0.0
    %1994 = vmatpush.msra.mxu0 0.0
    %1995 = vmatpush.msra.mxu0 0.0
    %1996 = vmatpush.msra.mxu0 0.0
    %1997 = vmatpush.msra.mxu0 0.0
    %1998 = vmatpush.msra.mxu0 0.0
    %1999 = vmatpush.msra.mxu0 0.0
    %2000 = vmatpush.msra.mxu0 0.0
    %2001 = vmatpush.msra.mxu0 0.0
    %2002 = vmatpush.msra.mxu0 0.0
    %2003 = vmatpush.msra.mxu0 0.0
    %2004 = vmatpush.msra.mxu0 0.0
    %2005 = vmatpush.msra.mxu0 0.0
    %v2006 = vand.u32 %v626, 4294901760
    %v2007 = vsub.f32 %v626, %v2006
    %2008 = vmatpush.msra.mxu0 %v2007
    %v2009 = vand.u32 %v1907, 4294901760
    %v2010 = vsub.f32 %v1907, %v2009
    %2011 = vmatmul.f32.gmra.mxu0 %v2010
    %v2012 = vpop.f32.mrf.mxu0
    %v2013 = vadd.f32 %v1981, %v2012
    %v2014 = vand.u32 %v1910, 4294901760
    %v2015 = vsub.f32 %v1910, %v2014
    %2016 = vmatmul.f32.gmra.mxu0 %v2015
    %v2017 = vpop.f32.mrf.mxu0
    %v2018 = vadd.f32 %v1985, %v2017
    %v2019 = vand.u32 %v1913, 4294901760
    %v2020 = vsub.f32 %v1913, %v2019
    %2021 = vmatmul.f32.gmra.mxu0 %v2020
    %v2022 = vpop.f32.mrf.mxu0
    %v2023 = vadd.f32 %v1989, %v2022
    %2024 = vdwg.mxu0
    %2025 = vmatpush.msra.mxu0 0.0
    %2026 = vmatpush.msra.mxu0 0.0
    %2027 = vmatpush.msra.mxu0 0.0
    %2028 = vmatpush.msra.mxu0 0.0
    %2029 = vmatpush.msra.mxu0 0.0
    %2030 = vmatpush.msra.mxu0 0.0
    %2031 = vmatpush.msra.mxu0 0.0
    %2032 = vmatpush.msra.mxu0 0.0
    %2033 = vmatpush.msra.mxu0 0.0
    %2034 = vmatpush.msra.mxu0 0.0
    %2035 = vmatpush.msra.mxu0 0.0
    %2036 = vmatpush.msra.mxu0 0.0
    %2037 = vmatpush.msra.mxu0 0.0
    %2038 = vmatpush.msra.mxu0 0.0
    %2039 = vmatpush.msra.mxu0 0.0
    %v2040 = vand.u32 %v626, 4294901760
    %2041 = vmatpush.msra.mxu0 %v2040
    %v2042 = vand.u32 %v1907, 4294901760
    %v2043 = vsub.f32 %v1907, %v2042
    %v2044 = vand.u32 %v2043, 4294901760
    %2045 = vmatmul.f32.gmra.mxu0 %v2044
    %v2046 = vpop.f32.mrf.mxu0
    %v2047 = vadd.f32 %v2013, %v2046
    %v2048 = vand.u32 %v1910, 4294901760
    %v2049 = vsub.f32 %v1910, %v2048
    %v2050 = vand.u32 %v2049, 4294901760
    %2051 = vmatmul.f32.gmra.mxu0 %v2050
    %v2052 = vpop.f32.mrf.mxu0
    %v2053 = vadd.f32 %v2018, %v2052
    %v2054 = vand.u32 %v1913, 4294901760
    %v2055 = vsub.f32 %v1913, %v2054
    %v2056 = vand.u32 %v2055, 4294901760
    %2057 = vmatmul.f32.gmra.mxu0 %v2056
    %v2058 = vpop.f32.mrf.mxu0
    %v2059 = vadd.f32 %v2023, %v2058
    %2060 = vdwg.mxu0
    %2061 = vmatpush.msra.mxu0 0.0
    %2062 = vmatpush.msra.mxu0 0.0
    %2063 = vmatpush.msra.mxu0 0.0
    %2064 = vmatpush.msra.mxu0 0.0
    %2065 = vmatpush.msra.mxu0 0.0
    %2066 = vmatpush.msra.mxu0 0.0
    %2067 = vmatpush.msra.mxu0 0.0
    %2068 = vmatpush.msra.mxu0 0.0
    %2069 = vmatpush.msra.mxu0 0.0
    %2070 = vmatpush.msra.mxu0 0.0
    %2071 = vmatpush.msra.mxu0 0.0
    %2072 = vmatpush.msra.mxu0 0.0
    %2073 = vmatpush.msra.mxu0 0.0
    %2074 = vmatpush.msra.mxu0 0.0
    %2075 = vmatpush.msra.mxu0 0.0
    %v2076 = vand.u32 %v626, 4294901760
    %v2077 = vsub.f32 %v626, %v2076
    %v2078 = vand.u32 %v2077, 4294901760
    %2079 = vmatpush.msra.mxu0 %v2078
    %v2080 = vand.u32 %v1907, 4294901760
    %2081 = vmatmul.f32.gmra.mxu0 %v2080
    %v2082 = vpop.f32.mrf.mxu0
    %v2083 = vadd.f32 %v2047, %v2082
    %v2084 = vand.u32 %v1910, 4294901760
    %2085 = vmatmul.f32.gmra.mxu0 %v2084
    %v2086 = vpop.f32.mrf.mxu0
    %v2087 = vadd.f32 %v2053, %v2086
    %v2088 = vand.u32 %v1913, 4294901760
    %2089 = vmatmul.f32.gmra.mxu0 %v2088
    %v2090 = vpop.f32.mrf.mxu0
    %v2091 = vadd.f32 %v2059, %v2090
    %2092 = vdwg.mxu0
    %2093 = vmatpush.msra.mxu0 0.0
    %2094 = vmatpush.msra.mxu0 0.0
    %2095 = vmatpush.msra.mxu0 0.0
    %2096 = vmatpush.msra.mxu0 0.0
    %2097 = vmatpush.msra.mxu0 0.0
    %2098 = vmatpush.msra.mxu0 0.0
    %2099 = vmatpush.msra.mxu0 0.0
    %2100 = vmatpush.msra.mxu0 0.0
    %2101 = vmatpush.msra.mxu0 0.0
    %2102 = vmatpush.msra.mxu0 0.0
    %2103 = vmatpush.msra.mxu0 0.0
    %2104 = vmatpush.msra.mxu0 0.0
    %2105 = vmatpush.msra.mxu0 0.0
    %2106 = vmatpush.msra.mxu0 0.0
    %2107 = vmatpush.msra.mxu0 0.0
    %v2108 = vand.u32 %v626, 4294901760
    %2109 = vmatpush.msra.mxu0 %v2108
    %v2110 = vand.u32 %v1907, 4294901760
    %2111 = vmatmul.f32.gmra.mxu0 %v2110
    %v2112 = vpop.f32.mrf.mxu0
    %v2113 = vadd.f32 %v2083, %v2112
    %v2114 = vand.u32 %v1910, 4294901760
    %2115 = vmatmul.f32.gmra.mxu0 %v2114
    %v2116 = vpop.f32.mrf.mxu0
    %v2117 = vadd.f32 %v2087, %v2116
    %v2118 = vand.u32 %v1913, 4294901760
    %2119 = vmatmul.f32.gmra.mxu0 %v2118
    %v2120 = vpop.f32.mrf.mxu0
    %v2121 = vadd.f32 %v2091, %v2120
    %2122 = vdwg.mxu0
    %v2124 = vsel %vm1471, %v760, 0
    %v2127 = vsel %vm1471, %v761, 0
    %v2130 = vsel %vm1471, %v762, 0
    %2132 = vmatpush.msra.mxu0 0.0
    %2133 = vmatpush.msra.mxu0 0.0
    %2134 = vmatpush.msra.mxu0 0.0
    %2135 = vmatpush.msra.mxu0 0.0
    %2136 = vmatpush.msra.mxu0 0.0
    %2137 = vmatpush.msra.mxu0 0.0
    %2138 = vmatpush.msra.mxu0 0.0
    %2139 = vmatpush.msra.mxu0 0.0
    %2140 = vmatpush.msra.mxu0 0.0
    %2141 = vmatpush.msra.mxu0 0.0
    %2142 = vmatpush.msra.mxu0 0.0
    %2143 = vmatpush.msra.mxu0 0.0
    %2144 = vmatpush.msra.mxu0 0.0
    %2145 = vmatpush.msra.mxu0 0.0
    %2146 = vmatpush.msra.mxu0 0.0
    %v2147 = vand.u32 %v630, 4294901760
    %2148 = vmatpush.msra.mxu0 %v2147
    %v2149 = vand.u32 %v2124, 4294901760
    %v2150 = vsub.f32 %v2124, %v2149
    %v2151 = vand.u32 %v2150, 4294901760
    %v2152 = vsub.f32 %v2150, %v2151
    %v2153 = vand.u32 %v2152, 4294901760
    %2154 = vmatmul.f32.gmra.mxu0 %v2153
    %v2155 = vpop.f32.mrf.mxu0
    %v2156 = vadd.f32 0.0, %v2155
    %v2157 = vand.u32 %v2127, 4294901760
    %v2158 = vsub.f32 %v2127, %v2157
    %v2159 = vand.u32 %v2158, 4294901760
    %v2160 = vsub.f32 %v2158, %v2159
    %v2161 = vand.u32 %v2160, 4294901760
    %2162 = vmatmul.f32.gmra.mxu0 %v2161
    %v2163 = vpop.f32.mrf.mxu0
    %v2164 = vadd.f32 0.0, %v2163
    %v2165 = vand.u32 %v2130, 4294901760
    %v2166 = vsub.f32 %v2130, %v2165
    %v2167 = vand.u32 %v2166, 4294901760
    %v2168 = vsub.f32 %v2166, %v2167
    %v2169 = vand.u32 %v2168, 4294901760
    %2170 = vmatmul.f32.gmra.mxu0 %v2169
    %v2171 = vpop.f32.mrf.mxu0
    %v2172 = vadd.f32 0.0, %v2171
    %2173 = vdwg.mxu0
    %2174 = vmatpush.msra.mxu0 0.0
    %2175 = vmatpush.msra.mxu0 0.0
    %2176 = vmatpush.msra.mxu0 0.0
    %2177 = vmatpush.msra.mxu0 0.0
    %2178 = vmatpush.msra.mxu0 0.0
    %2179 = vmatpush.msra.mxu0 0.0
    %2180 = vmatpush.msra.mxu0 0.0
    %2181 = vmatpush.msra.mxu0 0.0
    %2182 = vmatpush.msra.mxu0 0.0
    %2183 = vmatpush.msra.mxu0 0.0
    %2184 = vmatpush.msra.mxu0 0.0
    %2185 = vmatpush.msra.mxu0 0.0
    %2186 = vmatpush.msra.mxu0 0.0
    %2187 = vmatpush.msra.mxu0 0.0
    %2188 = vmatpush.msra.mxu0 0.0
    %v2189 = vand.u32 %v630, 4294901760
    %v2190 = vsub.f32 %v630, %v2189
    %v2191 = vand.u32 %v2190, 4294901760
    %v2192 = vsub.f32 %v2190, %v2191
    %v2193 = vand.u32 %v2192, 4294901760
    %2194 = vmatpush.msra.mxu0 %v2193
    %v2195 = vand.u32 %v2124, 4294901760
    %2196 = vmatmul.f32.gmra.mxu0 %v2195
    %v2197 = vpop.f32.mrf.mxu0
    %v2198 = vadd.f32 %v2156, %v2197
    %v2199 = vand.u32 %v2127, 4294901760
    %2200 = vmatmul.f32.gmra.mxu0 %v2199
    %v2201 = vpop.f32.mrf.mxu0
    %v2202 = vadd.f32 %v2164, %v2201
    %v2203 = vand.u32 %v2130, 4294901760
    %2204 = vmatmul.f32.gmra.mxu0 %v2203
    %v2205 = vpop.f32.mrf.mxu0
    %v2206 = vadd.f32 %v2172, %v2205
    %2207 = vdwg.mxu0
    %2208 = vmatpush.msra.mxu0 0.0
    %2209 = vmatpush.msra.mxu0 0.0
    %2210 = vmatpush.msra.mxu0 0.0
    %2211 = vmatpush.msra.mxu0 0.0
    %2212 = vmatpush.msra.mxu0 0.0
    %2213 = vmatpush.msra.mxu0 0.0
    %2214 = vmatpush.msra.mxu0 0.0
    %2215 = vmatpush.msra.mxu0 0.0
    %2216 = vmatpush.msra.mxu0 0.0
    %2217 = vmatpush.msra.mxu0 0.0
    %2218 = vmatpush.msra.mxu0 0.0
    %2219 = vmatpush.msra.mxu0 0.0
    %2220 = vmatpush.msra.mxu0 0.0
    %2221 = vmatpush.msra.mxu0 0.0
    %2222 = vmatpush.msra.mxu0 0.0
    %v2223 = vand.u32 %v630, 4294901760
    %v2224 = vsub.f32 %v630, %v2223
    %2225 = vmatpush.msra.mxu0 %v2224
    %v2226 = vand.u32 %v2124, 4294901760
    %v2227 = vsub.f32 %v2124, %v2226
    %2228 = vmatmul.f32.gmra.mxu0 %v2227
    %v2229 = vpop.f32.mrf.mxu0
    %v2230 = vadd.f32 %v2198, %v2229
    %v2231 = vand.u32 %v2127, 4294901760
    %v2232 = vsub.f32 %v2127, %v2231
    %2233 = vmatmul.f32.gmra.mxu0 %v2232
    %v2234 = vpop.f32.mrf.mxu0
    %v2235 = vadd.f32 %v2202, %v2234
    %v2236 = vand.u32 %v2130, 4294901760
    %v2237 = vsub.f32 %v2130, %v2236
    %2238 = vmatmul.f32.gmra.mxu0 %v2237
    %v2239 = vpop.f32.mrf.mxu0
    %v2240 = vadd.f32 %v2206, %v2239
    %2241 = vdwg.mxu0
    %2242 = vmatpush.msra.mxu0 0.0
    %2243 = vmatpush.msra.mxu0 0.0
    %2244 = vmatpush.msra.mxu0 0.0
    %2245 = vmatpush.msra.mxu0 0.0
    %2246 = vmatpush.msra.mxu0 0.0
    %2247 = vmatpush.msra.mxu0 0.0
    %2248 = vmatpush.msra.mxu0 0.0
    %2249 = vmatpush.msra.mxu0 0.0
    %2250 = vmatpush.msra.mxu0 0.0
    %2251 = vmatpush.msra.mxu0 0.0
    %2252 = vmatpush.msra.mxu0 0.0
    %2253 = vmatpush.msra.mxu0 0.0
    %2254 = vmatpush.msra.mxu0 0.0
    %2255 = vmatpush.msra.mxu0 0.0
    %2256 = vmatpush.msra.mxu0 0.0
    %v2257 = vand.u32 %v630, 4294901760
    %2258 = vmatpush.msra.mxu0 %v2257
    %v2259 = vand.u32 %v2124, 4294901760
    %v2260 = vsub.f32 %v2124, %v2259
    %v2261 = vand.u32 %v2260, 4294901760
    %2262 = vmatmul.f32.gmra.mxu0 %v2261
    %v2263 = vpop.f32.mrf.mxu0
    %v2264 = vadd.f32 %v2230, %v2263
    %v2265 = vand.u32 %v2127, 4294901760
    %v2266 = vsub.f32 %v2127, %v2265
    %v2267 = vand.u32 %v2266, 4294901760
    %2268 = vmatmul.f32.gmra.mxu0 %v2267
    %v2269 = vpop.f32.mrf.mxu0
    %v2270 = vadd.f32 %v2235, %v2269
    %v2271 = vand.u32 %v2130, 4294901760
    %v2272 = vsub.f32 %v2130, %v2271
    %v2273 = vand.u32 %v2272, 4294901760
    %2274 = vmatmul.f32.gmra.mxu0 %v2273
    %v2275 = vpop.f32.mrf.mxu0
    %v2276 = vadd.f32 %v2240, %v2275
    %2277 = vdwg.mxu0
    %2278 = vmatpush.msra.mxu0 0.0
    %2279 = vmatpush.msra.mxu0 0.0
    %2280 = vmatpush.msra.mxu0 0.0
    %2281 = vmatpush.msra.mxu0 0.0
    %2282 = vmatpush.msra.mxu0 0.0
    %2283 = vmatpush.msra.mxu0 0.0
    %2284 = vmatpush.msra.mxu0 0.0
    %2285 = vmatpush.msra.mxu0 0.0
    %2286 = vmatpush.msra.mxu0 0.0
    %2287 = vmatpush.msra.mxu0 0.0
    %2288 = vmatpush.msra.mxu0 0.0
    %2289 = vmatpush.msra.mxu0 0.0
    %2290 = vmatpush.msra.mxu0 0.0
    %2291 = vmatpush.msra.mxu0 0.0
    %2292 = vmatpush.msra.mxu0 0.0
    %v2293 = vand.u32 %v630, 4294901760
    %v2294 = vsub.f32 %v630, %v2293
    %v2295 = vand.u32 %v2294, 4294901760
    %2296 = vmatpush.msra.mxu0 %v2295
    %v2297 = vand.u32 %v2124, 4294901760
    %2298 = vmatmul.f32.gmra.mxu0 %v2297
    %v2299 = vpop.f32.mrf.mxu0
    %v2300 = vadd.f32 %v2264, %v2299
    %v2301 = vand.u32 %v2127, 4294901760
    %2302 = vmatmul.f32.gmra.mxu0 %v2301
    %v2303 = vpop.f32.mrf.mxu0
    %v2304 = vadd.f32 %v2270, %v2303
    %v2305 = vand.u32 %v2130, 4294901760
    %2306 = vmatmul.f32.gmra.mxu0 %v2305
    %v2307 = vpop.f32.mrf.mxu0
    %v2308 = vadd.f32 %v2276, %v2307
    %2309 = vdwg.mxu0
    %2310 = vmatpush.msra.mxu0 0.0
    %2311 = vmatpush.msra.mxu0 0.0
    %2312 = vmatpush.msra.mxu0 0.0
    %2313 = vmatpush.msra.mxu0 0.0
    %2314 = vmatpush.msra.mxu0 0.0
    %2315 = vmatpush.msra.mxu0 0.0
    %2316 = vmatpush.msra.mxu0 0.0
    %2317 = vmatpush.msra.mxu0 0.0
    %2318 = vmatpush.msra.mxu0 0.0
    %2319 = vmatpush.msra.mxu0 0.0
    %2320 = vmatpush.msra.mxu0 0.0
    %2321 = vmatpush.msra.mxu0 0.0
    %2322 = vmatpush.msra.mxu0 0.0
    %2323 = vmatpush.msra.mxu0 0.0
    %2324 = vmatpush.msra.mxu0 0.0
    %v2325 = vand.u32 %v630, 4294901760
    %2326 = vmatpush.msra.mxu0 %v2325
    %v2327 = vand.u32 %v2124, 4294901760
    %2328 = vmatmul.f32.gmra.mxu0 %v2327
    %v2329 = vpop.f32.mrf.mxu0
    %v2330 = vadd.f32 %v2300, %v2329
    %v2331 = vand.u32 %v2127, 4294901760
    %2332 = vmatmul.f32.gmra.mxu0 %v2331
    %v2333 = vpop.f32.mrf.mxu0
    %v2334 = vadd.f32 %v2304, %v2333
    %v2335 = vand.u32 %v2130, 4294901760
    %2336 = vmatmul.f32.gmra.mxu0 %v2335
    %v2337 = vpop.f32.mrf.mxu0
    %v2338 = vadd.f32 %v2308, %v2337
    %2339 = vdwg.mxu0
    %v2341 = vsel %vm1471, %v1359, 0
    %v2344 = vsel %vm1471, %v1360, 0
    %v2347 = vsel %vm1471, %v1361, 0
    %2349 = vmatpush.msra.mxu0 0.0
    %2350 = vmatpush.msra.mxu0 0.0
    %2351 = vmatpush.msra.mxu0 0.0
    %2352 = vmatpush.msra.mxu0 0.0
    %2353 = vmatpush.msra.mxu0 0.0
    %2354 = vmatpush.msra.mxu0 0.0
    %2355 = vmatpush.msra.mxu0 0.0
    %2356 = vmatpush.msra.mxu0 0.0
    %2357 = vmatpush.msra.mxu0 0.0
    %2358 = vmatpush.msra.mxu0 0.0
    %2359 = vmatpush.msra.mxu0 0.0
    %2360 = vmatpush.msra.mxu0 0.0
    %2361 = vmatpush.msra.mxu0 0.0
    %2362 = vmatpush.msra.mxu0 0.0
    %2363 = vmatpush.msra.mxu0 0.0
    %v2364 = vand.u32 %v1313, 4294901760
    %2365 = vmatpush.msra.mxu0 %v2364
    %v2366 = vand.u32 %v2341, 4294901760
    %v2367 = vsub.f32 %v2341, %v2366
    %v2368 = vand.u32 %v2367, 4294901760
    %v2369 = vsub.f32 %v2367, %v2368
    %v2370 = vand.u32 %v2369, 4294901760
    %2371 = vmatmul.f32.gmra.mxu0 %v2370
    %v2372 = vpop.f32.mrf.mxu0
    %v2373 = vadd.f32 0.0, %v2372
    %v2374 = vand.u32 %v2344, 4294901760
    %v2375 = vsub.f32 %v2344, %v2374
    %v2376 = vand.u32 %v2375, 4294901760
    %v2377 = vsub.f32 %v2375, %v2376
    %v2378 = vand.u32 %v2377, 4294901760
    %2379 = vmatmul.f32.gmra.mxu0 %v2378
    %v2380 = vpop.f32.mrf.mxu0
    %v2381 = vadd.f32 0.0, %v2380
    %v2382 = vand.u32 %v2347, 4294901760
    %v2383 = vsub.f32 %v2347, %v2382
    %v2384 = vand.u32 %v2383, 4294901760
    %v2385 = vsub.f32 %v2383, %v2384
    %v2386 = vand.u32 %v2385, 4294901760
    %2387 = vmatmul.f32.gmra.mxu0 %v2386
    %v2388 = vpop.f32.mrf.mxu0
    %v2389 = vadd.f32 0.0, %v2388
    %2390 = vdwg.mxu0
    %2391 = vmatpush.msra.mxu0 0.0
    %2392 = vmatpush.msra.mxu0 0.0
    %2393 = vmatpush.msra.mxu0 0.0
    %2394 = vmatpush.msra.mxu0 0.0
    %2395 = vmatpush.msra.mxu0 0.0
    %2396 = vmatpush.msra.mxu0 0.0
    %2397 = vmatpush.msra.mxu0 0.0
    %2398 = vmatpush.msra.mxu0 0.0
    %2399 = vmatpush.msra.mxu0 0.0
    %2400 = vmatpush.msra.mxu0 0.0
    %2401 = vmatpush.msra.mxu0 0.0
    %2402 = vmatpush.msra.mxu0 0.0
    %2403 = vmatpush.msra.mxu0 0.0
    %2404 = vmatpush.msra.mxu0 0.0
    %2405 = vmatpush.msra.mxu0 0.0
    %v2406 = vand.u32 %v1313, 4294901760
    %v2407 = vsub.f32 %v1313, %v2406
    %v2408 = vand.u32 %v2407, 4294901760
    %v2409 = vsub.f32 %v2407, %v2408
    %v2410 = vand.u32 %v2409, 4294901760
    %2411 = vmatpush.msra.mxu0 %v2410
    %v2412 = vand.u32 %v2341, 4294901760
    %2413 = vmatmul.f32.gmra.mxu0 %v2412
    %v2414 = vpop.f32.mrf.mxu0
    %v2415 = vadd.f32 %v2373, %v2414
    %v2416 = vand.u32 %v2344, 4294901760
    %2417 = vmatmul.f32.gmra.mxu0 %v2416
    %v2418 = vpop.f32.mrf.mxu0
    %v2419 = vadd.f32 %v2381, %v2418
    %v2420 = vand.u32 %v2347, 4294901760
    %2421 = vmatmul.f32.gmra.mxu0 %v2420
    %v2422 = vpop.f32.mrf.mxu0
    %v2423 = vadd.f32 %v2389, %v2422
    %2424 = vdwg.mxu0
    %2425 = vmatpush.msra.mxu0 0.0
    %2426 = vmatpush.msra.mxu0 0.0
    %2427 = vmatpush.msra.mxu0 0.0
    %2428 = vmatpush.msra.mxu0 0.0
    %2429 = vmatpush.msra.mxu0 0.0
    %2430 = vmatpush.msra.mxu0 0.0
    %2431 = vmatpush.msra.mxu0 0.0
    %2432 = vmatpush.msra.mxu0 0.0
    %2433 = vmatpush.msra.mxu0 0.0
    %2434 = vmatpush.msra.mxu0 0.0
    %2435 = vmatpush.msra.mxu0 0.0
    %2436 = vmatpush.msra.mxu0 0.0
    %2437 = vmatpush.msra.mxu0 0.0
    %2438 = vmatpush.msra.mxu0 0.0
    %2439 = vmatpush.msra.mxu0 0.0
    %v2440 = vand.u32 %v1313, 4294901760
    %v2441 = vsub.f32 %v1313, %v2440
    %2442 = vmatpush.msra.mxu0 %v2441
    %v2443 = vand.u32 %v2341, 4294901760
    %v2444 = vsub.f32 %v2341, %v2443
    %2445 = vmatmul.f32.gmra.mxu0 %v2444
    %v2446 = vpop.f32.mrf.mxu0
    %v2447 = vadd.f32 %v2415, %v2446
    %v2448 = vand.u32 %v2344, 4294901760
    %v2449 = vsub.f32 %v2344, %v2448
    %2450 = vmatmul.f32.gmra.mxu0 %v2449
    %v2451 = vpop.f32.mrf.mxu0
    %v2452 = vadd.f32 %v2419, %v2451
    %v2453 = vand.u32 %v2347, 4294901760
    %v2454 = vsub.f32 %v2347, %v2453
    %2455 = vmatmul.f32.gmra.mxu0 %v2454
    %v2456 = vpop.f32.mrf.mxu0
    %v2457 = vadd.f32 %v2423, %v2456
    %2458 = vdwg.mxu0
    %2459 = vmatpush.msra.mxu0 0.0
    %2460 = vmatpush.msra.mxu0 0.0
    %2461 = vmatpush.msra.mxu0 0.0
    %2462 = vmatpush.msra.mxu0 0.0
    %2463 = vmatpush.msra.mxu0 0.0
    %2464 = vmatpush.msra.mxu0 0.0
    %2465 = vmatpush.msra.mxu0 0.0
    %2466 = vmatpush.msra.mxu0 0.0
    %2467 = vmatpush.msra.mxu0 0.0
    %2468 = vmatpush.msra.mxu0 0.0
    %2469 = vmatpush.msra.mxu0 0.0
    %2470 = vmatpush.msra.mxu0 0.0
    %2471 = vmatpush.msra.mxu0 0.0
    %2472 = vmatpush.msra.mxu0 0.0
    %2473 = vmatpush.msra.mxu0 0.0
    %v2474 = vand.u32 %v1313, 4294901760
    %2475 = vmatpush.msra.mxu0 %v2474
    %v2476 = vand.u32 %v2341, 4294901760
    %v2477 = vsub.f32 %v2341, %v2476
    %v2478 = vand.u32 %v2477, 4294901760
    %2479 = vmatmul.f32.gmra.mxu0 %v2478
    %v2480 = vpop.f32.mrf.mxu0
    %v2481 = vadd.f32 %v2447, %v2480
    %v2482 = vand.u32 %v2344, 4294901760
    %v2483 = vsub.f32 %v2344, %v2482
    %v2484 = vand.u32 %v2483, 4294901760
    %2485 = vmatmul.f32.gmra.mxu0 %v2484
    %v2486 = vpop.f32.mrf.mxu0
    %v2487 = vadd.f32 %v2452, %v2486
    %v2488 = vand.u32 %v2347, 4294901760
    %v2489 = vsub.f32 %v2347, %v2488
    %v2490 = vand.u32 %v2489, 4294901760
    %2491 = vmatmul.f32.gmra.mxu0 %v2490
    %v2492 = vpop.f32.mrf.mxu0
    %v2493 = vadd.f32 %v2457, %v2492
    %2494 = vdwg.mxu0
    %2495 = vmatpush.msra.mxu0 0.0
    %2496 = vmatpush.msra.mxu0 0.0
    %2497 = vmatpush.msra.mxu0 0.0
    %2498 = vmatpush.msra.mxu0 0.0
    %2499 = vmatpush.msra.mxu0 0.0
    %2500 = vmatpush.msra.mxu0 0.0
    %2501 = vmatpush.msra.mxu0 0.0
    %2502 = vmatpush.msra.mxu0 0.0
    %2503 = vmatpush.msra.mxu0 0.0
    %2504 = vmatpush.msra.mxu0 0.0
    %2505 = vmatpush.msra.mxu0 0.0
    %2506 = vmatpush.msra.mxu0 0.0
    %2507 = vmatpush.msra.mxu0 0.0
    %2508 = vmatpush.msra.mxu0 0.0
    %2509 = vmatpush.msra.mxu0 0.0
    %v2510 = vand.u32 %v1313, 4294901760
    %v2511 = vsub.f32 %v1313, %v2510
    %v2512 = vand.u32 %v2511, 4294901760
    %2513 = vmatpush.msra.mxu0 %v2512
    %v2514 = vand.u32 %v2341, 4294901760
    %2515 = vmatmul.f32.gmra.mxu0 %v2514
    %v2516 = vpop.f32.mrf.mxu0
    %v2517 = vadd.f32 %v2481, %v2516
    %v2518 = vand.u32 %v2344, 4294901760
    %2519 = vmatmul.f32.gmra.mxu0 %v2518
    %v2520 = vpop.f32.mrf.mxu0
    %v2521 = vadd.f32 %v2487, %v2520
    %v2522 = vand.u32 %v2347, 4294901760
    %2523 = vmatmul.f32.gmra.mxu0 %v2522
    %v2524 = vpop.f32.mrf.mxu0
    %v2525 = vadd.f32 %v2493, %v2524
    %2526 = vdwg.mxu0
    %2527 = vmatpush.msra.mxu0 0.0
    %2528 = vmatpush.msra.mxu0 0.0
    %2529 = vmatpush.msra.mxu0 0.0
    %2530 = vmatpush.msra.mxu0 0.0
    %2531 = vmatpush.msra.mxu0 0.0
    %2532 = vmatpush.msra.mxu0 0.0
    %2533 = vmatpush.msra.mxu0 0.0
    %2534 = vmatpush.msra.mxu0 0.0
    %2535 = vmatpush.msra.mxu0 0.0
    %2536 = vmatpush.msra.mxu0 0.0
    %2537 = vmatpush.msra.mxu0 0.0
    %2538 = vmatpush.msra.mxu0 0.0
    %2539 = vmatpush.msra.mxu0 0.0
    %2540 = vmatpush.msra.mxu0 0.0
    %2541 = vmatpush.msra.mxu0 0.0
    %v2542 = vand.u32 %v1313, 4294901760
    %2543 = vmatpush.msra.mxu0 %v2542
    %v2544 = vand.u32 %v2341, 4294901760
    %2545 = vmatmul.f32.gmra.mxu0 %v2544
    %v2546 = vpop.f32.mrf.mxu0
    %v2547 = vadd.f32 %v2517, %v2546
    %v2548 = vand.u32 %v2344, 4294901760
    %2549 = vmatmul.f32.gmra.mxu0 %v2548
    %v2550 = vpop.f32.mrf.mxu0
    %v2551 = vadd.f32 %v2521, %v2550
    %v2552 = vand.u32 %v2347, 4294901760
    %2553 = vmatmul.f32.gmra.mxu0 %v2552
    %v2554 = vpop.f32.mrf.mxu0
    %v2555 = vadd.f32 %v2525, %v2554
    %2556 = vdwg.mxu0
    %v2558 = vsel %vm1471, %v1391, 0
    %v2561 = vsel %vm1471, %v1392, 0
    %v2564 = vsel %vm1471, %v1393, 0
    %2566 = vmatpush.msra.mxu0 0.0
    %2567 = vmatpush.msra.mxu0 0.0
    %2568 = vmatpush.msra.mxu0 0.0
    %2569 = vmatpush.msra.mxu0 0.0
    %2570 = vmatpush.msra.mxu0 0.0
    %2571 = vmatpush.msra.mxu0 0.0
    %2572 = vmatpush.msra.mxu0 0.0
    %2573 = vmatpush.msra.mxu0 0.0
    %2574 = vmatpush.msra.mxu0 0.0
    %2575 = vmatpush.msra.mxu0 0.0
    %2576 = vmatpush.msra.mxu0 0.0
    %2577 = vmatpush.msra.mxu0 0.0
    %2578 = vmatpush.msra.mxu0 0.0
    %2579 = vmatpush.msra.mxu0 0.0
    %2580 = vmatpush.msra.mxu0 0.0
    %v2581 = vand.u32 %v1317, 4294901760
    %2582 = vmatpush.msra.mxu0 %v2581
    %v2583 = vand.u32 %v2558, 4294901760
    %v2584 = vsub.f32 %v2558, %v2583
    %v2585 = vand.u32 %v2584, 4294901760
    %v2586 = vsub.f32 %v2584, %v2585
    %v2587 = vand.u32 %v2586, 4294901760
    %2588 = vmatmul.f32.gmra.mxu0 %v2587
    %v2589 = vpop.f32.mrf.mxu0
    %v2590 = vadd.f32 0.0, %v2589
    %v2591 = vand.u32 %v2561, 4294901760
    %v2592 = vsub.f32 %v2561, %v2591
    %v2593 = vand.u32 %v2592, 4294901760
    %v2594 = vsub.f32 %v2592, %v2593
    %v2595 = vand.u32 %v2594, 4294901760
    %2596 = vmatmul.f32.gmra.mxu0 %v2595
    %v2597 = vpop.f32.mrf.mxu0
    %v2598 = vadd.f32 0.0, %v2597
    %v2599 = vand.u32 %v2564, 4294901760
    %v2600 = vsub.f32 %v2564, %v2599
    %v2601 = vand.u32 %v2600, 4294901760
    %v2602 = vsub.f32 %v2600, %v2601
    %v2603 = vand.u32 %v2602, 4294901760
    %2604 = vmatmul.f32.gmra.mxu0 %v2603
    %v2605 = vpop.f32.mrf.mxu0
    %v2606 = vadd.f32 0.0, %v2605
    %2607 = vdwg.mxu0
    %2608 = vmatpush.msra.mxu0 0.0
    %2609 = vmatpush.msra.mxu0 0.0
    %2610 = vmatpush.msra.mxu0 0.0
    %2611 = vmatpush.msra.mxu0 0.0
    %2612 = vmatpush.msra.mxu0 0.0
    %2613 = vmatpush.msra.mxu0 0.0
    %2614 = vmatpush.msra.mxu0 0.0
    %2615 = vmatpush.msra.mxu0 0.0
    %2616 = vmatpush.msra.mxu0 0.0
    %2617 = vmatpush.msra.mxu0 0.0
    %2618 = vmatpush.msra.mxu0 0.0
    %2619 = vmatpush.msra.mxu0 0.0
    %2620 = vmatpush.msra.mxu0 0.0
    %2621 = vmatpush.msra.mxu0 0.0
    %2622 = vmatpush.msra.mxu0 0.0
    %v2623 = vand.u32 %v1317, 4294901760
    %v2624 = vsub.f32 %v1317, %v2623
    %v2625 = vand.u32 %v2624, 4294901760
    %v2626 = vsub.f32 %v2624, %v2625
    %v2627 = vand.u32 %v2626, 4294901760
    %2628 = vmatpush.msra.mxu0 %v2627
    %v2629 = vand.u32 %v2558, 4294901760
    %2630 = vmatmul.f32.gmra.mxu0 %v2629
    %v2631 = vpop.f32.mrf.mxu0
    %v2632 = vadd.f32 %v2590, %v2631
    %v2633 = vand.u32 %v2561, 4294901760
    %2634 = vmatmul.f32.gmra.mxu0 %v2633
    %v2635 = vpop.f32.mrf.mxu0
    %v2636 = vadd.f32 %v2598, %v2635
    %v2637 = vand.u32 %v2564, 4294901760
    %2638 = vmatmul.f32.gmra.mxu0 %v2637
    %v2639 = vpop.f32.mrf.mxu0
    %v2640 = vadd.f32 %v2606, %v2639
    %2641 = vdwg.mxu0
    %2642 = vmatpush.msra.mxu0 0.0
    %2643 = vmatpush.msra.mxu0 0.0
    %2644 = vmatpush.msra.mxu0 0.0
    %2645 = vmatpush.msra.mxu0 0.0
    %2646 = vmatpush.msra.mxu0 0.0
    %2647 = vmatpush.msra.mxu0 0.0
    %2648 = vmatpush.msra.mxu0 0.0
    %2649 = vmatpush.msra.mxu0 0.0
    %2650 = vmatpush.msra.mxu0 0.0
    %2651 = vmatpush.msra.mxu0 0.0
    %2652 = vmatpush.msra.mxu0 0.0
    %2653 = vmatpush.msra.mxu0 0.0
    %2654 = vmatpush.msra.mxu0 0.0
    %2655 = vmatpush.msra.mxu0 0.0
    %2656 = vmatpush.msra.mxu0 0.0
    %v2657 = vand.u32 %v1317, 4294901760
    %v2658 = vsub.f32 %v1317, %v2657
    %2659 = vmatpush.msra.mxu0 %v2658
    %v2660 = vand.u32 %v2558, 4294901760
    %v2661 = vsub.f32 %v2558, %v2660
    %2662 = vmatmul.f32.gmra.mxu0 %v2661
    %v2663 = vpop.f32.mrf.mxu0
    %v2664 = vadd.f32 %v2632, %v2663
    %v2665 = vand.u32 %v2561, 4294901760
    %v2666 = vsub.f32 %v2561, %v2665
    %2667 = vmatmul.f32.gmra.mxu0 %v2666
    %v2668 = vpop.f32.mrf.mxu0
    %v2669 = vadd.f32 %v2636, %v2668
    %v2670 = vand.u32 %v2564, 4294901760
    %v2671 = vsub.f32 %v2564, %v2670
    %2672 = vmatmul.f32.gmra.mxu0 %v2671
    %v2673 = vpop.f32.mrf.mxu0
    %v2674 = vadd.f32 %v2640, %v2673
    %2675 = vdwg.mxu0
    %2676 = vmatpush.msra.mxu0 0.0
    %2677 = vmatpush.msra.mxu0 0.0
    %2678 = vmatpush.msra.mxu0 0.0
    %2679 = vmatpush.msra.mxu0 0.0
    %2680 = vmatpush.msra.mxu0 0.0
    %2681 = vmatpush.msra.mxu0 0.0
    %2682 = vmatpush.msra.mxu0 0.0
    %2683 = vmatpush.msra.mxu0 0.0
    %2684 = vmatpush.msra.mxu0 0.0
    %2685 = vmatpush.msra.mxu0 0.0
    %2686 = vmatpush.msra.mxu0 0.0
    %2687 = vmatpush.msra.mxu0 0.0
    %2688 = vmatpush.msra.mxu0 0.0
    %2689 = vmatpush.msra.mxu0 0.0
    %2690 = vmatpush.msra.mxu0 0.0
    %v2691 = vand.u32 %v1317, 4294901760
    %2692 = vmatpush.msra.mxu0 %v2691
    %v2693 = vand.u32 %v2558, 4294901760
    %v2694 = vsub.f32 %v2558, %v2693
    %v2695 = vand.u32 %v2694, 4294901760
    %2696 = vmatmul.f32.gmra.mxu0 %v2695
    %v2697 = vpop.f32.mrf.mxu0
    %v2698 = vadd.f32 %v2664, %v2697
    %v2699 = vand.u32 %v2561, 4294901760
    %v2700 = vsub.f32 %v2561, %v2699
    %v2701 = vand.u32 %v2700, 4294901760
    %2702 = vmatmul.f32.gmra.mxu0 %v2701
    %v2703 = vpop.f32.mrf.mxu0
    %v2704 = vadd.f32 %v2669, %v2703
    %v2705 = vand.u32 %v2564, 4294901760
    %v2706 = vsub.f32 %v2564, %v2705
    %v2707 = vand.u32 %v2706, 4294901760
    %2708 = vmatmul.f32.gmra.mxu0 %v2707
    %v2709 = vpop.f32.mrf.mxu0
    %v2710 = vadd.f32 %v2674, %v2709
    %2711 = vdwg.mxu0
    %2712 = vmatpush.msra.mxu0 0.0
    %2713 = vmatpush.msra.mxu0 0.0
    %2714 = vmatpush.msra.mxu0 0.0
    %2715 = vmatpush.msra.mxu0 0.0
    %2716 = vmatpush.msra.mxu0 0.0
    %2717 = vmatpush.msra.mxu0 0.0
    %2718 = vmatpush.msra.mxu0 0.0
    %2719 = vmatpush.msra.mxu0 0.0
    %2720 = vmatpush.msra.mxu0 0.0
    %2721 = vmatpush.msra.mxu0 0.0
    %2722 = vmatpush.msra.mxu0 0.0
    %2723 = vmatpush.msra.mxu0 0.0
    %2724 = vmatpush.msra.mxu0 0.0
    %2725 = vmatpush.msra.mxu0 0.0
    %2726 = vmatpush.msra.mxu0 0.0
    %v2727 = vand.u32 %v1317, 4294901760
    %v2728 = vsub.f32 %v1317, %v2727
    %v2729 = vand.u32 %v2728, 4294901760
    %2730 = vmatpush.msra.mxu0 %v2729
    %v2731 = vand.u32 %v2558, 4294901760
    %2732 = vmatmul.f32.gmra.mxu0 %v2731
    %v2733 = vpop.f32.mrf.mxu0
    %v2734 = vadd.f32 %v2698, %v2733
    %v2735 = vand.u32 %v2561, 4294901760
    %2736 = vmatmul.f32.gmra.mxu0 %v2735
    %v2737 = vpop.f32.mrf.mxu0
    %v2738 = vadd.f32 %v2704, %v2737
    %v2739 = vand.u32 %v2564, 4294901760
    %2740 = vmatmul.f32.gmra.mxu0 %v2739
    %v2741 = vpop.f32.mrf.mxu0
    %v2742 = vadd.f32 %v2710, %v2741
    %2743 = vdwg.mxu0
    %2744 = vmatpush.msra.mxu0 0.0
    %2745 = vmatpush.msra.mxu0 0.0
    %2746 = vmatpush.msra.mxu0 0.0
    %2747 = vmatpush.msra.mxu0 0.0
    %2748 = vmatpush.msra.mxu0 0.0
    %2749 = vmatpush.msra.mxu0 0.0
    %2750 = vmatpush.msra.mxu0 0.0
    %2751 = vmatpush.msra.mxu0 0.0
    %2752 = vmatpush.msra.mxu0 0.0
    %2753 = vmatpush.msra.mxu0 0.0
    %2754 = vmatpush.msra.mxu0 0.0
    %2755 = vmatpush.msra.mxu0 0.0
    %2756 = vmatpush.msra.mxu0 0.0
    %2757 = vmatpush.msra.mxu0 0.0
    %2758 = vmatpush.msra.mxu0 0.0
    %v2759 = vand.u32 %v1317, 4294901760
    %2760 = vmatpush.msra.mxu0 %v2759
    %v2761 = vand.u32 %v2558, 4294901760
    %2762 = vmatmul.f32.gmra.mxu0 %v2761
    %v2763 = vpop.f32.mrf.mxu0
    %v2764 = vadd.f32 %v2734, %v2763
    %v2765 = vand.u32 %v2561, 4294901760
    %2766 = vmatmul.f32.gmra.mxu0 %v2765
    %v2767 = vpop.f32.mrf.mxu0
    %v2768 = vadd.f32 %v2738, %v2767
    %v2769 = vand.u32 %v2564, 4294901760
    %2770 = vmatmul.f32.gmra.mxu0 %v2769
    %v2771 = vpop.f32.mrf.mxu0
    %v2772 = vadd.f32 %v2742, %v2771
    %2773 = vdwg.mxu0
    %v2775 = vsel %vm1471, %v1423, 0
    %v2778 = vsel %vm1471, %v1424, 0
    %v2781 = vsel %vm1471, %v1425, 0
    %2783 = vmatpush.msra.mxu0 0.0
    %2784 = vmatpush.msra.mxu0 0.0
    %2785 = vmatpush.msra.mxu0 0.0
    %2786 = vmatpush.msra.mxu0 0.0
    %2787 = vmatpush.msra.mxu0 0.0
    %2788 = vmatpush.msra.mxu0 0.0
    %2789 = vmatpush.msra.mxu0 0.0
    %2790 = vmatpush.msra.mxu0 0.0
    %2791 = vmatpush.msra.mxu0 0.0
    %2792 = vmatpush.msra.mxu0 0.0
    %2793 = vmatpush.msra.mxu0 0.0
    %2794 = vmatpush.msra.mxu0 0.0
    %2795 = vmatpush.msra.mxu0 0.0
    %2796 = vmatpush.msra.mxu0 0.0
    %2797 = vmatpush.msra.mxu0 0.0
    %v2798 = vand.u32 %v1321, 4294901760
    %2799 = vmatpush.msra.mxu0 %v2798
    %v2800 = vand.u32 %v2775, 4294901760
    %v2801 = vsub.f32 %v2775, %v2800
    %v2802 = vand.u32 %v2801, 4294901760
    %v2803 = vsub.f32 %v2801, %v2802
    %v2804 = vand.u32 %v2803, 4294901760
    %2805 = vmatmul.f32.gmra.mxu0 %v2804
    %v2806 = vpop.f32.mrf.mxu0
    %v2807 = vadd.f32 0.0, %v2806
    %v2808 = vand.u32 %v2778, 4294901760
    %v2809 = vsub.f32 %v2778, %v2808
    %v2810 = vand.u32 %v2809, 4294901760
    %v2811 = vsub.f32 %v2809, %v2810
    %v2812 = vand.u32 %v2811, 4294901760
    %2813 = vmatmul.f32.gmra.mxu0 %v2812
    %v2814 = vpop.f32.mrf.mxu0
    %v2815 = vadd.f32 0.0, %v2814
    %v2816 = vand.u32 %v2781, 4294901760
    %v2817 = vsub.f32 %v2781, %v2816
    %v2818 = vand.u32 %v2817, 4294901760
    %v2819 = vsub.f32 %v2817, %v2818
    %v2820 = vand.u32 %v2819, 4294901760
    %2821 = vmatmul.f32.gmra.mxu0 %v2820
    %v2822 = vpop.f32.mrf.mxu0
    %v2823 = vadd.f32 0.0, %v2822
    %2824 = vdwg.mxu0
    %2825 = vmatpush.msra.mxu0 0.0
    %2826 = vmatpush.msra.mxu0 0.0
    %2827 = vmatpush.msra.mxu0 0.0
    %2828 = vmatpush.msra.mxu0 0.0
    %2829 = vmatpush.msra.mxu0 0.0
    %2830 = vmatpush.msra.mxu0 0.0
    %2831 = vmatpush.msra.mxu0 0.0
    %2832 = vmatpush.msra.mxu0 0.0
    %2833 = vmatpush.msra.mxu0 0.0
    %2834 = vmatpush.msra.mxu0 0.0
    %2835 = vmatpush.msra.mxu0 0.0
    %2836 = vmatpush.msra.mxu0 0.0
    %2837 = vmatpush.msra.mxu0 0.0
    %2838 = vmatpush.msra.mxu0 0.0
    %2839 = vmatpush.msra.mxu0 0.0
    %v2840 = vand.u32 %v1321, 4294901760
    %v2841 = vsub.f32 %v1321, %v2840
    %v2842 = vand.u32 %v2841, 4294901760
    %v2843 = vsub.f32 %v2841, %v2842
    %v2844 = vand.u32 %v2843, 4294901760
    %2845 = vmatpush.msra.mxu0 %v2844
    %v2846 = vand.u32 %v2775, 4294901760
    %2847 = vmatmul.f32.gmra.mxu0 %v2846
    %v2848 = vpop.f32.mrf.mxu0
    %v2849 = vadd.f32 %v2807, %v2848
    %v2850 = vand.u32 %v2778, 4294901760
    %2851 = vmatmul.f32.gmra.mxu0 %v2850
    %v2852 = vpop.f32.mrf.mxu0
    %v2853 = vadd.f32 %v2815, %v2852
    %v2854 = vand.u32 %v2781, 4294901760
    %2855 = vmatmul.f32.gmra.mxu0 %v2854
    %v2856 = vpop.f32.mrf.mxu0
    %v2857 = vadd.f32 %v2823, %v2856
    %2858 = vdwg.mxu0
    %2859 = vmatpush.msra.mxu0 0.0
    %2860 = vmatpush.msra.mxu0 0.0
    %2861 = vmatpush.msra.mxu0 0.0
    %2862 = vmatpush.msra.mxu0 0.0
    %2863 = vmatpush.msra.mxu0 0.0
    %2864 = vmatpush.msra.mxu0 0.0
    %2865 = vmatpush.msra.mxu0 0.0
    %2866 = vmatpush.msra.mxu0 0.0
    %2867 = vmatpush.msra.mxu0 0.0
    %2868 = vmatpush.msra.mxu0 0.0
    %2869 = vmatpush.msra.mxu0 0.0
    %2870 = vmatpush.msra.mxu0 0.0
    %2871 = vmatpush.msra.mxu0 0.0
    %2872 = vmatpush.msra.mxu0 0.0
    %2873 = vmatpush.msra.mxu0 0.0
    %v2874 = vand.u32 %v1321, 4294901760
    %v2875 = vsub.f32 %v1321, %v2874
    %2876 = vmatpush.msra.mxu0 %v2875
    %v2877 = vand.u32 %v2775, 4294901760
    %v2878 = vsub.f32 %v2775, %v2877
    %2879 = vmatmul.f32.gmra.mxu0 %v2878
    %v2880 = vpop.f32.mrf.mxu0
    %v2881 = vadd.f32 %v2849, %v2880
    %v2882 = vand.u32 %v2778, 4294901760
    %v2883 = vsub.f32 %v2778, %v2882
    %2884 = vmatmul.f32.gmra.mxu0 %v2883
    %v2885 = vpop.f32.mrf.mxu0
    %v2886 = vadd.f32 %v2853, %v2885
    %v2887 = vand.u32 %v2781, 4294901760
    %v2888 = vsub.f32 %v2781, %v2887
    %2889 = vmatmul.f32.gmra.mxu0 %v2888
    %v2890 = vpop.f32.mrf.mxu0
    %v2891 = vadd.f32 %v2857, %v2890
    %2892 = vdwg.mxu0
    %2893 = vmatpush.msra.mxu0 0.0
    %2894 = vmatpush.msra.mxu0 0.0
    %2895 = vmatpush.msra.mxu0 0.0
    %2896 = vmatpush.msra.mxu0 0.0
    %2897 = vmatpush.msra.mxu0 0.0
    %2898 = vmatpush.msra.mxu0 0.0
    %2899 = vmatpush.msra.mxu0 0.0
    %2900 = vmatpush.msra.mxu0 0.0
    %2901 = vmatpush.msra.mxu0 0.0
    %2902 = vmatpush.msra.mxu0 0.0
    %2903 = vmatpush.msra.mxu0 0.0
    %2904 = vmatpush.msra.mxu0 0.0
    %2905 = vmatpush.msra.mxu0 0.0
    %2906 = vmatpush.msra.mxu0 0.0
    %2907 = vmatpush.msra.mxu0 0.0
    %v2908 = vand.u32 %v1321, 4294901760
    %2909 = vmatpush.msra.mxu0 %v2908
    %v2910 = vand.u32 %v2775, 4294901760
    %v2911 = vsub.f32 %v2775, %v2910
    %v2912 = vand.u32 %v2911, 4294901760
    %2913 = vmatmul.f32.gmra.mxu0 %v2912
    %v2914 = vpop.f32.mrf.mxu0
    %v2915 = vadd.f32 %v2881, %v2914
    %v2916 = vand.u32 %v2778, 4294901760
    %v2917 = vsub.f32 %v2778, %v2916
    %v2918 = vand.u32 %v2917, 4294901760
    %2919 = vmatmul.f32.gmra.mxu0 %v2918
    %v2920 = vpop.f32.mrf.mxu0
    %v2921 = vadd.f32 %v2886, %v2920
    %v2922 = vand.u32 %v2781, 4294901760
    %v2923 = vsub.f32 %v2781, %v2922
    %v2924 = vand.u32 %v2923, 4294901760
    %2925 = vmatmul.f32.gmra.mxu0 %v2924
    %v2926 = vpop.f32.mrf.mxu0
    %v2927 = vadd.f32 %v2891, %v2926
    %2928 = vdwg.mxu0
    %2929 = vmatpush.msra.mxu0 0.0
    %2930 = vmatpush.msra.mxu0 0.0
    %2931 = vmatpush.msra.mxu0 0.0
    %2932 = vmatpush.msra.mxu0 0.0
    %2933 = vmatpush.msra.mxu0 0.0
    %2934 = vmatpush.msra.mxu0 0.0
    %2935 = vmatpush.msra.mxu0 0.0
    %2936 = vmatpush.msra.mxu0 0.0
    %2937 = vmatpush.msra.mxu0 0.0
    %2938 = vmatpush.msra.mxu0 0.0
    %2939 = vmatpush.msra.mxu0 0.0
    %2940 = vmatpush.msra.mxu0 0.0
    %2941 = vmatpush.msra.mxu0 0.0
    %2942 = vmatpush.msra.mxu0 0.0
    %2943 = vmatpush.msra.mxu0 0.0
    %v2944 = vand.u32 %v1321, 4294901760
    %v2945 = vsub.f32 %v1321, %v2944
    %v2946 = vand.u32 %v2945, 4294901760
    %2947 = vmatpush.msra.mxu0 %v2946
    %v2948 = vand.u32 %v2775, 4294901760
    %2949 = vmatmul.f32.gmra.mxu0 %v2948
    %v2950 = vpop.f32.mrf.mxu0
    %v2951 = vadd.f32 %v2915, %v2950
    %v2952 = vand.u32 %v2778, 4294901760
    %2953 = vmatmul.f32.gmra.mxu0 %v2952
    %v2954 = vpop.f32.mrf.mxu0
    %v2955 = vadd.f32 %v2921, %v2954
    %v2956 = vand.u32 %v2781, 4294901760
    %2957 = vmatmul.f32.gmra.mxu0 %v2956
    %v2958 = vpop.f32.mrf.mxu0
    %v2959 = vadd.f32 %v2927, %v2958
    %2960 = vdwg.mxu0
    %2961 = vmatpush.msra.mxu0 0.0
    %2962 = vmatpush.msra.mxu0 0.0
    %2963 = vmatpush.msra.mxu0 0.0
    %2964 = vmatpush.msra.mxu0 0.0
    %2965 = vmatpush.msra.mxu0 0.0
    %2966 = vmatpush.msra.mxu0 0.0
    %2967 = vmatpush.msra.mxu0 0.0
    %2968 = vmatpush.msra.mxu0 0.0
    %2969 = vmatpush.msra.mxu0 0.0
    %2970 = vmatpush.msra.mxu0 0.0
    %2971 = vmatpush.msra.mxu0 0.0
    %2972 = vmatpush.msra.mxu0 0.0
    %2973 = vmatpush.msra.mxu0 0.0
    %2974 = vmatpush.msra.mxu0 0.0
    %2975 = vmatpush.msra.mxu0 0.0
    %v2976 = vand.u32 %v1321, 4294901760
    %2977 = vmatpush.msra.mxu0 %v2976
    %v2978 = vand.u32 %v2775, 4294901760
    %2979 = vmatmul.f32.gmra.mxu0 %v2978
    %v2980 = vpop.f32.mrf.mxu0
    %v2981 = vadd.f32 %v2951, %v2980
    %v2982 = vand.u32 %v2778, 4294901760
    %2983 = vmatmul.f32.gmra.mxu0 %v2982
    %v2984 = vpop.f32.mrf.mxu0
    %v2985 = vadd.f32 %v2955, %v2984
    %v2986 = vand.u32 %v2781, 4294901760
    %2987 = vmatmul.f32.gmra.mxu0 %v2986
    %v2988 = vpop.f32.mrf.mxu0
    %v2989 = vadd.f32 %v2959, %v2988
    %2990 = vdwg.mxu0
    %v2992 = vsel %vm1471, %v1455, 0
    %v2995 = vsel %vm1471, %v1456, 0
    %v2998 = vsel %vm1471, %v1457, 0
    %3000 = vmatpush.msra.mxu0 0.0
    %3001 = vmatpush.msra.mxu0 0.0
    %3002 = vmatpush.msra.mxu0 0.0
    %3003 = vmatpush.msra.mxu0 0.0
    %3004 = vmatpush.msra.mxu0 0.0
    %3005 = vmatpush.msra.mxu0 0.0
    %3006 = vmatpush.msra.mxu0 0.0
    %3007 = vmatpush.msra.mxu0 0.0
    %3008 = vmatpush.msra.mxu0 0.0
    %3009 = vmatpush.msra.mxu0 0.0
    %3010 = vmatpush.msra.mxu0 0.0
    %3011 = vmatpush.msra.mxu0 0.0
    %3012 = vmatpush.msra.mxu0 0.0
    %3013 = vmatpush.msra.mxu0 0.0
    %3014 = vmatpush.msra.mxu0 0.0
    %v3015 = vand.u32 %v1325, 4294901760
    %3016 = vmatpush.msra.mxu0 %v3015
    %v3017 = vand.u32 %v2992, 4294901760
    %v3018 = vsub.f32 %v2992, %v3017
    %v3019 = vand.u32 %v3018, 4294901760
    %v3020 = vsub.f32 %v3018, %v3019
    %v3021 = vand.u32 %v3020, 4294901760
    %3022 = vmatmul.f32.gmra.mxu0 %v3021
    %v3023 = vpop.f32.mrf.mxu0
    %v3024 = vadd.f32 0.0, %v3023
    %v3025 = vand.u32 %v2995, 4294901760
    %v3026 = vsub.f32 %v2995, %v3025
    %v3027 = vand.u32 %v3026, 4294901760
    %v3028 = vsub.f32 %v3026, %v3027
    %v3029 = vand.u32 %v3028, 4294901760
    %3030 = vmatmul.f32.gmra.mxu0 %v3029
    %v3031 = vpop.f32.mrf.mxu0
    %v3032 = vadd.f32 0.0, %v3031
    %v3033 = vand.u32 %v2998, 4294901760
    %v3034 = vsub.f32 %v2998, %v3033
    %v3035 = vand.u32 %v3034, 4294901760
    %v3036 = vsub.f32 %v3034, %v3035
    %v3037 = vand.u32 %v3036, 4294901760
    %3038 = vmatmul.f32.gmra.mxu0 %v3037
    %v3039 = vpop.f32.mrf.mxu0
    %v3040 = vadd.f32 0.0, %v3039
    %3041 = vdwg.mxu0
    %3042 = vmatpush.msra.mxu0 0.0
    %3043 = vmatpush.msra.mxu0 0.0
    %3044 = vmatpush.msra.mxu0 0.0
    %3045 = vmatpush.msra.mxu0 0.0
    %3046 = vmatpush.msra.mxu0 0.0
    %3047 = vmatpush.msra.mxu0 0.0
    %3048 = vmatpush.msra.mxu0 0.0
    %3049 = vmatpush.msra.mxu0 0.0
    %3050 = vmatpush.msra.mxu0 0.0
    %3051 = vmatpush.msra.mxu0 0.0
    %3052 = vmatpush.msra.mxu0 0.0
    %3053 = vmatpush.msra.mxu0 0.0
    %3054 = vmatpush.msra.mxu0 0.0
    %3055 = vmatpush.msra.mxu0 0.0
    %3056 = vmatpush.msra.mxu0 0.0
    %v3057 = vand.u32 %v1325, 4294901760
    %v3058 = vsub.f32 %v1325, %v3057
    %v3059 = vand.u32 %v3058, 4294901760
    %v3060 = vsub.f32 %v3058, %v3059
    %v3061 = vand.u32 %v3060, 4294901760
    %3062 = vmatpush.msra.mxu0 %v3061
    %v3063 = vand.u32 %v2992, 4294901760
    %3064 = vmatmul.f32.gmra.mxu0 %v3063
    %v3065 = vpop.f32.mrf.mxu0
    %v3066 = vadd.f32 %v3024, %v3065
    %v3067 = vand.u32 %v2995, 4294901760
    %3068 = vmatmul.f32.gmra.mxu0 %v3067
    %v3069 = vpop.f32.mrf.mxu0
    %v3070 = vadd.f32 %v3032, %v3069
    %v3071 = vand.u32 %v2998, 4294901760
    %3072 = vmatmul.f32.gmra.mxu0 %v3071
    %v3073 = vpop.f32.mrf.mxu0
    %v3074 = vadd.f32 %v3040, %v3073
    %3075 = vdwg.mxu0
    %3076 = vmatpush.msra.mxu0 0.0
    %3077 = vmatpush.msra.mxu0 0.0
    %3078 = vmatpush.msra.mxu0 0.0
    %3079 = vmatpush.msra.mxu0 0.0
    %3080 = vmatpush.msra.mxu0 0.0
    %3081 = vmatpush.msra.mxu0 0.0
    %3082 = vmatpush.msra.mxu0 0.0
    %3083 = vmatpush.msra.mxu0 0.0
    %3084 = vmatpush.msra.mxu0 0.0
    %3085 = vmatpush.msra.mxu0 0.0
    %3086 = vmatpush.msra.mxu0 0.0
    %3087 = vmatpush.msra.mxu0 0.0
    %3088 = vmatpush.msra.mxu0 0.0
    %3089 = vmatpush.msra.mxu0 0.0
    %3090 = vmatpush.msra.mxu0 0.0
    %v3091 = vand.u32 %v1325, 4294901760
    %v3092 = vsub.f32 %v1325, %v3091
    %3093 = vmatpush.msra.mxu0 %v3092
    %v3094 = vand.u32 %v2992, 4294901760
    %v3095 = vsub.f32 %v2992, %v3094
    %3096 = vmatmul.f32.gmra.mxu0 %v3095
    %v3097 = vpop.f32.mrf.mxu0
    %v3098 = vadd.f32 %v3066, %v3097
    %v3099 = vand.u32 %v2995, 4294901760
    %v3100 = vsub.f32 %v2995, %v3099
    %3101 = vmatmul.f32.gmra.mxu0 %v3100
    %v3102 = vpop.f32.mrf.mxu0
    %v3103 = vadd.f32 %v3070, %v3102
    %v3104 = vand.u32 %v2998, 4294901760
    %v3105 = vsub.f32 %v2998, %v3104
    %3106 = vmatmul.f32.gmra.mxu0 %v3105
    %v3107 = vpop.f32.mrf.mxu0
    %v3108 = vadd.f32 %v3074, %v3107
    %3109 = vdwg.mxu0
    %3110 = vmatpush.msra.mxu0 0.0
    %3111 = vmatpush.msra.mxu0 0.0
    %3112 = vmatpush.msra.mxu0 0.0
    %3113 = vmatpush.msra.mxu0 0.0
    %3114 = vmatpush.msra.mxu0 0.0
    %3115 = vmatpush.msra.mxu0 0.0
    %3116 = vmatpush.msra.mxu0 0.0
    %3117 = vmatpush.msra.mxu0 0.0
    %3118 = vmatpush.msra.mxu0 0.0
    %3119 = vmatpush.msra.mxu0 0.0
    %3120 = vmatpush.msra.mxu0 0.0
    %3121 = vmatpush.msra.mxu0 0.0
    %3122 = vmatpush.msra.mxu0 0.0
    %3123 = vmatpush.msra.mxu0 0.0
    %3124 = vmatpush.msra.mxu0 0.0
    %v3125 = vand.u32 %v1325, 4294901760
    %3126 = vmatpush.msra.mxu0 %v3125
    %v3127 = vand.u32 %v2992, 4294901760
    %v3128 = vsub.f32 %v2992, %v3127
    %v3129 = vand.u32 %v3128, 4294901760
    %3130 = vmatmul.f32.gmra.mxu0 %v3129
    %v3131 = vpop.f32.mrf.mxu0
    %v3132 = vadd.f32 %v3098, %v3131
    %v3133 = vand.u32 %v2995, 4294901760
    %v3134 = vsub.f32 %v2995, %v3133
    %v3135 = vand.u32 %v3134, 4294901760
    %3136 = vmatmul.f32.gmra.mxu0 %v3135
    %v3137 = vpop.f32.mrf.mxu0
    %v3138 = vadd.f32 %v3103, %v3137
    %v3139 = vand.u32 %v2998, 4294901760
    %v3140 = vsub.f32 %v2998, %v3139
    %v3141 = vand.u32 %v3140, 4294901760
    %3142 = vmatmul.f32.gmra.mxu0 %v3141
    %v3143 = vpop.f32.mrf.mxu0
    %v3144 = vadd.f32 %v3108, %v3143
    %3145 = vdwg.mxu0
    %3146 = vmatpush.msra.mxu0 0.0
    %3147 = vmatpush.msra.mxu0 0.0
    %3148 = vmatpush.msra.mxu0 0.0
    %3149 = vmatpush.msra.mxu0 0.0
    %3150 = vmatpush.msra.mxu0 0.0
    %3151 = vmatpush.msra.mxu0 0.0
    %3152 = vmatpush.msra.mxu0 0.0
    %3153 = vmatpush.msra.mxu0 0.0
    %3154 = vmatpush.msra.mxu0 0.0
    %3155 = vmatpush.msra.mxu0 0.0
    %3156 = vmatpush.msra.mxu0 0.0
    %3157 = vmatpush.msra.mxu0 0.0
    %3158 = vmatpush.msra.mxu0 0.0
    %3159 = vmatpush.msra.mxu0 0.0
    %3160 = vmatpush.msra.mxu0 0.0
    %v3161 = vand.u32 %v1325, 4294901760
    %v3162 = vsub.f32 %v1325, %v3161
    %v3163 = vand.u32 %v3162, 4294901760
    %3164 = vmatpush.msra.mxu0 %v3163
    %v3165 = vand.u32 %v2992, 4294901760
    %3166 = vmatmul.f32.gmra.mxu0 %v3165
    %v3167 = vpop.f32.mrf.mxu0
    %v3168 = vadd.f32 %v3132, %v3167
    %v3169 = vand.u32 %v2995, 4294901760
    %3170 = vmatmul.f32.gmra.mxu0 %v3169
    %v3171 = vpop.f32.mrf.mxu0
    %v3172 = vadd.f32 %v3138, %v3171
    %v3173 = vand.u32 %v2998, 4294901760
    %3174 = vmatmul.f32.gmra.mxu0 %v3173
    %v3175 = vpop.f32.mrf.mxu0
    %v3176 = vadd.f32 %v3144, %v3175
    %3177 = vdwg.mxu0
    %3178 = vmatpush.msra.mxu0 0.0
    %3179 = vmatpush.msra.mxu0 0.0
    %3180 = vmatpush.msra.mxu0 0.0
    %3181 = vmatpush.msra.mxu0 0.0
    %3182 = vmatpush.msra.mxu0 0.0
    %3183 = vmatpush.msra.mxu0 0.0
    %3184 = vmatpush.msra.mxu0 0.0
    %3185 = vmatpush.msra.mxu0 0.0
    %3186 = vmatpush.msra.mxu0 0.0
    %3187 = vmatpush.msra.mxu0 0.0
    %3188 = vmatpush.msra.mxu0 0.0
    %3189 = vmatpush.msra.mxu0 0.0
    %3190 = vmatpush.msra.mxu0 0.0
    %3191 = vmatpush.msra.mxu0 0.0
    %3192 = vmatpush.msra.mxu0 0.0
    %v3193 = vand.u32 %v1325, 4294901760
    %3194 = vmatpush.msra.mxu0 %v3193
    %v3195 = vand.u32 %v2992, 4294901760
    %3196 = vmatmul.f32.gmra.mxu0 %v3195
    %v3197 = vpop.f32.mrf.mxu0
    %v3198 = vadd.f32 %v3168, %v3197
    %v3199 = vand.u32 %v2995, 4294901760
    %3200 = vmatmul.f32.gmra.mxu0 %v3199
    %v3201 = vpop.f32.mrf.mxu0
    %v3202 = vadd.f32 %v3172, %v3201
    %v3203 = vand.u32 %v2998, 4294901760
    %3204 = vmatmul.f32.gmra.mxu0 %v3203
    %v3205 = vpop.f32.mrf.mxu0
    %v3206 = vadd.f32 %v3176, %v3205
    %3207 = vdwg.mxu0
    %vm3208 = vcmask 138240
    %v3209 = vsel %vm3208, %v1679, -inf
    %3210 = vmax.xlane.f32.xlu0 %v3209
    %v3211 = vpop.xlane.xlu0 %3210
    %v3212 = vsel %vm3208, %v1683, -inf
    %3213 = vmax.xlane.f32.xlu0 %v3212
    %v3214 = vpop.xlane.xlu0 %3213
    %vm3215 = vcmask 131072
    %v3216 = vsel %vm3215, %v1687, -inf
    %3217 = vmax.xlane.f32.xlu0 %v3216
    %v3218 = vpop.xlane.xlu0 %3217
    %v3219 = vsel %vm3208, %v1896, -inf
    %3220 = vmax.xlane.f32.xlu0 %v3219
    %v3221 = vpop.xlane.xlu0 %3220
    %v3222 = vsel %vm3208, %v1900, -inf
    %3223 = vmax.xlane.f32.xlu0 %v3222
    %v3224 = vpop.xlane.xlu0 %3223
    %v3225 = vsel %vm3215, %v1904, -inf
    %3226 = vmax.xlane.f32.xlu0 %v3225
    %v3227 = vpop.xlane.xlu0 %3226
    %v3228 = vsel %vm3208, %v2113, -inf
    %3229 = vmax.xlane.f32.xlu0 %v3228
    %v3230 = vpop.xlane.xlu0 %3229
    %v3231 = vsel %vm3208, %v2117, -inf
    %3232 = vmax.xlane.f32.xlu0 %v3231
    %v3233 = vpop.xlane.xlu0 %3232
    %v3234 = vsel %vm3215, %v2121, -inf
    %3235 = vmax.xlane.f32.xlu0 %v3234
    %v3236 = vpop.xlane.xlu0 %3235
    %v3237 = vsel %vm3208, %v2330, -inf
    %3238 = vmax.xlane.f32.xlu0 %v3237
    %v3239 = vpop.xlane.xlu0 %3238
    %v3240 = vsel %vm3208, %v2334, -inf
    %3241 = vmax.xlane.f32.xlu0 %v3240
    %v3242 = vpop.xlane.xlu0 %3241
    %v3243 = vsel %vm3215, %v2338, -inf
    %3244 = vmax.xlane.f32.xlu0 %v3243
    %v3245 = vpop.xlane.xlu0 %3244
    %v3246 = vsel %vm3208, %v2547, -inf
    %3247 = vmax.xlane.f32.xlu0 %v3246
    %v3248 = vpop.xlane.xlu0 %3247
    %v3249 = vsel %vm3208, %v2551, -inf
    %3250 = vmax.xlane.f32.xlu0 %v3249
    %v3251 = vpop.xlane.xlu0 %3250
    %v3252 = vsel %vm3215, %v2555, -inf
    %3253 = vmax.xlane.f32.xlu0 %v3252
    %v3254 = vpop.xlane.xlu0 %3253
    %v3255 = vsel %vm3208, %v2764, -inf
    %3256 = vmax.xlane.f32.xlu0 %v3255
    %v3257 = vpop.xlane.xlu0 %3256
    %v3258 = vsel %vm3208, %v2768, -inf
    %3259 = vmax.xlane.f32.xlu0 %v3258
    %v3260 = vpop.xlane.xlu0 %3259
    %v3261 = vsel %vm3215, %v2772, -inf
    %3262 = vmax.xlane.f32.xlu0 %v3261
    %v3263 = vpop.xlane.xlu0 %3262
    %v3264 = vsel %vm3208, %v2981, -inf
    %3265 = vmax.xlane.f32.xlu0 %v3264
    %v3266 = vpop.xlane.xlu0 %3265
    %v3267 = vsel %vm3208, %v2985, -inf
    %3268 = vmax.xlane.f32.xlu0 %v3267
    %v3269 = vpop.xlane.xlu0 %3268
    %v3270 = vsel %vm3215, %v2989, -inf
    %3271 = vmax.xlane.f32.xlu0 %v3270
    %v3272 = vpop.xlane.xlu0 %3271
    %v3273 = vsel %vm3208, %v3198, -inf
    %3274 = vmax.xlane.f32.xlu0 %v3273
    %v3275 = vpop.xlane.xlu0 %3274
    %v3276 = vsel %vm3208, %v3202, -inf
    %3277 = vmax.xlane.f32.xlu0 %v3276
    %v3278 = vpop.xlane.xlu0 %3277
    %v3279 = vsel %vm3215, %v3206, -inf
    %3280 = vmax.xlane.f32.xlu0 %v3279
    %v3281 = vpop.xlane.xlu0 %3280
    %v3282 = vsub.f32 %v1679, %v3211
    %v3283 = vsub.f32 %v1683, %v3214
    %v3284 = vsub.f32 %v1687, %v3218
    %v3285 = vsub.f32 %v1896, %v3221
    %v3286 = vsub.f32 %v1900, %v3224
    %v3287 = vsub.f32 %v1904, %v3227
    %v3288 = vsub.f32 %v2113, %v3230
    %v3289 = vsub.f32 %v2117, %v3233
    %v3290 = vsub.f32 %v2121, %v3236
    %v3291 = vsub.f32 %v2330, %v3239
    %v3292 = vsub.f32 %v2334, %v3242
    %v3293 = vsub.f32 %v2338, %v3245
    %v3294 = vsub.f32 %v2547, %v3248
    %v3295 = vsub.f32 %v2551, %v3251
    %v3296 = vsub.f32 %v2555, %v3254
    %v3297 = vsub.f32 %v2764, %v3257
    %v3298 = vsub.f32 %v2768, %v3260
    %v3299 = vsub.f32 %v2772, %v3263
    %v3300 = vsub.f32 %v2981, %v3266
    %v3301 = vsub.f32 %v2985, %v3269
    %v3302 = vsub.f32 %v2989, %v3272
    %v3303 = vsub.f32 %v3198, %v3275
    %v3304 = vsub.f32 %v3202, %v3278
    %v3305 = vsub.f32 %v3206, %v3281
    %v3306 = vmul.f32 %v3282, 1.442695
    %v3307 = vpow.pop %v3306
    %v3308 = vmul.f32 %v3283, 1.442695
    %v3309 = vpow.pop %v3308
    %v3310 = vmul.f32 %v3284, 1.442695
    %v3311 = vpow.pop %v3310
    %v3312 = vmul.f32 %v3285, 1.442695
    %v3313 = vpow.pop %v3312
    %v3314 = vmul.f32 %v3286, 1.442695
    %v3315 = vpow.pop %v3314
    %v3316 = vmul.f32 %v3287, 1.442695
    %v3317 = vpow.pop %v3316
    %v3318 = vmul.f32 %v3288, 1.442695
    %v3319 = vpow.pop %v3318
    %v3320 = vmul.f32 %v3289, 1.442695
    %v3321 = vpow.pop %v3320
    %v3322 = vmul.f32 %v3290, 1.442695
    %v3323 = vpow.pop %v3322
    %v3324 = vmul.f32 %v3291, 1.442695
    %v3325 = vpow.pop %v3324
    %v3326 = vmul.f32 %v3292, 1.442695
    %v3327 = vpow.pop %v3326
    %v3328 = vmul.f32 %v3293, 1.442695
    %v3329 = vpow.pop %v3328
    %v3330 = vmul.f32 %v3294, 1.442695
    %v3331 = vpow.pop %v3330
    %v3332 = vmul.f32 %v3295, 1.442695
    %v3333 = vpow.pop %v3332
    %v3334 = vmul.f32 %v3296, 1.442695
    %v3335 = vpow.pop %v3334
    %v3336 = vmul.f32 %v3297, 1.442695
    %v3337 = vpow.pop %v3336
    %v3338 = vmul.f32 %v3298, 1.442695
    %v3339 = vpow.pop %v3338
    %v3340 = vmul.f32 %v3299, 1.442695
    %v3341 = vpow.pop %v3340
    %v3342 = vmul.f32 %v3300, 1.442695
    %v3343 = vpow.pop %v3342
    %v3344 = vmul.f32 %v3301, 1.442695
    %v3345 = vpow.pop %v3344
    %v3346 = vmul.f32 %v3302, 1.442695
    %v3347 = vpow.pop %v3346
    %v3348 = vmul.f32 %v3303, 1.442695
    %v3349 = vpow.pop %v3348
    %v3350 = vmul.f32 %v3304, 1.442695
    %v3351 = vpow.pop %v3350
    %v3352 = vmul.f32 %v3305, 1.442695
    %v3353 = vpow.pop %v3352
    %v3354 = vsel %vm3208, %v3307, 0.0
    %3355 = vadd.xlane.f32.xlu0 %v3354
    %v3356 = vpop.xlane.xlu0 %3355
    %v3357 = vsel %vm3208, %v3309, 0.0
    %3358 = vadd.xlane.f32.xlu0 %v3357
    %v3359 = vpop.xlane.xlu0 %3358
    %v3360 = vsel %vm3215, %v3311, 0.0
    %3361 = vadd.xlane.f32.xlu0 %v3360
    %v3362 = vpop.xlane.xlu0 %3361
    %v3363 = vsel %vm3208, %v3313, 0.0
    %3364 = vadd.xlane.f32.xlu0 %v3363
    %v3365 = vpop.xlane.xlu0 %3364
    %v3366 = vsel %vm3208, %v3315, 0.0
    %3367 = vadd.xlane.f32.xlu0 %v3366
    %v3368 = vpop.xlane.xlu0 %3367
    %v3369 = vsel %vm3215, %v3317, 0.0
    %3370 = vadd.xlane.f32.xlu0 %v3369
    %v3371 = vpop.xlane.xlu0 %3370
    %v3372 = vsel %vm3208, %v3319, 0.0
    %3373 = vadd.xlane.f32.xlu0 %v3372
    %v3374 = vpop.xlane.xlu0 %3373
    %v3375 = vsel %vm3208, %v3321, 0.0
    %3376 = vadd.xlane.f32.xlu0 %v3375
    %v3377 = vpop.xlane.xlu0 %3376
    %v3378 = vsel %vm3215, %v3323, 0.0
    %3379 = vadd.xlane.f32.xlu0 %v3378
    %v3380 = vpop.xlane.xlu0 %3379
    %v3381 = vsel %vm3208, %v3325, 0.0
    %3382 = vadd.xlane.f32.xlu0 %v3381
    %v3383 = vpop.xlane.xlu0 %3382
    %v3384 = vsel %vm3208, %v3327, 0.0
    %3385 = vadd.xlane.f32.xlu0 %v3384
    %v3386 = vpop.xlane.xlu0 %3385
    %v3387 = vsel %vm3215, %v3329, 0.0
    %3388 = vadd.xlane.f32.xlu0 %v3387
    %v3389 = vpop.xlane.xlu0 %3388
    %v3390 = vsel %vm3208, %v3331, 0.0
    %3391 = vadd.xlane.f32.xlu0 %v3390
    %v3392 = vpop.xlane.xlu0 %3391
    %v3393 = vsel %vm3208, %v3333, 0.0
    %3394 = vadd.xlane.f32.xlu0 %v3393
    %v3395 = vpop.xlane.xlu0 %3394
    %v3396 = vsel %vm3215, %v3335, 0.0
    %3397 = vadd.xlane.f32.xlu0 %v3396
    %v3398 = vpop.xlane.xlu0 %3397
    %v3399 = vsel %vm3208, %v3337, 0.0
    %3400 = vadd.xlane.f32.xlu0 %v3399
    %v3401 = vpop.xlane.xlu0 %3400
    %v3402 = vsel %vm3208, %v3339, 0.0
    %3403 = vadd.xlane.f32.xlu0 %v3402
    %v3404 = vpop.xlane.xlu0 %3403
    %v3405 = vsel %vm3215, %v3341, 0.0
    %3406 = vadd.xlane.f32.xlu0 %v3405
    %v3407 = vpop.xlane.xlu0 %3406
    %v3408 = vsel %vm3208, %v3343, 0.0
    %3409 = vadd.xlane.f32.xlu0 %v3408
    %v3410 = vpop.xlane.xlu0 %3409
    %v3411 = vsel %vm3208, %v3345, 0.0
    %3412 = vadd.xlane.f32.xlu0 %v3411
    %v3413 = vpop.xlane.xlu0 %3412
    %v3414 = vsel %vm3215, %v3347, 0.0
    %3415 = vadd.xlane.f32.xlu0 %v3414
    %v3416 = vpop.xlane.xlu0 %3415
    %v3417 = vsel %vm3208, %v3349, 0.0
    %3418 = vadd.xlane.f32.xlu0 %v3417
    %v3419 = vpop.xlane.xlu0 %3418
    %v3420 = vsel %vm3208, %v3351, 0.0
    %3421 = vadd.xlane.f32.xlu0 %v3420
    %v3422 = vpop.xlane.xlu0 %3421
    %v3423 = vsel %vm3215, %v3353, 0.0
    %3424 = vadd.xlane.f32.xlu0 %v3423
    %v3425 = vpop.xlane.xlu0 %3424
    %v3426 = vrcp.pop %v3356
    %v3427 = vmul.f32 %v3356, %v3426
    %v3428 = vsub.f32 1.0, %v3427
    %v3429 = vmul.f32 %v3426, %v3428
    %v3430 = vadd.f32 %v3426, %v3429
    %vm3431 = vweird.f32 %v3356
    %vm3432 = vweird.f32 %v3426
    %vm3433 = vmor %vm3431, %vm3432
    %v3434 = vsel %vm3433, %v3426, %v3430
    %v3435 = vand.u32 2147483647, %v3356
    %vm3436 = vcmp.eq.f32.partialorder %v3435, 8.507059e+37
    %v3437 = vand.u32 %v3356, 2147483648
    %v3438 = vor.u32 1.1754944e-38, %v3437
    %v3439 = vsel %vm3436, %v3438, %v3434
    %v3440 = vmul.f32 %v3307, %v3439
    %v3441 = vrcp.pop %v3359
    %v3442 = vmul.f32 %v3359, %v3441
    %v3443 = vsub.f32 1.0, %v3442
    %v3444 = vmul.f32 %v3441, %v3443
    %v3445 = vadd.f32 %v3441, %v3444
    %vm3446 = vweird.f32 %v3359
    %vm3447 = vweird.f32 %v3441
    %vm3448 = vmor %vm3446, %vm3447
    %v3449 = vsel %vm3448, %v3441, %v3445
    %v3450 = vand.u32 2147483647, %v3359
    %vm3451 = vcmp.eq.f32.partialorder %v3450, 8.507059e+37
    %v3452 = vand.u32 %v3359, 2147483648
    %v3453 = vor.u32 1.1754944e-38, %v3452
    %v3454 = vsel %vm3451, %v3453, %v3449
    %v3455 = vmul.f32 %v3309, %v3454
    %v3456 = vrcp.pop %v3362
    %v3457 = vmul.f32 %v3362, %v3456
    %v3458 = vsub.f32 1.0, %v3457
    %v3459 = vmul.f32 %v3456, %v3458
    %v3460 = vadd.f32 %v3456, %v3459
    %vm3461 = vweird.f32 %v3362
    %vm3462 = vweird.f32 %v3456
    %vm3463 = vmor %vm3461, %vm3462
    %v3464 = vsel %vm3463, %v3456, %v3460
    %v3465 = vand.u32 2147483647, %v3362
    %vm3466 = vcmp.eq.f32.partialorder %v3465, 8.507059e+37
    %v3467 = vand.u32 %v3362, 2147483648
    %v3468 = vor.u32 1.1754944e-38, %v3467
    %v3469 = vsel %vm3466, %v3468, %v3464
    %v3470 = vmul.f32 %v3311, %v3469
    %v3471 = vrcp.pop %v3365
    %v3472 = vmul.f32 %v3365, %v3471
    %v3473 = vsub.f32 1.0, %v3472
    %v3474 = vmul.f32 %v3471, %v3473
    %v3475 = vadd.f32 %v3471, %v3474
    %vm3476 = vweird.f32 %v3365
    %vm3477 = vweird.f32 %v3471
    %vm3478 = vmor %vm3476, %vm3477
    %v3479 = vsel %vm3478, %v3471, %v3475
    %v3480 = vand.u32 2147483647, %v3365
    %vm3481 = vcmp.eq.f32.partialorder %v3480, 8.507059e+37
    %v3482 = vand.u32 %v3365, 2147483648
    %v3483 = vor.u32 1.1754944e-38, %v3482
    %v3484 = vsel %vm3481, %v3483, %v3479
    %v3485 = vmul.f32 %v3313, %v3484
    %v3486 = vrcp.pop %v3368
    %v3487 = vmul.f32 %v3368, %v3486
    %v3488 = vsub.f32 1.0, %v3487
    %v3489 = vmul.f32 %v3486, %v3488
    %v3490 = vadd.f32 %v3486, %v3489
    %vm3491 = vweird.f32 %v3368
    %vm3492 = vweird.f32 %v3486
    %vm3493 = vmor %vm3491, %vm3492
    %v3494 = vsel %vm3493, %v3486, %v3490
    %v3495 = vand.u32 2147483647, %v3368
    %vm3496 = vcmp.eq.f32.partialorder %v3495, 8.507059e+37
    %v3497 = vand.u32 %v3368, 2147483648
    %v3498 = vor.u32 1.1754944e-38, %v3497
    %v3499 = vsel %vm3496, %v3498, %v3494
    %v3500 = vmul.f32 %v3315, %v3499
    %v3501 = vrcp.pop %v3371
    %v3502 = vmul.f32 %v3371, %v3501
    %v3503 = vsub.f32 1.0, %v3502
    %v3504 = vmul.f32 %v3501, %v3503
    %v3505 = vadd.f32 %v3501, %v3504
    %vm3506 = vweird.f32 %v3371
    %vm3507 = vweird.f32 %v3501
    %vm3508 = vmor %vm3506, %vm3507
    %v3509 = vsel %vm3508, %v3501, %v3505
    %v3510 = vand.u32 2147483647, %v3371
    %vm3511 = vcmp.eq.f32.partialorder %v3510, 8.507059e+37
    %v3512 = vand.u32 %v3371, 2147483648
    %v3513 = vor.u32 1.1754944e-38, %v3512
    %v3514 = vsel %vm3511, %v3513, %v3509
    %v3515 = vmul.f32 %v3317, %v3514
    %v3516 = vrcp.pop %v3374
    %v3517 = vmul.f32 %v3374, %v3516
    %v3518 = vsub.f32 1.0, %v3517
    %v3519 = vmul.f32 %v3516, %v3518
    %v3520 = vadd.f32 %v3516, %v3519
    %vm3521 = vweird.f32 %v3374
    %vm3522 = vweird.f32 %v3516
    %vm3523 = vmor %vm3521, %vm3522
    %v3524 = vsel %vm3523, %v3516, %v3520
    %v3525 = vand.u32 2147483647, %v3374
    %vm3526 = vcmp.eq.f32.partialorder %v3525, 8.507059e+37
    %v3527 = vand.u32 %v3374, 2147483648
    %v3528 = vor.u32 1.1754944e-38, %v3527
    %v3529 = vsel %vm3526, %v3528, %v3524
    %v3530 = vmul.f32 %v3319, %v3529
    %v3531 = vrcp.pop %v3377
    %v3532 = vmul.f32 %v3377, %v3531
    %v3533 = vsub.f32 1.0, %v3532
    %v3534 = vmul.f32 %v3531, %v3533
    %v3535 = vadd.f32 %v3531, %v3534
    %vm3536 = vweird.f32 %v3377
    %vm3537 = vweird.f32 %v3531
    %vm3538 = vmor %vm3536, %vm3537
    %v3539 = vsel %vm3538, %v3531, %v3535
    %v3540 = vand.u32 2147483647, %v3377
    %vm3541 = vcmp.eq.f32.partialorder %v3540, 8.507059e+37
    %v3542 = vand.u32 %v3377, 2147483648
    %v3543 = vor.u32 1.1754944e-38, %v3542
    %v3544 = vsel %vm3541, %v3543, %v3539
    %v3545 = vmul.f32 %v3321, %v3544
    %v3546 = vrcp.pop %v3380
    %v3547 = vmul.f32 %v3380, %v3546
    %v3548 = vsub.f32 1.0, %v3547
    %v3549 = vmul.f32 %v3546, %v3548
    %v3550 = vadd.f32 %v3546, %v3549
    %vm3551 = vweird.f32 %v3380
    %vm3552 = vweird.f32 %v3546
    %vm3553 = vmor %vm3551, %vm3552
    %v3554 = vsel %vm3553, %v3546, %v3550
    %v3555 = vand.u32 2147483647, %v3380
    %vm3556 = vcmp.eq.f32.partialorder %v3555, 8.507059e+37
    %v3557 = vand.u32 %v3380, 2147483648
    %v3558 = vor.u32 1.1754944e-38, %v3557
    %v3559 = vsel %vm3556, %v3558, %v3554
    %v3560 = vmul.f32 %v3323, %v3559
    %v3561 = vrcp.pop %v3383
    %v3562 = vmul.f32 %v3383, %v3561
    %v3563 = vsub.f32 1.0, %v3562
    %v3564 = vmul.f32 %v3561, %v3563
    %v3565 = vadd.f32 %v3561, %v3564
    %vm3566 = vweird.f32 %v3383
    %vm3567 = vweird.f32 %v3561
    %vm3568 = vmor %vm3566, %vm3567
    %v3569 = vsel %vm3568, %v3561, %v3565
    %v3570 = vand.u32 2147483647, %v3383
    %vm3571 = vcmp.eq.f32.partialorder %v3570, 8.507059e+37
    %v3572 = vand.u32 %v3383, 2147483648
    %v3573 = vor.u32 1.1754944e-38, %v3572
    %v3574 = vsel %vm3571, %v3573, %v3569
    %v3575 = vmul.f32 %v3325, %v3574
    %v3576 = vrcp.pop %v3386
    %v3577 = vmul.f32 %v3386, %v3576
    %v3578 = vsub.f32 1.0, %v3577
    %v3579 = vmul.f32 %v3576, %v3578
    %v3580 = vadd.f32 %v3576, %v3579
    %vm3581 = vweird.f32 %v3386
    %vm3582 = vweird.f32 %v3576
    %vm3583 = vmor %vm3581, %vm3582
    %v3584 = vsel %vm3583, %v3576, %v3580
    %v3585 = vand.u32 2147483647, %v3386
    %vm3586 = vcmp.eq.f32.partialorder %v3585, 8.507059e+37
    %v3587 = vand.u32 %v3386, 2147483648
    %v3588 = vor.u32 1.1754944e-38, %v3587
    %v3589 = vsel %vm3586, %v3588, %v3584
    %v3590 = vmul.f32 %v3327, %v3589
    %v3591 = vrcp.pop %v3389
    %v3592 = vmul.f32 %v3389, %v3591
    %v3593 = vsub.f32 1.0, %v3592
    %v3594 = vmul.f32 %v3591, %v3593
    %v3595 = vadd.f32 %v3591, %v3594
    %vm3596 = vweird.f32 %v3389
    %vm3597 = vweird.f32 %v3591
    %vm3598 = vmor %vm3596, %vm3597
    %v3599 = vsel %vm3598, %v3591, %v3595
    %v3600 = vand.u32 2147483647, %v3389
    %vm3601 = vcmp.eq.f32.partialorder %v3600, 8.507059e+37
    %v3602 = vand.u32 %v3389, 2147483648
    %v3603 = vor.u32 1.1754944e-38, %v3602
    %v3604 = vsel %vm3601, %v3603, %v3599
    %v3605 = vmul.f32 %v3329, %v3604
    %v3606 = vrcp.pop %v3392
    %v3607 = vmul.f32 %v3392, %v3606
    %v3608 = vsub.f32 1.0, %v3607
    %v3609 = vmul.f32 %v3606, %v3608
    %v3610 = vadd.f32 %v3606, %v3609
    %vm3611 = vweird.f32 %v3392
    %vm3612 = vweird.f32 %v3606
    %vm3613 = vmor %vm3611, %vm3612
    %v3614 = vsel %vm3613, %v3606, %v3610
    %v3615 = vand.u32 2147483647, %v3392
    %vm3616 = vcmp.eq.f32.partialorder %v3615, 8.507059e+37
    %v3617 = vand.u32 %v3392, 2147483648
    %v3618 = vor.u32 1.1754944e-38, %v3617
    %v3619 = vsel %vm3616, %v3618, %v3614
    %v3620 = vmul.f32 %v3331, %v3619
    %v3621 = vrcp.pop %v3395
    %v3622 = vmul.f32 %v3395, %v3621
    %v3623 = vsub.f32 1.0, %v3622
    %v3624 = vmul.f32 %v3621, %v3623
    %v3625 = vadd.f32 %v3621, %v3624
    %vm3626 = vweird.f32 %v3395
    %vm3627 = vweird.f32 %v3621
    %vm3628 = vmor %vm3626, %vm3627
    %v3629 = vsel %vm3628, %v3621, %v3625
    %v3630 = vand.u32 2147483647, %v3395
    %vm3631 = vcmp.eq.f32.partialorder %v3630, 8.507059e+37
    %v3632 = vand.u32 %v3395, 2147483648
    %v3633 = vor.u32 1.1754944e-38, %v3632
    %v3634 = vsel %vm3631, %v3633, %v3629
    %v3635 = vmul.f32 %v3333, %v3634
    %v3636 = vrcp.pop %v3398
    %v3637 = vmul.f32 %v3398, %v3636
    %v3638 = vsub.f32 1.0, %v3637
    %v3639 = vmul.f32 %v3636, %v3638
    %v3640 = vadd.f32 %v3636, %v3639
    %vm3641 = vweird.f32 %v3398
    %vm3642 = vweird.f32 %v3636
    %vm3643 = vmor %vm3641, %vm3642
    %v3644 = vsel %vm3643, %v3636, %v3640
    %v3645 = vand.u32 2147483647, %v3398
    %vm3646 = vcmp.eq.f32.partialorder %v3645, 8.507059e+37
    %v3647 = vand.u32 %v3398, 2147483648
    %v3648 = vor.u32 1.1754944e-38, %v3647
    %v3649 = vsel %vm3646, %v3648, %v3644
    %v3650 = vmul.f32 %v3335, %v3649
    %v3651 = vrcp.pop %v3401
    %v3652 = vmul.f32 %v3401, %v3651
    %v3653 = vsub.f32 1.0, %v3652
    %v3654 = vmul.f32 %v3651, %v3653
    %v3655 = vadd.f32 %v3651, %v3654
    %vm3656 = vweird.f32 %v3401
    %vm3657 = vweird.f32 %v3651
    %vm3658 = vmor %vm3656, %vm3657
    %v3659 = vsel %vm3658, %v3651, %v3655
    %v3660 = vand.u32 2147483647, %v3401
    %vm3661 = vcmp.eq.f32.partialorder %v3660, 8.507059e+37
    %v3662 = vand.u32 %v3401, 2147483648
    %v3663 = vor.u32 1.1754944e-38, %v3662
    %v3664 = vsel %vm3661, %v3663, %v3659
    %v3665 = vmul.f32 %v3337, %v3664
    %v3666 = vrcp.pop %v3404
    %v3667 = vmul.f32 %v3404, %v3666
    %v3668 = vsub.f32 1.0, %v3667
    %v3669 = vmul.f32 %v3666, %v3668
    %v3670 = vadd.f32 %v3666, %v3669
    %vm3671 = vweird.f32 %v3404
    %vm3672 = vweird.f32 %v3666
    %vm3673 = vmor %vm3671, %vm3672
    %v3674 = vsel %vm3673, %v3666, %v3670
    %v3675 = vand.u32 2147483647, %v3404
    %vm3676 = vcmp.eq.f32.partialorder %v3675, 8.507059e+37
    %v3677 = vand.u32 %v3404, 2147483648
    %v3678 = vor.u32 1.1754944e-38, %v3677
    %v3679 = vsel %vm3676, %v3678, %v3674
    %v3680 = vmul.f32 %v3339, %v3679
    %v3681 = vrcp.pop %v3407
    %v3682 = vmul.f32 %v3407, %v3681
    %v3683 = vsub.f32 1.0, %v3682
    %v3684 = vmul.f32 %v3681, %v3683
    %v3685 = vadd.f32 %v3681, %v3684
    %vm3686 = vweird.f32 %v3407
    %vm3687 = vweird.f32 %v3681
    %vm3688 = vmor %vm3686, %vm3687
    %v3689 = vsel %vm3688, %v3681, %v3685
    %v3690 = vand.u32 2147483647, %v3407
    %vm3691 = vcmp.eq.f32.partialorder %v3690, 8.507059e+37
    %v3692 = vand.u32 %v3407, 2147483648
    %v3693 = vor.u32 1.1754944e-38, %v3692
    %v3694 = vsel %vm3691, %v3693, %v3689
    %v3695 = vmul.f32 %v3341, %v3694
    %v3696 = vrcp.pop %v3410
    %v3697 = vmul.f32 %v3410, %v3696
    %v3698 = vsub.f32 1.0, %v3697
    %v3699 = vmul.f32 %v3696, %v3698
    %v3700 = vadd.f32 %v3696, %v3699
    %vm3701 = vweird.f32 %v3410
    %vm3702 = vweird.f32 %v3696
    %vm3703 = vmor %vm3701, %vm3702
    %v3704 = vsel %vm3703, %v3696, %v3700
    %v3705 = vand.u32 2147483647, %v3410
    %vm3706 = vcmp.eq.f32.partialorder %v3705, 8.507059e+37
    %v3707 = vand.u32 %v3410, 2147483648
    %v3708 = vor.u32 1.1754944e-38, %v3707
    %v3709 = vsel %vm3706, %v3708, %v3704
    %v3710 = vmul.f32 %v3343, %v3709
    %v3711 = vrcp.pop %v3413
    %v3712 = vmul.f32 %v3413, %v3711
    %v3713 = vsub.f32 1.0, %v3712
    %v3714 = vmul.f32 %v3711, %v3713
    %v3715 = vadd.f32 %v3711, %v3714
    %vm3716 = vweird.f32 %v3413
    %vm3717 = vweird.f32 %v3711
    %vm3718 = vmor %vm3716, %vm3717
    %v3719 = vsel %vm3718, %v3711, %v3715
    %v3720 = vand.u32 2147483647, %v3413
    %vm3721 = vcmp.eq.f32.partialorder %v3720, 8.507059e+37
    %v3722 = vand.u32 %v3413, 2147483648
    %v3723 = vor.u32 1.1754944e-38, %v3722
    %v3724 = vsel %vm3721, %v3723, %v3719
    %v3725 = vmul.f32 %v3345, %v3724
    %v3726 = vrcp.pop %v3416
    %v3727 = vmul.f32 %v3416, %v3726
    %v3728 = vsub.f32 1.0, %v3727
    %v3729 = vmul.f32 %v3726, %v3728
    %v3730 = vadd.f32 %v3726, %v3729
    %vm3731 = vweird.f32 %v3416
    %vm3732 = vweird.f32 %v3726
    %vm3733 = vmor %vm3731, %vm3732
    %v3734 = vsel %vm3733, %v3726, %v3730
    %v3735 = vand.u32 2147483647, %v3416
    %vm3736 = vcmp.eq.f32.partialorder %v3735, 8.507059e+37
    %v3737 = vand.u32 %v3416, 2147483648
    %v3738 = vor.u32 1.1754944e-38, %v3737
    %v3739 = vsel %vm3736, %v3738, %v3734
    %v3740 = vmul.f32 %v3347, %v3739
    %v3741 = vrcp.pop %v3419
    %v3742 = vmul.f32 %v3419, %v3741
    %v3743 = vsub.f32 1.0, %v3742
    %v3744 = vmul.f32 %v3741, %v3743
    %v3745 = vadd.f32 %v3741, %v3744
    %vm3746 = vweird.f32 %v3419
    %vm3747 = vweird.f32 %v3741
    %vm3748 = vmor %vm3746, %vm3747
    %v3749 = vsel %vm3748, %v3741, %v3745
    %v3750 = vand.u32 2147483647, %v3419
    %vm3751 = vcmp.eq.f32.partialorder %v3750, 8.507059e+37
    %v3752 = vand.u32 %v3419, 2147483648
    %v3753 = vor.u32 1.1754944e-38, %v3752
    %v3754 = vsel %vm3751, %v3753, %v3749
    %v3755 = vmul.f32 %v3349, %v3754
    %v3756 = vrcp.pop %v3422
    %v3757 = vmul.f32 %v3422, %v3756
    %v3758 = vsub.f32 1.0, %v3757
    %v3759 = vmul.f32 %v3756, %v3758
    %v3760 = vadd.f32 %v3756, %v3759
    %vm3761 = vweird.f32 %v3422
    %vm3762 = vweird.f32 %v3756
    %vm3763 = vmor %vm3761, %vm3762
    %v3764 = vsel %vm3763, %v3756, %v3760
    %v3765 = vand.u32 2147483647, %v3422
    %vm3766 = vcmp.eq.f32.partialorder %v3765, 8.507059e+37
    %v3767 = vand.u32 %v3422, 2147483648
    %v3768 = vor.u32 1.1754944e-38, %v3767
    %v3769 = vsel %vm3766, %v3768, %v3764
    %v3770 = vmul.f32 %v3351, %v3769
    %v3771 = vrcp.pop %v3425
    %v3772 = vmul.f32 %v3425, %v3771
    %v3773 = vsub.f32 1.0, %v3772
    %v3774 = vmul.f32 %v3771, %v3773
    %v3775 = vadd.f32 %v3771, %v3774
    %vm3776 = vweird.f32 %v3425
    %vm3777 = vweird.f32 %v3771
    %vm3778 = vmor %vm3776, %vm3777
    %v3779 = vsel %vm3778, %v3771, %v3775
    %v3780 = vand.u32 2147483647, %v3425
    %vm3781 = vcmp.eq.f32.partialorder %v3780, 8.507059e+37
    %v3782 = vand.u32 %v3425, 2147483648
    %v3783 = vor.u32 1.1754944e-38, %v3782
    %v3784 = vsel %vm3781, %v3783, %v3779
    %v3785 = vmul.f32 %v3353, %v3784
    %v3787 = vsel %vm3208, %v3440, 0
    %v3790 = vsel %vm3208, %v3455, 0
    %v3793 = vsel %vm3208, %v3470, 0
    %v3796 = vsel %vm3208, %v634, 0
    %3798 = vmatpush.xpose.msra.mxu0 0.0
    %3799 = vmatpush.xpose.msra.mxu0 0.0
    %3800 = vmatpush.xpose.msra.mxu0 0.0
    %3801 = vmatpush.xpose.msra.mxu0 0.0
    %3802 = vmatpush.xpose.msra.mxu0 0.0
    %3803 = vmatpush.xpose.msra.mxu0 0.0
    %3804 = vmatpush.xpose.msra.mxu0 0.0
    %3805 = vmatpush.xpose.msra.mxu0 0.0
    %3806 = vmatpush.xpose.msra.mxu0 0.0
    %3807 = vmatpush.xpose.msra.mxu0 0.0
    %3808 = vmatpush.xpose.msra.mxu0 0.0
    %3809 = vmatpush.xpose.msra.mxu0 0.0
    %3810 = vmatpush.xpose.msra.mxu0 0.0
    %3811 = vmatpush.xpose.msra.mxu0 0.0
    %3812 = vmatpush.xpose.msra.mxu0 0.0
    %v3813 = vand.u32 %v3796, 4294901760
    %3814 = vmatpush.xpose.msra.mxu0 %v3813
    %v3815 = vand.u32 %v3787, 4294901760
    %v3816 = vsub.f32 %v3787, %v3815
    %v3817 = vand.u32 %v3816, 4294901760
    %v3818 = vsub.f32 %v3816, %v3817
    %v3819 = vand.u32 %v3818, 4294901760
    %3820 = vmatmul.f32.gmra.mxu0 %v3819
    %v3821 = vpop.f32.mrf.mxu0
    %v3822 = vadd.f32 0.0, %v3821
    %v3823 = vand.u32 %v3790, 4294901760
    %v3824 = vsub.f32 %v3790, %v3823
    %v3825 = vand.u32 %v3824, 4294901760
    %v3826 = vsub.f32 %v3824, %v3825
    %v3827 = vand.u32 %v3826, 4294901760
    %3828 = vmatmul.f32.gmra.mxu0 %v3827
    %v3829 = vpop.f32.mrf.mxu0
    %v3830 = vadd.f32 0.0, %v3829
    %v3831 = vand.u32 %v3793, 4294901760
    %v3832 = vsub.f32 %v3793, %v3831
    %v3833 = vand.u32 %v3832, 4294901760
    %v3834 = vsub.f32 %v3832, %v3833
    %v3835 = vand.u32 %v3834, 4294901760
    %3836 = vmatmul.f32.gmra.mxu0 %v3835
    %v3837 = vpop.f32.mrf.mxu0
    %v3838 = vadd.f32 0.0, %v3837
    %3839 = vdwg.mxu0
    %3840 = vmatpush.xpose.msra.mxu0 0.0
    %3841 = vmatpush.xpose.msra.mxu0 0.0
    %3842 = vmatpush.xpose.msra.mxu0 0.0
    %3843 = vmatpush.xpose.msra.mxu0 0.0
    %3844 = vmatpush.xpose.msra.mxu0 0.0
    %3845 = vmatpush.xpose.msra.mxu0 0.0
    %3846 = vmatpush.xpose.msra.mxu0 0.0
    %3847 = vmatpush.xpose.msra.mxu0 0.0
    %3848 = vmatpush.xpose.msra.mxu0 0.0
    %3849 = vmatpush.xpose.msra.mxu0 0.0
    %3850 = vmatpush.xpose.msra.mxu0 0.0
    %3851 = vmatpush.xpose.msra.mxu0 0.0
    %3852 = vmatpush.xpose.msra.mxu0 0.0
    %3853 = vmatpush.xpose.msra.mxu0 0.0
    %3854 = vmatpush.xpose.msra.mxu0 0.0
    %v3855 = vand.u32 %v3796, 4294901760
    %v3856 = vsub.f32 %v3796, %v3855
    %v3857 = vand.u32 %v3856, 4294901760
    %v3858 = vsub.f32 %v3856, %v3857
    %v3859 = vand.u32 %v3858, 4294901760
    %3860 = vmatpush.xpose.msra.mxu0 %v3859
    %v3861 = vand.u32 %v3787, 4294901760
    %3862 = vmatmul.f32.gmra.mxu0 %v3861
    %v3863 = vpop.f32.mrf.mxu0
    %v3864 = vadd.f32 %v3822, %v3863
    %v3865 = vand.u32 %v3790, 4294901760
    %3866 = vmatmul.f32.gmra.mxu0 %v3865
    %v3867 = vpop.f32.mrf.mxu0
    %v3868 = vadd.f32 %v3830, %v3867
    %v3869 = vand.u32 %v3793, 4294901760
    %3870 = vmatmul.f32.gmra.mxu0 %v3869
    %v3871 = vpop.f32.mrf.mxu0
    %v3872 = vadd.f32 %v3838, %v3871
    %3873 = vdwg.mxu0
    %3874 = vmatpush.xpose.msra.mxu0 0.0
    %3875 = vmatpush.xpose.msra.mxu0 0.0
    %3876 = vmatpush.xpose.msra.mxu0 0.0
    %3877 = vmatpush.xpose.msra.mxu0 0.0
    %3878 = vmatpush.xpose.msra.mxu0 0.0
    %3879 = vmatpush.xpose.msra.mxu0 0.0
    %3880 = vmatpush.xpose.msra.mxu0 0.0
    %3881 = vmatpush.xpose.msra.mxu0 0.0
    %3882 = vmatpush.xpose.msra.mxu0 0.0
    %3883 = vmatpush.xpose.msra.mxu0 0.0
    %3884 = vmatpush.xpose.msra.mxu0 0.0
    %3885 = vmatpush.xpose.msra.mxu0 0.0
    %3886 = vmatpush.xpose.msra.mxu0 0.0
    %3887 = vmatpush.xpose.msra.mxu0 0.0
    %3888 = vmatpush.xpose.msra.mxu0 0.0
    %v3889 = vand.u32 %v3796, 4294901760
    %v3890 = vsub.f32 %v3796, %v3889
    %3891 = vmatpush.xpose.msra.mxu0 %v3890
    %v3892 = vand.u32 %v3787, 4294901760
    %v3893 = vsub.f32 %v3787, %v3892
    %3894 = vmatmul.f32.gmra.mxu0 %v3893
    %v3895 = vpop.f32.mrf.mxu0
    %v3896 = vadd.f32 %v3864, %v3895
    %v3897 = vand.u32 %v3790, 4294901760
    %v3898 = vsub.f32 %v3790, %v3897
    %3899 = vmatmul.f32.gmra.mxu0 %v3898
    %v3900 = vpop.f32.mrf.mxu0
    %v3901 = vadd.f32 %v3868, %v3900
    %v3902 = vand.u32 %v3793, 4294901760
    %v3903 = vsub.f32 %v3793, %v3902
    %3904 = vmatmul.f32.gmra.mxu0 %v3903
    %v3905 = vpop.f32.mrf.mxu0
    %v3906 = vadd.f32 %v3872, %v3905
    %3907 = vdwg.mxu0
    %3908 = vmatpush.xpose.msra.mxu0 0.0
    %3909 = vmatpush.xpose.msra.mxu0 0.0
    %3910 = vmatpush.xpose.msra.mxu0 0.0
    %3911 = vmatpush.xpose.msra.mxu0 0.0
    %3912 = vmatpush.xpose.msra.mxu0 0.0
    %3913 = vmatpush.xpose.msra.mxu0 0.0
    %3914 = vmatpush.xpose.msra.mxu0 0.0
    %3915 = vmatpush.xpose.msra.mxu0 0.0
    %3916 = vmatpush.xpose.msra.mxu0 0.0
    %3917 = vmatpush.xpose.msra.mxu0 0.0
    %3918 = vmatpush.xpose.msra.mxu0 0.0
    %3919 = vmatpush.xpose.msra.mxu0 0.0
    %3920 = vmatpush.xpose.msra.mxu0 0.0
    %3921 = vmatpush.xpose.msra.mxu0 0.0
    %3922 = vmatpush.xpose.msra.mxu0 0.0
    %v3923 = vand.u32 %v3796, 4294901760
    %3924 = vmatpush.xpose.msra.mxu0 %v3923
    %v3925 = vand.u32 %v3787, 4294901760
    %v3926 = vsub.f32 %v3787, %v3925
    %v3927 = vand.u32 %v3926, 4294901760
    %3928 = vmatmul.f32.gmra.mxu0 %v3927
    %v3929 = vpop.f32.mrf.mxu0
    %v3930 = vadd.f32 %v3896, %v3929
    %v3931 = vand.u32 %v3790, 4294901760
    %v3932 = vsub.f32 %v3790, %v3931
    %v3933 = vand.u32 %v3932, 4294901760
    %3934 = vmatmul.f32.gmra.mxu0 %v3933
    %v3935 = vpop.f32.mrf.mxu0
    %v3936 = vadd.f32 %v3901, %v3935
    %v3937 = vand.u32 %v3793, 4294901760
    %v3938 = vsub.f32 %v3793, %v3937
    %v3939 = vand.u32 %v3938, 4294901760
    %3940 = vmatmul.f32.gmra.mxu0 %v3939
    %v3941 = vpop.f32.mrf.mxu0
    %v3942 = vadd.f32 %v3906, %v3941
    %3943 = vdwg.mxu0
    %3944 = vmatpush.xpose.msra.mxu0 0.0
    %3945 = vmatpush.xpose.msra.mxu0 0.0
    %3946 = vmatpush.xpose.msra.mxu0 0.0
    %3947 = vmatpush.xpose.msra.mxu0 0.0
    %3948 = vmatpush.xpose.msra.mxu0 0.0
    %3949 = vmatpush.xpose.msra.mxu0 0.0
    %3950 = vmatpush.xpose.msra.mxu0 0.0
    %3951 = vmatpush.xpose.msra.mxu0 0.0
    %3952 = vmatpush.xpose.msra.mxu0 0.0
    %3953 = vmatpush.xpose.msra.mxu0 0.0
    %3954 = vmatpush.xpose.msra.mxu0 0.0
    %3955 = vmatpush.xpose.msra.mxu0 0.0
    %3956 = vmatpush.xpose.msra.mxu0 0.0
    %3957 = vmatpush.xpose.msra.mxu0 0.0
    %3958 = vmatpush.xpose.msra.mxu0 0.0
    %v3959 = vand.u32 %v3796, 4294901760
    %v3960 = vsub.f32 %v3796, %v3959
    %v3961 = vand.u32 %v3960, 4294901760
    %3962 = vmatpush.xpose.msra.mxu0 %v3961
    %v3963 = vand.u32 %v3787, 4294901760
    %3964 = vmatmul.f32.gmra.mxu0 %v3963
    %v3965 = vpop.f32.mrf.mxu0
    %v3966 = vadd.f32 %v3930, %v3965
    %v3967 = vand.u32 %v3790, 4294901760
    %3968 = vmatmul.f32.gmra.mxu0 %v3967
    %v3969 = vpop.f32.mrf.mxu0
    %v3970 = vadd.f32 %v3936, %v3969
    %v3971 = vand.u32 %v3793, 4294901760
    %3972 = vmatmul.f32.gmra.mxu0 %v3971
    %v3973 = vpop.f32.mrf.mxu0
    %v3974 = vadd.f32 %v3942, %v3973
    %3975 = vdwg.mxu0
    %3976 = vmatpush.xpose.msra.mxu0 0.0
    %3977 = vmatpush.xpose.msra.mxu0 0.0
    %3978 = vmatpush.xpose.msra.mxu0 0.0
    %3979 = vmatpush.xpose.msra.mxu0 0.0
    %3980 = vmatpush.xpose.msra.mxu0 0.0
    %3981 = vmatpush.xpose.msra.mxu0 0.0
    %3982 = vmatpush.xpose.msra.mxu0 0.0
    %3983 = vmatpush.xpose.msra.mxu0 0.0
    %3984 = vmatpush.xpose.msra.mxu0 0.0
    %3985 = vmatpush.xpose.msra.mxu0 0.0
    %3986 = vmatpush.xpose.msra.mxu0 0.0
    %3987 = vmatpush.xpose.msra.mxu0 0.0
    %3988 = vmatpush.xpose.msra.mxu0 0.0
    %3989 = vmatpush.xpose.msra.mxu0 0.0
    %3990 = vmatpush.xpose.msra.mxu0 0.0
    %v3991 = vand.u32 %v3796, 4294901760
    %3992 = vmatpush.xpose.msra.mxu0 %v3991
    %v3993 = vand.u32 %v3787, 4294901760
    %3994 = vmatmul.f32.gmra.mxu0 %v3993
    %v3995 = vpop.f32.mrf.mxu0
    %v3996 = vadd.f32 %v3966, %v3995
    %v3997 = vand.u32 %v3790, 4294901760
    %3998 = vmatmul.f32.gmra.mxu0 %v3997
    %v3999 = vpop.f32.mrf.mxu0
    %v4000 = vadd.f32 %v3970, %v3999
    %v4001 = vand.u32 %v3793, 4294901760
    %4002 = vmatmul.f32.gmra.mxu0 %v4001
    %v4003 = vpop.f32.mrf.mxu0
    %v4004 = vadd.f32 %v3974, %v4003
    %4005 = vdwg.mxu0
    %v4007 = vsel %vm3208, %v3485, 0
    %v4010 = vsel %vm3208, %v3500, 0
    %v4013 = vsel %vm3208, %v3515, 0
    %v4016 = vsel %vm3208, %v638, 0
    %4018 = vmatpush.xpose.msra.mxu0 0.0
    %4019 = vmatpush.xpose.msra.mxu0 0.0
    %4020 = vmatpush.xpose.msra.mxu0 0.0
    %4021 = vmatpush.xpose.msra.mxu0 0.0
    %4022 = vmatpush.xpose.msra.mxu0 0.0
    %4023 = vmatpush.xpose.msra.mxu0 0.0
    %4024 = vmatpush.xpose.msra.mxu0 0.0
    %4025 = vmatpush.xpose.msra.mxu0 0.0
    %4026 = vmatpush.xpose.msra.mxu0 0.0
    %4027 = vmatpush.xpose.msra.mxu0 0.0
    %4028 = vmatpush.xpose.msra.mxu0 0.0
    %4029 = vmatpush.xpose.msra.mxu0 0.0
    %4030 = vmatpush.xpose.msra.mxu0 0.0
    %4031 = vmatpush.xpose.msra.mxu0 0.0
    %4032 = vmatpush.xpose.msra.mxu0 0.0
    %v4033 = vand.u32 %v4016, 4294901760
    %4034 = vmatpush.xpose.msra.mxu0 %v4033
    %v4035 = vand.u32 %v4007, 4294901760
    %v4036 = vsub.f32 %v4007, %v4035
    %v4037 = vand.u32 %v4036, 4294901760
    %v4038 = vsub.f32 %v4036, %v4037
    %v4039 = vand.u32 %v4038, 4294901760
    %4040 = vmatmul.f32.gmra.mxu0 %v4039
    %v4041 = vpop.f32.mrf.mxu0
    %v4042 = vadd.f32 0.0, %v4041
    %v4043 = vand.u32 %v4010, 4294901760
    %v4044 = vsub.f32 %v4010, %v4043
    %v4045 = vand.u32 %v4044, 4294901760
    %v4046 = vsub.f32 %v4044, %v4045
    %v4047 = vand.u32 %v4046, 4294901760
    %4048 = vmatmul.f32.gmra.mxu0 %v4047
    %v4049 = vpop.f32.mrf.mxu0
    %v4050 = vadd.f32 0.0, %v4049
    %v4051 = vand.u32 %v4013, 4294901760
    %v4052 = vsub.f32 %v4013, %v4051
    %v4053 = vand.u32 %v4052, 4294901760
    %v4054 = vsub.f32 %v4052, %v4053
    %v4055 = vand.u32 %v4054, 4294901760
    %4056 = vmatmul.f32.gmra.mxu0 %v4055
    %v4057 = vpop.f32.mrf.mxu0
    %v4058 = vadd.f32 0.0, %v4057
    %4059 = vdwg.mxu0
    %4060 = vmatpush.xpose.msra.mxu0 0.0
    %4061 = vmatpush.xpose.msra.mxu0 0.0
    %4062 = vmatpush.xpose.msra.mxu0 0.0
    %4063 = vmatpush.xpose.msra.mxu0 0.0
    %4064 = vmatpush.xpose.msra.mxu0 0.0
    %4065 = vmatpush.xpose.msra.mxu0 0.0
    %4066 = vmatpush.xpose.msra.mxu0 0.0
    %4067 = vmatpush.xpose.msra.mxu0 0.0
    %4068 = vmatpush.xpose.msra.mxu0 0.0
    %4069 = vmatpush.xpose.msra.mxu0 0.0
    %4070 = vmatpush.xpose.msra.mxu0 0.0
    %4071 = vmatpush.xpose.msra.mxu0 0.0
    %4072 = vmatpush.xpose.msra.mxu0 0.0
    %4073 = vmatpush.xpose.msra.mxu0 0.0
    %4074 = vmatpush.xpose.msra.mxu0 0.0
    %v4075 = vand.u32 %v4016, 4294901760
    %v4076 = vsub.f32 %v4016, %v4075
    %v4077 = vand.u32 %v4076, 4294901760
    %v4078 = vsub.f32 %v4076, %v4077
    %v4079 = vand.u32 %v4078, 4294901760
    %4080 = vmatpush.xpose.msra.mxu0 %v4079
    %v4081 = vand.u32 %v4007, 4294901760
    %4082 = vmatmul.f32.gmra.mxu0 %v4081
    %v4083 = vpop.f32.mrf.mxu0
    %v4084 = vadd.f32 %v4042, %v4083
    %v4085 = vand.u32 %v4010, 4294901760
    %4086 = vmatmul.f32.gmra.mxu0 %v4085
    %v4087 = vpop.f32.mrf.mxu0
    %v4088 = vadd.f32 %v4050, %v4087
    %v4089 = vand.u32 %v4013, 4294901760
    %4090 = vmatmul.f32.gmra.mxu0 %v4089
    %v4091 = vpop.f32.mrf.mxu0
    %v4092 = vadd.f32 %v4058, %v4091
    %4093 = vdwg.mxu0
    %4094 = vmatpush.xpose.msra.mxu0 0.0
    %4095 = vmatpush.xpose.msra.mxu0 0.0
    %4096 = vmatpush.xpose.msra.mxu0 0.0
    %4097 = vmatpush.xpose.msra.mxu0 0.0
    %4098 = vmatpush.xpose.msra.mxu0 0.0
    %4099 = vmatpush.xpose.msra.mxu0 0.0
    %4100 = vmatpush.xpose.msra.mxu0 0.0
    %4101 = vmatpush.xpose.msra.mxu0 0.0
    %4102 = vmatpush.xpose.msra.mxu0 0.0
    %4103 = vmatpush.xpose.msra.mxu0 0.0
    %4104 = vmatpush.xpose.msra.mxu0 0.0
    %4105 = vmatpush.xpose.msra.mxu0 0.0
    %4106 = vmatpush.xpose.msra.mxu0 0.0
    %4107 = vmatpush.xpose.msra.mxu0 0.0
    %4108 = vmatpush.xpose.msra.mxu0 0.0
    %v4109 = vand.u32 %v4016, 4294901760
    %v4110 = vsub.f32 %v4016, %v4109
    %4111 = vmatpush.xpose.msra.mxu0 %v4110
    %v4112 = vand.u32 %v4007, 4294901760
    %v4113 = vsub.f32 %v4007, %v4112
    %4114 = vmatmul.f32.gmra.mxu0 %v4113
    %v4115 = vpop.f32.mrf.mxu0
    %v4116 = vadd.f32 %v4084, %v4115
    %v4117 = vand.u32 %v4010, 4294901760
    %v4118 = vsub.f32 %v4010, %v4117
    %4119 = vmatmul.f32.gmra.mxu0 %v4118
    %v4120 = vpop.f32.mrf.mxu0
    %v4121 = vadd.f32 %v4088, %v4120
    %v4122 = vand.u32 %v4013, 4294901760
    %v4123 = vsub.f32 %v4013, %v4122
    %4124 = vmatmul.f32.gmra.mxu0 %v4123
    %v4125 = vpop.f32.mrf.mxu0
    %v4126 = vadd.f32 %v4092, %v4125
    %4127 = vdwg.mxu0
    %4128 = vmatpush.xpose.msra.mxu0 0.0
    %4129 = vmatpush.xpose.msra.mxu0 0.0
    %4130 = vmatpush.xpose.msra.mxu0 0.0
    %4131 = vmatpush.xpose.msra.mxu0 0.0
    %4132 = vmatpush.xpose.msra.mxu0 0.0
    %4133 = vmatpush.xpose.msra.mxu0 0.0
    %4134 = vmatpush.xpose.msra.mxu0 0.0
    %4135 = vmatpush.xpose.msra.mxu0 0.0
    %4136 = vmatpush.xpose.msra.mxu0 0.0
    %4137 = vmatpush.xpose.msra.mxu0 0.0
    %4138 = vmatpush.xpose.msra.mxu0 0.0
    %4139 = vmatpush.xpose.msra.mxu0 0.0
    %4140 = vmatpush.xpose.msra.mxu0 0.0
    %4141 = vmatpush.xpose.msra.mxu0 0.0
    %4142 = vmatpush.xpose.msra.mxu0 0.0
    %v4143 = vand.u32 %v4016, 4294901760
    %4144 = vmatpush.xpose.msra.mxu0 %v4143
    %v4145 = vand.u32 %v4007, 4294901760
    %v4146 = vsub.f32 %v4007, %v4145
    %v4147 = vand.u32 %v4146, 4294901760
    %4148 = vmatmul.f32.gmra.mxu0 %v4147
    %v4149 = vpop.f32.mrf.mxu0
    %v4150 = vadd.f32 %v4116, %v4149
    %v4151 = vand.u32 %v4010, 4294901760
    %v4152 = vsub.f32 %v4010, %v4151
    %v4153 = vand.u32 %v4152, 4294901760
    %4154 = vmatmul.f32.gmra.mxu0 %v4153
    %v4155 = vpop.f32.mrf.mxu0
    %v4156 = vadd.f32 %v4121, %v4155
    %v4157 = vand.u32 %v4013, 4294901760
    %v4158 = vsub.f32 %v4013, %v4157
    %v4159 = vand.u32 %v4158, 4294901760
    %4160 = vmatmul.f32.gmra.mxu0 %v4159
    %v4161 = vpop.f32.mrf.mxu0
    %v4162 = vadd.f32 %v4126, %v4161
    %4163 = vdwg.mxu0
    %4164 = vmatpush.xpose.msra.mxu0 0.0
    %4165 = vmatpush.xpose.msra.mxu0 0.0
    %4166 = vmatpush.xpose.msra.mxu0 0.0
    %4167 = vmatpush.xpose.msra.mxu0 0.0
    %4168 = vmatpush.xpose.msra.mxu0 0.0
    %4169 = vmatpush.xpose.msra.mxu0 0.0
    %4170 = vmatpush.xpose.msra.mxu0 0.0
    %4171 = vmatpush.xpose.msra.mxu0 0.0
    %4172 = vmatpush.xpose.msra.mxu0 0.0
    %4173 = vmatpush.xpose.msra.mxu0 0.0
    %4174 = vmatpush.xpose.msra.mxu0 0.0
    %4175 = vmatpush.xpose.msra.mxu0 0.0
    %4176 = vmatpush.xpose.msra.mxu0 0.0
    %4177 = vmatpush.xpose.msra.mxu0 0.0
    %4178 = vmatpush.xpose.msra.mxu0 0.0
    %v4179 = vand.u32 %v4016, 4294901760
    %v4180 = vsub.f32 %v4016, %v4179
    %v4181 = vand.u32 %v4180, 4294901760
    %4182 = vmatpush.xpose.msra.mxu0 %v4181
    %v4183 = vand.u32 %v4007, 4294901760
    %4184 = vmatmul.f32.gmra.mxu0 %v4183
    %v4185 = vpop.f32.mrf.mxu0
    %v4186 = vadd.f32 %v4150, %v4185
    %v4187 = vand.u32 %v4010, 4294901760
    %4188 = vmatmul.f32.gmra.mxu0 %v4187
    %v4189 = vpop.f32.mrf.mxu0
    %v4190 = vadd.f32 %v4156, %v4189
    %v4191 = vand.u32 %v4013, 4294901760
    %4192 = vmatmul.f32.gmra.mxu0 %v4191
    %v4193 = vpop.f32.mrf.mxu0
    %v4194 = vadd.f32 %v4162, %v4193
    %4195 = vdwg.mxu0
    %4196 = vmatpush.xpose.msra.mxu0 0.0
    %4197 = vmatpush.xpose.msra.mxu0 0.0
    %4198 = vmatpush.xpose.msra.mxu0 0.0
    %4199 = vmatpush.xpose.msra.mxu0 0.0
    %4200 = vmatpush.xpose.msra.mxu0 0.0
    %4201 = vmatpush.xpose.msra.mxu0 0.0
    %4202 = vmatpush.xpose.msra.mxu0 0.0
    %4203 = vmatpush.xpose.msra.mxu0 0.0
    %4204 = vmatpush.xpose.msra.mxu0 0.0
    %4205 = vmatpush.xpose.msra.mxu0 0.0
    %4206 = vmatpush.xpose.msra.mxu0 0.0
    %4207 = vmatpush.xpose.msra.mxu0 0.0
    %4208 = vmatpush.xpose.msra.mxu0 0.0
    %4209 = vmatpush.xpose.msra.mxu0 0.0
    %4210 = vmatpush.xpose.msra.mxu0 0.0
    %v4211 = vand.u32 %v4016, 4294901760
    %4212 = vmatpush.xpose.msra.mxu0 %v4211
    %v4213 = vand.u32 %v4007, 4294901760
    %4214 = vmatmul.f32.gmra.mxu0 %v4213
    %v4215 = vpop.f32.mrf.mxu0
    %v4216 = vadd.f32 %v4186, %v4215
    %v4217 = vand.u32 %v4010, 4294901760
    %4218 = vmatmul.f32.gmra.mxu0 %v4217
    %v4219 = vpop.f32.mrf.mxu0
    %v4220 = vadd.f32 %v4190, %v4219
    %v4221 = vand.u32 %v4013, 4294901760
    %4222 = vmatmul.f32.gmra.mxu0 %v4221
    %v4223 = vpop.f32.mrf.mxu0
    %v4224 = vadd.f32 %v4194, %v4223
    %4225 = vdwg.mxu0
    %v4227 = vsel %vm3208, %v3530, 0
    %v4230 = vsel %vm3208, %v3545, 0
    %v4233 = vsel %vm3208, %v3560, 0
    %v4236 = vsel %vm3208, %v642, 0
    %4238 = vmatpush.xpose.msra.mxu0 0.0
    %4239 = vmatpush.xpose.msra.mxu0 0.0
    %4240 = vmatpush.xpose.msra.mxu0 0.0
    %4241 = vmatpush.xpose.msra.mxu0 0.0
    %4242 = vmatpush.xpose.msra.mxu0 0.0
    %4243 = vmatpush.xpose.msra.mxu0 0.0
    %4244 = vmatpush.xpose.msra.mxu0 0.0
    %4245 = vmatpush.xpose.msra.mxu0 0.0
    %4246 = vmatpush.xpose.msra.mxu0 0.0
    %4247 = vmatpush.xpose.msra.mxu0 0.0
    %4248 = vmatpush.xpose.msra.mxu0 0.0
    %4249 = vmatpush.xpose.msra.mxu0 0.0
    %4250 = vmatpush.xpose.msra.mxu0 0.0
    %4251 = vmatpush.xpose.msra.mxu0 0.0
    %4252 = vmatpush.xpose.msra.mxu0 0.0
    %v4253 = vand.u32 %v4236, 4294901760
    %4254 = vmatpush.xpose.msra.mxu0 %v4253
    %v4255 = vand.u32 %v4227, 4294901760
    %v4256 = vsub.f32 %v4227, %v4255
    %v4257 = vand.u32 %v4256, 4294901760
    %v4258 = vsub.f32 %v4256, %v4257
    %v4259 = vand.u32 %v4258, 4294901760
    %4260 = vmatmul.f32.gmra.mxu0 %v4259
    %v4261 = vpop.f32.mrf.mxu0
    %v4262 = vadd.f32 0.0, %v4261
    %v4263 = vand.u32 %v4230, 4294901760
    %v4264 = vsub.f32 %v4230, %v4263
    %v4265 = vand.u32 %v4264, 4294901760
    %v4266 = vsub.f32 %v4264, %v4265
    %v4267 = vand.u32 %v4266, 4294901760
    %4268 = vmatmul.f32.gmra.mxu0 %v4267
    %v4269 = vpop.f32.mrf.mxu0
    %v4270 = vadd.f32 0.0, %v4269
    %v4271 = vand.u32 %v4233, 4294901760
    %v4272 = vsub.f32 %v4233, %v4271
    %v4273 = vand.u32 %v4272, 4294901760
    %v4274 = vsub.f32 %v4272, %v4273
    %v4275 = vand.u32 %v4274, 4294901760
    %4276 = vmatmul.f32.gmra.mxu0 %v4275
    %v4277 = vpop.f32.mrf.mxu0
    %v4278 = vadd.f32 0.0, %v4277
    %4279 = vdwg.mxu0
    %4280 = vmatpush.xpose.msra.mxu0 0.0
    %4281 = vmatpush.xpose.msra.mxu0 0.0
    %4282 = vmatpush.xpose.msra.mxu0 0.0
    %4283 = vmatpush.xpose.msra.mxu0 0.0
    %4284 = vmatpush.xpose.msra.mxu0 0.0
    %4285 = vmatpush.xpose.msra.mxu0 0.0
    %4286 = vmatpush.xpose.msra.mxu0 0.0
    %4287 = vmatpush.xpose.msra.mxu0 0.0
    %4288 = vmatpush.xpose.msra.mxu0 0.0
    %4289 = vmatpush.xpose.msra.mxu0 0.0
    %4290 = vmatpush.xpose.msra.mxu0 0.0
    %4291 = vmatpush.xpose.msra.mxu0 0.0
    %4292 = vmatpush.xpose.msra.mxu0 0.0
    %4293 = vmatpush.xpose.msra.mxu0 0.0
    %4294 = vmatpush.xpose.msra.mxu0 0.0
    %v4295 = vand.u32 %v4236, 4294901760
    %v4296 = vsub.f32 %v4236, %v4295
    %v4297 = vand.u32 %v4296, 4294901760
    %v4298 = vsub.f32 %v4296, %v4297
    %v4299 = vand.u32 %v4298, 4294901760
    %4300 = vmatpush.xpose.msra.mxu0 %v4299
    %v4301 = vand.u32 %v4227, 4294901760
    %4302 = vmatmul.f32.gmra.mxu0 %v4301
    %v4303 = vpop.f32.mrf.mxu0
    %v4304 = vadd.f32 %v4262, %v4303
    %v4305 = vand.u32 %v4230, 4294901760
    %4306 = vmatmul.f32.gmra.mxu0 %v4305
    %v4307 = vpop.f32.mrf.mxu0
    %v4308 = vadd.f32 %v4270, %v4307
    %v4309 = vand.u32 %v4233, 4294901760
    %4310 = vmatmul.f32.gmra.mxu0 %v4309
    %v4311 = vpop.f32.mrf.mxu0
    %v4312 = vadd.f32 %v4278, %v4311
    %4313 = vdwg.mxu0
    %4314 = vmatpush.xpose.msra.mxu0 0.0
    %4315 = vmatpush.xpose.msra.mxu0 0.0
    %4316 = vmatpush.xpose.msra.mxu0 0.0
    %4317 = vmatpush.xpose.msra.mxu0 0.0
    %4318 = vmatpush.xpose.msra.mxu0 0.0
    %4319 = vmatpush.xpose.msra.mxu0 0.0
    %4320 = vmatpush.xpose.msra.mxu0 0.0
    %4321 = vmatpush.xpose.msra.mxu0 0.0
    %4322 = vmatpush.xpose.msra.mxu0 0.0
    %4323 = vmatpush.xpose.msra.mxu0 0.0
    %4324 = vmatpush.xpose.msra.mxu0 0.0
    %4325 = vmatpush.xpose.msra.mxu0 0.0
    %4326 = vmatpush.xpose.msra.mxu0 0.0
    %4327 = vmatpush.xpose.msra.mxu0 0.0
    %4328 = vmatpush.xpose.msra.mxu0 0.0
    %v4329 = vand.u32 %v4236, 4294901760
    %v4330 = vsub.f32 %v4236, %v4329
    %4331 = vmatpush.xpose.msra.mxu0 %v4330
    %v4332 = vand.u32 %v4227, 4294901760
    %v4333 = vsub.f32 %v4227, %v4332
    %4334 = vmatmul.f32.gmra.mxu0 %v4333
    %v4335 = vpop.f32.mrf.mxu0
    %v4336 = vadd.f32 %v4304, %v4335
    %v4337 = vand.u32 %v4230, 4294901760
    %v4338 = vsub.f32 %v4230, %v4337
    %4339 = vmatmul.f32.gmra.mxu0 %v4338
    %v4340 = vpop.f32.mrf.mxu0
    %v4341 = vadd.f32 %v4308, %v4340
    %v4342 = vand.u32 %v4233, 4294901760
    %v4343 = vsub.f32 %v4233, %v4342
    %4344 = vmatmul.f32.gmra.mxu0 %v4343
    %v4345 = vpop.f32.mrf.mxu0
    %v4346 = vadd.f32 %v4312, %v4345
    %4347 = vdwg.mxu0
    %4348 = vmatpush.xpose.msra.mxu0 0.0
    %4349 = vmatpush.xpose.msra.mxu0 0.0
    %4350 = vmatpush.xpose.msra.mxu0 0.0
    %4351 = vmatpush.xpose.msra.mxu0 0.0
    %4352 = vmatpush.xpose.msra.mxu0 0.0
    %4353 = vmatpush.xpose.msra.mxu0 0.0
    %4354 = vmatpush.xpose.msra.mxu0 0.0
    %4355 = vmatpush.xpose.msra.mxu0 0.0
    %4356 = vmatpush.xpose.msra.mxu0 0.0
    %4357 = vmatpush.xpose.msra.mxu0 0.0
    %4358 = vmatpush.xpose.msra.mxu0 0.0
    %4359 = vmatpush.xpose.msra.mxu0 0.0
    %4360 = vmatpush.xpose.msra.mxu0 0.0
    %4361 = vmatpush.xpose.msra.mxu0 0.0
    %4362 = vmatpush.xpose.msra.mxu0 0.0
    %v4363 = vand.u32 %v4236, 4294901760
    %4364 = vmatpush.xpose.msra.mxu0 %v4363
    %v4365 = vand.u32 %v4227, 4294901760
    %v4366 = vsub.f32 %v4227, %v4365
    %v4367 = vand.u32 %v4366, 4294901760
    %4368 = vmatmul.f32.gmra.mxu0 %v4367
    %v4369 = vpop.f32.mrf.mxu0
    %v4370 = vadd.f32 %v4336, %v4369
    %v4371 = vand.u32 %v4230, 4294901760
    %v4372 = vsub.f32 %v4230, %v4371
    %v4373 = vand.u32 %v4372, 4294901760
    %4374 = vmatmul.f32.gmra.mxu0 %v4373
    %v4375 = vpop.f32.mrf.mxu0
    %v4376 = vadd.f32 %v4341, %v4375
    %v4377 = vand.u32 %v4233, 4294901760
    %v4378 = vsub.f32 %v4233, %v4377
    %v4379 = vand.u32 %v4378, 4294901760
    %4380 = vmatmul.f32.gmra.mxu0 %v4379
    %v4381 = vpop.f32.mrf.mxu0
    %v4382 = vadd.f32 %v4346, %v4381
    %4383 = vdwg.mxu0
    %4384 = vmatpush.xpose.msra.mxu0 0.0
    %4385 = vmatpush.xpose.msra.mxu0 0.0
    %4386 = vmatpush.xpose.msra.mxu0 0.0
    %4387 = vmatpush.xpose.msra.mxu0 0.0
    %4388 = vmatpush.xpose.msra.mxu0 0.0
    %4389 = vmatpush.xpose.msra.mxu0 0.0
    %4390 = vmatpush.xpose.msra.mxu0 0.0
    %4391 = vmatpush.xpose.msra.mxu0 0.0
    %4392 = vmatpush.xpose.msra.mxu0 0.0
    %4393 = vmatpush.xpose.msra.mxu0 0.0
    %4394 = vmatpush.xpose.msra.mxu0 0.0
    %4395 = vmatpush.xpose.msra.mxu0 0.0
    %4396 = vmatpush.xpose.msra.mxu0 0.0
    %4397 = vmatpush.xpose.msra.mxu0 0.0
    %4398 = vmatpush.xpose.msra.mxu0 0.0
    %v4399 = vand.u32 %v4236, 4294901760
    %v4400 = vsub.f32 %v4236, %v4399
    %v4401 = vand.u32 %v4400, 4294901760
    %4402 = vmatpush.xpose.msra.mxu0 %v4401
    %v4403 = vand.u32 %v4227, 4294901760
    %4404 = vmatmul.f32.gmra.mxu0 %v4403
    %v4405 = vpop.f32.mrf.mxu0
    %v4406 = vadd.f32 %v4370, %v4405
    %v4407 = vand.u32 %v4230, 4294901760
    %4408 = vmatmul.f32.gmra.mxu0 %v4407
    %v4409 = vpop.f32.mrf.mxu0
    %v4410 = vadd.f32 %v4376, %v4409
    %v4411 = vand.u32 %v4233, 4294901760
    %4412 = vmatmul.f32.gmra.mxu0 %v4411
    %v4413 = vpop.f32.mrf.mxu0
    %v4414 = vadd.f32 %v4382, %v4413
    %4415 = vdwg.mxu0
    %4416 = vmatpush.xpose.msra.mxu0 0.0
    %4417 = vmatpush.xpose.msra.mxu0 0.0
    %4418 = vmatpush.xpose.msra.mxu0 0.0
    %4419 = vmatpush.xpose.msra.mxu0 0.0
    %4420 = vmatpush.xpose.msra.mxu0 0.0
    %4421 = vmatpush.xpose.msra.mxu0 0.0
    %4422 = vmatpush.xpose.msra.mxu0 0.0
    %4423 = vmatpush.xpose.msra.mxu0 0.0
    %4424 = vmatpush.xpose.msra.mxu0 0.0
    %4425 = vmatpush.xpose.msra.mxu0 0.0
    %4426 = vmatpush.xpose.msra.mxu0 0.0
    %4427 = vmatpush.xpose.msra.mxu0 0.0
    %4428 = vmatpush.xpose.msra.mxu0 0.0
    %4429 = vmatpush.xpose.msra.mxu0 0.0
    %4430 = vmatpush.xpose.msra.mxu0 0.0
    %v4431 = vand.u32 %v4236, 4294901760
    %4432 = vmatpush.xpose.msra.mxu0 %v4431
    %v4433 = vand.u32 %v4227, 4294901760
    %4434 = vmatmul.f32.gmra.mxu0 %v4433
    %v4435 = vpop.f32.mrf.mxu0
    %v4436 = vadd.f32 %v4406, %v4435
    %v4437 = vand.u32 %v4230, 4294901760
    %4438 = vmatmul.f32.gmra.mxu0 %v4437
    %v4439 = vpop.f32.mrf.mxu0
    %v4440 = vadd.f32 %v4410, %v4439
    %v4441 = vand.u32 %v4233, 4294901760
    %4442 = vmatmul.f32.gmra.mxu0 %v4441
    %v4443 = vpop.f32.mrf.mxu0
    %v4444 = vadd.f32 %v4414, %v4443
    %4445 = vdwg.mxu0
    %v4447 = vsel %vm3208, %v3575, 0
    %v4450 = vsel %vm3208, %v3590, 0
    %v4453 = vsel %vm3208, %v3605, 0
    %v4456 = vsel %vm3208, %v646, 0
    %4458 = vmatpush.xpose.msra.mxu0 0.0
    %4459 = vmatpush.xpose.msra.mxu0 0.0
    %4460 = vmatpush.xpose.msra.mxu0 0.0
    %4461 = vmatpush.xpose.msra.mxu0 0.0
    %4462 = vmatpush.xpose.msra.mxu0 0.0
    %4463 = vmatpush.xpose.msra.mxu0 0.0
    %4464 = vmatpush.xpose.msra.mxu0 0.0
    %4465 = vmatpush.xpose.msra.mxu0 0.0
    %4466 = vmatpush.xpose.msra.mxu0 0.0
    %4467 = vmatpush.xpose.msra.mxu0 0.0
    %4468 = vmatpush.xpose.msra.mxu0 0.0
    %4469 = vmatpush.xpose.msra.mxu0 0.0
    %4470 = vmatpush.xpose.msra.mxu0 0.0
    %4471 = vmatpush.xpose.msra.mxu0 0.0
    %4472 = vmatpush.xpose.msra.mxu0 0.0
    %v4473 = vand.u32 %v4456, 4294901760
    %4474 = vmatpush.xpose.msra.mxu0 %v4473
    %v4475 = vand.u32 %v4447, 4294901760
    %v4476 = vsub.f32 %v4447, %v4475
    %v4477 = vand.u32 %v4476, 4294901760
    %v4478 = vsub.f32 %v4476, %v4477
    %v4479 = vand.u32 %v4478, 4294901760
    %4480 = vmatmul.f32.gmra.mxu0 %v4479
    %v4481 = vpop.f32.mrf.mxu0
    %v4482 = vadd.f32 0.0, %v4481
    %v4483 = vand.u32 %v4450, 4294901760
    %v4484 = vsub.f32 %v4450, %v4483
    %v4485 = vand.u32 %v4484, 4294901760
    %v4486 = vsub.f32 %v4484, %v4485
    %v4487 = vand.u32 %v4486, 4294901760
    %4488 = vmatmul.f32.gmra.mxu0 %v4487
    %v4489 = vpop.f32.mrf.mxu0
    %v4490 = vadd.f32 0.0, %v4489
    %v4491 = vand.u32 %v4453, 4294901760
    %v4492 = vsub.f32 %v4453, %v4491
    %v4493 = vand.u32 %v4492, 4294901760
    %v4494 = vsub.f32 %v4492, %v4493
    %v4495 = vand.u32 %v4494, 4294901760
    %4496 = vmatmul.f32.gmra.mxu0 %v4495
    %v4497 = vpop.f32.mrf.mxu0
    %v4498 = vadd.f32 0.0, %v4497
    %4499 = vdwg.mxu0
    %4500 = vmatpush.xpose.msra.mxu0 0.0
    %4501 = vmatpush.xpose.msra.mxu0 0.0
    %4502 = vmatpush.xpose.msra.mxu0 0.0
    %4503 = vmatpush.xpose.msra.mxu0 0.0
    %4504 = vmatpush.xpose.msra.mxu0 0.0
    %4505 = vmatpush.xpose.msra.mxu0 0.0
    %4506 = vmatpush.xpose.msra.mxu0 0.0
    %4507 = vmatpush.xpose.msra.mxu0 0.0
    %4508 = vmatpush.xpose.msra.mxu0 0.0
    %4509 = vmatpush.xpose.msra.mxu0 0.0
    %4510 = vmatpush.xpose.msra.mxu0 0.0
    %4511 = vmatpush.xpose.msra.mxu0 0.0
    %4512 = vmatpush.xpose.msra.mxu0 0.0
    %4513 = vmatpush.xpose.msra.mxu0 0.0
    %4514 = vmatpush.xpose.msra.mxu0 0.0
    %v4515 = vand.u32 %v4456, 4294901760
    %v4516 = vsub.f32 %v4456, %v4515
    %v4517 = vand.u32 %v4516, 4294901760
    %v4518 = vsub.f32 %v4516, %v4517
    %v4519 = vand.u32 %v4518, 4294901760
    %4520 = vmatpush.xpose.msra.mxu0 %v4519
    %v4521 = vand.u32 %v4447, 4294901760
    %4522 = vmatmul.f32.gmra.mxu0 %v4521
    %v4523 = vpop.f32.mrf.mxu0
    %v4524 = vadd.f32 %v4482, %v4523
    %v4525 = vand.u32 %v4450, 4294901760
    %4526 = vmatmul.f32.gmra.mxu0 %v4525
    %v4527 = vpop.f32.mrf.mxu0
    %v4528 = vadd.f32 %v4490, %v4527
    %v4529 = vand.u32 %v4453, 4294901760
    %4530 = vmatmul.f32.gmra.mxu0 %v4529
    %v4531 = vpop.f32.mrf.mxu0
    %v4532 = vadd.f32 %v4498, %v4531
    %4533 = vdwg.mxu0
    %4534 = vmatpush.xpose.msra.mxu0 0.0
    %4535 = vmatpush.xpose.msra.mxu0 0.0
    %4536 = vmatpush.xpose.msra.mxu0 0.0
    %4537 = vmatpush.xpose.msra.mxu0 0.0
    %4538 = vmatpush.xpose.msra.mxu0 0.0
    %4539 = vmatpush.xpose.msra.mxu0 0.0
    %4540 = vmatpush.xpose.msra.mxu0 0.0
    %4541 = vmatpush.xpose.msra.mxu0 0.0
    %4542 = vmatpush.xpose.msra.mxu0 0.0
    %4543 = vmatpush.xpose.msra.mxu0 0.0
    %4544 = vmatpush.xpose.msra.mxu0 0.0
    %4545 = vmatpush.xpose.msra.mxu0 0.0
    %4546 = vmatpush.xpose.msra.mxu0 0.0
    %4547 = vmatpush.xpose.msra.mxu0 0.0
    %4548 = vmatpush.xpose.msra.mxu0 0.0
    %v4549 = vand.u32 %v4456, 4294901760
    %v4550 = vsub.f32 %v4456, %v4549
    %4551 = vmatpush.xpose.msra.mxu0 %v4550
    %v4552 = vand.u32 %v4447, 4294901760
    %v4553 = vsub.f32 %v4447, %v4552
    %4554 = vmatmul.f32.gmra.mxu0 %v4553
    %v4555 = vpop.f32.mrf.mxu0
    %v4556 = vadd.f32 %v4524, %v4555
    %v4557 = vand.u32 %v4450, 4294901760
    %v4558 = vsub.f32 %v4450, %v4557
    %4559 = vmatmul.f32.gmra.mxu0 %v4558
    %v4560 = vpop.f32.mrf.mxu0
    %v4561 = vadd.f32 %v4528, %v4560
    %v4562 = vand.u32 %v4453, 4294901760
    %v4563 = vsub.f32 %v4453, %v4562
    %4564 = vmatmul.f32.gmra.mxu0 %v4563
    %v4565 = vpop.f32.mrf.mxu0
    %v4566 = vadd.f32 %v4532, %v4565
    %4567 = vdwg.mxu0
    %4568 = vmatpush.xpose.msra.mxu0 0.0
    %4569 = vmatpush.xpose.msra.mxu0 0.0
    %4570 = vmatpush.xpose.msra.mxu0 0.0
    %4571 = vmatpush.xpose.msra.mxu0 0.0
    %4572 = vmatpush.xpose.msra.mxu0 0.0
    %4573 = vmatpush.xpose.msra.mxu0 0.0
    %4574 = vmatpush.xpose.msra.mxu0 0.0
    %4575 = vmatpush.xpose.msra.mxu0 0.0
    %4576 = vmatpush.xpose.msra.mxu0 0.0
    %4577 = vmatpush.xpose.msra.mxu0 0.0
    %4578 = vmatpush.xpose.msra.mxu0 0.0
    %4579 = vmatpush.xpose.msra.mxu0 0.0
    %4580 = vmatpush.xpose.msra.mxu0 0.0
    %4581 = vmatpush.xpose.msra.mxu0 0.0
    %4582 = vmatpush.xpose.msra.mxu0 0.0
    %v4583 = vand.u32 %v4456, 4294901760
    %4584 = vmatpush.xpose.msra.mxu0 %v4583
    %v4585 = vand.u32 %v4447, 4294901760
    %v4586 = vsub.f32 %v4447, %v4585
    %v4587 = vand.u32 %v4586, 4294901760
    %4588 = vmatmul.f32.gmra.mxu0 %v4587
    %v4589 = vpop.f32.mrf.mxu0
    %v4590 = vadd.f32 %v4556, %v4589
    %v4591 = vand.u32 %v4450, 4294901760
    %v4592 = vsub.f32 %v4450, %v4591
    %v4593 = vand.u32 %v4592, 4294901760
    %4594 = vmatmul.f32.gmra.mxu0 %v4593
    %v4595 = vpop.f32.mrf.mxu0
    %v4596 = vadd.f32 %v4561, %v4595
    %v4597 = vand.u32 %v4453, 4294901760
    %v4598 = vsub.f32 %v4453, %v4597
    %v4599 = vand.u32 %v4598, 4294901760
    %4600 = vmatmul.f32.gmra.mxu0 %v4599
    %v4601 = vpop.f32.mrf.mxu0
    %v4602 = vadd.f32 %v4566, %v4601
    %4603 = vdwg.mxu0
    %4604 = vmatpush.xpose.msra.mxu0 0.0
    %4605 = vmatpush.xpose.msra.mxu0 0.0
    %4606 = vmatpush.xpose.msra.mxu0 0.0
    %4607 = vmatpush.xpose.msra.mxu0 0.0
    %4608 = vmatpush.xpose.msra.mxu0 0.0
    %4609 = vmatpush.xpose.msra.mxu0 0.0
    %4610 = vmatpush.xpose.msra.mxu0 0.0
    %4611 = vmatpush.xpose.msra.mxu0 0.0
    %4612 = vmatpush.xpose.msra.mxu0 0.0
    %4613 = vmatpush.xpose.msra.mxu0 0.0
    %4614 = vmatpush.xpose.msra.mxu0 0.0
    %4615 = vmatpush.xpose.msra.mxu0 0.0
    %4616 = vmatpush.xpose.msra.mxu0 0.0
    %4617 = vmatpush.xpose.msra.mxu0 0.0
    %4618 = vmatpush.xpose.msra.mxu0 0.0
    %v4619 = vand.u32 %v4456, 4294901760
    %v4620 = vsub.f32 %v4456, %v4619
    %v4621 = vand.u32 %v4620, 4294901760
    %4622 = vmatpush.xpose.msra.mxu0 %v4621
    %v4623 = vand.u32 %v4447, 4294901760
    %4624 = vmatmul.f32.gmra.mxu0 %v4623
    %v4625 = vpop.f32.mrf.mxu0
    %v4626 = vadd.f32 %v4590, %v4625
    %v4627 = vand.u32 %v4450, 4294901760
    %4628 = vmatmul.f32.gmra.mxu0 %v4627
    %v4629 = vpop.f32.mrf.mxu0
    %v4630 = vadd.f32 %v4596, %v4629
    %v4631 = vand.u32 %v4453, 4294901760
    %4632 = vmatmul.f32.gmra.mxu0 %v4631
    %v4633 = vpop.f32.mrf.mxu0
    %v4634 = vadd.f32 %v4602, %v4633
    %4635 = vdwg.mxu0
    %4636 = vmatpush.xpose.msra.mxu0 0.0
    %4637 = vmatpush.xpose.msra.mxu0 0.0
    %4638 = vmatpush.xpose.msra.mxu0 0.0
    %4639 = vmatpush.xpose.msra.mxu0 0.0
    %4640 = vmatpush.xpose.msra.mxu0 0.0
    %4641 = vmatpush.xpose.msra.mxu0 0.0
    %4642 = vmatpush.xpose.msra.mxu0 0.0
    %4643 = vmatpush.xpose.msra.mxu0 0.0
    %4644 = vmatpush.xpose.msra.mxu0 0.0
    %4645 = vmatpush.xpose.msra.mxu0 0.0
    %4646 = vmatpush.xpose.msra.mxu0 0.0
    %4647 = vmatpush.xpose.msra.mxu0 0.0
    %4648 = vmatpush.xpose.msra.mxu0 0.0
    %4649 = vmatpush.xpose.msra.mxu0 0.0
    %4650 = vmatpush.xpose.msra.mxu0 0.0
    %v4651 = vand.u32 %v4456, 4294901760
    %4652 = vmatpush.xpose.msra.mxu0 %v4651
    %v4653 = vand.u32 %v4447, 4294901760
    %4654 = vmatmul.f32.gmra.mxu0 %v4653
    %v4655 = vpop.f32.mrf.mxu0
    %v4656 = vadd.f32 %v4626, %v4655
    %v4657 = vand.u32 %v4450, 4294901760
    %4658 = vmatmul.f32.gmra.mxu0 %v4657
    %v4659 = vpop.f32.mrf.mxu0
    %v4660 = vadd.f32 %v4630, %v4659
    %v4661 = vand.u32 %v4453, 4294901760
    %4662 = vmatmul.f32.gmra.mxu0 %v4661
    %v4663 = vpop.f32.mrf.mxu0
    %v4664 = vadd.f32 %v4634, %v4663
    %4665 = vdwg.mxu0
    %v4667 = vsel %vm3208, %v3620, 0
    %v4670 = vsel %vm3208, %v3635, 0
    %v4673 = vsel %vm3208, %v3650, 0
    %v4676 = vsel %vm3208, %v1329, 0
    %4678 = vmatpush.xpose.msra.mxu0 0.0
    %4679 = vmatpush.xpose.msra.mxu0 0.0
    %4680 = vmatpush.xpose.msra.mxu0 0.0
    %4681 = vmatpush.xpose.msra.mxu0 0.0
    %4682 = vmatpush.xpose.msra.mxu0 0.0
    %4683 = vmatpush.xpose.msra.mxu0 0.0
    %4684 = vmatpush.xpose.msra.mxu0 0.0
    %4685 = vmatpush.xpose.msra.mxu0 0.0
    %4686 = vmatpush.xpose.msra.mxu0 0.0
    %4687 = vmatpush.xpose.msra.mxu0 0.0
    %4688 = vmatpush.xpose.msra.mxu0 0.0
    %4689 = vmatpush.xpose.msra.mxu0 0.0
    %4690 = vmatpush.xpose.msra.mxu0 0.0
    %4691 = vmatpush.xpose.msra.mxu0 0.0
    %4692 = vmatpush.xpose.msra.mxu0 0.0
    %v4693 = vand.u32 %v4676, 4294901760
    %4694 = vmatpush.xpose.msra.mxu0 %v4693
    %v4695 = vand.u32 %v4667, 4294901760
    %v4696 = vsub.f32 %v4667, %v4695
    %v4697 = vand.u32 %v4696, 4294901760
    %v4698 = vsub.f32 %v4696, %v4697
    %v4699 = vand.u32 %v4698, 4294901760
    %4700 = vmatmul.f32.gmra.mxu0 %v4699
    %v4701 = vpop.f32.mrf.mxu0
    %v4702 = vadd.f32 0.0, %v4701
    %v4703 = vand.u32 %v4670, 4294901760
    %v4704 = vsub.f32 %v4670, %v4703
    %v4705 = vand.u32 %v4704, 4294901760
    %v4706 = vsub.f32 %v4704, %v4705
    %v4707 = vand.u32 %v4706, 4294901760
    %4708 = vmatmul.f32.gmra.mxu0 %v4707
    %v4709 = vpop.f32.mrf.mxu0
    %v4710 = vadd.f32 0.0, %v4709
    %v4711 = vand.u32 %v4673, 4294901760
    %v4712 = vsub.f32 %v4673, %v4711
    %v4713 = vand.u32 %v4712, 4294901760
    %v4714 = vsub.f32 %v4712, %v4713
    %v4715 = vand.u32 %v4714, 4294901760
    %4716 = vmatmul.f32.gmra.mxu0 %v4715
    %v4717 = vpop.f32.mrf.mxu0
    %v4718 = vadd.f32 0.0, %v4717
    %4719 = vdwg.mxu0
    %4720 = vmatpush.xpose.msra.mxu0 0.0
    %4721 = vmatpush.xpose.msra.mxu0 0.0
    %4722 = vmatpush.xpose.msra.mxu0 0.0
    %4723 = vmatpush.xpose.msra.mxu0 0.0
    %4724 = vmatpush.xpose.msra.mxu0 0.0
    %4725 = vmatpush.xpose.msra.mxu0 0.0
    %4726 = vmatpush.xpose.msra.mxu0 0.0
    %4727 = vmatpush.xpose.msra.mxu0 0.0
    %4728 = vmatpush.xpose.msra.mxu0 0.0
    %4729 = vmatpush.xpose.msra.mxu0 0.0
    %4730 = vmatpush.xpose.msra.mxu0 0.0
    %4731 = vmatpush.xpose.msra.mxu0 0.0
    %4732 = vmatpush.xpose.msra.mxu0 0.0
    %4733 = vmatpush.xpose.msra.mxu0 0.0
    %4734 = vmatpush.xpose.msra.mxu0 0.0
    %v4735 = vand.u32 %v4676, 4294901760
    %v4736 = vsub.f32 %v4676, %v4735
    %v4737 = vand.u32 %v4736, 4294901760
    %v4738 = vsub.f32 %v4736, %v4737
    %v4739 = vand.u32 %v4738, 4294901760
    %4740 = vmatpush.xpose.msra.mxu0 %v4739
    %v4741 = vand.u32 %v4667, 4294901760
    %4742 = vmatmul.f32.gmra.mxu0 %v4741
    %v4743 = vpop.f32.mrf.mxu0
    %v4744 = vadd.f32 %v4702, %v4743
    %v4745 = vand.u32 %v4670, 4294901760
    %4746 = vmatmul.f32.gmra.mxu0 %v4745
    %v4747 = vpop.f32.mrf.mxu0
    %v4748 = vadd.f32 %v4710, %v4747
    %v4749 = vand.u32 %v4673, 4294901760
    %4750 = vmatmul.f32.gmra.mxu0 %v4749
    %v4751 = vpop.f32.mrf.mxu0
    %v4752 = vadd.f32 %v4718, %v4751
    %4753 = vdwg.mxu0
    %4754 = vmatpush.xpose.msra.mxu0 0.0
    %4755 = vmatpush.xpose.msra.mxu0 0.0
    %4756 = vmatpush.xpose.msra.mxu0 0.0
    %4757 = vmatpush.xpose.msra.mxu0 0.0
    %4758 = vmatpush.xpose.msra.mxu0 0.0
    %4759 = vmatpush.xpose.msra.mxu0 0.0
    %4760 = vmatpush.xpose.msra.mxu0 0.0
    %4761 = vmatpush.xpose.msra.mxu0 0.0
    %4762 = vmatpush.xpose.msra.mxu0 0.0
    %4763 = vmatpush.xpose.msra.mxu0 0.0
    %4764 = vmatpush.xpose.msra.mxu0 0.0
    %4765 = vmatpush.xpose.msra.mxu0 0.0
    %4766 = vmatpush.xpose.msra.mxu0 0.0
    %4767 = vmatpush.xpose.msra.mxu0 0.0
    %4768 = vmatpush.xpose.msra.mxu0 0.0
    %v4769 = vand.u32 %v4676, 4294901760
    %v4770 = vsub.f32 %v4676, %v4769
    %4771 = vmatpush.xpose.msra.mxu0 %v4770
    %v4772 = vand.u32 %v4667, 4294901760
    %v4773 = vsub.f32 %v4667, %v4772
    %4774 = vmatmul.f32.gmra.mxu0 %v4773
    %v4775 = vpop.f32.mrf.mxu0
    %v4776 = vadd.f32 %v4744, %v4775
    %v4777 = vand.u32 %v4670, 4294901760
    %v4778 = vsub.f32 %v4670, %v4777
    %4779 = vmatmul.f32.gmra.mxu0 %v4778
    %v4780 = vpop.f32.mrf.mxu0
    %v4781 = vadd.f32 %v4748, %v4780
    %v4782 = vand.u32 %v4673, 4294901760
    %v4783 = vsub.f32 %v4673, %v4782
    %4784 = vmatmul.f32.gmra.mxu0 %v4783
    %v4785 = vpop.f32.mrf.mxu0
    %v4786 = vadd.f32 %v4752, %v4785
    %4787 = vdwg.mxu0
    %4788 = vmatpush.xpose.msra.mxu0 0.0
    %4789 = vmatpush.xpose.msra.mxu0 0.0
    %4790 = vmatpush.xpose.msra.mxu0 0.0
    %4791 = vmatpush.xpose.msra.mxu0 0.0
    %4792 = vmatpush.xpose.msra.mxu0 0.0
    %4793 = vmatpush.xpose.msra.mxu0 0.0
    %4794 = vmatpush.xpose.msra.mxu0 0.0
    %4795 = vmatpush.xpose.msra.mxu0 0.0
    %4796 = vmatpush.xpose.msra.mxu0 0.0
    %4797 = vmatpush.xpose.msra.mxu0 0.0
    %4798 = vmatpush.xpose.msra.mxu0 0.0
    %4799 = vmatpush.xpose.msra.mxu0 0.0
    %4800 = vmatpush.xpose.msra.mxu0 0.0
    %4801 = vmatpush.xpose.msra.mxu0 0.0
    %4802 = vmatpush.xpose.msra.mxu0 0.0
    %v4803 = vand.u32 %v4676, 4294901760
    %4804 = vmatpush.xpose.msra.mxu0 %v4803
    %v4805 = vand.u32 %v4667, 4294901760
    %v4806 = vsub.f32 %v4667, %v4805
    %v4807 = vand.u32 %v4806, 4294901760
    %4808 = vmatmul.f32.gmra.mxu0 %v4807
    %v4809 = vpop.f32.mrf.mxu0
    %v4810 = vadd.f32 %v4776, %v4809
    %v4811 = vand.u32 %v4670, 4294901760
    %v4812 = vsub.f32 %v4670, %v4811
    %v4813 = vand.u32 %v4812, 4294901760
    %4814 = vmatmul.f32.gmra.mxu0 %v4813
    %v4815 = vpop.f32.mrf.mxu0
    %v4816 = vadd.f32 %v4781, %v4815
    %v4817 = vand.u32 %v4673, 4294901760
    %v4818 = vsub.f32 %v4673, %v4817
    %v4819 = vand.u32 %v4818, 4294901760
    %4820 = vmatmul.f32.gmra.mxu0 %v4819
    %v4821 = vpop.f32.mrf.mxu0
    %v4822 = vadd.f32 %v4786, %v4821
    %4823 = vdwg.mxu0
    %4824 = vmatpush.xpose.msra.mxu0 0.0
    %4825 = vmatpush.xpose.msra.mxu0 0.0
    %4826 = vmatpush.xpose.msra.mxu0 0.0
    %4827 = vmatpush.xpose.msra.mxu0 0.0
    %4828 = vmatpush.xpose.msra.mxu0 0.0
    %4829 = vmatpush.xpose.msra.mxu0 0.0
    %4830 = vmatpush.xpose.msra.mxu0 0.0
    %4831 = vmatpush.xpose.msra.mxu0 0.0
    %4832 = vmatpush.xpose.msra.mxu0 0.0
    %4833 = vmatpush.xpose.msra.mxu0 0.0
    %4834 = vmatpush.xpose.msra.mxu0 0.0
    %4835 = vmatpush.xpose.msra.mxu0 0.0
    %4836 = vmatpush.xpose.msra.mxu0 0.0
    %4837 = vmatpush.xpose.msra.mxu0 0.0
    %4838 = vmatpush.xpose.msra.mxu0 0.0
    %v4839 = vand.u32 %v4676, 4294901760
    %v4840 = vsub.f32 %v4676, %v4839
    %v4841 = vand.u32 %v4840, 4294901760
    %4842 = vmatpush.xpose.msra.mxu0 %v4841
    %v4843 = vand.u32 %v4667, 4294901760
    %4844 = vmatmul.f32.gmra.mxu0 %v4843
    %v4845 = vpop.f32.mrf.mxu0
    %v4846 = vadd.f32 %v4810, %v4845
    %v4847 = vand.u32 %v4670, 4294901760
    %4848 = vmatmul.f32.gmra.mxu0 %v4847
    %v4849 = vpop.f32.mrf.mxu0
    %v4850 = vadd.f32 %v4816, %v4849
    %v4851 = vand.u32 %v4673, 4294901760
    %4852 = vmatmul.f32.gmra.mxu0 %v4851
    %v4853 = vpop.f32.mrf.mxu0
    %v4854 = vadd.f32 %v4822, %v4853
    %4855 = vdwg.mxu0
    %4856 = vmatpush.xpose.msra.mxu0 0.0
    %4857 = vmatpush.xpose.msra.mxu0 0.0
    %4858 = vmatpush.xpose.msra.mxu0 0.0
    %4859 = vmatpush.xpose.msra.mxu0 0.0
    %4860 = vmatpush.xpose.msra.mxu0 0.0
    %4861 = vmatpush.xpose.msra.mxu0 0.0
    %4862 = vmatpush.xpose.msra.mxu0 0.0
    %4863 = vmatpush.xpose.msra.mxu0 0.0
    %4864 = vmatpush.xpose.msra.mxu0 0.0
    %4865 = vmatpush.xpose.msra.mxu0 0.0
    %4866 = vmatpush.xpose.msra.mxu0 0.0
    %4867 = vmatpush.xpose.msra.mxu0 0.0
    %4868 = vmatpush.xpose.msra.mxu0 0.0
    %4869 = vmatpush.xpose.msra.mxu0 0.0
    %4870 = vmatpush.xpose.msra.mxu0 0.0
    %v4871 = vand.u32 %v4676, 4294901760
    %4872 = vmatpush.xpose.msra.mxu0 %v4871
    %v4873 = vand.u32 %v4667, 4294901760
    %4874 = vmatmul.f32.gmra.mxu0 %v4873
    %v4875 = vpop.f32.mrf.mxu0
    %v4876 = vadd.f32 %v4846, %v4875
    %v4877 = vand.u32 %v4670, 4294901760
    %4878 = vmatmul.f32.gmra.mxu0 %v4877
    %v4879 = vpop.f32.mrf.mxu0
    %v4880 = vadd.f32 %v4850, %v4879
    %v4881 = vand.u32 %v4673, 4294901760
    %4882 = vmatmul.f32.gmra.mxu0 %v4881
    %v4883 = vpop.f32.mrf.mxu0
    %v4884 = vadd.f32 %v4854, %v4883
    %4885 = vdwg.mxu0
    %v4887 = vsel %vm3208, %v3665, 0
    %v4890 = vsel %vm3208, %v3680, 0
    %v4893 = vsel %vm3208, %v3695, 0
    %v4896 = vsel %vm3208, %v1333, 0
    %4898 = vmatpush.xpose.msra.mxu0 0.0
    %4899 = vmatpush.xpose.msra.mxu0 0.0
    %4900 = vmatpush.xpose.msra.mxu0 0.0
    %4901 = vmatpush.xpose.msra.mxu0 0.0
    %4902 = vmatpush.xpose.msra.mxu0 0.0
    %4903 = vmatpush.xpose.msra.mxu0 0.0
    %4904 = vmatpush.xpose.msra.mxu0 0.0
    %4905 = vmatpush.xpose.msra.mxu0 0.0
    %4906 = vmatpush.xpose.msra.mxu0 0.0
    %4907 = vmatpush.xpose.msra.mxu0 0.0
    %4908 = vmatpush.xpose.msra.mxu0 0.0
    %4909 = vmatpush.xpose.msra.mxu0 0.0
    %4910 = vmatpush.xpose.msra.mxu0 0.0
    %4911 = vmatpush.xpose.msra.mxu0 0.0
    %4912 = vmatpush.xpose.msra.mxu0 0.0
    %v4913 = vand.u32 %v4896, 4294901760
    %4914 = vmatpush.xpose.msra.mxu0 %v4913
    %v4915 = vand.u32 %v4887, 4294901760
    %v4916 = vsub.f32 %v4887, %v4915
    %v4917 = vand.u32 %v4916, 4294901760
    %v4918 = vsub.f32 %v4916, %v4917
    %v4919 = vand.u32 %v4918, 4294901760
    %4920 = vmatmul.f32.gmra.mxu0 %v4919
    %v4921 = vpop.f32.mrf.mxu0
    %v4922 = vadd.f32 0.0, %v4921
    %v4923 = vand.u32 %v4890, 4294901760
    %v4924 = vsub.f32 %v4890, %v4923
    %v4925 = vand.u32 %v4924, 4294901760
    %v4926 = vsub.f32 %v4924, %v4925
    %v4927 = vand.u32 %v4926, 4294901760
    %4928 = vmatmul.f32.gmra.mxu0 %v4927
    %v4929 = vpop.f32.mrf.mxu0
    %v4930 = vadd.f32 0.0, %v4929
    %v4931 = vand.u32 %v4893, 4294901760
    %v4932 = vsub.f32 %v4893, %v4931
    %v4933 = vand.u32 %v4932, 4294901760
    %v4934 = vsub.f32 %v4932, %v4933
    %v4935 = vand.u32 %v4934, 4294901760
    %4936 = vmatmul.f32.gmra.mxu0 %v4935
    %v4937 = vpop.f32.mrf.mxu0
    %v4938 = vadd.f32 0.0, %v4937
    %4939 = vdwg.mxu0
    %4940 = vmatpush.xpose.msra.mxu0 0.0
    %4941 = vmatpush.xpose.msra.mxu0 0.0
    %4942 = vmatpush.xpose.msra.mxu0 0.0
    %4943 = vmatpush.xpose.msra.mxu0 0.0
    %4944 = vmatpush.xpose.msra.mxu0 0.0
    %4945 = vmatpush.xpose.msra.mxu0 0.0
    %4946 = vmatpush.xpose.msra.mxu0 0.0
    %4947 = vmatpush.xpose.msra.mxu0 0.0
    %4948 = vmatpush.xpose.msra.mxu0 0.0
    %4949 = vmatpush.xpose.msra.mxu0 0.0
    %4950 = vmatpush.xpose.msra.mxu0 0.0
    %4951 = vmatpush.xpose.msra.mxu0 0.0
    %4952 = vmatpush.xpose.msra.mxu0 0.0
    %4953 = vmatpush.xpose.msra.mxu0 0.0
    %4954 = vmatpush.xpose.msra.mxu0 0.0
    %v4955 = vand.u32 %v4896, 4294901760
    %v4956 = vsub.f32 %v4896, %v4955
    %v4957 = vand.u32 %v4956, 4294901760
    %v4958 = vsub.f32 %v4956, %v4957
    %v4959 = vand.u32 %v4958, 4294901760
    %4960 = vmatpush.xpose.msra.mxu0 %v4959
    %v4961 = vand.u32 %v4887, 4294901760
    %4962 = vmatmul.f32.gmra.mxu0 %v4961
    %v4963 = vpop.f32.mrf.mxu0
    %v4964 = vadd.f32 %v4922, %v4963
    %v4965 = vand.u32 %v4890, 4294901760
    %4966 = vmatmul.f32.gmra.mxu0 %v4965
    %v4967 = vpop.f32.mrf.mxu0
    %v4968 = vadd.f32 %v4930, %v4967
    %v4969 = vand.u32 %v4893, 4294901760
    %4970 = vmatmul.f32.gmra.mxu0 %v4969
    %v4971 = vpop.f32.mrf.mxu0
    %v4972 = vadd.f32 %v4938, %v4971
    %4973 = vdwg.mxu0
    %4974 = vmatpush.xpose.msra.mxu0 0.0
    %4975 = vmatpush.xpose.msra.mxu0 0.0
    %4976 = vmatpush.xpose.msra.mxu0 0.0
    %4977 = vmatpush.xpose.msra.mxu0 0.0
    %4978 = vmatpush.xpose.msra.mxu0 0.0
    %4979 = vmatpush.xpose.msra.mxu0 0.0
    %4980 = vmatpush.xpose.msra.mxu0 0.0
    %4981 = vmatpush.xpose.msra.mxu0 0.0
    %4982 = vmatpush.xpose.msra.mxu0 0.0
    %4983 = vmatpush.xpose.msra.mxu0 0.0
    %4984 = vmatpush.xpose.msra.mxu0 0.0
    %4985 = vmatpush.xpose.msra.mxu0 0.0
    %4986 = vmatpush.xpose.msra.mxu0 0.0
    %4987 = vmatpush.xpose.msra.mxu0 0.0
    %4988 = vmatpush.xpose.msra.mxu0 0.0
    %v4989 = vand.u32 %v4896, 4294901760
    %v4990 = vsub.f32 %v4896, %v4989
    %4991 = vmatpush.xpose.msra.mxu0 %v4990
    %v4992 = vand.u32 %v4887, 4294901760
    %v4993 = vsub.f32 %v4887, %v4992
    %4994 = vmatmul.f32.gmra.mxu0 %v4993
    %v4995 = vpop.f32.mrf.mxu0
    %v4996 = vadd.f32 %v4964, %v4995
    %v4997 = vand.u32 %v4890, 4294901760
    %v4998 = vsub.f32 %v4890, %v4997
    %4999 = vmatmul.f32.gmra.mxu0 %v4998
    %v5000 = vpop.f32.mrf.mxu0
    %v5001 = vadd.f32 %v4968, %v5000
    %v5002 = vand.u32 %v4893, 4294901760
    %v5003 = vsub.f32 %v4893, %v5002
    %5004 = vmatmul.f32.gmra.mxu0 %v5003
    %v5005 = vpop.f32.mrf.mxu0
    %v5006 = vadd.f32 %v4972, %v5005
    %5007 = vdwg.mxu0
    %5008 = vmatpush.xpose.msra.mxu0 0.0
    %5009 = vmatpush.xpose.msra.mxu0 0.0
    %5010 = vmatpush.xpose.msra.mxu0 0.0
    %5011 = vmatpush.xpose.msra.mxu0 0.0
    %5012 = vmatpush.xpose.msra.mxu0 0.0
    %5013 = vmatpush.xpose.msra.mxu0 0.0
    %5014 = vmatpush.xpose.msra.mxu0 0.0
    %5015 = vmatpush.xpose.msra.mxu0 0.0
    %5016 = vmatpush.xpose.msra.mxu0 0.0
    %5017 = vmatpush.xpose.msra.mxu0 0.0
    %5018 = vmatpush.xpose.msra.mxu0 0.0
    %5019 = vmatpush.xpose.msra.mxu0 0.0
    %5020 = vmatpush.xpose.msra.mxu0 0.0
    %5021 = vmatpush.xpose.msra.mxu0 0.0
    %5022 = vmatpush.xpose.msra.mxu0 0.0
    %v5023 = vand.u32 %v4896, 4294901760
    %5024 = vmatpush.xpose.msra.mxu0 %v5023
    %v5025 = vand.u32 %v4887, 4294901760
    %v5026 = vsub.f32 %v4887, %v5025
    %v5027 = vand.u32 %v5026, 4294901760
    %5028 = vmatmul.f32.gmra.mxu0 %v5027
    %v5029 = vpop.f32.mrf.mxu0
    %v5030 = vadd.f32 %v4996, %v5029
    %v5031 = vand.u32 %v4890, 4294901760
    %v5032 = vsub.f32 %v4890, %v5031
    %v5033 = vand.u32 %v5032, 4294901760
    %5034 = vmatmul.f32.gmra.mxu0 %v5033
    %v5035 = vpop.f32.mrf.mxu0
    %v5036 = vadd.f32 %v5001, %v5035
    %v5037 = vand.u32 %v4893, 4294901760
    %v5038 = vsub.f32 %v4893, %v5037
    %v5039 = vand.u32 %v5038, 4294901760
    %5040 = vmatmul.f32.gmra.mxu0 %v5039
    %v5041 = vpop.f32.mrf.mxu0
    %v5042 = vadd.f32 %v5006, %v5041
    %5043 = vdwg.mxu0
    %5044 = vmatpush.xpose.msra.mxu0 0.0
    %5045 = vmatpush.xpose.msra.mxu0 0.0
    %5046 = vmatpush.xpose.msra.mxu0 0.0
    %5047 = vmatpush.xpose.msra.mxu0 0.0
    %5048 = vmatpush.xpose.msra.mxu0 0.0
    %5049 = vmatpush.xpose.msra.mxu0 0.0
    %5050 = vmatpush.xpose.msra.mxu0 0.0
    %5051 = vmatpush.xpose.msra.mxu0 0.0
    %5052 = vmatpush.xpose.msra.mxu0 0.0
    %5053 = vmatpush.xpose.msra.mxu0 0.0
    %5054 = vmatpush.xpose.msra.mxu0 0.0
    %5055 = vmatpush.xpose.msra.mxu0 0.0
    %5056 = vmatpush.xpose.msra.mxu0 0.0
    %5057 = vmatpush.xpose.msra.mxu0 0.0
    %5058 = vmatpush.xpose.msra.mxu0 0.0
    %v5059 = vand.u32 %v4896, 4294901760
    %v5060 = vsub.f32 %v4896, %v5059
    %v5061 = vand.u32 %v5060, 4294901760
    %5062 = vmatpush.xpose.msra.mxu0 %v5061
    %v5063 = vand.u32 %v4887, 4294901760
    %5064 = vmatmul.f32.gmra.mxu0 %v5063
    %v5065 = vpop.f32.mrf.mxu0
    %v5066 = vadd.f32 %v5030, %v5065
    %v5067 = vand.u32 %v4890, 4294901760
    %5068 = vmatmul.f32.gmra.mxu0 %v5067
    %v5069 = vpop.f32.mrf.mxu0
    %v5070 = vadd.f32 %v5036, %v5069
    %v5071 = vand.u32 %v4893, 4294901760
    %5072 = vmatmul.f32.gmra.mxu0 %v5071
    %v5073 = vpop.f32.mrf.mxu0
    %v5074 = vadd.f32 %v5042, %v5073
    %5075 = vdwg.mxu0
    %5076 = vmatpush.xpose.msra.mxu0 0.0
    %5077 = vmatpush.xpose.msra.mxu0 0.0
    %5078 = vmatpush.xpose.msra.mxu0 0.0
    %5079 = vmatpush.xpose.msra.mxu0 0.0
    %5080 = vmatpush.xpose.msra.mxu0 0.0
    %5081 = vmatpush.xpose.msra.mxu0 0.0
    %5082 = vmatpush.xpose.msra.mxu0 0.0
    %5083 = vmatpush.xpose.msra.mxu0 0.0
    %5084 = vmatpush.xpose.msra.mxu0 0.0
    %5085 = vmatpush.xpose.msra.mxu0 0.0
    %5086 = vmatpush.xpose.msra.mxu0 0.0
    %5087 = vmatpush.xpose.msra.mxu0 0.0
    %5088 = vmatpush.xpose.msra.mxu0 0.0
    %5089 = vmatpush.xpose.msra.mxu0 0.0
    %5090 = vmatpush.xpose.msra.mxu0 0.0
    %v5091 = vand.u32 %v4896, 4294901760
    %5092 = vmatpush.xpose.msra.mxu0 %v5091
    %v5093 = vand.u32 %v4887, 4294901760
    %5094 = vmatmul.f32.gmra.mxu0 %v5093
    %v5095 = vpop.f32.mrf.mxu0
    %v5096 = vadd.f32 %v5066, %v5095
    %v5097 = vand.u32 %v4890, 4294901760
    %5098 = vmatmul.f32.gmra.mxu0 %v5097
    %v5099 = vpop.f32.mrf.mxu0
    %v5100 = vadd.f32 %v5070, %v5099
    %v5101 = vand.u32 %v4893, 4294901760
    %5102 = vmatmul.f32.gmra.mxu0 %v5101
    %v5103 = vpop.f32.mrf.mxu0
    %v5104 = vadd.f32 %v5074, %v5103
    %5105 = vdwg.mxu0
    %v5107 = vsel %vm3208, %v3710, 0
    %v5110 = vsel %vm3208, %v3725, 0
    %v5113 = vsel %vm3208, %v3740, 0
    %v5116 = vsel %vm3208, %v1337, 0
    %5118 = vmatpush.xpose.msra.mxu0 0.0
    %5119 = vmatpush.xpose.msra.mxu0 0.0
    %5120 = vmatpush.xpose.msra.mxu0 0.0
    %5121 = vmatpush.xpose.msra.mxu0 0.0
    %5122 = vmatpush.xpose.msra.mxu0 0.0
    %5123 = vmatpush.xpose.msra.mxu0 0.0
    %5124 = vmatpush.xpose.msra.mxu0 0.0
    %5125 = vmatpush.xpose.msra.mxu0 0.0
    %5126 = vmatpush.xpose.msra.mxu0 0.0
    %5127 = vmatpush.xpose.msra.mxu0 0.0
    %5128 = vmatpush.xpose.msra.mxu0 0.0
    %5129 = vmatpush.xpose.msra.mxu0 0.0
    %5130 = vmatpush.xpose.msra.mxu0 0.0
    %5131 = vmatpush.xpose.msra.mxu0 0.0
    %5132 = vmatpush.xpose.msra.mxu0 0.0
    %v5133 = vand.u32 %v5116, 4294901760
    %5134 = vmatpush.xpose.msra.mxu0 %v5133
    %v5135 = vand.u32 %v5107, 4294901760
    %v5136 = vsub.f32 %v5107, %v5135
    %v5137 = vand.u32 %v5136, 4294901760
    %v5138 = vsub.f32 %v5136, %v5137
    %v5139 = vand.u32 %v5138, 4294901760
    %5140 = vmatmul.f32.gmra.mxu0 %v5139
    %v5141 = vpop.f32.mrf.mxu0
    %v5142 = vadd.f32 0.0, %v5141
    %v5143 = vand.u32 %v5110, 4294901760
    %v5144 = vsub.f32 %v5110, %v5143
    %v5145 = vand.u32 %v5144, 4294901760
    %v5146 = vsub.f32 %v5144, %v5145
    %v5147 = vand.u32 %v5146, 4294901760
    %5148 = vmatmul.f32.gmra.mxu0 %v5147
    %v5149 = vpop.f32.mrf.mxu0
    %v5150 = vadd.f32 0.0, %v5149
    %v5151 = vand.u32 %v5113, 4294901760
    %v5152 = vsub.f32 %v5113, %v5151
    %v5153 = vand.u32 %v5152, 4294901760
    %v5154 = vsub.f32 %v5152, %v5153
    %v5155 = vand.u32 %v5154, 4294901760
    %5156 = vmatmul.f32.gmra.mxu0 %v5155
    %v5157 = vpop.f32.mrf.mxu0
    %v5158 = vadd.f32 0.0, %v5157
    %5159 = vdwg.mxu0
    %5160 = vmatpush.xpose.msra.mxu0 0.0
    %5161 = vmatpush.xpose.msra.mxu0 0.0
    %5162 = vmatpush.xpose.msra.mxu0 0.0
    %5163 = vmatpush.xpose.msra.mxu0 0.0
    %5164 = vmatpush.xpose.msra.mxu0 0.0
    %5165 = vmatpush.xpose.msra.mxu0 0.0
    %5166 = vmatpush.xpose.msra.mxu0 0.0
    %5167 = vmatpush.xpose.msra.mxu0 0.0
    %5168 = vmatpush.xpose.msra.mxu0 0.0
    %5169 = vmatpush.xpose.msra.mxu0 0.0
    %5170 = vmatpush.xpose.msra.mxu0 0.0
    %5171 = vmatpush.xpose.msra.mxu0 0.0
    %5172 = vmatpush.xpose.msra.mxu0 0.0
    %5173 = vmatpush.xpose.msra.mxu0 0.0
    %5174 = vmatpush.xpose.msra.mxu0 0.0
    %v5175 = vand.u32 %v5116, 4294901760
    %v5176 = vsub.f32 %v5116, %v5175
    %v5177 = vand.u32 %v5176, 4294901760
    %v5178 = vsub.f32 %v5176, %v5177
    %v5179 = vand.u32 %v5178, 4294901760
    %5180 = vmatpush.xpose.msra.mxu0 %v5179
    %v5181 = vand.u32 %v5107, 4294901760
    %5182 = vmatmul.f32.gmra.mxu0 %v5181
    %v5183 = vpop.f32.mrf.mxu0
    %v5184 = vadd.f32 %v5142, %v5183
    %v5185 = vand.u32 %v5110, 4294901760
    %5186 = vmatmul.f32.gmra.mxu0 %v5185
    %v5187 = vpop.f32.mrf.mxu0
    %v5188 = vadd.f32 %v5150, %v5187
    %v5189 = vand.u32 %v5113, 4294901760
    %5190 = vmatmul.f32.gmra.mxu0 %v5189
    %v5191 = vpop.f32.mrf.mxu0
    %v5192 = vadd.f32 %v5158, %v5191
    %5193 = vdwg.mxu0
    %5194 = vmatpush.xpose.msra.mxu0 0.0
    %5195 = vmatpush.xpose.msra.mxu0 0.0
    %5196 = vmatpush.xpose.msra.mxu0 0.0
    %5197 = vmatpush.xpose.msra.mxu0 0.0
    %5198 = vmatpush.xpose.msra.mxu0 0.0
    %5199 = vmatpush.xpose.msra.mxu0 0.0
    %5200 = vmatpush.xpose.msra.mxu0 0.0
    %5201 = vmatpush.xpose.msra.mxu0 0.0
    %5202 = vmatpush.xpose.msra.mxu0 0.0
    %5203 = vmatpush.xpose.msra.mxu0 0.0
    %5204 = vmatpush.xpose.msra.mxu0 0.0
    %5205 = vmatpush.xpose.msra.mxu0 0.0
    %5206 = vmatpush.xpose.msra.mxu0 0.0
    %5207 = vmatpush.xpose.msra.mxu0 0.0
    %5208 = vmatpush.xpose.msra.mxu0 0.0
    %v5209 = vand.u32 %v5116, 4294901760
    %v5210 = vsub.f32 %v5116, %v5209
    %5211 = vmatpush.xpose.msra.mxu0 %v5210
    %v5212 = vand.u32 %v5107, 4294901760
    %v5213 = vsub.f32 %v5107, %v5212
    %5214 = vmatmul.f32.gmra.mxu0 %v5213
    %v5215 = vpop.f32.mrf.mxu0
    %v5216 = vadd.f32 %v5184, %v5215
    %v5217 = vand.u32 %v5110, 4294901760
    %v5218 = vsub.f32 %v5110, %v5217
    %5219 = vmatmul.f32.gmra.mxu0 %v5218
    %v5220 = vpop.f32.mrf.mxu0
    %v5221 = vadd.f32 %v5188, %v5220
    %v5222 = vand.u32 %v5113, 4294901760
    %v5223 = vsub.f32 %v5113, %v5222
    %5224 = vmatmul.f32.gmra.mxu0 %v5223
    %v5225 = vpop.f32.mrf.mxu0
    %v5226 = vadd.f32 %v5192, %v5225
    %5227 = vdwg.mxu0
    %5228 = vmatpush.xpose.msra.mxu0 0.0
    %5229 = vmatpush.xpose.msra.mxu0 0.0
    %5230 = vmatpush.xpose.msra.mxu0 0.0
    %5231 = vmatpush.xpose.msra.mxu0 0.0
    %5232 = vmatpush.xpose.msra.mxu0 0.0
    %5233 = vmatpush.xpose.msra.mxu0 0.0
    %5234 = vmatpush.xpose.msra.mxu0 0.0
    %5235 = vmatpush.xpose.msra.mxu0 0.0
    %5236 = vmatpush.xpose.msra.mxu0 0.0
    %5237 = vmatpush.xpose.msra.mxu0 0.0
    %5238 = vmatpush.xpose.msra.mxu0 0.0
    %5239 = vmatpush.xpose.msra.mxu0 0.0
    %5240 = vmatpush.xpose.msra.mxu0 0.0
    %5241 = vmatpush.xpose.msra.mxu0 0.0
    %5242 = vmatpush.xpose.msra.mxu0 0.0
    %v5243 = vand.u32 %v5116, 4294901760
    %5244 = vmatpush.xpose.msra.mxu0 %v5243
    %v5245 = vand.u32 %v5107, 4294901760
    %v5246 = vsub.f32 %v5107, %v5245
    %v5247 = vand.u32 %v5246, 4294901760
    %5248 = vmatmul.f32.gmra.mxu0 %v5247
    %v5249 = vpop.f32.mrf.mxu0
    %v5250 = vadd.f32 %v5216, %v5249
    %v5251 = vand.u32 %v5110, 4294901760
    %v5252 = vsub.f32 %v5110, %v5251
    %v5253 = vand.u32 %v5252, 4294901760
    %5254 = vmatmul.f32.gmra.mxu0 %v5253
    %v5255 = vpop.f32.mrf.mxu0
    %v5256 = vadd.f32 %v5221, %v5255
    %v5257 = vand.u32 %v5113, 4294901760
    %v5258 = vsub.f32 %v5113, %v5257
    %v5259 = vand.u32 %v5258, 4294901760
    %5260 = vmatmul.f32.gmra.mxu0 %v5259
    %v5261 = vpop.f32.mrf.mxu0
    %v5262 = vadd.f32 %v5226, %v5261
    %5263 = vdwg.mxu0
    %5264 = vmatpush.xpose.msra.mxu0 0.0
    %5265 = vmatpush.xpose.msra.mxu0 0.0
    %5266 = vmatpush.xpose.msra.mxu0 0.0
    %5267 = vmatpush.xpose.msra.mxu0 0.0
    %5268 = vmatpush.xpose.msra.mxu0 0.0
    %5269 = vmatpush.xpose.msra.mxu0 0.0
    %5270 = vmatpush.xpose.msra.mxu0 0.0
    %5271 = vmatpush.xpose.msra.mxu0 0.0
    %5272 = vmatpush.xpose.msra.mxu0 0.0
    %5273 = vmatpush.xpose.msra.mxu0 0.0
    %5274 = vmatpush.xpose.msra.mxu0 0.0
    %5275 = vmatpush.xpose.msra.mxu0 0.0
    %5276 = vmatpush.xpose.msra.mxu0 0.0
    %5277 = vmatpush.xpose.msra.mxu0 0.0
    %5278 = vmatpush.xpose.msra.mxu0 0.0
    %v5279 = vand.u32 %v5116, 4294901760
    %v5280 = vsub.f32 %v5116, %v5279
    %v5281 = vand.u32 %v5280, 4294901760
    %5282 = vmatpush.xpose.msra.mxu0 %v5281
    %v5283 = vand.u32 %v5107, 4294901760
    %5284 = vmatmul.f32.gmra.mxu0 %v5283
    %v5285 = vpop.f32.mrf.mxu0
    %v5286 = vadd.f32 %v5250, %v5285
    %v5287 = vand.u32 %v5110, 4294901760
    %5288 = vmatmul.f32.gmra.mxu0 %v5287
    %v5289 = vpop.f32.mrf.mxu0
    %v5290 = vadd.f32 %v5256, %v5289
    %v5291 = vand.u32 %v5113, 4294901760
    %5292 = vmatmul.f32.gmra.mxu0 %v5291
    %v5293 = vpop.f32.mrf.mxu0
    %v5294 = vadd.f32 %v5262, %v5293
    %5295 = vdwg.mxu0
    %5296 = vmatpush.xpose.msra.mxu0 0.0
    %5297 = vmatpush.xpose.msra.mxu0 0.0
    %5298 = vmatpush.xpose.msra.mxu0 0.0
    %5299 = vmatpush.xpose.msra.mxu0 0.0
    %5300 = vmatpush.xpose.msra.mxu0 0.0
    %5301 = vmatpush.xpose.msra.mxu0 0.0
    %5302 = vmatpush.xpose.msra.mxu0 0.0
    %5303 = vmatpush.xpose.msra.mxu0 0.0
    %5304 = vmatpush.xpose.msra.mxu0 0.0
    %5305 = vmatpush.xpose.msra.mxu0 0.0
    %5306 = vmatpush.xpose.msra.mxu0 0.0
    %5307 = vmatpush.xpose.msra.mxu0 0.0
    %5308 = vmatpush.xpose.msra.mxu0 0.0
    %5309 = vmatpush.xpose.msra.mxu0 0.0
    %5310 = vmatpush.xpose.msra.mxu0 0.0
    %v5311 = vand.u32 %v5116, 4294901760
    %5312 = vmatpush.xpose.msra.mxu0 %v5311
    %v5313 = vand.u32 %v5107, 4294901760
    %5314 = vmatmul.f32.gmra.mxu0 %v5313
    %v5315 = vpop.f32.mrf.mxu0
    %v5316 = vadd.f32 %v5286, %v5315
    %v5317 = vand.u32 %v5110, 4294901760
    %5318 = vmatmul.f32.gmra.mxu0 %v5317
    %v5319 = vpop.f32.mrf.mxu0
    %v5320 = vadd.f32 %v5290, %v5319
    %v5321 = vand.u32 %v5113, 4294901760
    %5322 = vmatmul.f32.gmra.mxu0 %v5321
    %v5323 = vpop.f32.mrf.mxu0
    %v5324 = vadd.f32 %v5294, %v5323
    %5325 = vdwg.mxu0
    %v5327 = vsel %vm3208, %v3755, 0
    %v5330 = vsel %vm3208, %v3770, 0
    %v5333 = vsel %vm3208, %v3785, 0
    %v5336 = vsel %vm3208, %v1341, 0
    %5338 = vmatpush.xpose.msra.mxu0 0.0
    %5339 = vmatpush.xpose.msra.mxu0 0.0
    %5340 = vmatpush.xpose.msra.mxu0 0.0
    %5341 = vmatpush.xpose.msra.mxu0 0.0
    %5342 = vmatpush.xpose.msra.mxu0 0.0
    %5343 = vmatpush.xpose.msra.mxu0 0.0
    %5344 = vmatpush.xpose.msra.mxu0 0.0
    %5345 = vmatpush.xpose.msra.mxu0 0.0
    %5346 = vmatpush.xpose.msra.mxu0 0.0
    %5347 = vmatpush.xpose.msra.mxu0 0.0
    %5348 = vmatpush.xpose.msra.mxu0 0.0
    %5349 = vmatpush.xpose.msra.mxu0 0.0
    %5350 = vmatpush.xpose.msra.mxu0 0.0
    %5351 = vmatpush.xpose.msra.mxu0 0.0
    %5352 = vmatpush.xpose.msra.mxu0 0.0
    %v5353 = vand.u32 %v5336, 4294901760
    %5354 = vmatpush.xpose.msra.mxu0 %v5353
    %v5355 = vand.u32 %v5327, 4294901760
    %v5356 = vsub.f32 %v5327, %v5355
    %v5357 = vand.u32 %v5356, 4294901760
    %v5358 = vsub.f32 %v5356, %v5357
    %v5359 = vand.u32 %v5358, 4294901760
    %5360 = vmatmul.f32.gmra.mxu0 %v5359
    %v5361 = vpop.f32.mrf.mxu0
    %v5362 = vadd.f32 0.0, %v5361
    %v5363 = vand.u32 %v5330, 4294901760
    %v5364 = vsub.f32 %v5330, %v5363
    %v5365 = vand.u32 %v5364, 4294901760
    %v5366 = vsub.f32 %v5364, %v5365
    %v5367 = vand.u32 %v5366, 4294901760
    %5368 = vmatmul.f32.gmra.mxu0 %v5367
    %v5369 = vpop.f32.mrf.mxu0
    %v5370 = vadd.f32 0.0, %v5369
    %v5371 = vand.u32 %v5333, 4294901760
    %v5372 = vsub.f32 %v5333, %v5371
    %v5373 = vand.u32 %v5372, 4294901760
    %v5374 = vsub.f32 %v5372, %v5373
    %v5375 = vand.u32 %v5374, 4294901760
    %5376 = vmatmul.f32.gmra.mxu0 %v5375
    %v5377 = vpop.f32.mrf.mxu0
    %v5378 = vadd.f32 0.0, %v5377
    %5379 = vdwg.mxu0
    %5380 = vmatpush.xpose.msra.mxu0 0.0
    %5381 = vmatpush.xpose.msra.mxu0 0.0
    %5382 = vmatpush.xpose.msra.mxu0 0.0
    %5383 = vmatpush.xpose.msra.mxu0 0.0
    %5384 = vmatpush.xpose.msra.mxu0 0.0
    %5385 = vmatpush.xpose.msra.mxu0 0.0
    %5386 = vmatpush.xpose.msra.mxu0 0.0
    %5387 = vmatpush.xpose.msra.mxu0 0.0
    %5388 = vmatpush.xpose.msra.mxu0 0.0
    %5389 = vmatpush.xpose.msra.mxu0 0.0
    %5390 = vmatpush.xpose.msra.mxu0 0.0
    %5391 = vmatpush.xpose.msra.mxu0 0.0
    %5392 = vmatpush.xpose.msra.mxu0 0.0
    %5393 = vmatpush.xpose.msra.mxu0 0.0
    %5394 = vmatpush.xpose.msra.mxu0 0.0
    %v5395 = vand.u32 %v5336, 4294901760
    %v5396 = vsub.f32 %v5336, %v5395
    %v5397 = vand.u32 %v5396, 4294901760
    %v5398 = vsub.f32 %v5396, %v5397
    %v5399 = vand.u32 %v5398, 4294901760
    %5400 = vmatpush.xpose.msra.mxu0 %v5399
    %v5401 = vand.u32 %v5327, 4294901760
    %5402 = vmatmul.f32.gmra.mxu0 %v5401
    %v5403 = vpop.f32.mrf.mxu0
    %v5404 = vadd.f32 %v5362, %v5403
    %v5405 = vand.u32 %v5330, 4294901760
    %5406 = vmatmul.f32.gmra.mxu0 %v5405
    %v5407 = vpop.f32.mrf.mxu0
    %v5408 = vadd.f32 %v5370, %v5407
    %v5409 = vand.u32 %v5333, 4294901760
    %5410 = vmatmul.f32.gmra.mxu0 %v5409
    %v5411 = vpop.f32.mrf.mxu0
    %v5412 = vadd.f32 %v5378, %v5411
    %5413 = vdwg.mxu0
    %5414 = vmatpush.xpose.msra.mxu0 0.0
    %5415 = vmatpush.xpose.msra.mxu0 0.0
    %5416 = vmatpush.xpose.msra.mxu0 0.0
    %5417 = vmatpush.xpose.msra.mxu0 0.0
    %5418 = vmatpush.xpose.msra.mxu0 0.0
    %5419 = vmatpush.xpose.msra.mxu0 0.0
    %5420 = vmatpush.xpose.msra.mxu0 0.0
    %5421 = vmatpush.xpose.msra.mxu0 0.0
    %5422 = vmatpush.xpose.msra.mxu0 0.0
    %5423 = vmatpush.xpose.msra.mxu0 0.0
    %5424 = vmatpush.xpose.msra.mxu0 0.0
    %5425 = vmatpush.xpose.msra.mxu0 0.0
    %5426 = vmatpush.xpose.msra.mxu0 0.0
    %5427 = vmatpush.xpose.msra.mxu0 0.0
    %5428 = vmatpush.xpose.msra.mxu0 0.0
    %v5429 = vand.u32 %v5336, 4294901760
    %v5430 = vsub.f32 %v5336, %v5429
    %5431 = vmatpush.xpose.msra.mxu0 %v5430
    %v5432 = vand.u32 %v5327, 4294901760
    %v5433 = vsub.f32 %v5327, %v5432
    %5434 = vmatmul.f32.gmra.mxu0 %v5433
    %v5435 = vpop.f32.mrf.mxu0
    %v5436 = vadd.f32 %v5404, %v5435
    %v5437 = vand.u32 %v5330, 4294901760
    %v5438 = vsub.f32 %v5330, %v5437
    %5439 = vmatmul.f32.gmra.mxu0 %v5438
    %v5440 = vpop.f32.mrf.mxu0
    %v5441 = vadd.f32 %v5408, %v5440
    %v5442 = vand.u32 %v5333, 4294901760
    %v5443 = vsub.f32 %v5333, %v5442
    %5444 = vmatmul.f32.gmra.mxu0 %v5443
    %v5445 = vpop.f32.mrf.mxu0
    %v5446 = vadd.f32 %v5412, %v5445
    %5447 = vdwg.mxu0
    %5448 = vmatpush.xpose.msra.mxu0 0.0
    %5449 = vmatpush.xpose.msra.mxu0 0.0
    %5450 = vmatpush.xpose.msra.mxu0 0.0
    %5451 = vmatpush.xpose.msra.mxu0 0.0
    %5452 = vmatpush.xpose.msra.mxu0 0.0
    %5453 = vmatpush.xpose.msra.mxu0 0.0
    %5454 = vmatpush.xpose.msra.mxu0 0.0
    %5455 = vmatpush.xpose.msra.mxu0 0.0
    %5456 = vmatpush.xpose.msra.mxu0 0.0
    %5457 = vmatpush.xpose.msra.mxu0 0.0
    %5458 = vmatpush.xpose.msra.mxu0 0.0
    %5459 = vmatpush.xpose.msra.mxu0 0.0
    %5460 = vmatpush.xpose.msra.mxu0 0.0
    %5461 = vmatpush.xpose.msra.mxu0 0.0
    %5462 = vmatpush.xpose.msra.mxu0 0.0
    %v5463 = vand.u32 %v5336, 4294901760
    %5464 = vmatpush.xpose.msra.mxu0 %v5463
    %v5465 = vand.u32 %v5327, 4294901760
    %v5466 = vsub.f32 %v5327, %v5465
    %v5467 = vand.u32 %v5466, 4294901760
    %5468 = vmatmul.f32.gmra.mxu0 %v5467
    %v5469 = vpop.f32.mrf.mxu0
    %v5470 = vadd.f32 %v5436, %v5469
    %v5471 = vand.u32 %v5330, 4294901760
    %v5472 = vsub.f32 %v5330, %v5471
    %v5473 = vand.u32 %v5472, 4294901760
    %5474 = vmatmul.f32.gmra.mxu0 %v5473
    %v5475 = vpop.f32.mrf.mxu0
    %v5476 = vadd.f32 %v5441, %v5475
    %v5477 = vand.u32 %v5333, 4294901760
    %v5478 = vsub.f32 %v5333, %v5477
    %v5479 = vand.u32 %v5478, 4294901760
    %5480 = vmatmul.f32.gmra.mxu0 %v5479
    %v5481 = vpop.f32.mrf.mxu0
    %v5482 = vadd.f32 %v5446, %v5481
    %5483 = vdwg.mxu0
    %5484 = vmatpush.xpose.msra.mxu0 0.0
    %5485 = vmatpush.xpose.msra.mxu0 0.0
    %5486 = vmatpush.xpose.msra.mxu0 0.0
    %5487 = vmatpush.xpose.msra.mxu0 0.0
    %5488 = vmatpush.xpose.msra.mxu0 0.0
    %5489 = vmatpush.xpose.msra.mxu0 0.0
    %5490 = vmatpush.xpose.msra.mxu0 0.0
    %5491 = vmatpush.xpose.msra.mxu0 0.0
    %5492 = vmatpush.xpose.msra.mxu0 0.0
    %5493 = vmatpush.xpose.msra.mxu0 0.0
    %5494 = vmatpush.xpose.msra.mxu0 0.0
    %5495 = vmatpush.xpose.msra.mxu0 0.0
    %5496 = vmatpush.xpose.msra.mxu0 0.0
    %5497 = vmatpush.xpose.msra.mxu0 0.0
    %5498 = vmatpush.xpose.msra.mxu0 0.0
    %v5499 = vand.u32 %v5336, 4294901760
    %v5500 = vsub.f32 %v5336, %v5499
    %v5501 = vand.u32 %v5500, 4294901760
    %5502 = vmatpush.xpose.msra.mxu0 %v5501
    %v5503 = vand.u32 %v5327, 4294901760
    %5504 = vmatmul.f32.gmra.mxu0 %v5503
    %v5505 = vpop.f32.mrf.mxu0
    %v5506 = vadd.f32 %v5470, %v5505
    %v5507 = vand.u32 %v5330, 4294901760
    %5508 = vmatmul.f32.gmra.mxu0 %v5507
    %v5509 = vpop.f32.mrf.mxu0
    %v5510 = vadd.f32 %v5476, %v5509
    %v5511 = vand.u32 %v5333, 4294901760
    %5512 = vmatmul.f32.gmra.mxu0 %v5511
    %v5513 = vpop.f32.mrf.mxu0
    %v5514 = vadd.f32 %v5482, %v5513
    %5515 = vdwg.mxu0
    %5516 = vmatpush.xpose.msra.mxu0 0.0
    %5517 = vmatpush.xpose.msra.mxu0 0.0
    %5518 = vmatpush.xpose.msra.mxu0 0.0
    %5519 = vmatpush.xpose.msra.mxu0 0.0
    %5520 = vmatpush.xpose.msra.mxu0 0.0
    %5521 = vmatpush.xpose.msra.mxu0 0.0
    %5522 = vmatpush.xpose.msra.mxu0 0.0
    %5523 = vmatpush.xpose.msra.mxu0 0.0
    %5524 = vmatpush.xpose.msra.mxu0 0.0
    %5525 = vmatpush.xpose.msra.mxu0 0.0
    %5526 = vmatpush.xpose.msra.mxu0 0.0
    %5527 = vmatpush.xpose.msra.mxu0 0.0
    %5528 = vmatpush.xpose.msra.mxu0 0.0
    %5529 = vmatpush.xpose.msra.mxu0 0.0
    %5530 = vmatpush.xpose.msra.mxu0 0.0
    %v5531 = vand.u32 %v5336, 4294901760
    %5532 = vmatpush.xpose.msra.mxu0 %v5531
    %v5533 = vand.u32 %v5327, 4294901760
    %5534 = vmatmul.f32.gmra.mxu0 %v5533
    %v5535 = vpop.f32.mrf.mxu0
    %v5536 = vadd.f32 %v5506, %v5535
    %v5537 = vand.u32 %v5330, 4294901760
    %5538 = vmatmul.f32.gmra.mxu0 %v5537
    %v5539 = vpop.f32.mrf.mxu0
    %v5540 = vadd.f32 %v5510, %v5539
    %v5541 = vand.u32 %v5333, 4294901760
    %5542 = vmatmul.f32.gmra.mxu0 %v5541
    %v5543 = vpop.f32.mrf.mxu0
    %v5544 = vadd.f32 %v5514, %v5543
    %5545 = vdwg.mxu0
    %v5546 = vld [vmem:[%s1 + $0xe0] sm:$0x1]
    %v5547 = vld [vmem:[%s1 + $0xc0] sm:$0xff]
    %v5549 = vsel %vm1471, %v3996, 0
    %v5552 = vsel %vm1471, %v4000, 0
    %v5555 = vsel %vm1471, %v4004, 0
    %5557 = vmatpush.msra.mxu0 0.0
    %5558 = vmatpush.msra.mxu0 0.0
    %5559 = vmatpush.msra.mxu0 0.0
    %5560 = vmatpush.msra.mxu0 0.0
    %5561 = vmatpush.msra.mxu0 0.0
    %5562 = vmatpush.msra.mxu0 0.0
    %5563 = vmatpush.msra.mxu0 0.0
    %5564 = vmatpush.msra.mxu0 0.0
    %5565 = vmatpush.msra.mxu0 0.0
    %5566 = vmatpush.msra.mxu0 0.0
    %5567 = vmatpush.msra.mxu0 0.0
    %5568 = vmatpush.msra.mxu0 0.0
    %5569 = vmatpush.msra.mxu0 0.0
    %5570 = vmatpush.msra.mxu0 0.0
    %5571 = vmatpush.msra.mxu0 0.0
    %v5572 = vand.u32 %v5547, 4294901760
    %5573 = vmatpush.msra.mxu0 %v5572
    %v5574 = vand.u32 %v5549, 4294901760
    %v5575 = vsub.f32 %v5549, %v5574
    %v5576 = vand.u32 %v5575, 4294901760
    %v5577 = vsub.f32 %v5575, %v5576
    %v5578 = vand.u32 %v5577, 4294901760
    %5579 = vmatmul.f32.gmra.mxu0 %v5578
    %v5580 = vpop.f32.mrf.mxu0
    %v5581 = vadd.f32 0.0, %v5580
    %v5582 = vand.u32 %v5552, 4294901760
    %v5583 = vsub.f32 %v5552, %v5582
    %v5584 = vand.u32 %v5583, 4294901760
    %v5585 = vsub.f32 %v5583, %v5584
    %v5586 = vand.u32 %v5585, 4294901760
    %5587 = vmatmul.f32.gmra.mxu0 %v5586
    %v5588 = vpop.f32.mrf.mxu0
    %v5589 = vadd.f32 0.0, %v5588
    %v5590 = vand.u32 %v5555, 4294901760
    %v5591 = vsub.f32 %v5555, %v5590
    %v5592 = vand.u32 %v5591, 4294901760
    %v5593 = vsub.f32 %v5591, %v5592
    %v5594 = vand.u32 %v5593, 4294901760
    %5595 = vmatmul.f32.gmra.mxu0 %v5594
    %v5596 = vpop.f32.mrf.mxu0
    %v5597 = vadd.f32 0.0, %v5596
    %5598 = vdwg.mxu0
    %5599 = vmatpush.msra.mxu0 0.0
    %5600 = vmatpush.msra.mxu0 0.0
    %5601 = vmatpush.msra.mxu0 0.0
    %5602 = vmatpush.msra.mxu0 0.0
    %5603 = vmatpush.msra.mxu0 0.0
    %5604 = vmatpush.msra.mxu0 0.0
    %5605 = vmatpush.msra.mxu0 0.0
    %5606 = vmatpush.msra.mxu0 0.0
    %5607 = vmatpush.msra.mxu0 0.0
    %5608 = vmatpush.msra.mxu0 0.0
    %5609 = vmatpush.msra.mxu0 0.0
    %5610 = vmatpush.msra.mxu0 0.0
    %5611 = vmatpush.msra.mxu0 0.0
    %5612 = vmatpush.msra.mxu0 0.0
    %5613 = vmatpush.msra.mxu0 0.0
    %v5614 = vand.u32 %v5547, 4294901760
    %v5615 = vsub.f32 %v5547, %v5614
    %v5616 = vand.u32 %v5615, 4294901760
    %v5617 = vsub.f32 %v5615, %v5616
    %v5618 = vand.u32 %v5617, 4294901760
    %5619 = vmatpush.msra.mxu0 %v5618
    %v5620 = vand.u32 %v5549, 4294901760
    %5621 = vmatmul.f32.gmra.mxu0 %v5620
    %v5622 = vpop.f32.mrf.mxu0
    %v5623 = vadd.f32 %v5581, %v5622
    %v5624 = vand.u32 %v5552, 4294901760
    %5625 = vmatmul.f32.gmra.mxu0 %v5624
    %v5626 = vpop.f32.mrf.mxu0
    %v5627 = vadd.f32 %v5589, %v5626
    %v5628 = vand.u32 %v5555, 4294901760
    %5629 = vmatmul.f32.gmra.mxu0 %v5628
    %v5630 = vpop.f32.mrf.mxu0
    %v5631 = vadd.f32 %v5597, %v5630
    %5632 = vdwg.mxu0
    %5633 = vmatpush.msra.mxu0 0.0
    %5634 = vmatpush.msra.mxu0 0.0
    %5635 = vmatpush.msra.mxu0 0.0
    %5636 = vmatpush.msra.mxu0 0.0
    %5637 = vmatpush.msra.mxu0 0.0
    %5638 = vmatpush.msra.mxu0 0.0
    %5639 = vmatpush.msra.mxu0 0.0
    %5640 = vmatpush.msra.mxu0 0.0
    %5641 = vmatpush.msra.mxu0 0.0
    %5642 = vmatpush.msra.mxu0 0.0
    %5643 = vmatpush.msra.mxu0 0.0
    %5644 = vmatpush.msra.mxu0 0.0
    %5645 = vmatpush.msra.mxu0 0.0
    %5646 = vmatpush.msra.mxu0 0.0
    %5647 = vmatpush.msra.mxu0 0.0
    %v5648 = vand.u32 %v5547, 4294901760
    %v5649 = vsub.f32 %v5547, %v5648
    %5650 = vmatpush.msra.mxu0 %v5649
    %v5651 = vand.u32 %v5549, 4294901760
    %v5652 = vsub.f32 %v5549, %v5651
    %5653 = vmatmul.f32.gmra.mxu0 %v5652
    %v5654 = vpop.f32.mrf.mxu0
    %v5655 = vadd.f32 %v5623, %v5654
    %v5656 = vand.u32 %v5552, 4294901760
    %v5657 = vsub.f32 %v5552, %v5656
    %5658 = vmatmul.f32.gmra.mxu0 %v5657
    %v5659 = vpop.f32.mrf.mxu0
    %v5660 = vadd.f32 %v5627, %v5659
    %v5661 = vand.u32 %v5555, 4294901760
    %v5662 = vsub.f32 %v5555, %v5661
    %5663 = vmatmul.f32.gmra.mxu0 %v5662
    %v5664 = vpop.f32.mrf.mxu0
    %v5665 = vadd.f32 %v5631, %v5664
    %5666 = vdwg.mxu0
    %5667 = vmatpush.msra.mxu0 0.0
    %5668 = vmatpush.msra.mxu0 0.0
    %5669 = vmatpush.msra.mxu0 0.0
    %5670 = vmatpush.msra.mxu0 0.0
    %5671 = vmatpush.msra.mxu0 0.0
    %5672 = vmatpush.msra.mxu0 0.0
    %5673 = vmatpush.msra.mxu0 0.0
    %5674 = vmatpush.msra.mxu0 0.0
    %5675 = vmatpush.msra.mxu0 0.0
    %5676 = vmatpush.msra.mxu0 0.0
    %5677 = vmatpush.msra.mxu0 0.0
    %5678 = vmatpush.msra.mxu0 0.0
    %5679 = vmatpush.msra.mxu0 0.0
    %5680 = vmatpush.msra.mxu0 0.0
    %5681 = vmatpush.msra.mxu0 0.0
    %v5682 = vand.u32 %v5547, 4294901760
    %5683 = vmatpush.msra.mxu0 %v5682
    %v5684 = vand.u32 %v5549, 4294901760
    %v5685 = vsub.f32 %v5549, %v5684
    %v5686 = vand.u32 %v5685, 4294901760
    %5687 = vmatmul.f32.gmra.mxu0 %v5686
    %v5688 = vpop.f32.mrf.mxu0
    %v5689 = vadd.f32 %v5655, %v5688
    %v5690 = vand.u32 %v5552, 4294901760
    %v5691 = vsub.f32 %v5552, %v5690
    %v5692 = vand.u32 %v5691, 4294901760
    %5693 = vmatmul.f32.gmra.mxu0 %v5692
    %v5694 = vpop.f32.mrf.mxu0
    %v5695 = vadd.f32 %v5660, %v5694
    %v5696 = vand.u32 %v5555, 4294901760
    %v5697 = vsub.f32 %v5555, %v5696
    %v5698 = vand.u32 %v5697, 4294901760
    %5699 = vmatmul.f32.gmra.mxu0 %v5698
    %v5700 = vpop.f32.mrf.mxu0
    %v5701 = vadd.f32 %v5665, %v5700
    %5702 = vdwg.mxu0
    %5703 = vmatpush.msra.mxu0 0.0
    %5704 = vmatpush.msra.mxu0 0.0
    %5705 = vmatpush.msra.mxu0 0.0
    %5706 = vmatpush.msra.mxu0 0.0
    %5707 = vmatpush.msra.mxu0 0.0
    %5708 = vmatpush.msra.mxu0 0.0
    %5709 = vmatpush.msra.mxu0 0.0
    %5710 = vmatpush.msra.mxu0 0.0
    %5711 = vmatpush.msra.mxu0 0.0
    %5712 = vmatpush.msra.mxu0 0.0
    %5713 = vmatpush.msra.mxu0 0.0
    %5714 = vmatpush.msra.mxu0 0.0
    %5715 = vmatpush.msra.mxu0 0.0
    %5716 = vmatpush.msra.mxu0 0.0
    %5717 = vmatpush.msra.mxu0 0.0
    %v5718 = vand.u32 %v5547, 4294901760
    %v5719 = vsub.f32 %v5547, %v5718
    %v5720 = vand.u32 %v5719, 4294901760
    %5721 = vmatpush.msra.mxu0 %v5720
    %v5722 = vand.u32 %v5549, 4294901760
    %5723 = vmatmul.f32.gmra.mxu0 %v5722
    %v5724 = vpop.f32.mrf.mxu0
    %v5725 = vadd.f32 %v5689, %v5724
    %v5726 = vand.u32 %v5552, 4294901760
    %5727 = vmatmul.f32.gmra.mxu0 %v5726
    %v5728 = vpop.f32.mrf.mxu0
    %v5729 = vadd.f32 %v5695, %v5728
    %v5730 = vand.u32 %v5555, 4294901760
    %5731 = vmatmul.f32.gmra.mxu0 %v5730
    %v5732 = vpop.f32.mrf.mxu0
    %v5733 = vadd.f32 %v5701, %v5732
    %5734 = vdwg.mxu0
    %5735 = vmatpush.msra.mxu0 0.0
    %5736 = vmatpush.msra.mxu0 0.0
    %5737 = vmatpush.msra.mxu0 0.0
    %5738 = vmatpush.msra.mxu0 0.0
    %5739 = vmatpush.msra.mxu0 0.0
    %5740 = vmatpush.msra.mxu0 0.0
    %5741 = vmatpush.msra.mxu0 0.0
    %5742 = vmatpush.msra.mxu0 0.0
    %5743 = vmatpush.msra.mxu0 0.0
    %5744 = vmatpush.msra.mxu0 0.0
    %5745 = vmatpush.msra.mxu0 0.0
    %5746 = vmatpush.msra.mxu0 0.0
    %5747 = vmatpush.msra.mxu0 0.0
    %5748 = vmatpush.msra.mxu0 0.0
    %5749 = vmatpush.msra.mxu0 0.0
    %v5750 = vand.u32 %v5547, 4294901760
    %5751 = vmatpush.msra.mxu0 %v5750
    %v5752 = vand.u32 %v5549, 4294901760
    %5753 = vmatmul.f32.gmra.mxu0 %v5752
    %v5754 = vpop.f32.mrf.mxu0
    %v5755 = vadd.f32 %v5725, %v5754
    %v5756 = vand.u32 %v5552, 4294901760
    %5757 = vmatmul.f32.gmra.mxu0 %v5756
    %v5758 = vpop.f32.mrf.mxu0
    %v5759 = vadd.f32 %v5729, %v5758
    %v5760 = vand.u32 %v5555, 4294901760
    %5761 = vmatmul.f32.gmra.mxu0 %v5760
    %v5762 = vpop.f32.mrf.mxu0
    %v5763 = vadd.f32 %v5733, %v5762
    %5764 = vdwg.mxu0
    %v5765 = vperm.slane %v5546, 0
    %v5766 = vadd.f32 %v5765, %v5755
    %v5767 = vadd.f32 %v5765, %v5759
    %v5768 = vadd.f32 %v5765, %v5763
    %v5769 = vld [vmem:[%s1 + $0xc8] sm:$0xff]
    %v5771 = vsel %vm1471, %v4216, 0
    %v5774 = vsel %vm1471, %v4220, 0
    %v5777 = vsel %vm1471, %v4224, 0
    %5779 = vmatpush.msra.mxu0 0.0
    %5780 = vmatpush.msra.mxu0 0.0
    %5781 = vmatpush.msra.mxu0 0.0
    %5782 = vmatpush.msra.mxu0 0.0
    %5783 = vmatpush.msra.mxu0 0.0
    %5784 = vmatpush.msra.mxu0 0.0
    %5785 = vmatpush.msra.mxu0 0.0
    %5786 = vmatpush.msra.mxu0 0.0
    %5787 = vmatpush.msra.mxu0 0.0
    %5788 = vmatpush.msra.mxu0 0.0
    %5789 = vmatpush.msra.mxu0 0.0
    %5790 = vmatpush.msra.mxu0 0.0
    %5791 = vmatpush.msra.mxu0 0.0
    %5792 = vmatpush.msra.mxu0 0.0
    %5793 = vmatpush.msra.mxu0 0.0
    %v5794 = vand.u32 %v5769, 4294901760
    %5795 = vmatpush.msra.mxu0 %v5794
    %v5796 = vand.u32 %v5771, 4294901760
    %v5797 = vsub.f32 %v5771, %v5796
    %v5798 = vand.u32 %v5797, 4294901760
    %v5799 = vsub.f32 %v5797, %v5798
    %v5800 = vand.u32 %v5799, 4294901760
    %5801 = vmatmul.f32.gmra.mxu0 %v5800
    %v5802 = vpop.f32.mrf.mxu0
    %v5803 = vadd.f32 0.0, %v5802
    %v5804 = vand.u32 %v5774, 4294901760
    %v5805 = vsub.f32 %v5774, %v5804
    %v5806 = vand.u32 %v5805, 4294901760
    %v5807 = vsub.f32 %v5805, %v5806
    %v5808 = vand.u32 %v5807, 4294901760
    %5809 = vmatmul.f32.gmra.mxu0 %v5808
    %v5810 = vpop.f32.mrf.mxu0
    %v5811 = vadd.f32 0.0, %v5810
    %v5812 = vand.u32 %v5777, 4294901760
    %v5813 = vsub.f32 %v5777, %v5812
    %v5814 = vand.u32 %v5813, 4294901760
    %v5815 = vsub.f32 %v5813, %v5814
    %v5816 = vand.u32 %v5815, 4294901760
    %5817 = vmatmul.f32.gmra.mxu0 %v5816
    %v5818 = vpop.f32.mrf.mxu0
    %v5819 = vadd.f32 0.0, %v5818
    %5820 = vdwg.mxu0
    %5821 = vmatpush.msra.mxu0 0.0
    %5822 = vmatpush.msra.mxu0 0.0
    %5823 = vmatpush.msra.mxu0 0.0
    %5824 = vmatpush.msra.mxu0 0.0
    %5825 = vmatpush.msra.mxu0 0.0
    %5826 = vmatpush.msra.mxu0 0.0
    %5827 = vmatpush.msra.mxu0 0.0
    %5828 = vmatpush.msra.mxu0 0.0
    %5829 = vmatpush.msra.mxu0 0.0
    %5830 = vmatpush.msra.mxu0 0.0
    %5831 = vmatpush.msra.mxu0 0.0
    %5832 = vmatpush.msra.mxu0 0.0
    %5833 = vmatpush.msra.mxu0 0.0
    %5834 = vmatpush.msra.mxu0 0.0
    %5835 = vmatpush.msra.mxu0 0.0
    %v5836 = vand.u32 %v5769, 4294901760
    %v5837 = vsub.f32 %v5769, %v5836
    %v5838 = vand.u32 %v5837, 4294901760
    %v5839 = vsub.f32 %v5837, %v5838
    %v5840 = vand.u32 %v5839, 4294901760
    %5841 = vmatpush.msra.mxu0 %v5840
    %v5842 = vand.u32 %v5771, 4294901760
    %5843 = vmatmul.f32.gmra.mxu0 %v5842
    %v5844 = vpop.f32.mrf.mxu0
    %v5845 = vadd.f32 %v5803, %v5844
    %v5846 = vand.u32 %v5774, 4294901760
    %5847 = vmatmul.f32.gmra.mxu0 %v5846
    %v5848 = vpop.f32.mrf.mxu0
    %v5849 = vadd.f32 %v5811, %v5848
    %v5850 = vand.u32 %v5777, 4294901760
    %5851 = vmatmul.f32.gmra.mxu0 %v5850
    %v5852 = vpop.f32.mrf.mxu0
    %v5853 = vadd.f32 %v5819, %v5852
    %5854 = vdwg.mxu0
    %5855 = vmatpush.msra.mxu0 0.0
    %5856 = vmatpush.msra.mxu0 0.0
    %5857 = vmatpush.msra.mxu0 0.0
    %5858 = vmatpush.msra.mxu0 0.0
    %5859 = vmatpush.msra.mxu0 0.0
    %5860 = vmatpush.msra.mxu0 0.0
    %5861 = vmatpush.msra.mxu0 0.0
    %5862 = vmatpush.msra.mxu0 0.0
    %5863 = vmatpush.msra.mxu0 0.0
    %5864 = vmatpush.msra.mxu0 0.0
    %5865 = vmatpush.msra.mxu0 0.0
    %5866 = vmatpush.msra.mxu0 0.0
    %5867 = vmatpush.msra.mxu0 0.0
    %5868 = vmatpush.msra.mxu0 0.0
    %5869 = vmatpush.msra.mxu0 0.0
    %v5870 = vand.u32 %v5769, 4294901760
    %v5871 = vsub.f32 %v5769, %v5870
    %5872 = vmatpush.msra.mxu0 %v5871
    %v5873 = vand.u32 %v5771, 4294901760
    %v5874 = vsub.f32 %v5771, %v5873
    %5875 = vmatmul.f32.gmra.mxu0 %v5874
    %v5876 = vpop.f32.mrf.mxu0
    %v5877 = vadd.f32 %v5845, %v5876
    %v5878 = vand.u32 %v5774, 4294901760
    %v5879 = vsub.f32 %v5774, %v5878
    %5880 = vmatmul.f32.gmra.mxu0 %v5879
    %v5881 = vpop.f32.mrf.mxu0
    %v5882 = vadd.f32 %v5849, %v5881
    %v5883 = vand.u32 %v5777, 4294901760
    %v5884 = vsub.f32 %v5777, %v5883
    %5885 = vmatmul.f32.gmra.mxu0 %v5884
    %v5886 = vpop.f32.mrf.mxu0
    %v5887 = vadd.f32 %v5853, %v5886
    %5888 = vdwg.mxu0
    %5889 = vmatpush.msra.mxu0 0.0
    %5890 = vmatpush.msra.mxu0 0.0
    %5891 = vmatpush.msra.mxu0 0.0
    %5892 = vmatpush.msra.mxu0 0.0
    %5893 = vmatpush.msra.mxu0 0.0
    %5894 = vmatpush.msra.mxu0 0.0
    %5895 = vmatpush.msra.mxu0 0.0
    %5896 = vmatpush.msra.mxu0 0.0
    %5897 = vmatpush.msra.mxu0 0.0
    %5898 = vmatpush.msra.mxu0 0.0
    %5899 = vmatpush.msra.mxu0 0.0
    %5900 = vmatpush.msra.mxu0 0.0
    %5901 = vmatpush.msra.mxu0 0.0
    %5902 = vmatpush.msra.mxu0 0.0
    %5903 = vmatpush.msra.mxu0 0.0
    %v5904 = vand.u32 %v5769, 4294901760
    %5905 = vmatpush.msra.mxu0 %v5904
    %v5906 = vand.u32 %v5771, 4294901760
    %v5907 = vsub.f32 %v5771, %v5906
    %v5908 = vand.u32 %v5907, 4294901760
    %5909 = vmatmul.f32.gmra.mxu0 %v5908
    %v5910 = vpop.f32.mrf.mxu0
    %v5911 = vadd.f32 %v5877, %v5910
    %v5912 = vand.u32 %v5774, 4294901760
    %v5913 = vsub.f32 %v5774, %v5912
    %v5914 = vand.u32 %v5913, 4294901760
    %5915 = vmatmul.f32.gmra.mxu0 %v5914
    %v5916 = vpop.f32.mrf.mxu0
    %v5917 = vadd.f32 %v5882, %v5916
    %v5918 = vand.u32 %v5777, 4294901760
    %v5919 = vsub.f32 %v5777, %v5918
    %v5920 = vand.u32 %v5919, 4294901760
    %5921 = vmatmul.f32.gmra.mxu0 %v5920
    %v5922 = vpop.f32.mrf.mxu0
    %v5923 = vadd.f32 %v5887, %v5922
    %5924 = vdwg.mxu0
    %5925 = vmatpush.msra.mxu0 0.0
    %5926 = vmatpush.msra.mxu0 0.0
    %5927 = vmatpush.msra.mxu0 0.0
    %5928 = vmatpush.msra.mxu0 0.0
    %5929 = vmatpush.msra.mxu0 0.0
    %5930 = vmatpush.msra.mxu0 0.0
    %5931 = vmatpush.msra.mxu0 0.0
    %5932 = vmatpush.msra.mxu0 0.0
    %5933 = vmatpush.msra.mxu0 0.0
    %5934 = vmatpush.msra.mxu0 0.0
    %5935 = vmatpush.msra.mxu0 0.0
    %5936 = vmatpush.msra.mxu0 0.0
    %5937 = vmatpush.msra.mxu0 0.0
    %5938 = vmatpush.msra.mxu0 0.0
    %5939 = vmatpush.msra.mxu0 0.0
    %v5940 = vand.u32 %v5769, 4294901760
    %v5941 = vsub.f32 %v5769, %v5940
    %v5942 = vand.u32 %v5941, 4294901760
    %5943 = vmatpush.msra.mxu0 %v5942
    %v5944 = vand.u32 %v5771, 4294901760
    %5945 = vmatmul.f32.gmra.mxu0 %v5944
    %v5946 = vpop.f32.mrf.mxu0
    %v5947 = vadd.f32 %v5911, %v5946
    %v5948 = vand.u32 %v5774, 4294901760
    %5949 = vmatmul.f32.gmra.mxu0 %v5948
    %v5950 = vpop.f32.mrf.mxu0
    %v5951 = vadd.f32 %v5917, %v5950
    %v5952 = vand.u32 %v5777, 4294901760
    %5953 = vmatmul.f32.gmra.mxu0 %v5952
    %v5954 = vpop.f32.mrf.mxu0
    %v5955 = vadd.f32 %v5923, %v5954
    %5956 = vdwg.mxu0
    %5957 = vmatpush.msra.mxu0 0.0
    %5958 = vmatpush.msra.mxu0 0.0
    %5959 = vmatpush.msra.mxu0 0.0
    %5960 = vmatpush.msra.mxu0 0.0
    %5961 = vmatpush.msra.mxu0 0.0
    %5962 = vmatpush.msra.mxu0 0.0
    %5963 = vmatpush.msra.mxu0 0.0
    %5964 = vmatpush.msra.mxu0 0.0
    %5965 = vmatpush.msra.mxu0 0.0
    %5966 = vmatpush.msra.mxu0 0.0
    %5967 = vmatpush.msra.mxu0 0.0
    %5968 = vmatpush.msra.mxu0 0.0
    %5969 = vmatpush.msra.mxu0 0.0
    %5970 = vmatpush.msra.mxu0 0.0
    %5971 = vmatpush.msra.mxu0 0.0
    %v5972 = vand.u32 %v5769, 4294901760
    %5973 = vmatpush.msra.mxu0 %v5972
    %v5974 = vand.u32 %v5771, 4294901760
    %5975 = vmatmul.f32.gmra.mxu0 %v5974
    %v5976 = vpop.f32.mrf.mxu0
    %v5977 = vadd.f32 %v5947, %v5976
    %v5978 = vand.u32 %v5774, 4294901760
    %5979 = vmatmul.f32.gmra.mxu0 %v5978
    %v5980 = vpop.f32.mrf.mxu0
    %v5981 = vadd.f32 %v5951, %v5980
    %v5982 = vand.u32 %v5777, 4294901760
    %5983 = vmatmul.f32.gmra.mxu0 %v5982
    %v5984 = vpop.f32.mrf.mxu0
    %v5985 = vadd.f32 %v5955, %v5984
    %5986 = vdwg.mxu0
    %v5987 = vadd.f32 %v5766, %v5977
    %v5988 = vadd.f32 %v5767, %v5981
    %v5989 = vadd.f32 %v5768, %v5985
    %v5990 = vld [vmem:[%s1 + $0xd0] sm:$0xff]
    %v5992 = vsel %vm1471, %v4436, 0
    %v5995 = vsel %vm1471, %v4440, 0
    %v5998 = vsel %vm1471, %v4444, 0
    %6000 = vmatpush.msra.mxu0 0.0
    %6001 = vmatpush.msra.mxu0 0.0
    %6002 = vmatpush.msra.mxu0 0.0
    %6003 = vmatpush.msra.mxu0 0.0
    %6004 = vmatpush.msra.mxu0 0.0
    %6005 = vmatpush.msra.mxu0 0.0
    %6006 = vmatpush.msra.mxu0 0.0
    %6007 = vmatpush.msra.mxu0 0.0
    %6008 = vmatpush.msra.mxu0 0.0
    %6009 = vmatpush.msra.mxu0 0.0
    %6010 = vmatpush.msra.mxu0 0.0
    %6011 = vmatpush.msra.mxu0 0.0
    %6012 = vmatpush.msra.mxu0 0.0
    %6013 = vmatpush.msra.mxu0 0.0
    %6014 = vmatpush.msra.mxu0 0.0
    %v6015 = vand.u32 %v5990, 4294901760
    %6016 = vmatpush.msra.mxu0 %v6015
    %v6017 = vand.u32 %v5992, 4294901760
    %v6018 = vsub.f32 %v5992, %v6017
    %v6019 = vand.u32 %v6018, 4294901760
    %v6020 = vsub.f32 %v6018, %v6019
    %v6021 = vand.u32 %v6020, 4294901760
    %6022 = vmatmul.f32.gmra.mxu0 %v6021
    %v6023 = vpop.f32.mrf.mxu0
    %v6024 = vadd.f32 0.0, %v6023
    %v6025 = vand.u32 %v5995, 4294901760
    %v6026 = vsub.f32 %v5995, %v6025
    %v6027 = vand.u32 %v6026, 4294901760
    %v6028 = vsub.f32 %v6026, %v6027
    %v6029 = vand.u32 %v6028, 4294901760
    %6030 = vmatmul.f32.gmra.mxu0 %v6029
    %v6031 = vpop.f32.mrf.mxu0
    %v6032 = vadd.f32 0.0, %v6031
    %v6033 = vand.u32 %v5998, 4294901760
    %v6034 = vsub.f32 %v5998, %v6033
    %v6035 = vand.u32 %v6034, 4294901760
    %v6036 = vsub.f32 %v6034, %v6035
    %v6037 = vand.u32 %v6036, 4294901760
    %6038 = vmatmul.f32.gmra.mxu0 %v6037
    %v6039 = vpop.f32.mrf.mxu0
    %v6040 = vadd.f32 0.0, %v6039
    %6041 = vdwg.mxu0
    %6042 = vmatpush.msra.mxu0 0.0
    %6043 = vmatpush.msra.mxu0 0.0
    %6044 = vmatpush.msra.mxu0 0.0
    %6045 = vmatpush.msra.mxu0 0.0
    %6046 = vmatpush.msra.mxu0 0.0
    %6047 = vmatpush.msra.mxu0 0.0
    %6048 = vmatpush.msra.mxu0 0.0
    %6049 = vmatpush.msra.mxu0 0.0
    %6050 = vmatpush.msra.mxu0 0.0
    %6051 = vmatpush.msra.mxu0 0.0
    %6052 = vmatpush.msra.mxu0 0.0
    %6053 = vmatpush.msra.mxu0 0.0
    %6054 = vmatpush.msra.mxu0 0.0
    %6055 = vmatpush.msra.mxu0 0.0
    %6056 = vmatpush.msra.mxu0 0.0
    %v6057 = vand.u32 %v5990, 4294901760
    %v6058 = vsub.f32 %v5990, %v6057
    %v6059 = vand.u32 %v6058, 4294901760
    %v6060 = vsub.f32 %v6058, %v6059
    %v6061 = vand.u32 %v6060, 4294901760
    %6062 = vmatpush.msra.mxu0 %v6061
    %v6063 = vand.u32 %v5992, 4294901760
    %6064 = vmatmul.f32.gmra.mxu0 %v6063
    %v6065 = vpop.f32.mrf.mxu0
    %v6066 = vadd.f32 %v6024, %v6065
    %v6067 = vand.u32 %v5995, 4294901760
    %6068 = vmatmul.f32.gmra.mxu0 %v6067
    %v6069 = vpop.f32.mrf.mxu0
    %v6070 = vadd.f32 %v6032, %v6069
    %v6071 = vand.u32 %v5998, 4294901760
    %6072 = vmatmul.f32.gmra.mxu0 %v6071
    %v6073 = vpop.f32.mrf.mxu0
    %v6074 = vadd.f32 %v6040, %v6073
    %6075 = vdwg.mxu0
    %6076 = vmatpush.msra.mxu0 0.0
    %6077 = vmatpush.msra.mxu0 0.0
    %6078 = vmatpush.msra.mxu0 0.0
    %6079 = vmatpush.msra.mxu0 0.0
    %6080 = vmatpush.msra.mxu0 0.0
    %6081 = vmatpush.msra.mxu0 0.0
    %6082 = vmatpush.msra.mxu0 0.0
    %6083 = vmatpush.msra.mxu0 0.0
    %6084 = vmatpush.msra.mxu0 0.0
    %6085 = vmatpush.msra.mxu0 0.0
    %6086 = vmatpush.msra.mxu0 0.0
    %6087 = vmatpush.msra.mxu0 0.0
    %6088 = vmatpush.msra.mxu0 0.0
    %6089 = vmatpush.msra.mxu0 0.0
    %6090 = vmatpush.msra.mxu0 0.0
    %v6091 = vand.u32 %v5990, 4294901760
    %v6092 = vsub.f32 %v5990, %v6091
    %6093 = vmatpush.msra.mxu0 %v6092
    %v6094 = vand.u32 %v5992, 4294901760
    %v6095 = vsub.f32 %v5992, %v6094
    %6096 = vmatmul.f32.gmra.mxu0 %v6095
    %v6097 = vpop.f32.mrf.mxu0
    %v6098 = vadd.f32 %v6066, %v6097
    %v6099 = vand.u32 %v5995, 4294901760
    %v6100 = vsub.f32 %v5995, %v6099
    %6101 = vmatmul.f32.gmra.mxu0 %v6100
    %v6102 = vpop.f32.mrf.mxu0
    %v6103 = vadd.f32 %v6070, %v6102
    %v6104 = vand.u32 %v5998, 4294901760
    %v6105 = vsub.f32 %v5998, %v6104
    %6106 = vmatmul.f32.gmra.mxu0 %v6105
    %v6107 = vpop.f32.mrf.mxu0
    %v6108 = vadd.f32 %v6074, %v6107
    %6109 = vdwg.mxu0
    %6110 = vmatpush.msra.mxu0 0.0
    %6111 = vmatpush.msra.mxu0 0.0
    %6112 = vmatpush.msra.mxu0 0.0
    %6113 = vmatpush.msra.mxu0 0.0
    %6114 = vmatpush.msra.mxu0 0.0
    %6115 = vmatpush.msra.mxu0 0.0
    %6116 = vmatpush.msra.mxu0 0.0
    %6117 = vmatpush.msra.mxu0 0.0
    %6118 = vmatpush.msra.mxu0 0.0
    %6119 = vmatpush.msra.mxu0 0.0
    %6120 = vmatpush.msra.mxu0 0.0
    %6121 = vmatpush.msra.mxu0 0.0
    %6122 = vmatpush.msra.mxu0 0.0
    %6123 = vmatpush.msra.mxu0 0.0
    %6124 = vmatpush.msra.mxu0 0.0
    %v6125 = vand.u32 %v5990, 4294901760
    %6126 = vmatpush.msra.mxu0 %v6125
    %v6127 = vand.u32 %v5992, 4294901760
    %v6128 = vsub.f32 %v5992, %v6127
    %v6129 = vand.u32 %v6128, 4294901760
    %6130 = vmatmul.f32.gmra.mxu0 %v6129
    %v6131 = vpop.f32.mrf.mxu0
    %v6132 = vadd.f32 %v6098, %v6131
    %v6133 = vand.u32 %v5995, 4294901760
    %v6134 = vsub.f32 %v5995, %v6133
    %v6135 = vand.u32 %v6134, 4294901760
    %6136 = vmatmul.f32.gmra.mxu0 %v6135
    %v6137 = vpop.f32.mrf.mxu0
    %v6138 = vadd.f32 %v6103, %v6137
    %v6139 = vand.u32 %v5998, 4294901760
    %v6140 = vsub.f32 %v5998, %v6139
    %v6141 = vand.u32 %v6140, 4294901760
    %6142 = vmatmul.f32.gmra.mxu0 %v6141
    %v6143 = vpop.f32.mrf.mxu0
    %v6144 = vadd.f32 %v6108, %v6143
    %6145 = vdwg.mxu0
    %6146 = vmatpush.msra.mxu0 0.0
    %6147 = vmatpush.msra.mxu0 0.0
    %6148 = vmatpush.msra.mxu0 0.0
    %6149 = vmatpush.msra.mxu0 0.0
    %6150 = vmatpush.msra.mxu0 0.0
    %6151 = vmatpush.msra.mxu0 0.0
    %6152 = vmatpush.msra.mxu0 0.0
    %6153 = vmatpush.msra.mxu0 0.0
    %6154 = vmatpush.msra.mxu0 0.0
    %6155 = vmatpush.msra.mxu0 0.0
    %6156 = vmatpush.msra.mxu0 0.0
    %6157 = vmatpush.msra.mxu0 0.0
    %6158 = vmatpush.msra.mxu0 0.0
    %6159 = vmatpush.msra.mxu0 0.0
    %6160 = vmatpush.msra.mxu0 0.0
    %v6161 = vand.u32 %v5990, 4294901760
    %v6162 = vsub.f32 %v5990, %v6161
    %v6163 = vand.u32 %v6162, 4294901760
    %6164 = vmatpush.msra.mxu0 %v6163
    %v6165 = vand.u32 %v5992, 4294901760
    %6166 = vmatmul.f32.gmra.mxu0 %v6165
    %v6167 = vpop.f32.mrf.mxu0
    %v6168 = vadd.f32 %v6132, %v6167
    %v6169 = vand.u32 %v5995, 4294901760
    %6170 = vmatmul.f32.gmra.mxu0 %v6169
    %v6171 = vpop.f32.mrf.mxu0
    %v6172 = vadd.f32 %v6138, %v6171
    %v6173 = vand.u32 %v5998, 4294901760
    %6174 = vmatmul.f32.gmra.mxu0 %v6173
    %v6175 = vpop.f32.mrf.mxu0
    %v6176 = vadd.f32 %v6144, %v6175
    %6177 = vdwg.mxu0
    %6178 = vmatpush.msra.mxu0 0.0
    %6179 = vmatpush.msra.mxu0 0.0
    %6180 = vmatpush.msra.mxu0 0.0
    %6181 = vmatpush.msra.mxu0 0.0
    %6182 = vmatpush.msra.mxu0 0.0
    %6183 = vmatpush.msra.mxu0 0.0
    %6184 = vmatpush.msra.mxu0 0.0
    %6185 = vmatpush.msra.mxu0 0.0
    %6186 = vmatpush.msra.mxu0 0.0
    %6187 = vmatpush.msra.mxu0 0.0
    %6188 = vmatpush.msra.mxu0 0.0
    %6189 = vmatpush.msra.mxu0 0.0
    %6190 = vmatpush.msra.mxu0 0.0
    %6191 = vmatpush.msra.mxu0 0.0
    %6192 = vmatpush.msra.mxu0 0.0
    %v6193 = vand.u32 %v5990, 4294901760
    %6194 = vmatpush.msra.mxu0 %v6193
    %v6195 = vand.u32 %v5992, 4294901760
    %6196 = vmatmul.f32.gmra.mxu0 %v6195
    %v6197 = vpop.f32.mrf.mxu0
    %v6198 = vadd.f32 %v6168, %v6197
    %v6199 = vand.u32 %v5995, 4294901760
    %6200 = vmatmul.f32.gmra.mxu0 %v6199
    %v6201 = vpop.f32.mrf.mxu0
    %v6202 = vadd.f32 %v6172, %v6201
    %v6203 = vand.u32 %v5998, 4294901760
    %6204 = vmatmul.f32.gmra.mxu0 %v6203
    %v6205 = vpop.f32.mrf.mxu0
    %v6206 = vadd.f32 %v6176, %v6205
    %6207 = vdwg.mxu0
    %v6208 = vadd.f32 %v5987, %v6198
    %v6209 = vadd.f32 %v5988, %v6202
    %v6210 = vadd.f32 %v5989, %v6206
    %v6211 = vld [vmem:[%s1 + $0xd8] sm:$0xff]
    %v6213 = vsel %vm1471, %v4656, 0
    %v6216 = vsel %vm1471, %v4660, 0
    %v6219 = vsel %vm1471, %v4664, 0
    %6221 = vmatpush.msra.mxu0 0.0
    %6222 = vmatpush.msra.mxu0 0.0
    %6223 = vmatpush.msra.mxu0 0.0
    %6224 = vmatpush.msra.mxu0 0.0
    %6225 = vmatpush.msra.mxu0 0.0
    %6226 = vmatpush.msra.mxu0 0.0
    %6227 = vmatpush.msra.mxu0 0.0
    %6228 = vmatpush.msra.mxu0 0.0
    %6229 = vmatpush.msra.mxu0 0.0
    %6230 = vmatpush.msra.mxu0 0.0
    %6231 = vmatpush.msra.mxu0 0.0
    %6232 = vmatpush.msra.mxu0 0.0
    %6233 = vmatpush.msra.mxu0 0.0
    %6234 = vmatpush.msra.mxu0 0.0
    %6235 = vmatpush.msra.mxu0 0.0
    %v6236 = vand.u32 %v6211, 4294901760
    %6237 = vmatpush.msra.mxu0 %v6236
    %v6238 = vand.u32 %v6213, 4294901760
    %v6239 = vsub.f32 %v6213, %v6238
    %v6240 = vand.u32 %v6239, 4294901760
    %v6241 = vsub.f32 %v6239, %v6240
    %v6242 = vand.u32 %v6241, 4294901760
    %6243 = vmatmul.f32.gmra.mxu0 %v6242
    %v6244 = vpop.f32.mrf.mxu0
    %v6245 = vadd.f32 0.0, %v6244
    %v6246 = vand.u32 %v6216, 4294901760
    %v6247 = vsub.f32 %v6216, %v6246
    %v6248 = vand.u32 %v6247, 4294901760
    %v6249 = vsub.f32 %v6247, %v6248
    %v6250 = vand.u32 %v6249, 4294901760
    %6251 = vmatmul.f32.gmra.mxu0 %v6250
    %v6252 = vpop.f32.mrf.mxu0
    %v6253 = vadd.f32 0.0, %v6252
    %v6254 = vand.u32 %v6219, 4294901760
    %v6255 = vsub.f32 %v6219, %v6254
    %v6256 = vand.u32 %v6255, 4294901760
    %v6257 = vsub.f32 %v6255, %v6256
    %v6258 = vand.u32 %v6257, 4294901760
    %6259 = vmatmul.f32.gmra.mxu0 %v6258
    %v6260 = vpop.f32.mrf.mxu0
    %v6261 = vadd.f32 0.0, %v6260
    %6262 = vdwg.mxu0
    %6263 = vmatpush.msra.mxu0 0.0
    %6264 = vmatpush.msra.mxu0 0.0
    %6265 = vmatpush.msra.mxu0 0.0
    %6266 = vmatpush.msra.mxu0 0.0
    %6267 = vmatpush.msra.mxu0 0.0
    %6268 = vmatpush.msra.mxu0 0.0
    %6269 = vmatpush.msra.mxu0 0.0
    %6270 = vmatpush.msra.mxu0 0.0
    %6271 = vmatpush.msra.mxu0 0.0
    %6272 = vmatpush.msra.mxu0 0.0
    %6273 = vmatpush.msra.mxu0 0.0
    %6274 = vmatpush.msra.mxu0 0.0
    %6275 = vmatpush.msra.mxu0 0.0
    %6276 = vmatpush.msra.mxu0 0.0
    %6277 = vmatpush.msra.mxu0 0.0
    %v6278 = vand.u32 %v6211, 4294901760
    %v6279 = vsub.f32 %v6211, %v6278
    %v6280 = vand.u32 %v6279, 4294901760
    %v6281 = vsub.f32 %v6279, %v6280
    %v6282 = vand.u32 %v6281, 4294901760
    %6283 = vmatpush.msra.mxu0 %v6282
    %v6284 = vand.u32 %v6213, 4294901760
    %6285 = vmatmul.f32.gmra.mxu0 %v6284
    %v6286 = vpop.f32.mrf.mxu0
    %v6287 = vadd.f32 %v6245, %v6286
    %v6288 = vand.u32 %v6216, 4294901760
    %6289 = vmatmul.f32.gmra.mxu0 %v6288
    %v6290 = vpop.f32.mrf.mxu0
    %v6291 = vadd.f32 %v6253, %v6290
    %v6292 = vand.u32 %v6219, 4294901760
    %6293 = vmatmul.f32.gmra.mxu0 %v6292
    %v6294 = vpop.f32.mrf.mxu0
    %v6295 = vadd.f32 %v6261, %v6294
    %6296 = vdwg.mxu0
    %6297 = vmatpush.msra.mxu0 0.0
    %6298 = vmatpush.msra.mxu0 0.0
    %6299 = vmatpush.msra.mxu0 0.0
    %6300 = vmatpush.msra.mxu0 0.0
    %6301 = vmatpush.msra.mxu0 0.0
    %6302 = vmatpush.msra.mxu0 0.0
    %6303 = vmatpush.msra.mxu0 0.0
    %6304 = vmatpush.msra.mxu0 0.0
    %6305 = vmatpush.msra.mxu0 0.0
    %6306 = vmatpush.msra.mxu0 0.0
    %6307 = vmatpush.msra.mxu0 0.0
    %6308 = vmatpush.msra.mxu0 0.0
    %6309 = vmatpush.msra.mxu0 0.0
    %6310 = vmatpush.msra.mxu0 0.0
    %6311 = vmatpush.msra.mxu0 0.0
    %v6312 = vand.u32 %v6211, 4294901760
    %v6313 = vsub.f32 %v6211, %v6312
    %6314 = vmatpush.msra.mxu0 %v6313
    %v6315 = vand.u32 %v6213, 4294901760
    %v6316 = vsub.f32 %v6213, %v6315
    %6317 = vmatmul.f32.gmra.mxu0 %v6316
    %v6318 = vpop.f32.mrf.mxu0
    %v6319 = vadd.f32 %v6287, %v6318
    %v6320 = vand.u32 %v6216, 4294901760
    %v6321 = vsub.f32 %v6216, %v6320
    %6322 = vmatmul.f32.gmra.mxu0 %v6321
    %v6323 = vpop.f32.mrf.mxu0
    %v6324 = vadd.f32 %v6291, %v6323
    %v6325 = vand.u32 %v6219, 4294901760
    %v6326 = vsub.f32 %v6219, %v6325
    %6327 = vmatmul.f32.gmra.mxu0 %v6326
    %v6328 = vpop.f32.mrf.mxu0
    %v6329 = vadd.f32 %v6295, %v6328
    %6330 = vdwg.mxu0
    %6331 = vmatpush.msra.mxu0 0.0
    %6332 = vmatpush.msra.mxu0 0.0
    %6333 = vmatpush.msra.mxu0 0.0
    %6334 = vmatpush.msra.mxu0 0.0
    %6335 = vmatpush.msra.mxu0 0.0
    %6336 = vmatpush.msra.mxu0 0.0
    %6337 = vmatpush.msra.mxu0 0.0
    %6338 = vmatpush.msra.mxu0 0.0
    %6339 = vmatpush.msra.mxu0 0.0
    %6340 = vmatpush.msra.mxu0 0.0
    %6341 = vmatpush.msra.mxu0 0.0
    %6342 = vmatpush.msra.mxu0 0.0
    %6343 = vmatpush.msra.mxu0 0.0
    %6344 = vmatpush.msra.mxu0 0.0
    %6345 = vmatpush.msra.mxu0 0.0
    %v6346 = vand.u32 %v6211, 4294901760
    %6347 = vmatpush.msra.mxu0 %v6346
    %v6348 = vand.u32 %v6213, 4294901760
    %v6349 = vsub.f32 %v6213, %v6348
    %v6350 = vand.u32 %v6349, 4294901760
    %6351 = vmatmul.f32.gmra.mxu0 %v6350
    %v6352 = vpop.f32.mrf.mxu0
    %v6353 = vadd.f32 %v6319, %v6352
    %v6354 = vand.u32 %v6216, 4294901760
    %v6355 = vsub.f32 %v6216, %v6354
    %v6356 = vand.u32 %v6355, 4294901760
    %6357 = vmatmul.f32.gmra.mxu0 %v6356
    %v6358 = vpop.f32.mrf.mxu0
    %v6359 = vadd.f32 %v6324, %v6358
    %v6360 = vand.u32 %v6219, 4294901760
    %v6361 = vsub.f32 %v6219, %v6360
    %v6362 = vand.u32 %v6361, 4294901760
    %6363 = vmatmul.f32.gmra.mxu0 %v6362
    %v6364 = vpop.f32.mrf.mxu0
    %v6365 = vadd.f32 %v6329, %v6364
    %6366 = vdwg.mxu0
    %6367 = vmatpush.msra.mxu0 0.0
    %6368 = vmatpush.msra.mxu0 0.0
    %6369 = vmatpush.msra.mxu0 0.0
    %6370 = vmatpush.msra.mxu0 0.0
    %6371 = vmatpush.msra.mxu0 0.0
    %6372 = vmatpush.msra.mxu0 0.0
    %6373 = vmatpush.msra.mxu0 0.0
    %6374 = vmatpush.msra.mxu0 0.0
    %6375 = vmatpush.msra.mxu0 0.0
    %6376 = vmatpush.msra.mxu0 0.0
    %6377 = vmatpush.msra.mxu0 0.0
    %6378 = vmatpush.msra.mxu0 0.0
    %6379 = vmatpush.msra.mxu0 0.0
    %6380 = vmatpush.msra.mxu0 0.0
    %6381 = vmatpush.msra.mxu0 0.0
    %v6382 = vand.u32 %v6211, 4294901760
    %v6383 = vsub.f32 %v6211, %v6382
    %v6384 = vand.u32 %v6383, 4294901760
    %6385 = vmatpush.msra.mxu0 %v6384
    %v6386 = vand.u32 %v6213, 4294901760
    %6387 = vmatmul.f32.gmra.mxu0 %v6386
    %v6388 = vpop.f32.mrf.mxu0
    %v6389 = vadd.f32 %v6353, %v6388
    %v6390 = vand.u32 %v6216, 4294901760
    %6391 = vmatmul.f32.gmra.mxu0 %v6390
    %v6392 = vpop.f32.mrf.mxu0
    %v6393 = vadd.f32 %v6359, %v6392
    %v6394 = vand.u32 %v6219, 4294901760
    %6395 = vmatmul.f32.gmra.mxu0 %v6394
    %v6396 = vpop.f32.mrf.mxu0
    %v6397 = vadd.f32 %v6365, %v6396
    %6398 = vdwg.mxu0
    %6399 = vmatpush.msra.mxu0 0.0
    %6400 = vmatpush.msra.mxu0 0.0
    %6401 = vmatpush.msra.mxu0 0.0
    %6402 = vmatpush.msra.mxu0 0.0
    %6403 = vmatpush.msra.mxu0 0.0
    %6404 = vmatpush.msra.mxu0 0.0
    %6405 = vmatpush.msra.mxu0 0.0
    %6406 = vmatpush.msra.mxu0 0.0
    %6407 = vmatpush.msra.mxu0 0.0
    %6408 = vmatpush.msra.mxu0 0.0
    %6409 = vmatpush.msra.mxu0 0.0
    %6410 = vmatpush.msra.mxu0 0.0
    %6411 = vmatpush.msra.mxu0 0.0
    %6412 = vmatpush.msra.mxu0 0.0
    %6413 = vmatpush.msra.mxu0 0.0
    %v6414 = vand.u32 %v6211, 4294901760
    %6415 = vmatpush.msra.mxu0 %v6414
    %v6416 = vand.u32 %v6213, 4294901760
    %6417 = vmatmul.f32.gmra.mxu0 %v6416
    %v6418 = vpop.f32.mrf.mxu0
    %v6419 = vadd.f32 %v6389, %v6418
    %v6420 = vand.u32 %v6216, 4294901760
    %6421 = vmatmul.f32.gmra.mxu0 %v6420
    %v6422 = vpop.f32.mrf.mxu0
    %v6423 = vadd.f32 %v6393, %v6422
    %v6424 = vand.u32 %v6219, 4294901760
    %6425 = vmatmul.f32.gmra.mxu0 %v6424
    %v6426 = vpop.f32.mrf.mxu0
    %v6427 = vadd.f32 %v6397, %v6426
    %6428 = vdwg.mxu0
    %v6429 = vadd.f32 %v6208, %v6419
    %v6430 = vadd.f32 %v6209, %v6423
    %v6431 = vadd.f32 %v6210, %v6427
    %v6433 = vsel %vm1471, %v4876, 0
    %v6436 = vsel %vm1471, %v4880, 0
    %v6439 = vsel %vm1471, %v4884, 0
    %6441 = vmatpush.msra.mxu0 0.0
    %6442 = vmatpush.msra.mxu0 0.0
    %6443 = vmatpush.msra.mxu0 0.0
    %6444 = vmatpush.msra.mxu0 0.0
    %6445 = vmatpush.msra.mxu0 0.0
    %6446 = vmatpush.msra.mxu0 0.0
    %6447 = vmatpush.msra.mxu0 0.0
    %6448 = vmatpush.msra.mxu0 0.0
    %6449 = vmatpush.msra.mxu0 0.0
    %6450 = vmatpush.msra.mxu0 0.0
    %6451 = vmatpush.msra.mxu0 0.0
    %6452 = vmatpush.msra.mxu0 0.0
    %6453 = vmatpush.msra.mxu0 0.0
    %6454 = vmatpush.msra.mxu0 0.0
    %6455 = vmatpush.msra.mxu0 0.0
    %v6456 = vand.u32 %v5547, 4294901760
    %6457 = vmatpush.msra.mxu0 %v6456
    %v6458 = vand.u32 %v6433, 4294901760
    %v6459 = vsub.f32 %v6433, %v6458
    %v6460 = vand.u32 %v6459, 4294901760
    %v6461 = vsub.f32 %v6459, %v6460
    %v6462 = vand.u32 %v6461, 4294901760
    %6463 = vmatmul.f32.gmra.mxu0 %v6462
    %v6464 = vpop.f32.mrf.mxu0
    %v6465 = vadd.f32 0.0, %v6464
    %v6466 = vand.u32 %v6436, 4294901760
    %v6467 = vsub.f32 %v6436, %v6466
    %v6468 = vand.u32 %v6467, 4294901760
    %v6469 = vsub.f32 %v6467, %v6468
    %v6470 = vand.u32 %v6469, 4294901760
    %6471 = vmatmul.f32.gmra.mxu0 %v6470
    %v6472 = vpop.f32.mrf.mxu0
    %v6473 = vadd.f32 0.0, %v6472
    %v6474 = vand.u32 %v6439, 4294901760
    %v6475 = vsub.f32 %v6439, %v6474
    %v6476 = vand.u32 %v6475, 4294901760
    %v6477 = vsub.f32 %v6475, %v6476
    %v6478 = vand.u32 %v6477, 4294901760
    %6479 = vmatmul.f32.gmra.mxu0 %v6478
    %v6480 = vpop.f32.mrf.mxu0
    %v6481 = vadd.f32 0.0, %v6480
    %6482 = vdwg.mxu0
    %6483 = vmatpush.msra.mxu0 0.0
    %6484 = vmatpush.msra.mxu0 0.0
    %6485 = vmatpush.msra.mxu0 0.0
    %6486 = vmatpush.msra.mxu0 0.0
    %6487 = vmatpush.msra.mxu0 0.0
    %6488 = vmatpush.msra.mxu0 0.0
    %6489 = vmatpush.msra.mxu0 0.0
    %6490 = vmatpush.msra.mxu0 0.0
    %6491 = vmatpush.msra.mxu0 0.0
    %6492 = vmatpush.msra.mxu0 0.0
    %6493 = vmatpush.msra.mxu0 0.0
    %6494 = vmatpush.msra.mxu0 0.0
    %6495 = vmatpush.msra.mxu0 0.0
    %6496 = vmatpush.msra.mxu0 0.0
    %6497 = vmatpush.msra.mxu0 0.0
    %v6498 = vand.u32 %v5547, 4294901760
    %v6499 = vsub.f32 %v5547, %v6498
    %v6500 = vand.u32 %v6499, 4294901760
    %v6501 = vsub.f32 %v6499, %v6500
    %v6502 = vand.u32 %v6501, 4294901760
    %6503 = vmatpush.msra.mxu0 %v6502
    %v6504 = vand.u32 %v6433, 4294901760
    %6505 = vmatmul.f32.gmra.mxu0 %v6504
    %v6506 = vpop.f32.mrf.mxu0
    %v6507 = vadd.f32 %v6465, %v6506
    %v6508 = vand.u32 %v6436, 4294901760
    %6509 = vmatmul.f32.gmra.mxu0 %v6508
    %v6510 = vpop.f32.mrf.mxu0
    %v6511 = vadd.f32 %v6473, %v6510
    %v6512 = vand.u32 %v6439, 4294901760
    %6513 = vmatmul.f32.gmra.mxu0 %v6512
    %v6514 = vpop.f32.mrf.mxu0
    %v6515 = vadd.f32 %v6481, %v6514
    %6516 = vdwg.mxu0
    %6517 = vmatpush.msra.mxu0 0.0
    %6518 = vmatpush.msra.mxu0 0.0
    %6519 = vmatpush.msra.mxu0 0.0
    %6520 = vmatpush.msra.mxu0 0.0
    %6521 = vmatpush.msra.mxu0 0.0
    %6522 = vmatpush.msra.mxu0 0.0
    %6523 = vmatpush.msra.mxu0 0.0
    %6524 = vmatpush.msra.mxu0 0.0
    %6525 = vmatpush.msra.mxu0 0.0
    %6526 = vmatpush.msra.mxu0 0.0
    %6527 = vmatpush.msra.mxu0 0.0
    %6528 = vmatpush.msra.mxu0 0.0
    %6529 = vmatpush.msra.mxu0 0.0
    %6530 = vmatpush.msra.mxu0 0.0
    %6531 = vmatpush.msra.mxu0 0.0
    %v6532 = vand.u32 %v5547, 4294901760
    %v6533 = vsub.f32 %v5547, %v6532
    %6534 = vmatpush.msra.mxu0 %v6533
    %v6535 = vand.u32 %v6433, 4294901760
    %v6536 = vsub.f32 %v6433, %v6535
    %6537 = vmatmul.f32.gmra.mxu0 %v6536
    %v6538 = vpop.f32.mrf.mxu0
    %v6539 = vadd.f32 %v6507, %v6538
    %v6540 = vand.u32 %v6436, 4294901760
    %v6541 = vsub.f32 %v6436, %v6540
    %6542 = vmatmul.f32.gmra.mxu0 %v6541
    %v6543 = vpop.f32.mrf.mxu0
    %v6544 = vadd.f32 %v6511, %v6543
    %v6545 = vand.u32 %v6439, 4294901760
    %v6546 = vsub.f32 %v6439, %v6545
    %6547 = vmatmul.f32.gmra.mxu0 %v6546
    %v6548 = vpop.f32.mrf.mxu0
    %v6549 = vadd.f32 %v6515, %v6548
    %6550 = vdwg.mxu0
    %6551 = vmatpush.msra.mxu0 0.0
    %6552 = vmatpush.msra.mxu0 0.0
    %6553 = vmatpush.msra.mxu0 0.0
    %6554 = vmatpush.msra.mxu0 0.0
    %6555 = vmatpush.msra.mxu0 0.0
    %6556 = vmatpush.msra.mxu0 0.0
    %6557 = vmatpush.msra.mxu0 0.0
    %6558 = vmatpush.msra.mxu0 0.0
    %6559 = vmatpush.msra.mxu0 0.0
    %6560 = vmatpush.msra.mxu0 0.0
    %6561 = vmatpush.msra.mxu0 0.0
    %6562 = vmatpush.msra.mxu0 0.0
    %6563 = vmatpush.msra.mxu0 0.0
    %6564 = vmatpush.msra.mxu0 0.0
    %6565 = vmatpush.msra.mxu0 0.0
    %v6566 = vand.u32 %v5547, 4294901760
    %6567 = vmatpush.msra.mxu0 %v6566
    %v6568 = vand.u32 %v6433, 4294901760
    %v6569 = vsub.f32 %v6433, %v6568
    %v6570 = vand.u32 %v6569, 4294901760
    %6571 = vmatmul.f32.gmra.mxu0 %v6570
    %v6572 = vpop.f32.mrf.mxu0
    %v6573 = vadd.f32 %v6539, %v6572
    %v6574 = vand.u32 %v6436, 4294901760
    %v6575 = vsub.f32 %v6436, %v6574
    %v6576 = vand.u32 %v6575, 4294901760
    %6577 = vmatmul.f32.gmra.mxu0 %v6576
    %v6578 = vpop.f32.mrf.mxu0
    %v6579 = vadd.f32 %v6544, %v6578
    %v6580 = vand.u32 %v6439, 4294901760
    %v6581 = vsub.f32 %v6439, %v6580
    %v6582 = vand.u32 %v6581, 4294901760
    %6583 = vmatmul.f32.gmra.mxu0 %v6582
    %v6584 = vpop.f32.mrf.mxu0
    %v6585 = vadd.f32 %v6549, %v6584
    %6586 = vdwg.mxu0
    %6587 = vmatpush.msra.mxu0 0.0
    %6588 = vmatpush.msra.mxu0 0.0
    %6589 = vmatpush.msra.mxu0 0.0
    %6590 = vmatpush.msra.mxu0 0.0
    %6591 = vmatpush.msra.mxu0 0.0
    %6592 = vmatpush.msra.mxu0 0.0
    %6593 = vmatpush.msra.mxu0 0.0
    %6594 = vmatpush.msra.mxu0 0.0
    %6595 = vmatpush.msra.mxu0 0.0
    %6596 = vmatpush.msra.mxu0 0.0
    %6597 = vmatpush.msra.mxu0 0.0
    %6598 = vmatpush.msra.mxu0 0.0
    %6599 = vmatpush.msra.mxu0 0.0
    %6600 = vmatpush.msra.mxu0 0.0
    %6601 = vmatpush.msra.mxu0 0.0
    %v6602 = vand.u32 %v5547, 4294901760
    %v6603 = vsub.f32 %v5547, %v6602
    %v6604 = vand.u32 %v6603, 4294901760
    %6605 = vmatpush.msra.mxu0 %v6604
    %v6606 = vand.u32 %v6433, 4294901760
    %6607 = vmatmul.f32.gmra.mxu0 %v6606
    %v6608 = vpop.f32.mrf.mxu0
    %v6609 = vadd.f32 %v6573, %v6608
    %v6610 = vand.u32 %v6436, 4294901760
    %6611 = vmatmul.f32.gmra.mxu0 %v6610
    %v6612 = vpop.f32.mrf.mxu0
    %v6613 = vadd.f32 %v6579, %v6612
    %v6614 = vand.u32 %v6439, 4294901760
    %6615 = vmatmul.f32.gmra.mxu0 %v6614
    %v6616 = vpop.f32.mrf.mxu0
    %v6617 = vadd.f32 %v6585, %v6616
    %6618 = vdwg.mxu0
    %6619 = vmatpush.msra.mxu0 0.0
    %6620 = vmatpush.msra.mxu0 0.0
    %6621 = vmatpush.msra.mxu0 0.0
    %6622 = vmatpush.msra.mxu0 0.0
    %6623 = vmatpush.msra.mxu0 0.0
    %6624 = vmatpush.msra.mxu0 0.0
    %6625 = vmatpush.msra.mxu0 0.0
    %6626 = vmatpush.msra.mxu0 0.0
    %6627 = vmatpush.msra.mxu0 0.0
    %6628 = vmatpush.msra.mxu0 0.0
    %6629 = vmatpush.msra.mxu0 0.0
    %6630 = vmatpush.msra.mxu0 0.0
    %6631 = vmatpush.msra.mxu0 0.0
    %6632 = vmatpush.msra.mxu0 0.0
    %6633 = vmatpush.msra.mxu0 0.0
    %v6634 = vand.u32 %v5547, 4294901760
    %6635 = vmatpush.msra.mxu0 %v6634
    %v6636 = vand.u32 %v6433, 4294901760
    %6637 = vmatmul.f32.gmra.mxu0 %v6636
    %v6638 = vpop.f32.mrf.mxu0
    %v6639 = vadd.f32 %v6609, %v6638
    %v6640 = vand.u32 %v6436, 4294901760
    %6641 = vmatmul.f32.gmra.mxu0 %v6640
    %v6642 = vpop.f32.mrf.mxu0
    %v6643 = vadd.f32 %v6613, %v6642
    %v6644 = vand.u32 %v6439, 4294901760
    %6645 = vmatmul.f32.gmra.mxu0 %v6644
    %v6646 = vpop.f32.mrf.mxu0
    %v6647 = vadd.f32 %v6617, %v6646
    %6648 = vdwg.mxu0
    %v6649 = vadd.f32 %v5765, %v6639
    %v6650 = vadd.f32 %v5765, %v6643
    %v6651 = vadd.f32 %v5765, %v6647
    %v6653 = vsel %vm1471, %v5096, 0
    %v6656 = vsel %vm1471, %v5100, 0
    %v6659 = vsel %vm1471, %v5104, 0
    %6661 = vmatpush.msra.mxu0 0.0
    %6662 = vmatpush.msra.mxu0 0.0
    %6663 = vmatpush.msra.mxu0 0.0
    %6664 = vmatpush.msra.mxu0 0.0
    %6665 = vmatpush.msra.mxu0 0.0
    %6666 = vmatpush.msra.mxu0 0.0
    %6667 = vmatpush.msra.mxu0 0.0
    %6668 = vmatpush.msra.mxu0 0.0
    %6669 = vmatpush.msra.mxu0 0.0
    %6670 = vmatpush.msra.mxu0 0.0
    %6671 = vmatpush.msra.mxu0 0.0
    %6672 = vmatpush.msra.mxu0 0.0
    %6673 = vmatpush.msra.mxu0 0.0
    %6674 = vmatpush.msra.mxu0 0.0
    %6675 = vmatpush.msra.mxu0 0.0
    %v6676 = vand.u32 %v5769, 4294901760
    %6677 = vmatpush.msra.mxu0 %v6676
    %v6678 = vand.u32 %v6653, 4294901760
    %v6679 = vsub.f32 %v6653, %v6678
    %v6680 = vand.u32 %v6679, 4294901760
    %v6681 = vsub.f32 %v6679, %v6680
    %v6682 = vand.u32 %v6681, 4294901760
    %6683 = vmatmul.f32.gmra.mxu0 %v6682
    %v6684 = vpop.f32.mrf.mxu0
    %v6685 = vadd.f32 0.0, %v6684
    %v6686 = vand.u32 %v6656, 4294901760
    %v6687 = vsub.f32 %v6656, %v6686
    %v6688 = vand.u32 %v6687, 4294901760
    %v6689 = vsub.f32 %v6687, %v6688
    %v6690 = vand.u32 %v6689, 4294901760
    %6691 = vmatmul.f32.gmra.mxu0 %v6690
    %v6692 = vpop.f32.mrf.mxu0
    %v6693 = vadd.f32 0.0, %v6692
    %v6694 = vand.u32 %v6659, 4294901760
    %v6695 = vsub.f32 %v6659, %v6694
    %v6696 = vand.u32 %v6695, 4294901760
    %v6697 = vsub.f32 %v6695, %v6696
    %v6698 = vand.u32 %v6697, 4294901760
    %6699 = vmatmul.f32.gmra.mxu0 %v6698
    %v6700 = vpop.f32.mrf.mxu0
    %v6701 = vadd.f32 0.0, %v6700
    %6702 = vdwg.mxu0
    %6703 = vmatpush.msra.mxu0 0.0
    %6704 = vmatpush.msra.mxu0 0.0
    %6705 = vmatpush.msra.mxu0 0.0
    %6706 = vmatpush.msra.mxu0 0.0
    %6707 = vmatpush.msra.mxu0 0.0
    %6708 = vmatpush.msra.mxu0 0.0
    %6709 = vmatpush.msra.mxu0 0.0
    %6710 = vmatpush.msra.mxu0 0.0
    %6711 = vmatpush.msra.mxu0 0.0
    %6712 = vmatpush.msra.mxu0 0.0
    %6713 = vmatpush.msra.mxu0 0.0
    %6714 = vmatpush.msra.mxu0 0.0
    %6715 = vmatpush.msra.mxu0 0.0
    %6716 = vmatpush.msra.mxu0 0.0
    %6717 = vmatpush.msra.mxu0 0.0
    %v6718 = vand.u32 %v5769, 4294901760
    %v6719 = vsub.f32 %v5769, %v6718
    %v6720 = vand.u32 %v6719, 4294901760
    %v6721 = vsub.f32 %v6719, %v6720
    %v6722 = vand.u32 %v6721, 4294901760
    %6723 = vmatpush.msra.mxu0 %v6722
    %v6724 = vand.u32 %v6653, 4294901760
    %6725 = vmatmul.f32.gmra.mxu0 %v6724
    %v6726 = vpop.f32.mrf.mxu0
    %v6727 = vadd.f32 %v6685, %v6726
    %v6728 = vand.u32 %v6656, 4294901760
    %6729 = vmatmul.f32.gmra.mxu0 %v6728
    %v6730 = vpop.f32.mrf.mxu0
    %v6731 = vadd.f32 %v6693, %v6730
    %v6732 = vand.u32 %v6659, 4294901760
    %6733 = vmatmul.f32.gmra.mxu0 %v6732
    %v6734 = vpop.f32.mrf.mxu0
    %v6735 = vadd.f32 %v6701, %v6734
    %6736 = vdwg.mxu0
    %6737 = vmatpush.msra.mxu0 0.0
    %6738 = vmatpush.msra.mxu0 0.0
    %6739 = vmatpush.msra.mxu0 0.0
    %6740 = vmatpush.msra.mxu0 0.0
    %6741 = vmatpush.msra.mxu0 0.0
    %6742 = vmatpush.msra.mxu0 0.0
    %6743 = vmatpush.msra.mxu0 0.0
    %6744 = vmatpush.msra.mxu0 0.0
    %6745 = vmatpush.msra.mxu0 0.0
    %6746 = vmatpush.msra.mxu0 0.0
    %6747 = vmatpush.msra.mxu0 0.0
    %6748 = vmatpush.msra.mxu0 0.0
    %6749 = vmatpush.msra.mxu0 0.0
    %6750 = vmatpush.msra.mxu0 0.0
    %6751 = vmatpush.msra.mxu0 0.0
    %v6752 = vand.u32 %v5769, 4294901760
    %v6753 = vsub.f32 %v5769, %v6752
    %6754 = vmatpush.msra.mxu0 %v6753
    %v6755 = vand.u32 %v6653, 4294901760
    %v6756 = vsub.f32 %v6653, %v6755
    %6757 = vmatmul.f32.gmra.mxu0 %v6756
    %v6758 = vpop.f32.mrf.mxu0
    %v6759 = vadd.f32 %v6727, %v6758
    %v6760 = vand.u32 %v6656, 4294901760
    %v6761 = vsub.f32 %v6656, %v6760
    %6762 = vmatmul.f32.gmra.mxu0 %v6761
    %v6763 = vpop.f32.mrf.mxu0
    %v6764 = vadd.f32 %v6731, %v6763
    %v6765 = vand.u32 %v6659, 4294901760
    %v6766 = vsub.f32 %v6659, %v6765
    %6767 = vmatmul.f32.gmra.mxu0 %v6766
    %v6768 = vpop.f32.mrf.mxu0
    %v6769 = vadd.f32 %v6735, %v6768
    %6770 = vdwg.mxu0
    %6771 = vmatpush.msra.mxu0 0.0
    %6772 = vmatpush.msra.mxu0 0.0
    %6773 = vmatpush.msra.mxu0 0.0
    %6774 = vmatpush.msra.mxu0 0.0
    %6775 = vmatpush.msra.mxu0 0.0
    %6776 = vmatpush.msra.mxu0 0.0
    %6777 = vmatpush.msra.mxu0 0.0
    %6778 = vmatpush.msra.mxu0 0.0
    %6779 = vmatpush.msra.mxu0 0.0
    %6780 = vmatpush.msra.mxu0 0.0
    %6781 = vmatpush.msra.mxu0 0.0
    %6782 = vmatpush.msra.mxu0 0.0
    %6783 = vmatpush.msra.mxu0 0.0
    %6784 = vmatpush.msra.mxu0 0.0
    %6785 = vmatpush.msra.mxu0 0.0
    %v6786 = vand.u32 %v5769, 4294901760
    %6787 = vmatpush.msra.mxu0 %v6786
    %v6788 = vand.u32 %v6653, 4294901760
    %v6789 = vsub.f32 %v6653, %v6788
    %v6790 = vand.u32 %v6789, 4294901760
    %6791 = vmatmul.f32.gmra.mxu0 %v6790
    %v6792 = vpop.f32.mrf.mxu0
    %v6793 = vadd.f32 %v6759, %v6792
    %v6794 = vand.u32 %v6656, 4294901760
    %v6795 = vsub.f32 %v6656, %v6794
    %v6796 = vand.u32 %v6795, 4294901760
    %6797 = vmatmul.f32.gmra.mxu0 %v6796
    %v6798 = vpop.f32.mrf.mxu0
    %v6799 = vadd.f32 %v6764, %v6798
    %v6800 = vand.u32 %v6659, 4294901760
    %v6801 = vsub.f32 %v6659, %v6800
    %v6802 = vand.u32 %v6801, 4294901760
    %6803 = vmatmul.f32.gmra.mxu0 %v6802
    %v6804 = vpop.f32.mrf.mxu0
    %v6805 = vadd.f32 %v6769, %v6804
    %6806 = vdwg.mxu0
    %6807 = vmatpush.msra.mxu0 0.0
    %6808 = vmatpush.msra.mxu0 0.0
    %6809 = vmatpush.msra.mxu0 0.0
    %6810 = vmatpush.msra.mxu0 0.0
    %6811 = vmatpush.msra.mxu0 0.0
    %6812 = vmatpush.msra.mxu0 0.0
    %6813 = vmatpush.msra.mxu0 0.0
    %6814 = vmatpush.msra.mxu0 0.0
    %6815 = vmatpush.msra.mxu0 0.0
    %6816 = vmatpush.msra.mxu0 0.0
    %6817 = vmatpush.msra.mxu0 0.0
    %6818 = vmatpush.msra.mxu0 0.0
    %6819 = vmatpush.msra.mxu0 0.0
    %6820 = vmatpush.msra.mxu0 0.0
    %6821 = vmatpush.msra.mxu0 0.0
    %v6822 = vand.u32 %v5769, 4294901760
    %v6823 = vsub.f32 %v5769, %v6822
    %v6824 = vand.u32 %v6823, 4294901760
    %6825 = vmatpush.msra.mxu0 %v6824
    %v6826 = vand.u32 %v6653, 4294901760
    %6827 = vmatmul.f32.gmra.mxu0 %v6826
    %v6828 = vpop.f32.mrf.mxu0
    %v6829 = vadd.f32 %v6793, %v6828
    %v6830 = vand.u32 %v6656, 4294901760
    %6831 = vmatmul.f32.gmra.mxu0 %v6830
    %v6832 = vpop.f32.mrf.mxu0
    %v6833 = vadd.f32 %v6799, %v6832
    %v6834 = vand.u32 %v6659, 4294901760
    %6835 = vmatmul.f32.gmra.mxu0 %v6834
    %v6836 = vpop.f32.mrf.mxu0
    %v6837 = vadd.f32 %v6805, %v6836
    %6838 = vdwg.mxu0
    %6839 = vmatpush.msra.mxu0 0.0
    %6840 = vmatpush.msra.mxu0 0.0
    %6841 = vmatpush.msra.mxu0 0.0
    %6842 = vmatpush.msra.mxu0 0.0
    %6843 = vmatpush.msra.mxu0 0.0
    %6844 = vmatpush.msra.mxu0 0.0
    %6845 = vmatpush.msra.mxu0 0.0
    %6846 = vmatpush.msra.mxu0 0.0
    %6847 = vmatpush.msra.mxu0 0.0
    %6848 = vmatpush.msra.mxu0 0.0
    %6849 = vmatpush.msra.mxu0 0.0
    %6850 = vmatpush.msra.mxu0 0.0
    %6851 = vmatpush.msra.mxu0 0.0
    %6852 = vmatpush.msra.mxu0 0.0
    %6853 = vmatpush.msra.mxu0 0.0
    %v6854 = vand.u32 %v5769, 4294901760
    %6855 = vmatpush.msra.mxu0 %v6854
    %v6856 = vand.u32 %v6653, 4294901760
    %6857 = vmatmul.f32.gmra.mxu0 %v6856
    %v6858 = vpop.f32.mrf.mxu0
    %v6859 = vadd.f32 %v6829, %v6858
    %v6860 = vand.u32 %v6656, 4294901760
    %6861 = vmatmul.f32.gmra.mxu0 %v6860
    %v6862 = vpop.f32.mrf.mxu0
    %v6863 = vadd.f32 %v6833, %v6862
    %v6864 = vand.u32 %v6659, 4294901760
    %6865 = vmatmul.f32.gmra.mxu0 %v6864
    %v6866 = vpop.f32.mrf.mxu0
    %v6867 = vadd.f32 %v6837, %v6866
    %6868 = vdwg.mxu0
    %v6869 = vadd.f32 %v6649, %v6859
    %v6870 = vadd.f32 %v6650, %v6863
    %v6871 = vadd.f32 %v6651, %v6867
    %v6873 = vsel %vm1471, %v5316, 0
    %v6876 = vsel %vm1471, %v5320, 0
    %v6879 = vsel %vm1471, %v5324, 0
    %6881 = vmatpush.msra.mxu0 0.0
    %6882 = vmatpush.msra.mxu0 0.0
    %6883 = vmatpush.msra.mxu0 0.0
    %6884 = vmatpush.msra.mxu0 0.0
    %6885 = vmatpush.msra.mxu0 0.0
    %6886 = vmatpush.msra.mxu0 0.0
    %6887 = vmatpush.msra.mxu0 0.0
    %6888 = vmatpush.msra.mxu0 0.0
    %6889 = vmatpush.msra.mxu0 0.0
    %6890 = vmatpush.msra.mxu0 0.0
    %6891 = vmatpush.msra.mxu0 0.0
    %6892 = vmatpush.msra.mxu0 0.0
    %6893 = vmatpush.msra.mxu0 0.0
    %6894 = vmatpush.msra.mxu0 0.0
    %6895 = vmatpush.msra.mxu0 0.0
    %v6896 = vand.u32 %v5990, 4294901760
    %6897 = vmatpush.msra.mxu0 %v6896
    %v6898 = vand.u32 %v6873, 4294901760
    %v6899 = vsub.f32 %v6873, %v6898
    %v6900 = vand.u32 %v6899, 4294901760
    %v6901 = vsub.f32 %v6899, %v6900
    %v6902 = vand.u32 %v6901, 4294901760
    %6903 = vmatmul.f32.gmra.mxu0 %v6902
    %v6904 = vpop.f32.mrf.mxu0
    %v6905 = vadd.f32 0.0, %v6904
    %v6906 = vand.u32 %v6876, 4294901760
    %v6907 = vsub.f32 %v6876, %v6906
    %v6908 = vand.u32 %v6907, 4294901760
    %v6909 = vsub.f32 %v6907, %v6908
    %v6910 = vand.u32 %v6909, 4294901760
    %6911 = vmatmul.f32.gmra.mxu0 %v6910
    %v6912 = vpop.f32.mrf.mxu0
    %v6913 = vadd.f32 0.0, %v6912
    %v6914 = vand.u32 %v6879, 4294901760
    %v6915 = vsub.f32 %v6879, %v6914
    %v6916 = vand.u32 %v6915, 4294901760
    %v6917 = vsub.f32 %v6915, %v6916
    %v6918 = vand.u32 %v6917, 4294901760
    %6919 = vmatmul.f32.gmra.mxu0 %v6918
    %v6920 = vpop.f32.mrf.mxu0
    %v6921 = vadd.f32 0.0, %v6920
    %6922 = vdwg.mxu0
    %6923 = vmatpush.msra.mxu0 0.0
    %6924 = vmatpush.msra.mxu0 0.0
    %6925 = vmatpush.msra.mxu0 0.0
    %6926 = vmatpush.msra.mxu0 0.0
    %6927 = vmatpush.msra.mxu0 0.0
    %6928 = vmatpush.msra.mxu0 0.0
    %6929 = vmatpush.msra.mxu0 0.0
    %6930 = vmatpush.msra.mxu0 0.0
    %6931 = vmatpush.msra.mxu0 0.0
    %6932 = vmatpush.msra.mxu0 0.0
    %6933 = vmatpush.msra.mxu0 0.0
    %6934 = vmatpush.msra.mxu0 0.0
    %6935 = vmatpush.msra.mxu0 0.0
    %6936 = vmatpush.msra.mxu0 0.0
    %6937 = vmatpush.msra.mxu0 0.0
    %v6938 = vand.u32 %v5990, 4294901760
    %v6939 = vsub.f32 %v5990, %v6938
    %v6940 = vand.u32 %v6939, 4294901760
    %v6941 = vsub.f32 %v6939, %v6940
    %v6942 = vand.u32 %v6941, 4294901760
    %6943 = vmatpush.msra.mxu0 %v6942
    %v6944 = vand.u32 %v6873, 4294901760
    %6945 = vmatmul.f32.gmra.mxu0 %v6944
    %v6946 = vpop.f32.mrf.mxu0
    %v6947 = vadd.f32 %v6905, %v6946
    %v6948 = vand.u32 %v6876, 4294901760
    %6949 = vmatmul.f32.gmra.mxu0 %v6948
    %v6950 = vpop.f32.mrf.mxu0
    %v6951 = vadd.f32 %v6913, %v6950
    %v6952 = vand.u32 %v6879, 4294901760
    %6953 = vmatmul.f32.gmra.mxu0 %v6952
    %v6954 = vpop.f32.mrf.mxu0
    %v6955 = vadd.f32 %v6921, %v6954
    %6956 = vdwg.mxu0
    %6957 = vmatpush.msra.mxu0 0.0
    %6958 = vmatpush.msra.mxu0 0.0
    %6959 = vmatpush.msra.mxu0 0.0
    %6960 = vmatpush.msra.mxu0 0.0
    %6961 = vmatpush.msra.mxu0 0.0
    %6962 = vmatpush.msra.mxu0 0.0
    %6963 = vmatpush.msra.mxu0 0.0
    %6964 = vmatpush.msra.mxu0 0.0
    %6965 = vmatpush.msra.mxu0 0.0
    %6966 = vmatpush.msra.mxu0 0.0
    %6967 = vmatpush.msra.mxu0 0.0
    %6968 = vmatpush.msra.mxu0 0.0
    %6969 = vmatpush.msra.mxu0 0.0
    %6970 = vmatpush.msra.mxu0 0.0
    %6971 = vmatpush.msra.mxu0 0.0
    %v6972 = vand.u32 %v5990, 4294901760
    %v6973 = vsub.f32 %v5990, %v6972
    %6974 = vmatpush.msra.mxu0 %v6973
    %v6975 = vand.u32 %v6873, 4294901760
    %v6976 = vsub.f32 %v6873, %v6975
    %6977 = vmatmul.f32.gmra.mxu0 %v6976
    %v6978 = vpop.f32.mrf.mxu0
    %v6979 = vadd.f32 %v6947, %v6978
    %v6980 = vand.u32 %v6876, 4294901760
    %v6981 = vsub.f32 %v6876, %v6980
    %6982 = vmatmul.f32.gmra.mxu0 %v6981
    %v6983 = vpop.f32.mrf.mxu0
    %v6984 = vadd.f32 %v6951, %v6983
    %v6985 = vand.u32 %v6879, 4294901760
    %v6986 = vsub.f32 %v6879, %v6985
    %6987 = vmatmul.f32.gmra.mxu0 %v6986
    %v6988 = vpop.f32.mrf.mxu0
    %v6989 = vadd.f32 %v6955, %v6988
    %6990 = vdwg.mxu0
    %6991 = vmatpush.msra.mxu0 0.0
    %6992 = vmatpush.msra.mxu0 0.0
    %6993 = vmatpush.msra.mxu0 0.0
    %6994 = vmatpush.msra.mxu0 0.0
    %6995 = vmatpush.msra.mxu0 0.0
    %6996 = vmatpush.msra.mxu0 0.0
    %6997 = vmatpush.msra.mxu0 0.0
    %6998 = vmatpush.msra.mxu0 0.0
    %6999 = vmatpush.msra.mxu0 0.0
    %7000 = vmatpush.msra.mxu0 0.0
    %7001 = vmatpush.msra.mxu0 0.0
    %7002 = vmatpush.msra.mxu0 0.0
    %7003 = vmatpush.msra.mxu0 0.0
    %7004 = vmatpush.msra.mxu0 0.0
    %7005 = vmatpush.msra.mxu0 0.0
    %v7006 = vand.u32 %v5990, 4294901760
    %7007 = vmatpush.msra.mxu0 %v7006
    %v7008 = vand.u32 %v6873, 4294901760
    %v7009 = vsub.f32 %v6873, %v7008
    %v7010 = vand.u32 %v7009, 4294901760
    %7011 = vmatmul.f32.gmra.mxu0 %v7010
    %v7012 = vpop.f32.mrf.mxu0
    %v7013 = vadd.f32 %v6979, %v7012
    %v7014 = vand.u32 %v6876, 4294901760
    %v7015 = vsub.f32 %v6876, %v7014
    %v7016 = vand.u32 %v7015, 4294901760
    %7017 = vmatmul.f32.gmra.mxu0 %v7016
    %v7018 = vpop.f32.mrf.mxu0
    %v7019 = vadd.f32 %v6984, %v7018
    %v7020 = vand.u32 %v6879, 4294901760
    %v7021 = vsub.f32 %v6879, %v7020
    %v7022 = vand.u32 %v7021, 4294901760
    %7023 = vmatmul.f32.gmra.mxu0 %v7022
    %v7024 = vpop.f32.mrf.mxu0
    %v7025 = vadd.f32 %v6989, %v7024
    %7026 = vdwg.mxu0
    %7027 = vmatpush.msra.mxu0 0.0
    %7028 = vmatpush.msra.mxu0 0.0
    %7029 = vmatpush.msra.mxu0 0.0
    %7030 = vmatpush.msra.mxu0 0.0
    %7031 = vmatpush.msra.mxu0 0.0
    %7032 = vmatpush.msra.mxu0 0.0
    %7033 = vmatpush.msra.mxu0 0.0
    %7034 = vmatpush.msra.mxu0 0.0
    %7035 = vmatpush.msra.mxu0 0.0
    %7036 = vmatpush.msra.mxu0 0.0
    %7037 = vmatpush.msra.mxu0 0.0
    %7038 = vmatpush.msra.mxu0 0.0
    %7039 = vmatpush.msra.mxu0 0.0
    %7040 = vmatpush.msra.mxu0 0.0
    %7041 = vmatpush.msra.mxu0 0.0
    %v7042 = vand.u32 %v5990, 4294901760
    %v7043 = vsub.f32 %v5990, %v7042
    %v7044 = vand.u32 %v7043, 4294901760
    %7045 = vmatpush.msra.mxu0 %v7044
    %v7046 = vand.u32 %v6873, 4294901760
    %7047 = vmatmul.f32.gmra.mxu0 %v7046
    %v7048 = vpop.f32.mrf.mxu0
    %v7049 = vadd.f32 %v7013, %v7048
    %v7050 = vand.u32 %v6876, 4294901760
    %7051 = vmatmul.f32.gmra.mxu0 %v7050
    %v7052 = vpop.f32.mrf.mxu0
    %v7053 = vadd.f32 %v7019, %v7052
    %v7054 = vand.u32 %v6879, 4294901760
    %7055 = vmatmul.f32.gmra.mxu0 %v7054
    %v7056 = vpop.f32.mrf.mxu0
    %v7057 = vadd.f32 %v7025, %v7056
    %7058 = vdwg.mxu0
    %7059 = vmatpush.msra.mxu0 0.0
    %7060 = vmatpush.msra.mxu0 0.0
    %7061 = vmatpush.msra.mxu0 0.0
    %7062 = vmatpush.msra.mxu0 0.0
    %7063 = vmatpush.msra.mxu0 0.0
    %7064 = vmatpush.msra.mxu0 0.0
    %7065 = vmatpush.msra.mxu0 0.0
    %7066 = vmatpush.msra.mxu0 0.0
    %7067 = vmatpush.msra.mxu0 0.0
    %7068 = vmatpush.msra.mxu0 0.0
    %7069 = vmatpush.msra.mxu0 0.0
    %7070 = vmatpush.msra.mxu0 0.0
    %7071 = vmatpush.msra.mxu0 0.0
    %7072 = vmatpush.msra.mxu0 0.0
    %7073 = vmatpush.msra.mxu0 0.0
    %v7074 = vand.u32 %v5990, 4294901760
    %7075 = vmatpush.msra.mxu0 %v7074
    %v7076 = vand.u32 %v6873, 4294901760
    %7077 = vmatmul.f32.gmra.mxu0 %v7076
    %v7078 = vpop.f32.mrf.mxu0
    %v7079 = vadd.f32 %v7049, %v7078
    %v7080 = vand.u32 %v6876, 4294901760
    %7081 = vmatmul.f32.gmra.mxu0 %v7080
    %v7082 = vpop.f32.mrf.mxu0
    %v7083 = vadd.f32 %v7053, %v7082
    %v7084 = vand.u32 %v6879, 4294901760
    %7085 = vmatmul.f32.gmra.mxu0 %v7084
    %v7086 = vpop.f32.mrf.mxu0
    %v7087 = vadd.f32 %v7057, %v7086
    %7088 = vdwg.mxu0
    %v7089 = vadd.f32 %v6869, %v7079
    %v7090 = vadd.f32 %v6870, %v7083
    %v7091 = vadd.f32 %v6871, %v7087
    %v7093 = vsel %vm1471, %v5536, 0
    %v7096 = vsel %vm1471, %v5540, 0
    %v7099 = vsel %vm1471, %v5544, 0
    %7101 = vmatpush.msra.mxu0 0.0
    %7102 = vmatpush.msra.mxu0 0.0
    %7103 = vmatpush.msra.mxu0 0.0
    %7104 = vmatpush.msra.mxu0 0.0
    %7105 = vmatpush.msra.mxu0 0.0
    %7106 = vmatpush.msra.mxu0 0.0
    %7107 = vmatpush.msra.mxu0 0.0
    %7108 = vmatpush.msra.mxu0 0.0
    %7109 = vmatpush.msra.mxu0 0.0
    %7110 = vmatpush.msra.mxu0 0.0
    %7111 = vmatpush.msra.mxu0 0.0
    %7112 = vmatpush.msra.mxu0 0.0
    %7113 = vmatpush.msra.mxu0 0.0
    %7114 = vmatpush.msra.mxu0 0.0
    %7115 = vmatpush.msra.mxu0 0.0
    %v7116 = vand.u32 %v6211, 4294901760
    %7117 = vmatpush.msra.mxu0 %v7116
    %v7118 = vand.u32 %v7093, 4294901760
    %v7119 = vsub.f32 %v7093, %v7118
    %v7120 = vand.u32 %v7119, 4294901760
    %v7121 = vsub.f32 %v7119, %v7120
    %v7122 = vand.u32 %v7121, 4294901760
    %7123 = vmatmul.f32.gmra.mxu0 %v7122
    %v7124 = vpop.f32.mrf.mxu0
    %v7125 = vadd.f32 0.0, %v7124
    %v7126 = vand.u32 %v7096, 4294901760
    %v7127 = vsub.f32 %v7096, %v7126
    %v7128 = vand.u32 %v7127, 4294901760
    %v7129 = vsub.f32 %v7127, %v7128
    %v7130 = vand.u32 %v7129, 4294901760
    %7131 = vmatmul.f32.gmra.mxu0 %v7130
    %v7132 = vpop.f32.mrf.mxu0
    %v7133 = vadd.f32 0.0, %v7132
    %v7134 = vand.u32 %v7099, 4294901760
    %v7135 = vsub.f32 %v7099, %v7134
    %v7136 = vand.u32 %v7135, 4294901760
    %v7137 = vsub.f32 %v7135, %v7136
    %v7138 = vand.u32 %v7137, 4294901760
    %7139 = vmatmul.f32.gmra.mxu0 %v7138
    %v7140 = vpop.f32.mrf.mxu0
    %v7141 = vadd.f32 0.0, %v7140
    %7142 = vdwg.mxu0
    %7143 = vmatpush.msra.mxu0 0.0
    %7144 = vmatpush.msra.mxu0 0.0
    %7145 = vmatpush.msra.mxu0 0.0
    %7146 = vmatpush.msra.mxu0 0.0
    %7147 = vmatpush.msra.mxu0 0.0
    %7148 = vmatpush.msra.mxu0 0.0
    %7149 = vmatpush.msra.mxu0 0.0
    %7150 = vmatpush.msra.mxu0 0.0
    %7151 = vmatpush.msra.mxu0 0.0
    %7152 = vmatpush.msra.mxu0 0.0
    %7153 = vmatpush.msra.mxu0 0.0
    %7154 = vmatpush.msra.mxu0 0.0
    %7155 = vmatpush.msra.mxu0 0.0
    %7156 = vmatpush.msra.mxu0 0.0
    %7157 = vmatpush.msra.mxu0 0.0
    %v7158 = vand.u32 %v6211, 4294901760
    %v7159 = vsub.f32 %v6211, %v7158
    %v7160 = vand.u32 %v7159, 4294901760
    %v7161 = vsub.f32 %v7159, %v7160
    %v7162 = vand.u32 %v7161, 4294901760
    %7163 = vmatpush.msra.mxu0 %v7162
    %v7164 = vand.u32 %v7093, 4294901760
    %7165 = vmatmul.f32.gmra.mxu0 %v7164
    %v7166 = vpop.f32.mrf.mxu0
    %v7167 = vadd.f32 %v7125, %v7166
    %v7168 = vand.u32 %v7096, 4294901760
    %7169 = vmatmul.f32.gmra.mxu0 %v7168
    %v7170 = vpop.f32.mrf.mxu0
    %v7171 = vadd.f32 %v7133, %v7170
    %v7172 = vand.u32 %v7099, 4294901760
    %7173 = vmatmul.f32.gmra.mxu0 %v7172
    %v7174 = vpop.f32.mrf.mxu0
    %v7175 = vadd.f32 %v7141, %v7174
    %7176 = vdwg.mxu0
    %7177 = vmatpush.msra.mxu0 0.0
    %7178 = vmatpush.msra.mxu0 0.0
    %7179 = vmatpush.msra.mxu0 0.0
    %7180 = vmatpush.msra.mxu0 0.0
    %7181 = vmatpush.msra.mxu0 0.0
    %7182 = vmatpush.msra.mxu0 0.0
    %7183 = vmatpush.msra.mxu0 0.0
    %7184 = vmatpush.msra.mxu0 0.0
    %7185 = vmatpush.msra.mxu0 0.0
    %7186 = vmatpush.msra.mxu0 0.0
    %7187 = vmatpush.msra.mxu0 0.0
    %7188 = vmatpush.msra.mxu0 0.0
    %7189 = vmatpush.msra.mxu0 0.0
    %7190 = vmatpush.msra.mxu0 0.0
    %7191 = vmatpush.msra.mxu0 0.0
    %v7192 = vand.u32 %v6211, 4294901760
    %v7193 = vsub.f32 %v6211, %v7192
    %7194 = vmatpush.msra.mxu0 %v7193
    %v7195 = vand.u32 %v7093, 4294901760
    %v7196 = vsub.f32 %v7093, %v7195
    %7197 = vmatmul.f32.gmra.mxu0 %v7196
    %v7198 = vpop.f32.mrf.mxu0
    %v7199 = vadd.f32 %v7167, %v7198
    %v7200 = vand.u32 %v7096, 4294901760
    %v7201 = vsub.f32 %v7096, %v7200
    %7202 = vmatmul.f32.gmra.mxu0 %v7201
    %v7203 = vpop.f32.mrf.mxu0
    %v7204 = vadd.f32 %v7171, %v7203
    %v7205 = vand.u32 %v7099, 4294901760
    %v7206 = vsub.f32 %v7099, %v7205
    %7207 = vmatmul.f32.gmra.mxu0 %v7206
    %v7208 = vpop.f32.mrf.mxu0
    %v7209 = vadd.f32 %v7175, %v7208
    %7210 = vdwg.mxu0
    %7211 = vmatpush.msra.mxu0 0.0
    %7212 = vmatpush.msra.mxu0 0.0
    %7213 = vmatpush.msra.mxu0 0.0
    %7214 = vmatpush.msra.mxu0 0.0
    %7215 = vmatpush.msra.mxu0 0.0
    %7216 = vmatpush.msra.mxu0 0.0
    %7217 = vmatpush.msra.mxu0 0.0
    %7218 = vmatpush.msra.mxu0 0.0
    %7219 = vmatpush.msra.mxu0 0.0
    %7220 = vmatpush.msra.mxu0 0.0
    %7221 = vmatpush.msra.mxu0 0.0
    %7222 = vmatpush.msra.mxu0 0.0
    %7223 = vmatpush.msra.mxu0 0.0
    %7224 = vmatpush.msra.mxu0 0.0
    %7225 = vmatpush.msra.mxu0 0.0
    %v7226 = vand.u32 %v6211, 4294901760
    %7227 = vmatpush.msra.mxu0 %v7226
    %v7228 = vand.u32 %v7093, 4294901760
    %v7229 = vsub.f32 %v7093, %v7228
    %v7230 = vand.u32 %v7229, 4294901760
    %7231 = vmatmul.f32.gmra.mxu0 %v7230
    %v7232 = vpop.f32.mrf.mxu0
    %v7233 = vadd.f32 %v7199, %v7232
    %v7234 = vand.u32 %v7096, 4294901760
    %v7235 = vsub.f32 %v7096, %v7234
    %v7236 = vand.u32 %v7235, 4294901760
    %7237 = vmatmul.f32.gmra.mxu0 %v7236
    %v7238 = vpop.f32.mrf.mxu0
    %v7239 = vadd.f32 %v7204, %v7238
    %v7240 = vand.u32 %v7099, 4294901760
    %v7241 = vsub.f32 %v7099, %v7240
    %v7242 = vand.u32 %v7241, 4294901760
    %7243 = vmatmul.f32.gmra.mxu0 %v7242
    %v7244 = vpop.f32.mrf.mxu0
    %v7245 = vadd.f32 %v7209, %v7244
    %7246 = vdwg.mxu0
    %7247 = vmatpush.msra.mxu0 0.0
    %7248 = vmatpush.msra.mxu0 0.0
    %7249 = vmatpush.msra.mxu0 0.0
    %7250 = vmatpush.msra.mxu0 0.0
    %7251 = vmatpush.msra.mxu0 0.0
    %7252 = vmatpush.msra.mxu0 0.0
    %7253 = vmatpush.msra.mxu0 0.0
    %7254 = vmatpush.msra.mxu0 0.0
    %7255 = vmatpush.msra.mxu0 0.0
    %7256 = vmatpush.msra.mxu0 0.0
    %7257 = vmatpush.msra.mxu0 0.0
    %7258 = vmatpush.msra.mxu0 0.0
    %7259 = vmatpush.msra.mxu0 0.0
    %7260 = vmatpush.msra.mxu0 0.0
    %7261 = vmatpush.msra.mxu0 0.0
    %v7262 = vand.u32 %v6211, 4294901760
    %v7263 = vsub.f32 %v6211, %v7262
    %v7264 = vand.u32 %v7263, 4294901760
    %7265 = vmatpush.msra.mxu0 %v7264
    %v7266 = vand.u32 %v7093, 4294901760
    %7267 = vmatmul.f32.gmra.mxu0 %v7266
    %v7268 = vpop.f32.mrf.mxu0
    %v7269 = vadd.f32 %v7233, %v7268
    %v7270 = vand.u32 %v7096, 4294901760
    %7271 = vmatmul.f32.gmra.mxu0 %v7270
    %v7272 = vpop.f32.mrf.mxu0
    %v7273 = vadd.f32 %v7239, %v7272
    %v7274 = vand.u32 %v7099, 4294901760
    %7275 = vmatmul.f32.gmra.mxu0 %v7274
    %v7276 = vpop.f32.mrf.mxu0
    %v7277 = vadd.f32 %v7245, %v7276
    %7278 = vdwg.mxu0
    %7279 = vmatpush.msra.mxu0 0.0
    %7280 = vmatpush.msra.mxu0 0.0
    %7281 = vmatpush.msra.mxu0 0.0
    %7282 = vmatpush.msra.mxu0 0.0
    %7283 = vmatpush.msra.mxu0 0.0
    %7284 = vmatpush.msra.mxu0 0.0
    %7285 = vmatpush.msra.mxu0 0.0
    %7286 = vmatpush.msra.mxu0 0.0
    %7287 = vmatpush.msra.mxu0 0.0
    %7288 = vmatpush.msra.mxu0 0.0
    %7289 = vmatpush.msra.mxu0 0.0
    %7290 = vmatpush.msra.mxu0 0.0
    %7291 = vmatpush.msra.mxu0 0.0
    %7292 = vmatpush.msra.mxu0 0.0
    %7293 = vmatpush.msra.mxu0 0.0
    %v7294 = vand.u32 %v6211, 4294901760
    %7295 = vmatpush.msra.mxu0 %v7294
    %v7296 = vand.u32 %v7093, 4294901760
    %7297 = vmatmul.f32.gmra.mxu0 %v7296
    %v7298 = vpop.f32.mrf.mxu0
    %v7299 = vadd.f32 %v7269, %v7298
    %v7300 = vand.u32 %v7096, 4294901760
    %7301 = vmatmul.f32.gmra.mxu0 %v7300
    %v7302 = vpop.f32.mrf.mxu0
    %v7303 = vadd.f32 %v7273, %v7302
    %v7304 = vand.u32 %v7099, 4294901760
    %7305 = vmatmul.f32.gmra.mxu0 %v7304
    %v7306 = vpop.f32.mrf.mxu0
    %v7307 = vadd.f32 %v7277, %v7306
    %7308 = vdwg.mxu0
    %v7309 = vadd.f32 %v7089, %v7299
    %v7310 = vadd.f32 %v7090, %v7303
    %v7311 = vadd.f32 %v7091, %v7307
    %7315 = vrot.lane.b32.xlu0 %v7309, 64
    %v7316 = vpop.permute.xlu0 %7315
    %7317 = vrot.lane.b32.xlu0 %v7310, 64
    %v7318 = vpop.permute.xlu0 %7317
    %7319 = vrot.lane.b32.xlu0 %v7311, 64
    %v7320 = vpop.permute.xlu0 %7319
    %vm7324 = vcmask 523264
    %v7325 = vsel %vm7324, %v6429, %v7316
    %v7326 = vsel %vm7324, %v6430, %v7318
    %v7327 = vsel %vm7324, %v6431, %v7320
    %7328 = vst [vmem:[#allocation2] sm:$0xff] %v7325
    %7329 = vst [vmem:[#allocation2 + $0x8] sm:$0xff] %v7326
    %7330 = vst [vmem:[#allocation2 + $0x10] sm:$0x1] %v7327
    // Predicated region
    $region10: #{tpu_custom_call.1} parent=1 // pred_check
      _
    $region11: #{tpu_custom_call.1} parent=1 // pred_check_branch
      %7332 = sbr.rel (0) target = $region13
    $region12: #{tpu_custom_call.1} parent=1 // pred_region
      %7334 = vsyncadd [#allocation3], 0
      %s7335 = sshll.u32 [#allocation2], 4
      %s7336 = int_to_ptr.vmem [resolvable:$true] %s7335
      %s7337 = sshll.u32 %s2, 4
      %s7338 = int_to_ptr.hbm [resolvable:$true] %s7337
      %7343 = dma.vmem_to_hbm [thread:$0]  %s7336, 384, %s7338, [#allocation3], 128, 128, 8
    $region13: #{tpu_custom_call.1} parent=1 // pred_fallthru
      _
    // Predicated region
    $region14: #{tpu_custom_call.1} parent=1 // pred_check
      _
    $region15: #{tpu_custom_call.1} parent=1 // pred_check_branch
      %7345 = sbr.rel (0) target = $region17
    $region16: #{tpu_custom_call.1} parent=1 // pred_region
      %7347 = dma.done [#allocation3], 384
    $region17: #{tpu_custom_call.1} parent=1 // pred_fallthru
      _
    %7348 = vsyncpa [#allocation3], 1

</llo_original>
